<compile_context>
chip_gen: v7x
topology: tpu7x:2x2x1
jax: 0.10.0
libtpu: 0.0.40
codegen_flags: <defaults>
</compile_context>

<pallas_src>
import functools
import math

import jax
import jax.numpy as jnp
from jax.experimental import pallas as pl
from jax.experimental.pallas import tpu as pltpu

_VMEM_LIMIT = 32 * 1024 * 1024  # safe scoped-VMEM budget on v5e/v6e/v7x


def _round_up(x, m):
    return (x + m - 1) // m * m


def _pick_seq_tile(n, max_tile=128):
    for t in (max_tile, 64, 32, 16, 8):
        if n % t == 0:
            return t
    return n  # fall back to the full extent (always legal)


# ---------------------------------------------------------------------------
# Tiled linear:  y = act(x @ w + b)
# ---------------------------------------------------------------------------
def _linear_kernel(x_ref, w_ref, b_ref, o_ref, acc_ref, *, activation):
    k = pl.program_id(2)

    @pl.when(k == 0)
    def _():
        acc_ref[...] = jnp.zeros(acc_ref.shape, jnp.float32)

    acc_ref[...] += jnp.dot(x_ref[...], w_ref[...],
                            preferred_element_type=jnp.float32)

    @pl.when(k == pl.num_programs(2) - 1)
    def _():
        y = acc_ref[...] + b_ref[...]          # bias add hoisted out of K loop
        if activation == "relu":
            y = jnp.maximum(y, 0.0)
        elif activation == "tanh":
            y = jnp.tanh(y)
        o_ref[...] = y.astype(o_ref.dtype)


def pallas_linear(x, w, b, activation="none"):
    """x: (M, K), w: (K, N), b: (N,) -> (M, N) in fp32."""
    M, K = x.shape
    N = w.shape[1]
    tm = min(256, _round_up(M, 8))
    tn = min(512, _round_up(N, 128))
    tk = min(512, _round_up(K, 128))
    Mp, Np, Kp = _round_up(M, tm), _round_up(N, tn), _round_up(K, tk)

    xp = x if (Mp == M and Kp == K) else jnp.pad(x, ((0, Mp - M), (0, Kp - K)))
    wp = w if (Kp == K and Np == N) else jnp.pad(w, ((0, Kp - K), (0, Np - N)))
    bp = b if Np == N else jnp.pad(b, (0, Np - N))

    grid = (Mp // tm, Np // tn, Kp // tk)
    out = pl.pallas_call(
        functools.partial(_linear_kernel, activation=activation),
        out_shape=jax.ShapeDtypeStruct((Mp, Np), jnp.float32),
        grid=grid,
        in_specs=[
            pl.BlockSpec((tm, tk), lambda i, j, k: (i, k)),
            pl.BlockSpec((tk, tn), lambda i, j, k: (k, j)),
            pl.BlockSpec((1, tn), lambda i, j, k: (0, j)),
        ],
        out_specs=pl.BlockSpec((tm, tn), lambda i, j, k: (i, j)),
        scratch_shapes=[pltpu.VMEM((tm, tn), jnp.float32)],
        compiler_params=pltpu.CompilerParams(
            dimension_semantics=("parallel", "parallel", "arbitrary"),
            vmem_limit_bytes=_VMEM_LIMIT),
        cost_estimate=pl.CostEstimate(
            flops=2 * Mp * Np * Kp,
            transcendentals=Mp * Np if activation == "tanh" else 0,
            bytes_accessed=4 * (Mp * Kp + Kp * Np + 2 * Mp * Np)),
    )(xp, wp, bp.reshape(1, Np))

    if Mp != M or Np != N:
        out = out[:M, :N]
    return out


# ---------------------------------------------------------------------------
# Fused (residual +) LayerNorm
# ---------------------------------------------------------------------------
def _ln_finish(x, g_ref, b_ref, o_ref, eps):
    mean = jnp.mean(x, axis=-1, keepdims=True)
    var = jnp.mean(jnp.square(x - mean), axis=-1, keepdims=True)
    y = (x - mean) * jax.lax.rsqrt(var + eps)
    o_ref[...] = (y * g_ref[...] + b_ref[...]).astype(o_ref.dtype)


def _ln_kernel(x_ref, g_ref, b_ref, o_ref, *, eps):
    _ln_finish(x_ref[...].astype(jnp.float32), g_ref, b_ref, o_ref, eps)


def _ln_res_kernel(x_ref, r_ref, g_ref, b_ref, o_ref, *, eps):
    x = x_ref[...].astype(jnp.float32) + r_ref[...].astype(jnp.float32)
    _ln_finish(x, g_ref, b_ref, o_ref, eps)


def pallas_layernorm(x, gamma, beta, residual=None, eps=1e-5):
    """LN(x) or LN(x + residual); x: (M, D)."""
    M, D = x.shape
    tm = min(512, _round_up(M, 8))
    Mp = _round_up(M, tm)
    xs = [x] if residual is None else [x, residual]
    if Mp != M:
        xs = [jnp.pad(a, ((0, Mp - M), (0, 0))) for a in xs]
    kernel = _ln_kernel if residual is None else _ln_res_kernel
    row_spec = pl.BlockSpec((tm, D), lambda i: (i, 0))
    vec_spec = pl.BlockSpec((1, D), lambda i: (0, 0))
    out = pl.pallas_call(
        functools.partial(kernel, eps=eps),
        out_shape=jax.ShapeDtypeStruct((Mp, D), jnp.float32),
        grid=(Mp // tm,),
        in_specs=[row_spec] * len(xs) + [vec_spec, vec_spec],
        out_specs=row_spec,
        compiler_params=pltpu.CompilerParams(
            dimension_semantics=("parallel",),
            vmem_limit_bytes=_VMEM_LIMIT),
        cost_estimate=pl.CostEstimate(
            flops=10 * Mp * D, transcendentals=Mp,
            bytes_accessed=4 * Mp * D * (len(xs) + 1)),
    )(*xs, gamma.reshape(1, D), beta.reshape(1, D))
    return out[:M] if Mp != M else out


# ---------------------------------------------------------------------------
# Flash-style multi-head attention (online softmax, no full score matrix)
# ---------------------------------------------------------------------------
def _flash_kernel(q_ref, k_ref, v_ref, o_ref, m_sc, l_sc, acc_sc, *, scale):
    ki = pl.program_id(2)

    @pl.when(ki == 0)
    def _():
        m_sc[...] = jnp.full(m_sc.shape, -jnp.inf, jnp.float32)
        l_sc[...] = jnp.zeros(l_sc.shape, jnp.float32)
        acc_sc[...] = jnp.zeros(acc_sc.shape, jnp.float32)

    q = q_ref[...].astype(jnp.float32)
    k = k_ref[...].astype(jnp.float32)
    v = v_ref[...].astype(jnp.float32)
    s = jnp.einsum("bqd,bkd->bqk", q, k,
                   preferred_element_type=jnp.float32) * scale   # (1, tq, tk)

    m_prev = m_sc[...]
    m_new = jnp.maximum(m_prev, jnp.max(s, axis=-1, keepdims=True))
    alpha = jnp.exp(m_prev - m_new)
    p = jnp.exp(s - m_new)
    l_sc[...] = alpha * l_sc[...] + jnp.sum(p, axis=-1, keepdims=True)
    acc_sc[...] = alpha * acc_sc[...] + jnp.einsum(
        "bqk,bkd->bqd", p, v, preferred_element_type=jnp.float32)
    m_sc[...] = m_new

    @pl.when(ki == pl.num_programs(2) - 1)
    def _():
        o_ref[...] = (acc_sc[...] *
                      pl.reciprocal(l_sc[...], approx=True)).astype(o_ref.dtype)


def pallas_flash_attention(q, k, v):
    """q: (BH, Lq, Dh), k/v: (BH, Lk, Dh) -> (BH, Lq, Dh)."""
    BH, Lq, Dh = q.shape
    Lk = k.shape[1]
    scale = 1.0 / math.sqrt(Dh)
    tq = _pick_seq_tile(Lq)
    tk = _pick_seq_tile(Lk)
    grid = (BH, Lq // tq, Lk // tk)
    return pl.pallas_call(
        functools.partial(_flash_kernel, scale=scale),
        out_shape=jax.ShapeDtypeStruct((BH, Lq, Dh), jnp.float32),
        grid=grid,
        in_specs=[
            pl.BlockSpec((1, tq, Dh), lambda b, qi, ki: (b, qi, 0)),
            pl.BlockSpec((1, tk, Dh), lambda b, qi, ki: (b, ki, 0)),
            pl.BlockSpec((1, tk, Dh), lambda b, qi, ki: (b, ki, 0)),
        ],
        out_specs=pl.BlockSpec((1, tq, Dh), lambda b, qi, ki: (b, qi, 0)),
        scratch_shapes=[pltpu.VMEM((1, tq, 1), jnp.float32),
                        pltpu.VMEM((1, tq, 1), jnp.float32),
                        pltpu.VMEM((1, tq, Dh), jnp.float32)],
        compiler_params=pltpu.CompilerParams(
            dimension_semantics=("parallel", "parallel", "arbitrary"),
            vmem_limit_bytes=_VMEM_LIMIT),
        cost_estimate=pl.CostEstimate(
            flops=4 * BH * Lq * Lk * Dh,
            transcendentals=BH * Lq * Lk,
            bytes_accessed=4 * BH * (2 * Lq * Dh + 2 * Lk * Dh)),
    )(q, k, v)


# ---------------------------------------------------------------------------
# Transformer building blocks (thin JAX glue around the Pallas kernels)
# ---------------------------------------------------------------------------
def _to_heads(x, B, L, nhead, dh):
    # (B*L, nhead*dh) -> (B*nhead, L, dh)   [layout glue only]
    return x.reshape(B, L, nhead, dh).transpose(0, 2, 1, 3).reshape(B * nhead, L, dh)


def _from_heads(x, B, L, nhead, dh):
    # (B*nhead, L, dh) -> (B*L, nhead*dh)
    return x.reshape(B, nhead, L, dh).transpose(0, 2, 1, 3).reshape(B * L, nhead * dh)


def self_attention(x2, B, L, p, nhead):
    E = x2.shape[1]
    dh = E // nhead
    qkv = pallas_linear(x2, p["w_qkv"], p["b_qkv"])      # fused QKV projection
    q, k, v = jnp.split(qkv, 3, axis=-1)
    o = pallas_flash_attention(_to_heads(q, B, L, nhead, dh),
                               _to_heads(k, B, L, nhead, dh),
                               _to_heads(v, B, L, nhead, dh))
    return pallas_linear(_from_heads(o, B, L, nhead, dh), p["wo"], p["bo"])


def cross_attention(xq2, B, Lq, mem2, Lk, p, nhead):
    E = xq2.shape[1]
    dh = E // nhead
    q = pallas_linear(xq2, p["wq"], p["bq"])
    kv = pallas_linear(mem2, p["w_kv"], p["b_kv"])       # fused KV projection
    k, v = jnp.split(kv, 2, axis=-1)
    o = pallas_flash_attention(_to_heads(q, B, Lq, nhead, dh),
                               _to_heads(k, B, Lk, nhead, dh),
                               _to_heads(v, B, Lk, nhead, dh))
    return pallas_linear(_from_heads(o, B, Lq, nhead, dh), p["wo"], p["bo"])


def encoder_layer(x2, B, L, p, nhead):
    a = self_attention(x2, B, L, p["self_attn"], nhead)
    x2 = pallas_layernorm(a, p["norm1"]["g"], p["norm1"]["b"], residual=x2)
    f = pallas_linear(x2, p["lin1"]["w"], p["lin1"]["b"], activation="relu")
    f = pallas_linear(f, p["lin2"]["w"], p["lin2"]["b"])
    x2 = pallas_layernorm(f, p["norm2"]["g"], p["norm2"]["b"], residual=x2)
    return x2


def decoder_layer(x2, mem2, B, Lq, Lk, p, nhead):
    a = self_attention(x2, B, Lq, p["self_attn"], nhead)
    x2 = pallas_layernorm(a, p["norm1"]["g"], p["norm1"]["b"], residual=x2)
    a = cross_attention(x2, B, Lq, mem2, Lk, p["cross_attn"], nhead)
    x2 = pallas_layernorm(a, p["norm2"]["g"], p["norm2"]["b"], residual=x2)
    f = pallas_linear(x2, p["lin1"]["w"], p["lin1"]["b"], activation="relu")
    f = pallas_linear(f, p["lin2"]["w"], p["lin2"]["b"])
    x2 = pallas_layernorm(f, p["norm3"]["g"], p["norm3"]["b"], residual=x2)
    return x2


def text2image_forward(params, input_ids, attention_mask, noise, cfg):
    B, S = input_ids.shape
    nhead = cfg["nhead"]
    d_model = cfg["d_model"]
    L_img = cfg["img_size"] * cfg["img_size"]
    assert d_model % nhead == 0, "d_model must be divisible by nhead"
    assert S <= params["pos_emb"].shape[0], "sequence longer than pos_emb table"

    # --- text encoder stand-in (deterministic) -------------------------------
    # TODO(synk): pretrained BertModel replaced by token+position embedding + LN.
    tok = jnp.take(params["tok_emb"], input_ids, axis=0)          # (B, S, H)
    pos = params["pos_emb"][:S][None, :, :]
    hidden = (tok + pos).reshape(B * S, cfg["bert_hidden"])
    hidden = pallas_layernorm(hidden, params["emb_ln"]["g"], params["emb_ln"]["b"])
    del attention_mask  # only used inside BERT; transformer gets no masks

    # --- text_linear -----------------------------------------------------------
    text2 = pallas_linear(hidden, params["text_linear"]["w"],
                          params["text_linear"]["b"])             # (B*S, d_model)

    # --- nn.Transformer(src=noise_seq, tgt=text_embeds) ------------------------
    mem2 = noise.reshape(B * L_img, d_model)
    for lp in params["enc_layers"]:
        mem2 = encoder_layer(mem2, B, L_img, lp, nhead)
    mem2 = pallas_layernorm(mem2, params["enc_norm"]["g"], params["enc_norm"]["b"])

    x2 = text2
    for lp in params["dec_layers"]:
        x2 = decoder_layer(x2, mem2, B, S, L_img, lp, nhead)
    x2 = pallas_layernorm(x2, params["dec_norm"]["g"], params["dec_norm"]["b"])

    # --- output head: Linear -> ReLU -> Linear -> Tanh -------------------------
    h = pallas_linear(x2, params["out1"]["w"], params["out1"]["b"], activation="relu")
    img = pallas_linear(h, params["out2"]["w"], params["out2"]["b"], activation="tanh")
    return img.reshape(B * S, 3, cfg["img_size"], cfg["img_size"])


# ---------------------------------------------------------------------------
# Deterministic parameter initialization
# ---------------------------------------------------------------------------
def _dense(key, fan_in, fan_out):
    return {"w": jax.random.normal(key, (fan_in, fan_out), jnp.float32) * 0.02,
            "b": jnp.zeros((fan_out,), jnp.float32)}


def _ln_params(dim):
    return {"g": jnp.ones((dim,), jnp.float32), "b": jnp.zeros((dim,), jnp.float32)}


def _self_attn_params(key, dim):
    kq, kk, kv, ko = jax.random.split(key, 4)
    n = lambda k: jax.random.normal(k, (dim, dim), jnp.float32) * 0.02
    return {"w_qkv": jnp.concatenate([n(kq), n(kk), n(kv)], axis=1),
            "b_qkv": jnp.zeros((3 * dim,), jnp.float32),
            "wo": n(ko), "bo": jnp.zeros((dim,), jnp.float32)}


def _cross_attn_params(key, dim):
    kq, kk, kv, ko = jax.random.split(key, 4)
    n = lambda k: jax.random.normal(k, (dim, dim), jnp.float32) * 0.02
    return {"wq": n(kq), "bq": jnp.zeros((dim,), jnp.float32),
            "w_kv": jnp.concatenate([n(kk), n(kv)], axis=1),
            "b_kv": jnp.zeros((2 * dim,), jnp.float32),
            "wo": n(ko), "bo": jnp.zeros((dim,), jnp.float32)}


def _enc_layer(key, d, ff):
    k1, k2, k3 = jax.random.split(key, 3)
    return {"self_attn": _self_attn_params(k1, d), "norm1": _ln_params(d),
            "lin1": _dense(k2, d, ff), "lin2": _dense(k3, ff, d),
            "norm2": _ln_params(d)}


def _dec_layer(key, d, ff):
    k1, k2, k3, k4 = jax.random.split(key, 4)
    return {"self_attn": _self_attn_params(k1, d), "norm1": _ln_params(d),
            "cross_attn": _cross_attn_params(k2, d), "norm2": _ln_params(d),
            "lin1": _dense(k3, d, ff), "lin2": _dense(k4, ff, d),
            "norm3": _ln_params(d)}


def init_params(key, cfg):
    d = cfg["d_model"]
    ff = cfg["dim_feedforward"]
    keys = jax.random.split(
        key, 8 + cfg["num_encoder_layers"] + cfg["num_decoder_layers"])
    it = iter(keys)
    return {
        "tok_emb": jax.random.normal(
            next(it), (cfg["vocab_size"], cfg["bert_hidden"]), jnp.float32) * 0.02,
        "pos_emb": jax.random.normal(
            next(it), (cfg["max_positions"], cfg["bert_hidden"]), jnp.float32) * 0.02,
        "emb_ln": _ln_params(cfg["bert_hidden"]),
        "text_linear": _dense(next(it), cfg["bert_hidden"], cfg["latent_dim"]),
        "enc_layers": [_enc_layer(next(it), d, ff)
                       for _ in range(cfg["num_encoder_layers"])],
        "enc_norm": _ln_params(d),
        "dec_layers": [_dec_layer(next(it), d, ff)
                       for _ in range(cfg["num_decoder_layers"])],
        "dec_norm": _ln_params(d),
        "out1": _dense(next(it), d, 128),
        "out2": _dense(next(it), 128, cfg["img_size"] * cfg["img_size"] * 3),
    }


# ---------------------------------------------------------------------------
if __name__ == "__main__":
    # Small but lane-friendly config (d_model / ff / bert_hidden multiples of 128).
    cfg = dict(img_size=8, latent_dim=128, d_model=128, nhead=8,
               num_encoder_layers=2, num_decoder_layers=2,
               dim_feedforward=256, vocab_size=100, bert_hidden=128,
               max_positions=64)

    key = jax.random.PRNGKey(0)
    k_param, k_ids, k_noise = jax.random.split(key, 3)
    params = init_params(k_param, cfg)

    B, S = 2, 8
    input_ids = jax.random.randint(k_ids, (B, S), 0, cfg["vocab_size"], dtype=jnp.int32)
    attention_mask = jnp.ones((B, S), dtype=jnp.int32)

    # torch.randn(batch, img, img, latent_dim).view(batch, img*img, latent_dim)
    noise = jax.random.normal(
        k_noise, (B, cfg["img_size"], cfg["img_size"], cfg["latent_dim"]), jnp.float32)
    noise = noise.reshape(B, cfg["img_size"] * cfg["img_size"], cfg["latent_dim"])

    forward = jax.jit(
        lambda p, ids, mask, nz: text2image_forward(p, ids, mask, nz, cfg))
    img = forward(params, input_ids, attention_mask, noise)
    img = jax.block_until_ready(img)

    assert img.shape == (B * S, 3, cfg["img_size"], cfg["img_size"]), img.shape
    assert bool(jnp.all(jnp.isfinite(img)))
    print("KERNEL_OK")
</pallas_src>

<mosaic_0001>
module attributes {stable_mosaic.version = 11 : i64} {
  func.func @_linear_kernel(%arg0: i32, %arg1: i32, %arg2: i32, %arg3: memref<128x128xf32, #tpu.memory_space<vmem>>, %arg4: memref<128x384xf32, #tpu.memory_space<vmem>>, %arg5: memref<1x384xf32, #tpu.memory_space<vmem>>, %arg6: memref<128x384xf32, #tpu.memory_space<vmem>>, %arg7: memref<128x384xf32, #tpu.memory_space<vmem>>) attributes {dimension_semantics = [#tpu.dimension_semantics<parallel>, #tpu.dimension_semantics<parallel>, #tpu.dimension_semantics<arbitrary>], iteration_bounds = array<i64: 1, 1, 1>, scalar_prefetch = 0 : i64, scratch_operands = 1 : i64, tpu.core_type = #tpu.core_type<tc>, window_params = [{transform_indices = @transform_0, window_bounds = array<i64: 128, 128>}, {transform_indices = @transform_1, window_bounds = array<i64: 128, 384>}, {transform_indices = @transform_2, window_bounds = array<i64: 1, 384>}, {transform_indices = @transform_3, window_bounds = array<i64: 128, 384>}]} {
    %c0_i32 = arith.constant 0 : i32
    %0 = arith.cmpi eq, %arg2, %c0_i32 : i32
    %1 = arith.extui %0 : i1 to i32
    %c0_i32_0 = arith.constant 0 : i32
    %2 = arith.cmpi ne, %1, %c0_i32_0 : i32
    scf.if %2 {
      %cst_10 = arith.constant 0.000000e+00 : f32
      %12 = vector.broadcast %cst_10 : f32 to vector<128x384xf32>
      %c0_11 = arith.constant 0 : index
      %c0_12 = arith.constant 0 : index
      %13 = vector.load %arg7[%c0_11, %c0_12] : memref<128x384xf32, #tpu.memory_space<vmem>>, vector<128x384xf32>
      tpu.vector_store %arg7[%c0_11, %c0_12], %12 {strides = array<i32>} : memref<128x384xf32, #tpu.memory_space<vmem>>, vector<128x384xf32>,
    } else {
    }
    %c0 = arith.constant 0 : index
    %c0_1 = arith.constant 0 : index
    %3 = vector.load %arg7[%c0, %c0_1] : memref<128x384xf32, #tpu.memory_space<vmem>>, vector<128x384xf32>
    %c0_2 = arith.constant 0 : index
    %c0_3 = arith.constant 0 : index
    %4 = vector.load %arg3[%c0_2, %c0_3] : memref<128x128xf32, #tpu.memory_space<vmem>>, vector<128x128xf32>
    %c0_4 = arith.constant 0 : index
    %c0_5 = arith.constant 0 : index
    %5 = vector.load %arg4[%c0_4, %c0_5] : memref<128x384xf32, #tpu.memory_space<vmem>>, vector<128x384xf32>
    %cst = arith.constant dense<0.000000e+00> : vector<128x384xf32>
    %6 = tpu.matmul %4, %5, %cst {dimension_numbers = #tpu.dot_dimension_numbers<[1], [0], [0], [1], [0, 0, 1, 1], [], []>} : vector<128x128xf32>, vector<128x384xf32>, vector<128x384xf32> -> vector<128x384xf32>
    %7 = arith.addf %3, %6 : vector<128x384xf32>
    %c0_6 = arith.constant 0 : index
    %c0_7 = arith.constant 0 : index
    %8 = vector.load %arg7[%c0_6, %c0_7] : memref<128x384xf32, #tpu.memory_space<vmem>>, vector<128x384xf32>
    tpu.vector_store %arg7[%c0_6, %c0_7], %7 {strides = array<i32>} : memref<128x384xf32, #tpu.memory_space<vmem>>, vector<128x384xf32>,
    %c0_i32_8 = arith.constant 0 : i32
    %9 = arith.cmpi eq, %arg2, %c0_i32_8 : i32
    %10 = arith.extui %9 : i1 to i32
    %c0_i32_9 = arith.constant 0 : i32
    %11 = arith.cmpi ne, %10, %c0_i32_9 : i32
    scf.if %11 {
      %c0_10 = arith.constant 0 : index
      %c0_11 = arith.constant 0 : index
      %12 = vector.load %arg7[%c0_10, %c0_11] : memref<128x384xf32, #tpu.memory_space<vmem>>, vector<128x384xf32>
      %c0_12 = arith.constant 0 : index
      %c0_13 = arith.constant 0 : index
      %13 = vector.load %arg5[%c0_12, %c0_13] : memref<1x384xf32, #tpu.memory_space<vmem>>, vector<1x384xf32>
      %14 = vector.broadcast %13 : vector<1x384xf32> to vector<128x384xf32>
      %15 = arith.addf %12, %14 : vector<128x384xf32>
      %c0_14 = arith.constant 0 : index
      %c0_15 = arith.constant 0 : index
      %16 = vector.load %arg6[%c0_14, %c0_15] : memref<128x384xf32, #tpu.memory_space<vmem>>, vector<128x384xf32>
      tpu.vector_store %arg6[%c0_14, %c0_15], %15 {strides = array<i32>} : memref<128x384xf32, #tpu.memory_space<vmem>>, vector<128x384xf32>,
    } else {
    }
    return
  }
  func.func @transform_0(%arg0: i32, %arg1: i32, %arg2: i32) -> (i32, i32) {
    %c0_i32 = arith.constant 0 : i32
    return %arg0, %arg2 : i32, i32
  }
  func.func @transform_1(%arg0: i32, %arg1: i32, %arg2: i32) -> (i32, i32) {
    %c0_i32 = arith.constant 0 : i32
    return %arg2, %arg1 : i32, i32
  }
  func.func @transform_2(%arg0: i32, %arg1: i32, %arg2: i32) -> (i32, i32) {
    %c0_i32 = arith.constant 0 : i32
    %c0_i32_0 = arith.constant 0 : i32
    return %c0_i32, %arg1 : i32, i32
  }
  func.func @transform_3(%arg0: i32, %arg1: i32, %arg2: i32) -> (i32, i32) {
    %c0_i32 = arith.constant 0 : i32
    return %arg0, %arg1 : i32, i32
  }
}

module attributes {stable_mosaic.version = 11 : i64} {
  func.func @_flash_kernel(%arg0: i32, %arg1: i32, %arg2: i32, %arg3: memref<1x64x16xf32, #tpu.memory_space<vmem>>, %arg4: memref<1x64x16xf32, #tpu.memory_space<vmem>>, %arg5: memref<1x64x16xf32, #tpu.memory_space<vmem>>, %arg6: memref<1x64x16xf32, #tpu.memory_space<vmem>>, %arg7: memref<1x64x1xf32, #tpu.memory_space<vmem>>, %arg8: memref<1x64x1xf32, #tpu.memory_space<vmem>>, %arg9: memref<1x64x16xf32, #tpu.memory_space<vmem>>) attributes {dimension_semantics = [#tpu.dimension_semantics<parallel>, #tpu.dimension_semantics<parallel>, #tpu.dimension_semantics<arbitrary>], iteration_bounds = array<i64: 16, 1, 1>, scalar_prefetch = 0 : i64, scratch_operands = 3 : i64, tpu.core_type = #tpu.core_type<tc>, window_params = [{transform_indices = @transform_0, window_bounds = array<i64: 1, 64, 16>}, {transform_indices = @transform_1, window_bounds = array<i64: 1, 64, 16>}, {transform_indices = @transform_2, window_bounds = array<i64: 1, 64, 16>}, {transform_indices = @transform_3, window_bounds = array<i64: 1, 64, 16>}]} {
    %c0_i32 = arith.constant 0 : i32
    %0 = arith.cmpi eq, %arg2, %c0_i32 : i32
    %1 = arith.extui %0 : i1 to i32
    %c0_i32_0 = arith.constant 0 : i32
    %2 = arith.cmpi ne, %1, %c0_i32_0 : i32
    scf.if %2 {
      %cst_33 = arith.constant 0xFF800000 : f32
      %34 = vector.broadcast %cst_33 : f32 to vector<1x64x1xf32>
      %c0_34 = arith.constant 0 : index
      %c0_35 = arith.constant 0 : index
      %c0_36 = arith.constant 0 : index
      %35 = vector.load %arg7[%c0_34, %c0_35, %c0_36] : memref<1x64x1xf32, #tpu.memory_space<vmem>>, vector<1x64x1xf32>
      tpu.vector_store %arg7[%c0_34, %c0_35, %c0_36], %34 {strides = array<i32>} : memref<1x64x1xf32, #tpu.memory_space<vmem>>, vector<1x64x1xf32>,
      %cst_37 = arith.constant 0.000000e+00 : f32
      %36 = vector.broadcast %cst_37 : f32 to vector<1x64x1xf32>
      %c0_38 = arith.constant 0 : index
      %c0_39 = arith.constant 0 : index
      %c0_40 = arith.constant 0 : index
      %37 = vector.load %arg8[%c0_38, %c0_39, %c0_40] : memref<1x64x1xf32, #tpu.memory_space<vmem>>, vector<1x64x1xf32>
      tpu.vector_store %arg8[%c0_38, %c0_39, %c0_40], %36 {strides = array<i32>} : memref<1x64x1xf32, #tpu.memory_space<vmem>>, vector<1x64x1xf32>,
      %cst_41 = arith.constant 0.000000e+00 : f32
      %38 = vector.broadcast %cst_41 : f32 to vector<1x64x16xf32>
      %c0_42 = arith.constant 0 : index
      %c0_43 = arith.constant 0 : index
      %c0_44 = arith.constant 0 : index
      %39 = vector.load %arg9[%c0_42, %c0_43, %c0_44] : memref<1x64x16xf32, #tpu.memory_space<vmem>>, vector<1x64x16xf32>
      tpu.vector_store %arg9[%c0_42, %c0_43, %c0_44], %38 {strides = array<i32>} : memref<1x64x16xf32, #tpu.memory_space<vmem>>, vector<1x64x16xf32>,
    } else {
    }
    %c0 = arith.constant 0 : index
    %c0_1 = arith.constant 0 : index
    %c0_2 = arith.constant 0 : index
    %3 = vector.load %arg3[%c0, %c0_1, %c0_2] : memref<1x64x16xf32, #tpu.memory_space<vmem>>, vector<1x64x16xf32>
    %c0_3 = arith.constant 0 : index
    %c0_4 = arith.constant 0 : index
    %c0_5 = arith.constant 0 : index
    %4 = vector.load %arg4[%c0_3, %c0_4, %c0_5] : memref<1x64x16xf32, #tpu.memory_space<vmem>>, vector<1x64x16xf32>
    %c0_6 = arith.constant 0 : index
    %c0_7 = arith.constant 0 : index
    %c0_8 = arith.constant 0 : index
    %5 = vector.load %arg5[%c0_6, %c0_7, %c0_8] : memref<1x64x16xf32, #tpu.memory_space<vmem>>, vector<1x64x16xf32>
    "tpu.trace_start"() <{level = 10 : i32, message = "bqd,bkd->bqk"}> : () -> ()
    %cst = arith.constant dense<0.000000e+00> : vector<1x64x64xf32>
    %6 = tpu.matmul %3, %4, %cst {dimension_numbers = #tpu.dot_dimension_numbers<[2], [2], [1], [1], [0, 0, 0, 1, 1, 1], [0], [0]>} : vector<1x64x16xf32>, vector<1x64x16xf32>, vector<1x64x64xf32> -> vector<1x64x64xf32>
    "tpu.trace_stop"() : () -> ()
    %cst_9 = arith.constant 2.500000e-01 : f32
    %7 = vector.broadcast %cst_9 : f32 to vector<1x64x64xf32>
    %8 = arith.mulf %6, %7 : vector<1x64x64xf32>
    %c0_10 = arith.constant 0 : index
    %c0_11 = arith.constant 0 : index
    %c0_12 = arith.constant 0 : index
    %9 = vector.load %arg7[%c0_10, %c0_11, %c0_12] : memref<1x64x1xf32, #tpu.memory_space<vmem>>, vector<1x64x1xf32>
    %cst_13 = arith.constant dense<0xFF800000> : vector<1x64xf32>
    %10 = vector.multi_reduction <maximumf>, %8, %cst_13 [2] : vector<1x64x64xf32> to vector<1x64xf32>
    %11 = vector.shape_cast %10 : vector<1x64xf32> to vector<1x64x1xf32>
    %12 = arith.maximumf %9, %11 : vector<1x64x1xf32>
    %13 = arith.subf %9, %12 : vector<1x64x1xf32>
    %14 = math.exp %13 : vector<1x64x1xf32>
    %15 = vector.broadcast %12 : vector<1x64x1xf32> to vector<1x64x64xf32>
    %16 = arith.subf %8, %15 : vector<1x64x64xf32>
    %17 = math.exp %16 : vector<1x64x64xf32>
    %c0_14 = arith.constant 0 : index
    %c0_15 = arith.constant 0 : index
    %c0_16 = arith.constant 0 : index
    %18 = vector.load %arg8[%c0_14, %c0_15, %c0_16] : memref<1x64x1xf32, #tpu.memory_space<vmem>>, vector<1x64x1xf32>
    %19 = arith.mulf %14, %18 : vector<1x64x1xf32>
    %cst_17 = arith.constant dense<0.000000e+00> : vector<1x64xf32>
    %20 = vector.multi_reduction <add>, %17, %cst_17 [2] : vector<1x64x64xf32> to vector<1x64xf32>
    %21 = vector.shape_cast %20 : vector<1x64xf32> to vector<1x64x1xf32>
    %22 = arith.addf %19, %21 : vector<1x64x1xf32>
    %c0_18 = arith.constant 0 : index
    %c0_19 = arith.constant 0 : index
    %c0_20 = arith.constant 0 : index
    %23 = vector.load %arg8[%c0_18, %c0_19, %c0_20] : memref<1x64x1xf32, #tpu.memory_space<vmem>>, vector<1x64x1xf32>
    tpu.vector_store %arg8[%c0_18, %c0_19, %c0_20], %22 {strides = array<i32>} : memref<1x64x1xf32, #tpu.memory_space<vmem>>, vector<1x64x1xf32>,
    %c0_21 = arith.constant 0 : index
    %c0_22 = arith.constant 0 : index
    %c0_23 = arith.constant 0 : index
    %24 = vector.load %arg9[%c0_21, %c0_22, %c0_23] : memref<1x64x16xf32, #tpu.memory_space<vmem>>, vector<1x64x16xf32>
    %25 = vector.broadcast %14 : vector<1x64x1xf32> to vector<1x64x16xf32>
    %26 = arith.mulf %25, %24 : vector<1x64x16xf32>
    "tpu.trace_start"() <{level = 10 : i32, message = "bqk,bkd->bqd"}> : () -> ()
    %cst_24 = arith.constant dense<0.000000e+00> : vector<1x64x16xf32>
    %27 = tpu.matmul %17, %5, %cst_24 {dimension_numbers = #tpu.dot_dimension_numbers<[2], [1], [1], [2], [0, 0, 0, 1, 1, 2], [0], [0]>} : vector<1x64x64xf32>, vector<1x64x16xf32>, vector<1x64x16xf32> -> vector<1x64x16xf32>
    "tpu.trace_stop"() : () -> ()
    %28 = arith.addf %26, %27 : vector<1x64x16xf32>
    %c0_25 = arith.constant 0 : index
    %c0_26 = arith.constant 0 : index
    %c0_27 = arith.constant 0 : index
    %29 = vector.load %arg9[%c0_25, %c0_26, %c0_27] : memref<1x64x16xf32, #tpu.memory_space<vmem>>, vector<1x64x16xf32>
    tpu.vector_store %arg9[%c0_25, %c0_26, %c0_27], %28 {strides = array<i32>} : memref<1x64x16xf32, #tpu.memory_space<vmem>>, vector<1x64x16xf32>,
    %c0_28 = arith.constant 0 : index
    %c0_29 = arith.constant 0 : index
    %c0_30 = arith.constant 0 : index
    %30 = vector.load %arg7[%c0_28, %c0_29, %c0_30] : memref<1x64x1xf32, #tpu.memory_space<vmem>>, vector<1x64x1xf32>
    tpu.vector_store %arg7[%c0_28, %c0_29, %c0_30], %12 {strides = array<i32>} : memref<1x64x1xf32, #tpu.memory_space<vmem>>, vector<1x64x1xf32>,
    %c0_i32_31 = arith.constant 0 : i32
    %31 = arith.cmpi eq, %arg2, %c0_i32_31 : i32
    %32 = arith.extui %31 : i1 to i32
    %c0_i32_32 = arith.constant 0 : i32
    %33 = arith.cmpi ne, %32, %c0_i32_32 : i32
    scf.if %33 {
      %c0_33 = arith.constant 0 : index
      %c0_34 = arith.constant 0 : index
      %c0_35 = arith.constant 0 : index
      %34 = vector.load %arg9[%c0_33, %c0_34, %c0_35] : memref<1x64x16xf32, #tpu.memory_space<vmem>>, vector<1x64x16xf32>
      %c0_36 = arith.constant 0 : index
      %c0_37 = arith.constant 0 : index
      %c0_38 = arith.constant 0 : index
      %35 = vector.load %arg8[%c0_36, %c0_37, %c0_38] : memref<1x64x1xf32, #tpu.memory_space<vmem>>, vector<1x64x1xf32>
      %36 = tpu.reciprocal %35 {approx = true} : vector<1x64x1xf32> -> vector<1x64x1xf32>
      %37 = vector.broadcast %36 : vector<1x64x1xf32> to vector<1x64x16xf32>
      %38 = arith.mulf %34, %37 : vector<1x64x16xf32>
      %c0_39 = arith.constant 0 : index
      %c0_40 = arith.constant 0 : index
      %c0_41 = arith.constant 0 : index
      %39 = vector.load %arg6[%c0_39, %c0_40, %c0_41] : memref<1x64x16xf32, #tpu.memory_space<vmem>>, vector<1x64x16xf32>
      tpu.vector_store %arg6[%c0_39, %c0_40, %c0_41], %38 {strides = array<i32>} : memref<1x64x16xf32, #tpu.memory_space<vmem>>, vector<1x64x16xf32>,
    } else {
    }
    return
  }
  func.func @transform_0(%arg0: i32, %arg1: i32, %arg2: i32) -> (i32, i32, i32) {
    %c0_i32 = arith.constant 0 : i32
    %c0_i32_0 = arith.constant 0 : i32
    return %arg0, %arg1, %c0_i32 : i32, i32, i32
  }
  func.func @transform_1(%arg0: i32, %arg1: i32, %arg2: i32) -> (i32, i32, i32) {
    %c0_i32 = arith.constant 0 : i32
    %c0_i32_0 = arith.constant 0 : i32
    return %arg0, %arg2, %c0_i32 : i32, i32, i32
  }
  func.func @transform_2(%arg0: i32, %arg1: i32, %arg2: i32) -> (i32, i32, i32) {
    %c0_i32 = arith.constant 0 : i32
    %c0_i32_0 = arith.constant 0 : i32
    return %arg0, %arg2, %c0_i32 : i32, i32, i32
  }
  func.func @transform_3(%arg0: i32, %arg1: i32, %arg2: i32) -> (i32, i32, i32) {
    %c0_i32 = arith.constant 0 : i32
    %c0_i32_0 = arith.constant 0 : i32
    return %arg0, %arg1, %c0_i32 : i32, i32, i32
  }
}

module attributes {stable_mosaic.version = 11 : i64} {
  func.func @_ln_res_kernel(%arg0: i32, %arg1: memref<128x128xf32, #tpu.memory_space<vmem>>, %arg2: memref<128x128xf32, #tpu.memory_space<vmem>>, %arg3: memref<1x128xf32, #tpu.memory_space<vmem>>, %arg4: memref<1x128xf32, #tpu.memory_space<vmem>>, %arg5: memref<128x128xf32, #tpu.memory_space<vmem>>) attributes {dimension_semantics = [#tpu.dimension_semantics<parallel>], iteration_bounds = array<i64: 1>, scalar_prefetch = 0 : i64, scratch_operands = 0 : i64, tpu.core_type = #tpu.core_type<tc>, window_params = [{transform_indices = @transform_0, window_bounds = array<i64: 128, 128>}, {transform_indices = @transform_1, window_bounds = array<i64: 128, 128>}, {pipeline_mode = #tpu.pipeline_mode<synchronous>, transform_indices = @transform_2, window_bounds = array<i64: 1, 128>}, {pipeline_mode = #tpu.pipeline_mode<synchronous>, transform_indices = @transform_3, window_bounds = array<i64: 1, 128>}, {transform_indices = @transform_4, window_bounds = array<i64: 128, 128>}]} {
    %c0 = arith.constant 0 : index
    %c0_0 = arith.constant 0 : index
    %0 = vector.load %arg1[%c0, %c0_0] : memref<128x128xf32, #tpu.memory_space<vmem>>, vector<128x128xf32>
    %c0_1 = arith.constant 0 : index
    %c0_2 = arith.constant 0 : index
    %1 = vector.load %arg2[%c0_1, %c0_2] : memref<128x128xf32, #tpu.memory_space<vmem>>, vector<128x128xf32>
    %2 = arith.addf %0, %1 : vector<128x128xf32>
    %cst = arith.constant dense<0.000000e+00> : vector<128xf32>
    %3 = vector.multi_reduction <add>, %2, %cst [1] : vector<128x128xf32> to vector<128xf32>
    %4 = vector.shape_cast %3 : vector<128xf32> to vector<128x1xf32>
    %cst_3 = arith.constant 1.280000e+02 : f32
    %5 = vector.broadcast %cst_3 : f32 to vector<128x1xf32>
    %6 = arith.divf %4, %5 : vector<128x1xf32>
    %7 = vector.broadcast %6 : vector<128x1xf32> to vector<128x128xf32>
    %8 = arith.subf %2, %7 : vector<128x128xf32>
    %9 = arith.mulf %8, %8 : vector<128x128xf32>
    %cst_4 = arith.constant dense<0.000000e+00> : vector<128xf32>
    %10 = vector.multi_reduction <add>, %9, %cst_4 [1] : vector<128x128xf32> to vector<128xf32>
    %11 = vector.shape_cast %10 : vector<128xf32> to vector<128x1xf32>
    %cst_5 = arith.constant 1.280000e+02 : f32
    %12 = vector.broadcast %cst_5 : f32 to vector<128x1xf32>
    %13 = arith.divf %11, %12 : vector<128x1xf32>
    %14 = vector.broadcast %6 : vector<128x1xf32> to vector<128x128xf32>
    %15 = arith.subf %2, %14 : vector<128x128xf32>
    %cst_6 = arith.constant 9.99999974E-6 : f32
    %16 = vector.broadcast %cst_6 : f32 to vector<128x1xf32>
    %17 = arith.addf %13, %16 : vector<128x1xf32>
    %18 = math.rsqrt %17 : vector<128x1xf32>
    %19 = vector.broadcast %18 : vector<128x1xf32> to vector<128x128xf32>
    %20 = arith.mulf %15, %19 : vector<128x128xf32>
    %c0_7 = arith.constant 0 : index
    %c0_8 = arith.constant 0 : index
    %21 = vector.load %arg3[%c0_7, %c0_8] : memref<1x128xf32, #tpu.memory_space<vmem>>, vector<1x128xf32>
    %22 = vector.broadcast %21 : vector<1x128xf32> to vector<128x128xf32>
    %23 = arith.mulf %20, %22 : vector<128x128xf32>
    %c0_9 = arith.constant 0 : index
    %c0_10 = arith.constant 0 : index
    %24 = vector.load %arg4[%c0_9, %c0_10] : memref<1x128xf32, #tpu.memory_space<vmem>>, vector<1x128xf32>
    %25 = vector.broadcast %24 : vector<1x128xf32> to vector<128x128xf32>
    %26 = arith.addf %23, %25 : vector<128x128xf32>
    %c0_11 = arith.constant 0 : index
    %c0_12 = arith.constant 0 : index
    %27 = vector.load %arg5[%c0_11, %c0_12] : memref<128x128xf32, #tpu.memory_space<vmem>>, vector<128x128xf32>
    tpu.vector_store %arg5[%c0_11, %c0_12], %26 {strides = array<i32>} : memref<128x128xf32, #tpu.memory_space<vmem>>, vector<128x128xf32>,
    return
  }
  func.func @transform_0(%arg0: i32) -> (i32, i32) {
    %c0_i32 = arith.constant 0 : i32
    %c0_i32_0 = arith.constant 0 : i32
    return %arg0, %c0_i32 : i32, i32
  }
  func.func @transform_1(%arg0: i32) -> (i32, i32) {
    %c0_i32 = arith.constant 0 : i32
    %c0_i32_0 = arith.constant 0 : i32
    return %arg0, %c0_i32 : i32, i32
  }
  func.func @transform_2(%arg0: i32) -> (i32, i32) {
    %c0_i32 = arith.constant 0 : i32
    %c0_i32_0 = arith.constant 0 : i32
    %c0_i32_1 = arith.constant 0 : i32
    return %c0_i32, %c0_i32_0 : i32, i32
  }
  func.func @transform_3(%arg0: i32) -> (i32, i32) {
    %c0_i32 = arith.constant 0 : i32
    %c0_i32_0 = arith.constant 0 : i32
    %c0_i32_1 = arith.constant 0 : i32
    return %c0_i32, %c0_i32_0 : i32, i32
  }
  func.func @transform_4(%arg0: i32) -> (i32, i32) {
    %c0_i32 = arith.constant 0 : i32
    %c0_i32_0 = arith.constant 0 : i32
    return %arg0, %c0_i32 : i32, i32
  }
}

module attributes {stable_mosaic.version = 11 : i64} {
  func.func @_linear_kernel(%arg0: i32, %arg1: i32, %arg2: i32, %arg3: memref<128x128xf32, #tpu.memory_space<vmem>>, %arg4: memref<128x128xf32, #tpu.memory_space<vmem>>, %arg5: memref<1x128xf32, #tpu.memory_space<vmem>>, %arg6: memref<128x128xf32, #tpu.memory_space<vmem>>, %arg7: memref<128x128xf32, #tpu.memory_space<vmem>>) attributes {dimension_semantics = [#tpu.dimension_semantics<parallel>, #tpu.dimension_semantics<parallel>, #tpu.dimension_semantics<arbitrary>], iteration_bounds = array<i64: 1, 1, 1>, scalar_prefetch = 0 : i64, scratch_operands = 1 : i64, tpu.core_type = #tpu.core_type<tc>, window_params = [{transform_indices = @transform_0, window_bounds = array<i64: 128, 128>}, {transform_indices = @transform_1, window_bounds = array<i64: 128, 128>}, {transform_indices = @transform_2, window_bounds = array<i64: 1, 128>}, {transform_indices = @transform_3, window_bounds = array<i64: 128, 128>}]} {
    %c0_i32 = arith.constant 0 : i32
    %0 = arith.cmpi eq, %arg2, %c0_i32 : i32
    %1 = arith.extui %0 : i1 to i32
    %c0_i32_0 = arith.constant 0 : i32
    %2 = arith.cmpi ne, %1, %c0_i32_0 : i32
    scf.if %2 {
      %cst_10 = arith.constant 0.000000e+00 : f32
      %12 = vector.broadcast %cst_10 : f32 to vector<128x128xf32>
      %c0_11 = arith.constant 0 : index
      %c0_12 = arith.constant 0 : index
      %13 = vector.load %arg7[%c0_11, %c0_12] : memref<128x128xf32, #tpu.memory_space<vmem>>, vector<128x128xf32>
      tpu.vector_store %arg7[%c0_11, %c0_12], %12 {strides = array<i32>} : memref<128x128xf32, #tpu.memory_space<vmem>>, vector<128x128xf32>,
    } else {
    }
    %c0 = arith.constant 0 : index
    %c0_1 = arith.constant 0 : index
    %3 = vector.load %arg7[%c0, %c0_1] : memref<128x128xf32, #tpu.memory_space<vmem>>, vector<128x128xf32>
    %c0_2 = arith.constant 0 : index
    %c0_3 = arith.constant 0 : index
    %4 = vector.load %arg3[%c0_2, %c0_3] : memref<128x128xf32, #tpu.memory_space<vmem>>, vector<128x128xf32>
    %c0_4 = arith.constant 0 : index
    %c0_5 = arith.constant 0 : index
    %5 = vector.load %arg4[%c0_4, %c0_5] : memref<128x128xf32, #tpu.memory_space<vmem>>, vector<128x128xf32>
    %cst = arith.constant dense<0.000000e+00> : vector<128x128xf32>
    %6 = tpu.matmul %4, %5, %cst {dimension_numbers = #tpu.dot_dimension_numbers<[1], [0], [0], [1], [0, 0, 1, 1], [], []>} : vector<128x128xf32>, vector<128x128xf32>, vector<128x128xf32> -> vector<128x128xf32>
    %7 = arith.addf %3, %6 : vector<128x128xf32>
    %c0_6 = arith.constant 0 : index
    %c0_7 = arith.constant 0 : index
    %8 = vector.load %arg7[%c0_6, %c0_7] : memref<128x128xf32, #tpu.memory_space<vmem>>, vector<128x128xf32>
    tpu.vector_store %arg7[%c0_6, %c0_7], %7 {strides = array<i32>} : memref<128x128xf32, #tpu.memory_space<vmem>>, vector<128x128xf32>,
    %c0_i32_8 = arith.constant 0 : i32
    %9 = arith.cmpi eq, %arg2, %c0_i32_8 : i32
    %10 = arith.extui %9 : i1 to i32
    %c0_i32_9 = arith.constant 0 : i32
    %11 = arith.cmpi ne, %10, %c0_i32_9 : i32
    scf.if %11 {
      %c0_10 = arith.constant 0 : index
      %c0_11 = arith.constant 0 : index
      %12 = vector.load %arg7[%c0_10, %c0_11] : memref<128x128xf32, #tpu.memory_space<vmem>>, vector<128x128xf32>
      %c0_12 = arith.constant 0 : index
      %c0_13 = arith.constant 0 : index
      %13 = vector.load %arg5[%c0_12, %c0_13] : memref<1x128xf32, #tpu.memory_space<vmem>>, vector<1x128xf32>
      %14 = vector.broadcast %13 : vector<1x128xf32> to vector<128x128xf32>
      %15 = arith.addf %12, %14 : vector<128x128xf32>
      %c0_14 = arith.constant 0 : index
      %c0_15 = arith.constant 0 : index
      %16 = vector.load %arg6[%c0_14, %c0_15] : memref<128x128xf32, #tpu.memory_space<vmem>>, vector<128x128xf32>
      tpu.vector_store %arg6[%c0_14, %c0_15], %15 {strides = array<i32>} : memref<128x128xf32, #tpu.memory_space<vmem>>, vector<128x128xf32>,
    } else {
    }
    return
  }
  func.func @transform_0(%arg0: i32, %arg1: i32, %arg2: i32) -> (i32, i32) {
    %c0_i32 = arith.constant 0 : i32
    return %arg0, %arg2 : i32, i32
  }
  func.func @transform_1(%arg0: i32, %arg1: i32, %arg2: i32) -> (i32, i32) {
    %c0_i32 = arith.constant 0 : i32
    return %arg2, %arg1 : i32, i32
  }
  func.func @transform_2(%arg0: i32, %arg1: i32, %arg2: i32) -> (i32, i32) {
    %c0_i32 = arith.constant 0 : i32
    %c0_i32_0 = arith.constant 0 : i32
    return %c0_i32, %arg1 : i32, i32
  }
  func.func @transform_3(%arg0: i32, %arg1: i32, %arg2: i32) -> (i32, i32) {
    %c0_i32 = arith.constant 0 : i32
    return %arg0, %arg1 : i32, i32
  }
}

module attributes {stable_mosaic.version = 11 : i64} {
  func.func @_linear_kernel(%arg0: i32, %arg1: i32, %arg2: i32, %arg3: memref<128x128xf32, #tpu.memory_space<vmem>>, %arg4: memref<128x256xf32, #tpu.memory_space<vmem>>, %arg5: memref<1x256xf32, #tpu.memory_space<vmem>>, %arg6: memref<128x256xf32, #tpu.memory_space<vmem>>, %arg7: memref<128x256xf32, #tpu.memory_space<vmem>>) attributes {dimension_semantics = [#tpu.dimension_semantics<parallel>, #tpu.dimension_semantics<parallel>, #tpu.dimension_semantics<arbitrary>], iteration_bounds = array<i64: 1, 1, 1>, scalar_prefetch = 0 : i64, scratch_operands = 1 : i64, tpu.core_type = #tpu.core_type<tc>, window_params = [{transform_indices = @transform_0, window_bounds = array<i64: 128, 128>}, {transform_indices = @transform_1, window_bounds = array<i64: 128, 256>}, {transform_indices = @transform_2, window_bounds = array<i64: 1, 256>}, {transform_indices = @transform_3, window_bounds = array<i64: 128, 256>}]} {
    %c0_i32 = arith.constant 0 : i32
    %0 = arith.cmpi eq, %arg2, %c0_i32 : i32
    %1 = arith.extui %0 : i1 to i32
    %c0_i32_0 = arith.constant 0 : i32
    %2 = arith.cmpi ne, %1, %c0_i32_0 : i32
    scf.if %2 {
      %cst_10 = arith.constant 0.000000e+00 : f32
      %12 = vector.broadcast %cst_10 : f32 to vector<128x256xf32>
      %c0_11 = arith.constant 0 : index
      %c0_12 = arith.constant 0 : index
      %13 = vector.load %arg7[%c0_11, %c0_12] : memref<128x256xf32, #tpu.memory_space<vmem>>, vector<128x256xf32>
      tpu.vector_store %arg7[%c0_11, %c0_12], %12 {strides = array<i32>} : memref<128x256xf32, #tpu.memory_space<vmem>>, vector<128x256xf32>,
    } else {
    }
    %c0 = arith.constant 0 : index
    %c0_1 = arith.constant 0 : index
    %3 = vector.load %arg7[%c0, %c0_1] : memref<128x256xf32, #tpu.memory_space<vmem>>, vector<128x256xf32>
    %c0_2 = arith.constant 0 : index
    %c0_3 = arith.constant 0 : index
    %4 = vector.load %arg3[%c0_2, %c0_3] : memref<128x128xf32, #tpu.memory_space<vmem>>, vector<128x128xf32>
    %c0_4 = arith.constant 0 : index
    %c0_5 = arith.constant 0 : index
    %5 = vector.load %arg4[%c0_4, %c0_5] : memref<128x256xf32, #tpu.memory_space<vmem>>, vector<128x256xf32>
    %cst = arith.constant dense<0.000000e+00> : vector<128x256xf32>
    %6 = tpu.matmul %4, %5, %cst {dimension_numbers = #tpu.dot_dimension_numbers<[1], [0], [0], [1], [0, 0, 1, 1], [], []>} : vector<128x128xf32>, vector<128x256xf32>, vector<128x256xf32> -> vector<128x256xf32>
    %7 = arith.addf %3, %6 : vector<128x256xf32>
    %c0_6 = arith.constant 0 : index
    %c0_7 = arith.constant 0 : index
    %8 = vector.load %arg7[%c0_6, %c0_7] : memref<128x256xf32, #tpu.memory_space<vmem>>, vector<128x256xf32>
    tpu.vector_store %arg7[%c0_6, %c0_7], %7 {strides = array<i32>} : memref<128x256xf32, #tpu.memory_space<vmem>>, vector<128x256xf32>,
    %c0_i32_8 = arith.constant 0 : i32
    %9 = arith.cmpi eq, %arg2, %c0_i32_8 : i32
    %10 = arith.extui %9 : i1 to i32
    %c0_i32_9 = arith.constant 0 : i32
    %11 = arith.cmpi ne, %10, %c0_i32_9 : i32
    scf.if %11 {
      %c0_10 = arith.constant 0 : index
      %c0_11 = arith.constant 0 : index
      %12 = vector.load %arg7[%c0_10, %c0_11] : memref<128x256xf32, #tpu.memory_space<vmem>>, vector<128x256xf32>
      %c0_12 = arith.constant 0 : index
      %c0_13 = arith.constant 0 : index
      %13 = vector.load %arg5[%c0_12, %c0_13] : memref<1x256xf32, #tpu.memory_space<vmem>>, vector<1x256xf32>
      %14 = vector.broadcast %13 : vector<1x256xf32> to vector<128x256xf32>
      %15 = arith.addf %12, %14 : vector<128x256xf32>
      %cst_14 = arith.constant 0.000000e+00 : f32
      %16 = vector.broadcast %cst_14 : f32 to vector<128x256xf32>
      %17 = arith.maximumf %15, %16 : vector<128x256xf32>
      %c0_15 = arith.constant 0 : index
      %c0_16 = arith.constant 0 : index
      %18 = vector.load %arg6[%c0_15, %c0_16] : memref<128x256xf32, #tpu.memory_space<vmem>>, vector<128x256xf32>
      tpu.vector_store %arg6[%c0_15, %c0_16], %17 {strides = array<i32>} : memref<128x256xf32, #tpu.memory_space<vmem>>, vector<128x256xf32>,
    } else {
    }
    return
  }
  func.func @transform_0(%arg0: i32, %arg1: i32, %arg2: i32) -> (i32, i32) {
    %c0_i32 = arith.constant 0 : i32
    return %arg0, %arg2 : i32, i32
  }
  func.func @transform_1(%arg0: i32, %arg1: i32, %arg2: i32) -> (i32, i32) {
    %c0_i32 = arith.constant 0 : i32
    return %arg2, %arg1 : i32, i32
  }
  func.func @transform_2(%arg0: i32, %arg1: i32, %arg2: i32) -> (i32, i32) {
    %c0_i32 = arith.constant 0 : i32
    %c0_i32_0 = arith.constant 0 : i32
    return %c0_i32, %arg1 : i32, i32
  }
  func.func @transform_3(%arg0: i32, %arg1: i32, %arg2: i32) -> (i32, i32) {
    %c0_i32 = arith.constant 0 : i32
    return %arg0, %arg1 : i32, i32
  }
}

module attributes {stable_mosaic.version = 11 : i64} {
  func.func @_linear_kernel(%arg0: i32, %arg1: i32, %arg2: i32, %arg3: memref<128x256xf32, #tpu.memory_space<vmem>>, %arg4: memref<256x128xf32, #tpu.memory_space<vmem>>, %arg5: memref<1x128xf32, #tpu.memory_space<vmem>>, %arg6: memref<128x128xf32, #tpu.memory_space<vmem>>, %arg7: memref<128x128xf32, #tpu.memory_space<vmem>>) attributes {dimension_semantics = [#tpu.dimension_semantics<parallel>, #tpu.dimension_semantics<parallel>, #tpu.dimension_semantics<arbitrary>], iteration_bounds = array<i64: 1, 1, 1>, scalar_prefetch = 0 : i64, scratch_operands = 1 : i64, tpu.core_type = #tpu.core_type<tc>, window_params = [{transform_indices = @transform_0, window_bounds = array<i64: 128, 256>}, {transform_indices = @transform_1, window_bounds = array<i64: 256, 128>}, {transform_indices = @transform_2, window_bounds = array<i64: 1, 128>}, {transform_indices = @transform_3, window_bounds = array<i64: 128, 128>}]} {
    %c0_i32 = arith.constant 0 : i32
    %0 = arith.cmpi eq, %arg2, %c0_i32 : i32
    %1 = arith.extui %0 : i1 to i32
    %c0_i32_0 = arith.constant 0 : i32
    %2 = arith.cmpi ne, %1, %c0_i32_0 : i32
    scf.if %2 {
      %cst_10 = arith.constant 0.000000e+00 : f32
      %12 = vector.broadcast %cst_10 : f32 to vector<128x128xf32>
      %c0_11 = arith.constant 0 : index
      %c0_12 = arith.constant 0 : index
      %13 = vector.load %arg7[%c0_11, %c0_12] : memref<128x128xf32, #tpu.memory_space<vmem>>, vector<128x128xf32>
      tpu.vector_store %arg7[%c0_11, %c0_12], %12 {strides = array<i32>} : memref<128x128xf32, #tpu.memory_space<vmem>>, vector<128x128xf32>,
    } else {
    }
    %c0 = arith.constant 0 : index
    %c0_1 = arith.constant 0 : index
    %3 = vector.load %arg7[%c0, %c0_1] : memref<128x128xf32, #tpu.memory_space<vmem>>, vector<128x128xf32>
    %c0_2 = arith.constant 0 : index
    %c0_3 = arith.constant 0 : index
    %4 = vector.load %arg3[%c0_2, %c0_3] : memref<128x256xf32, #tpu.memory_space<vmem>>, vector<128x256xf32>
    %c0_4 = arith.constant 0 : index
    %c0_5 = arith.constant 0 : index
    %5 = vector.load %arg4[%c0_4, %c0_5] : memref<256x128xf32, #tpu.memory_space<vmem>>, vector<256x128xf32>
    %cst = arith.constant dense<0.000000e+00> : vector<128x128xf32>
    %6 = tpu.matmul %4, %5, %cst {dimension_numbers = #tpu.dot_dimension_numbers<[1], [0], [0], [1], [0, 0, 1, 1], [], []>} : vector<128x256xf32>, vector<256x128xf32>, vector<128x128xf32> -> vector<128x128xf32>
    %7 = arith.addf %3, %6 : vector<128x128xf32>
    %c0_6 = arith.constant 0 : index
    %c0_7 = arith.constant 0 : index
    %8 = vector.load %arg7[%c0_6, %c0_7] : memref<128x128xf32, #tpu.memory_space<vmem>>, vector<128x128xf32>
    tpu.vector_store %arg7[%c0_6, %c0_7], %7 {strides = array<i32>} : memref<128x128xf32, #tpu.memory_space<vmem>>, vector<128x128xf32>,
    %c0_i32_8 = arith.constant 0 : i32
    %9 = arith.cmpi eq, %arg2, %c0_i32_8 : i32
    %10 = arith.extui %9 : i1 to i32
    %c0_i32_9 = arith.constant 0 : i32
    %11 = arith.cmpi ne, %10, %c0_i32_9 : i32
    scf.if %11 {
      %c0_10 = arith.constant 0 : index
      %c0_11 = arith.constant 0 : index
      %12 = vector.load %arg7[%c0_10, %c0_11] : memref<128x128xf32, #tpu.memory_space<vmem>>, vector<128x128xf32>
      %c0_12 = arith.constant 0 : index
      %c0_13 = arith.constant 0 : index
      %13 = vector.load %arg5[%c0_12, %c0_13] : memref<1x128xf32, #tpu.memory_space<vmem>>, vector<1x128xf32>
      %14 = vector.broadcast %13 : vector<1x128xf32> to vector<128x128xf32>
      %15 = arith.addf %12, %14 : vector<128x128xf32>
      %c0_14 = arith.constant 0 : index
      %c0_15 = arith.constant 0 : index
      %16 = vector.load %arg6[%c0_14, %c0_15] : memref<128x128xf32, #tpu.memory_space<vmem>>, vector<128x128xf32>
      tpu.vector_store %arg6[%c0_14, %c0_15], %15 {strides = array<i32>} : memref<128x128xf32, #tpu.memory_space<vmem>>, vector<128x128xf32>,
    } else {
    }
    return
  }
  func.func @transform_0(%arg0: i32, %arg1: i32, %arg2: i32) -> (i32, i32) {
    %c0_i32 = arith.constant 0 : i32
    return %arg0, %arg2 : i32, i32
  }
  func.func @transform_1(%arg0: i32, %arg1: i32, %arg2: i32) -> (i32, i32) {
    %c0_i32 = arith.constant 0 : i32
    return %arg2, %arg1 : i32, i32
  }
  func.func @transform_2(%arg0: i32, %arg1: i32, %arg2: i32) -> (i32, i32) {
    %c0_i32 = arith.constant 0 : i32
    %c0_i32_0 = arith.constant 0 : i32
    return %c0_i32, %arg1 : i32, i32
  }
  func.func @transform_3(%arg0: i32, %arg1: i32, %arg2: i32) -> (i32, i32) {
    %c0_i32 = arith.constant 0 : i32
    return %arg0, %arg1 : i32, i32
  }
}

module attributes {stable_mosaic.version = 11 : i64} {
  func.func @_linear_kernel(%arg0: i32, %arg1: i32, %arg2: i32, %arg3: memref<128x128xf32, #tpu.memory_space<vmem>>, %arg4: memref<128x384xf32, #tpu.memory_space<vmem>>, %arg5: memref<1x384xf32, #tpu.memory_space<vmem>>, %arg6: memref<128x384xf32, #tpu.memory_space<vmem>>, %arg7: memref<128x384xf32, #tpu.memory_space<vmem>>) attributes {dimension_semantics = [#tpu.dimension_semantics<parallel>, #tpu.dimension_semantics<parallel>, #tpu.dimension_semantics<arbitrary>], iteration_bounds = array<i64: 1, 1, 1>, scalar_prefetch = 0 : i64, scratch_operands = 1 : i64, tpu.core_type = #tpu.core_type<tc>, window_params = [{transform_indices = @transform_0, window_bounds = array<i64: 128, 128>}, {transform_indices = @transform_1, window_bounds = array<i64: 128, 384>}, {transform_indices = @transform_2, window_bounds = array<i64: 1, 384>}, {transform_indices = @transform_3, window_bounds = array<i64: 128, 384>}]} {
    %c0_i32 = arith.constant 0 : i32
    %0 = arith.cmpi eq, %arg2, %c0_i32 : i32
    %1 = arith.extui %0 : i1 to i32
    %c0_i32_0 = arith.constant 0 : i32
    %2 = arith.cmpi ne, %1, %c0_i32_0 : i32
    scf.if %2 {
      %cst_10 = arith.constant 0.000000e+00 : f32
      %12 = vector.broadcast %cst_10 : f32 to vector<128x384xf32>
      %c0_11 = arith.constant 0 : index
      %c0_12 = arith.constant 0 : index
      %13 = vector.load %arg7[%c0_11, %c0_12] : memref<128x384xf32, #tpu.memory_space<vmem>>, vector<128x384xf32>
      tpu.vector_store %arg7[%c0_11, %c0_12], %12 {strides = array<i32>} : memref<128x384xf32, #tpu.memory_space<vmem>>, vector<128x384xf32>,
    } else {
    }
    %c0 = arith.constant 0 : index
    %c0_1 = arith.constant 0 : index
    %3 = vector.load %arg7[%c0, %c0_1] : memref<128x384xf32, #tpu.memory_space<vmem>>, vector<128x384xf32>
    %c0_2 = arith.constant 0 : index
    %c0_3 = arith.constant 0 : index
    %4 = vector.load %arg3[%c0_2, %c0_3] : memref<128x128xf32, #tpu.memory_space<vmem>>, vector<128x128xf32>
    %c0_4 = arith.constant 0 : index
    %c0_5 = arith.constant 0 : index
    %5 = vector.load %arg4[%c0_4, %c0_5] : memref<128x384xf32, #tpu.memory_space<vmem>>, vector<128x384xf32>
    %cst = arith.constant dense<0.000000e+00> : vector<128x384xf32>
    %6 = tpu.matmul %4, %5, %cst {dimension_numbers = #tpu.dot_dimension_numbers<[1], [0], [0], [1], [0, 0, 1, 1], [], []>} : vector<128x128xf32>, vector<128x384xf32>, vector<128x384xf32> -> vector<128x384xf32>
    %7 = arith.addf %3, %6 : vector<128x384xf32>
    %c0_6 = arith.constant 0 : index
    %c0_7 = arith.constant 0 : index
    %8 = vector.load %arg7[%c0_6, %c0_7] : memref<128x384xf32, #tpu.memory_space<vmem>>, vector<128x384xf32>
    tpu.vector_store %arg7[%c0_6, %c0_7], %7 {strides = array<i32>} : memref<128x384xf32, #tpu.memory_space<vmem>>, vector<128x384xf32>,
    %c0_i32_8 = arith.constant 0 : i32
    %9 = arith.cmpi eq, %arg2, %c0_i32_8 : i32
    %10 = arith.extui %9 : i1 to i32
    %c0_i32_9 = arith.constant 0 : i32
    %11 = arith.cmpi ne, %10, %c0_i32_9 : i32
    scf.if %11 {
      %c0_10 = arith.constant 0 : index
      %c0_11 = arith.constant 0 : index
      %12 = vector.load %arg7[%c0_10, %c0_11] : memref<128x384xf32, #tpu.memory_space<vmem>>, vector<128x384xf32>
      %c0_12 = arith.constant 0 : index
      %c0_13 = arith.constant 0 : index
      %13 = vector.load %arg5[%c0_12, %c0_13] : memref<1x384xf32, #tpu.memory_space<vmem>>, vector<1x384xf32>
      %14 = vector.broadcast %13 : vector<1x384xf32> to vector<128x384xf32>
      %15 = arith.addf %12, %14 : vector<128x384xf32>
      %c0_14 = arith.constant 0 : index
      %c0_15 = arith.constant 0 : index
      %16 = vector.load %arg6[%c0_14, %c0_15] : memref<128x384xf32, #tpu.memory_space<vmem>>, vector<128x384xf32>
      tpu.vector_store %arg6[%c0_14, %c0_15], %15 {strides = array<i32>} : memref<128x384xf32, #tpu.memory_space<vmem>>, vector<128x384xf32>,
    } else {
    }
    return
  }
  func.func @transform_0(%arg0: i32, %arg1: i32, %arg2: i32) -> (i32, i32) {
    %c0_i32 = arith.constant 0 : i32
    return %arg0, %arg2 : i32, i32
  }
  func.func @transform_1(%arg0: i32, %arg1: i32, %arg2: i32) -> (i32, i32) {
    %c0_i32 = arith.constant 0 : i32
    return %arg2, %arg1 : i32, i32
  }
  func.func @transform_2(%arg0: i32, %arg1: i32, %arg2: i32) -> (i32, i32) {
    %c0_i32 = arith.constant 0 : i32
    %c0_i32_0 = arith.constant 0 : i32
    return %c0_i32, %arg1 : i32, i32
  }
  func.func @transform_3(%arg0: i32, %arg1: i32, %arg2: i32) -> (i32, i32) {
    %c0_i32 = arith.constant 0 : i32
    return %arg0, %arg1 : i32, i32
  }
}

module attributes {stable_mosaic.version = 11 : i64} {
  func.func @_ln_kernel(%arg0: i32, %arg1: memref<128x128xf32, #tpu.memory_space<vmem>>, %arg2: memref<1x128xf32, #tpu.memory_space<vmem>>, %arg3: memref<1x128xf32, #tpu.memory_space<vmem>>, %arg4: memref<128x128xf32, #tpu.memory_space<vmem>>) attributes {dimension_semantics = [#tpu.dimension_semantics<parallel>], iteration_bounds = array<i64: 1>, scalar_prefetch = 0 : i64, scratch_operands = 0 : i64, tpu.core_type = #tpu.core_type<tc>, window_params = [{transform_indices = @transform_0, window_bounds = array<i64: 128, 128>}, {pipeline_mode = #tpu.pipeline_mode<synchronous>, transform_indices = @transform_1, window_bounds = array<i64: 1, 128>}, {pipeline_mode = #tpu.pipeline_mode<synchronous>, transform_indices = @transform_2, window_bounds = array<i64: 1, 128>}, {transform_indices = @transform_3, window_bounds = array<i64: 128, 128>}]} {
    %c0 = arith.constant 0 : index
    %c0_0 = arith.constant 0 : index
    %0 = vector.load %arg1[%c0, %c0_0] : memref<128x128xf32, #tpu.memory_space<vmem>>, vector<128x128xf32>
    %cst = arith.constant dense<0.000000e+00> : vector<128xf32>
    %1 = vector.multi_reduction <add>, %0, %cst [1] : vector<128x128xf32> to vector<128xf32>
    %2 = vector.shape_cast %1 : vector<128xf32> to vector<128x1xf32>
    %cst_1 = arith.constant 1.280000e+02 : f32
    %3 = vector.broadcast %cst_1 : f32 to vector<128x1xf32>
    %4 = arith.divf %2, %3 : vector<128x1xf32>
    %5 = vector.broadcast %4 : vector<128x1xf32> to vector<128x128xf32>
    %6 = arith.subf %0, %5 : vector<128x128xf32>
    %7 = arith.mulf %6, %6 : vector<128x128xf32>
    %cst_2 = arith.constant dense<0.000000e+00> : vector<128xf32>
    %8 = vector.multi_reduction <add>, %7, %cst_2 [1] : vector<128x128xf32> to vector<128xf32>
    %9 = vector.shape_cast %8 : vector<128xf32> to vector<128x1xf32>
    %cst_3 = arith.constant 1.280000e+02 : f32
    %10 = vector.broadcast %cst_3 : f32 to vector<128x1xf32>
    %11 = arith.divf %9, %10 : vector<128x1xf32>
    %12 = vector.broadcast %4 : vector<128x1xf32> to vector<128x128xf32>
    %13 = arith.subf %0, %12 : vector<128x128xf32>
    %cst_4 = arith.constant 9.99999974E-6 : f32
    %14 = vector.broadcast %cst_4 : f32 to vector<128x1xf32>
    %15 = arith.addf %11, %14 : vector<128x1xf32>
    %16 = math.rsqrt %15 : vector<128x1xf32>
    %17 = vector.broadcast %16 : vector<128x1xf32> to vector<128x128xf32>
    %18 = arith.mulf %13, %17 : vector<128x128xf32>
    %c0_5 = arith.constant 0 : index
    %c0_6 = arith.constant 0 : index
    %19 = vector.load %arg2[%c0_5, %c0_6] : memref<1x128xf32, #tpu.memory_space<vmem>>, vector<1x128xf32>
    %20 = vector.broadcast %19 : vector<1x128xf32> to vector<128x128xf32>
    %21 = arith.mulf %18, %20 : vector<128x128xf32>
    %c0_7 = arith.constant 0 : index
    %c0_8 = arith.constant 0 : index
    %22 = vector.load %arg3[%c0_7, %c0_8] : memref<1x128xf32, #tpu.memory_space<vmem>>, vector<1x128xf32>
    %23 = vector.broadcast %22 : vector<1x128xf32> to vector<128x128xf32>
    %24 = arith.addf %21, %23 : vector<128x128xf32>
    %c0_9 = arith.constant 0 : index
    %c0_10 = arith.constant 0 : index
    %25 = vector.load %arg4[%c0_9, %c0_10] : memref<128x128xf32, #tpu.memory_space<vmem>>, vector<128x128xf32>
    tpu.vector_store %arg4[%c0_9, %c0_10], %24 {strides = array<i32>} : memref<128x128xf32, #tpu.memory_space<vmem>>, vector<128x128xf32>,
    return
  }
  func.func @transform_0(%arg0: i32) -> (i32, i32) {
    %c0_i32 = arith.constant 0 : i32
    %c0_i32_0 = arith.constant 0 : i32
    return %arg0, %c0_i32 : i32, i32
  }
  func.func @transform_1(%arg0: i32) -> (i32, i32) {
    %c0_i32 = arith.constant 0 : i32
    %c0_i32_0 = arith.constant 0 : i32
    %c0_i32_1 = arith.constant 0 : i32
    return %c0_i32, %c0_i32_0 : i32, i32
  }
  func.func @transform_2(%arg0: i32) -> (i32, i32) {
    %c0_i32 = arith.constant 0 : i32
    %c0_i32_0 = arith.constant 0 : i32
    %c0_i32_1 = arith.constant 0 : i32
    return %c0_i32, %c0_i32_0 : i32, i32
  }
  func.func @transform_3(%arg0: i32) -> (i32, i32) {
    %c0_i32 = arith.constant 0 : i32
    %c0_i32_0 = arith.constant 0 : i32
    return %arg0, %c0_i32 : i32, i32
  }
}

module attributes {stable_mosaic.version = 11 : i64} {
  func.func @_linear_kernel(%arg0: i32, %arg1: i32, %arg2: i32, %arg3: memref<128x128xf32, #tpu.memory_space<vmem>>, %arg4: memref<128x256xf32, #tpu.memory_space<vmem>>, %arg5: memref<1x256xf32, #tpu.memory_space<vmem>>, %arg6: memref<128x256xf32, #tpu.memory_space<vmem>>, %arg7: memref<128x256xf32, #tpu.memory_space<vmem>>) attributes {dimension_semantics = [#tpu.dimension_semantics<parallel>, #tpu.dimension_semantics<parallel>, #tpu.dimension_semantics<arbitrary>], iteration_bounds = array<i64: 1, 1, 1>, scalar_prefetch = 0 : i64, scratch_operands = 1 : i64, tpu.core_type = #tpu.core_type<tc>, window_params = [{transform_indices = @transform_0, window_bounds = array<i64: 128, 128>}, {transform_indices = @transform_1, window_bounds = array<i64: 128, 256>}, {transform_indices = @transform_2, window_bounds = array<i64: 1, 256>}, {transform_indices = @transform_3, window_bounds = array<i64: 128, 256>}]} {
    %c0_i32 = arith.constant 0 : i32
    %0 = arith.cmpi eq, %arg2, %c0_i32 : i32
    %1 = arith.extui %0 : i1 to i32
    %c0_i32_0 = arith.constant 0 : i32
    %2 = arith.cmpi ne, %1, %c0_i32_0 : i32
    scf.if %2 {
      %cst_10 = arith.constant 0.000000e+00 : f32
      %12 = vector.broadcast %cst_10 : f32 to vector<128x256xf32>
      %c0_11 = arith.constant 0 : index
      %c0_12 = arith.constant 0 : index
      %13 = vector.load %arg7[%c0_11, %c0_12] : memref<128x256xf32, #tpu.memory_space<vmem>>, vector<128x256xf32>
      tpu.vector_store %arg7[%c0_11, %c0_12], %12 {strides = array<i32>} : memref<128x256xf32, #tpu.memory_space<vmem>>, vector<128x256xf32>,
    } else {
    }
    %c0 = arith.constant 0 : index
    %c0_1 = arith.constant 0 : index
    %3 = vector.load %arg7[%c0, %c0_1] : memref<128x256xf32, #tpu.memory_space<vmem>>, vector<128x256xf32>
    %c0_2 = arith.constant 0 : index
    %c0_3 = arith.constant 0 : index
    %4 = vector.load %arg3[%c0_2, %c0_3] : memref<128x128xf32, #tpu.memory_space<vmem>>, vector<128x128xf32>
    %c0_4 = arith.constant 0 : index
    %c0_5 = arith.constant 0 : index
    %5 = vector.load %arg4[%c0_4, %c0_5] : memref<128x256xf32, #tpu.memory_space<vmem>>, vector<128x256xf32>
    %cst = arith.constant dense<0.000000e+00> : vector<128x256xf32>
    %6 = tpu.matmul %4, %5, %cst {dimension_numbers = #tpu.dot_dimension_numbers<[1], [0], [0], [1], [0, 0, 1, 1], [], []>} : vector<128x128xf32>, vector<128x256xf32>, vector<128x256xf32> -> vector<128x256xf32>
    %7 = arith.addf %3, %6 : vector<128x256xf32>
    %c0_6 = arith.constant 0 : index
    %c0_7 = arith.constant 0 : index
    %8 = vector.load %arg7[%c0_6, %c0_7] : memref<128x256xf32, #tpu.memory_space<vmem>>, vector<128x256xf32>
    tpu.vector_store %arg7[%c0_6, %c0_7], %7 {strides = array<i32>} : memref<128x256xf32, #tpu.memory_space<vmem>>, vector<128x256xf32>,
    %c0_i32_8 = arith.constant 0 : i32
    %9 = arith.cmpi eq, %arg2, %c0_i32_8 : i32
    %10 = arith.extui %9 : i1 to i32
    %c0_i32_9 = arith.constant 0 : i32
    %11 = arith.cmpi ne, %10, %c0_i32_9 : i32
    scf.if %11 {
      %c0_10 = arith.constant 0 : index
      %c0_11 = arith.constant 0 : index
      %12 = vector.load %arg7[%c0_10, %c0_11] : memref<128x256xf32, #tpu.memory_space<vmem>>, vector<128x256xf32>
      %c0_12 = arith.constant 0 : index
      %c0_13 = arith.constant 0 : index
      %13 = vector.load %arg5[%c0_12, %c0_13] : memref<1x256xf32, #tpu.memory_space<vmem>>, vector<1x256xf32>
      %14 = vector.broadcast %13 : vector<1x256xf32> to vector<128x256xf32>
      %15 = arith.addf %12, %14 : vector<128x256xf32>
      %c0_14 = arith.constant 0 : index
      %c0_15 = arith.constant 0 : index
      %16 = vector.load %arg6[%c0_14, %c0_15] : memref<128x256xf32, #tpu.memory_space<vmem>>, vector<128x256xf32>
      tpu.vector_store %arg6[%c0_14, %c0_15], %15 {strides = array<i32>} : memref<128x256xf32, #tpu.memory_space<vmem>>, vector<128x256xf32>,
    } else {
    }
    return
  }
  func.func @transform_0(%arg0: i32, %arg1: i32, %arg2: i32) -> (i32, i32) {
    %c0_i32 = arith.constant 0 : i32
    return %arg0, %arg2 : i32, i32
  }
  func.func @transform_1(%arg0: i32, %arg1: i32, %arg2: i32) -> (i32, i32) {
    %c0_i32 = arith.constant 0 : i32
    return %arg2, %arg1 : i32, i32
  }
  func.func @transform_2(%arg0: i32, %arg1: i32, %arg2: i32) -> (i32, i32) {
    %c0_i32 = arith.constant 0 : i32
    %c0_i32_0 = arith.constant 0 : i32
    return %c0_i32, %arg1 : i32, i32
  }
  func.func @transform_3(%arg0: i32, %arg1: i32, %arg2: i32) -> (i32, i32) {
    %c0_i32 = arith.constant 0 : i32
    return %arg0, %arg1 : i32, i32
  }
}

module attributes {stable_mosaic.version = 11 : i64} {
  func.func @_linear_kernel(%arg0: i32, %arg1: i32, %arg2: i32, %arg3: memref<16x128xf32, #tpu.memory_space<vmem>>, %arg4: memref<128x128xf32, #tpu.memory_space<vmem>>, %arg5: memref<1x128xf32, #tpu.memory_space<vmem>>, %arg6: memref<16x128xf32, #tpu.memory_space<vmem>>, %arg7: memref<16x128xf32, #tpu.memory_space<vmem>>) attributes {dimension_semantics = [#tpu.dimension_semantics<parallel>, #tpu.dimension_semantics<parallel>, #tpu.dimension_semantics<arbitrary>], iteration_bounds = array<i64: 1, 1, 1>, scalar_prefetch = 0 : i64, scratch_operands = 1 : i64, tpu.core_type = #tpu.core_type<tc>, window_params = [{transform_indices = @transform_0, window_bounds = array<i64: 16, 128>}, {transform_indices = @transform_1, window_bounds = array<i64: 128, 128>}, {transform_indices = @transform_2, window_bounds = array<i64: 1, 128>}, {transform_indices = @transform_3, window_bounds = array<i64: 16, 128>}]} {
    %c0_i32 = arith.constant 0 : i32
    %0 = arith.cmpi eq, %arg2, %c0_i32 : i32
    %1 = arith.extui %0 : i1 to i32
    %c0_i32_0 = arith.constant 0 : i32
    %2 = arith.cmpi ne, %1, %c0_i32_0 : i32
    scf.if %2 {
      %cst_10 = arith.constant 0.000000e+00 : f32
      %12 = vector.broadcast %cst_10 : f32 to vector<16x128xf32>
      %c0_11 = arith.constant 0 : index
      %c0_12 = arith.constant 0 : index
      %13 = vector.load %arg7[%c0_11, %c0_12] : memref<16x128xf32, #tpu.memory_space<vmem>>, vector<16x128xf32>
      tpu.vector_store %arg7[%c0_11, %c0_12], %12 {strides = array<i32>} : memref<16x128xf32, #tpu.memory_space<vmem>>, vector<16x128xf32>,
    } else {
    }
    %c0 = arith.constant 0 : index
    %c0_1 = arith.constant 0 : index
    %3 = vector.load %arg7[%c0, %c0_1] : memref<16x128xf32, #tpu.memory_space<vmem>>, vector<16x128xf32>
    %c0_2 = arith.constant 0 : index
    %c0_3 = arith.constant 0 : index
    %4 = vector.load %arg3[%c0_2, %c0_3] : memref<16x128xf32, #tpu.memory_space<vmem>>, vector<16x128xf32>
    %c0_4 = arith.constant 0 : index
    %c0_5 = arith.constant 0 : index
    %5 = vector.load %arg4[%c0_4, %c0_5] : memref<128x128xf32, #tpu.memory_space<vmem>>, vector<128x128xf32>
    %cst = arith.constant dense<0.000000e+00> : vector<16x128xf32>
    %6 = tpu.matmul %4, %5, %cst {dimension_numbers = #tpu.dot_dimension_numbers<[1], [0], [0], [1], [0, 0, 1, 1], [], []>} : vector<16x128xf32>, vector<128x128xf32>, vector<16x128xf32> -> vector<16x128xf32>
    %7 = arith.addf %3, %6 : vector<16x128xf32>
    %c0_6 = arith.constant 0 : index
    %c0_7 = arith.constant 0 : index
    %8 = vector.load %arg7[%c0_6, %c0_7] : memref<16x128xf32, #tpu.memory_space<vmem>>, vector<16x128xf32>
    tpu.vector_store %arg7[%c0_6, %c0_7], %7 {strides = array<i32>} : memref<16x128xf32, #tpu.memory_space<vmem>>, vector<16x128xf32>,
    %c0_i32_8 = arith.constant 0 : i32
    %9 = arith.cmpi eq, %arg2, %c0_i32_8 : i32
    %10 = arith.extui %9 : i1 to i32
    %c0_i32_9 = arith.constant 0 : i32
    %11 = arith.cmpi ne, %10, %c0_i32_9 : i32
    scf.if %11 {
      %c0_10 = arith.constant 0 : index
      %c0_11 = arith.constant 0 : index
      %12 = vector.load %arg7[%c0_10, %c0_11] : memref<16x128xf32, #tpu.memory_space<vmem>>, vector<16x128xf32>
      %c0_12 = arith.constant 0 : index
      %c0_13 = arith.constant 0 : index
      %13 = vector.load %arg5[%c0_12, %c0_13] : memref<1x128xf32, #tpu.memory_space<vmem>>, vector<1x128xf32>
      %14 = vector.broadcast %13 : vector<1x128xf32> to vector<16x128xf32>
      %15 = arith.addf %12, %14 : vector<16x128xf32>
      %c0_14 = arith.constant 0 : index
      %c0_15 = arith.constant 0 : index
      %16 = vector.load %arg6[%c0_14, %c0_15] : memref<16x128xf32, #tpu.memory_space<vmem>>, vector<16x128xf32>
      tpu.vector_store %arg6[%c0_14, %c0_15], %15 {strides = array<i32>} : memref<16x128xf32, #tpu.memory_space<vmem>>, vector<16x128xf32>,
    } else {
    }
    return
  }
  func.func @transform_0(%arg0: i32, %arg1: i32, %arg2: i32) -> (i32, i32) {
    %c0_i32 = arith.constant 0 : i32
    return %arg0, %arg2 : i32, i32
  }
  func.func @transform_1(%arg0: i32, %arg1: i32, %arg2: i32) -> (i32, i32) {
    %c0_i32 = arith.constant 0 : i32
    return %arg2, %arg1 : i32, i32
  }
  func.func @transform_2(%arg0: i32, %arg1: i32, %arg2: i32) -> (i32, i32) {
    %c0_i32 = arith.constant 0 : i32
    %c0_i32_0 = arith.constant 0 : i32
    return %c0_i32, %arg1 : i32, i32
  }
  func.func @transform_3(%arg0: i32, %arg1: i32, %arg2: i32) -> (i32, i32) {
    %c0_i32 = arith.constant 0 : i32
    return %arg0, %arg1 : i32, i32
  }
}

module attributes {stable_mosaic.version = 11 : i64} {
  func.func @_ln_kernel(%arg0: i32, %arg1: memref<16x128xf32, #tpu.memory_space<vmem>>, %arg2: memref<1x128xf32, #tpu.memory_space<vmem>>, %arg3: memref<1x128xf32, #tpu.memory_space<vmem>>, %arg4: memref<16x128xf32, #tpu.memory_space<vmem>>) attributes {dimension_semantics = [#tpu.dimension_semantics<parallel>], iteration_bounds = array<i64: 1>, scalar_prefetch = 0 : i64, scratch_operands = 0 : i64, tpu.core_type = #tpu.core_type<tc>, window_params = [{transform_indices = @transform_0, window_bounds = array<i64: 16, 128>}, {pipeline_mode = #tpu.pipeline_mode<synchronous>, transform_indices = @transform_1, window_bounds = array<i64: 1, 128>}, {pipeline_mode = #tpu.pipeline_mode<synchronous>, transform_indices = @transform_2, window_bounds = array<i64: 1, 128>}, {transform_indices = @transform_3, window_bounds = array<i64: 16, 128>}]} {
    %c0 = arith.constant 0 : index
    %c0_0 = arith.constant 0 : index
    %0 = vector.load %arg1[%c0, %c0_0] : memref<16x128xf32, #tpu.memory_space<vmem>>, vector<16x128xf32>
    %cst = arith.constant dense<0.000000e+00> : vector<16xf32>
    %1 = vector.multi_reduction <add>, %0, %cst [1] : vector<16x128xf32> to vector<16xf32>
    %2 = vector.shape_cast %1 : vector<16xf32> to vector<16x1xf32>
    %cst_1 = arith.constant 1.280000e+02 : f32
    %3 = vector.broadcast %cst_1 : f32 to vector<16x1xf32>
    %4 = arith.divf %2, %3 : vector<16x1xf32>
    %5 = vector.broadcast %4 : vector<16x1xf32> to vector<16x128xf32>
    %6 = arith.subf %0, %5 : vector<16x128xf32>
    %7 = arith.mulf %6, %6 : vector<16x128xf32>
    %cst_2 = arith.constant dense<0.000000e+00> : vector<16xf32>
    %8 = vector.multi_reduction <add>, %7, %cst_2 [1] : vector<16x128xf32> to vector<16xf32>
    %9 = vector.shape_cast %8 : vector<16xf32> to vector<16x1xf32>
    %cst_3 = arith.constant 1.280000e+02 : f32
    %10 = vector.broadcast %cst_3 : f32 to vector<16x1xf32>
    %11 = arith.divf %9, %10 : vector<16x1xf32>
    %12 = vector.broadcast %4 : vector<16x1xf32> to vector<16x128xf32>
    %13 = arith.subf %0, %12 : vector<16x128xf32>
    %cst_4 = arith.constant 9.99999974E-6 : f32
    %14 = vector.broadcast %cst_4 : f32 to vector<16x1xf32>
    %15 = arith.addf %11, %14 : vector<16x1xf32>
    %16 = math.rsqrt %15 : vector<16x1xf32>
    %17 = vector.broadcast %16 : vector<16x1xf32> to vector<16x128xf32>
    %18 = arith.mulf %13, %17 : vector<16x128xf32>
    %c0_5 = arith.constant 0 : index
    %c0_6 = arith.constant 0 : index
    %19 = vector.load %arg2[%c0_5, %c0_6] : memref<1x128xf32, #tpu.memory_space<vmem>>, vector<1x128xf32>
    %20 = vector.broadcast %19 : vector<1x128xf32> to vector<16x128xf32>
    %21 = arith.mulf %18, %20 : vector<16x128xf32>
    %c0_7 = arith.constant 0 : index
    %c0_8 = arith.constant 0 : index
    %22 = vector.load %arg3[%c0_7, %c0_8] : memref<1x128xf32, #tpu.memory_space<vmem>>, vector<1x128xf32>
    %23 = vector.broadcast %22 : vector<1x128xf32> to vector<16x128xf32>
    %24 = arith.addf %21, %23 : vector<16x128xf32>
    %c0_9 = arith.constant 0 : index
    %c0_10 = arith.constant 0 : index
    %25 = vector.load %arg4[%c0_9, %c0_10] : memref<16x128xf32, #tpu.memory_space<vmem>>, vector<16x128xf32>
    tpu.vector_store %arg4[%c0_9, %c0_10], %24 {strides = array<i32>} : memref<16x128xf32, #tpu.memory_space<vmem>>, vector<16x128xf32>,
    return
  }
  func.func @transform_0(%arg0: i32) -> (i32, i32) {
    %c0_i32 = arith.constant 0 : i32
    %c0_i32_0 = arith.constant 0 : i32
    return %arg0, %c0_i32 : i32, i32
  }
  func.func @transform_1(%arg0: i32) -> (i32, i32) {
    %c0_i32 = arith.constant 0 : i32
    %c0_i32_0 = arith.constant 0 : i32
    %c0_i32_1 = arith.constant 0 : i32
    return %c0_i32, %c0_i32_0 : i32, i32
  }
  func.func @transform_2(%arg0: i32) -> (i32, i32) {
    %c0_i32 = arith.constant 0 : i32
    %c0_i32_0 = arith.constant 0 : i32
    %c0_i32_1 = arith.constant 0 : i32
    return %c0_i32, %c0_i32_0 : i32, i32
  }
  func.func @transform_3(%arg0: i32) -> (i32, i32) {
    %c0_i32 = arith.constant 0 : i32
    %c0_i32_0 = arith.constant 0 : i32
    return %arg0, %c0_i32 : i32, i32
  }
}

module attributes {stable_mosaic.version = 11 : i64} {
  func.func @_linear_kernel(%arg0: i32, %arg1: i32, %arg2: i32, %arg3: memref<16x128xf32, #tpu.memory_space<vmem>>, %arg4: memref<128x384xf32, #tpu.memory_space<vmem>>, %arg5: memref<1x384xf32, #tpu.memory_space<vmem>>, %arg6: memref<16x384xf32, #tpu.memory_space<vmem>>, %arg7: memref<16x384xf32, #tpu.memory_space<vmem>>) attributes {dimension_semantics = [#tpu.dimension_semantics<parallel>, #tpu.dimension_semantics<parallel>, #tpu.dimension_semantics<arbitrary>], iteration_bounds = array<i64: 1, 1, 1>, scalar_prefetch = 0 : i64, scratch_operands = 1 : i64, tpu.core_type = #tpu.core_type<tc>, window_params = [{transform_indices = @transform_0, window_bounds = array<i64: 16, 128>}, {transform_indices = @transform_1, window_bounds = array<i64: 128, 384>}, {transform_indices = @transform_2, window_bounds = array<i64: 1, 384>}, {transform_indices = @transform_3, window_bounds = array<i64: 16, 384>}]} {
    %c0_i32 = arith.constant 0 : i32
    %0 = arith.cmpi eq, %arg2, %c0_i32 : i32
    %1 = arith.extui %0 : i1 to i32
    %c0_i32_0 = arith.constant 0 : i32
    %2 = arith.cmpi ne, %1, %c0_i32_0 : i32
    scf.if %2 {
      %cst_10 = arith.constant 0.000000e+00 : f32
      %12 = vector.broadcast %cst_10 : f32 to vector<16x384xf32>
      %c0_11 = arith.constant 0 : index
      %c0_12 = arith.constant 0 : index
      %13 = vector.load %arg7[%c0_11, %c0_12] : memref<16x384xf32, #tpu.memory_space<vmem>>, vector<16x384xf32>
      tpu.vector_store %arg7[%c0_11, %c0_12], %12 {strides = array<i32>} : memref<16x384xf32, #tpu.memory_space<vmem>>, vector<16x384xf32>,
    } else {
    }
    %c0 = arith.constant 0 : index
    %c0_1 = arith.constant 0 : index
    %3 = vector.load %arg7[%c0, %c0_1] : memref<16x384xf32, #tpu.memory_space<vmem>>, vector<16x384xf32>
    %c0_2 = arith.constant 0 : index
    %c0_3 = arith.constant 0 : index
    %4 = vector.load %arg3[%c0_2, %c0_3] : memref<16x128xf32, #tpu.memory_space<vmem>>, vector<16x128xf32>
    %c0_4 = arith.constant 0 : index
    %c0_5 = arith.constant 0 : index
    %5 = vector.load %arg4[%c0_4, %c0_5] : memref<128x384xf32, #tpu.memory_space<vmem>>, vector<128x384xf32>
    %cst = arith.constant dense<0.000000e+00> : vector<16x384xf32>
    %6 = tpu.matmul %4, %5, %cst {dimension_numbers = #tpu.dot_dimension_numbers<[1], [0], [0], [1], [0, 0, 1, 1], [], []>} : vector<16x128xf32>, vector<128x384xf32>, vector<16x384xf32> -> vector<16x384xf32>
    %7 = arith.addf %3, %6 : vector<16x384xf32>
    %c0_6 = arith.constant 0 : index
    %c0_7 = arith.constant 0 : index
    %8 = vector.load %arg7[%c0_6, %c0_7] : memref<16x384xf32, #tpu.memory_space<vmem>>, vector<16x384xf32>
    tpu.vector_store %arg7[%c0_6, %c0_7], %7 {strides = array<i32>} : memref<16x384xf32, #tpu.memory_space<vmem>>, vector<16x384xf32>,
    %c0_i32_8 = arith.constant 0 : i32
    %9 = arith.cmpi eq, %arg2, %c0_i32_8 : i32
    %10 = arith.extui %9 : i1 to i32
    %c0_i32_9 = arith.constant 0 : i32
    %11 = arith.cmpi ne, %10, %c0_i32_9 : i32
    scf.if %11 {
      %c0_10 = arith.constant 0 : index
      %c0_11 = arith.constant 0 : index
      %12 = vector.load %arg7[%c0_10, %c0_11] : memref<16x384xf32, #tpu.memory_space<vmem>>, vector<16x384xf32>
      %c0_12 = arith.constant 0 : index
      %c0_13 = arith.constant 0 : index
      %13 = vector.load %arg5[%c0_12, %c0_13] : memref<1x384xf32, #tpu.memory_space<vmem>>, vector<1x384xf32>
      %14 = vector.broadcast %13 : vector<1x384xf32> to vector<16x384xf32>
      %15 = arith.addf %12, %14 : vector<16x384xf32>
      %c0_14 = arith.constant 0 : index
      %c0_15 = arith.constant 0 : index
      %16 = vector.load %arg6[%c0_14, %c0_15] : memref<16x384xf32, #tpu.memory_space<vmem>>, vector<16x384xf32>
      tpu.vector_store %arg6[%c0_14, %c0_15], %15 {strides = array<i32>} : memref<16x384xf32, #tpu.memory_space<vmem>>, vector<16x384xf32>,
    } else {
    }
    return
  }
  func.func @transform_0(%arg0: i32, %arg1: i32, %arg2: i32) -> (i32, i32) {
    %c0_i32 = arith.constant 0 : i32
    return %arg0, %arg2 : i32, i32
  }
  func.func @transform_1(%arg0: i32, %arg1: i32, %arg2: i32) -> (i32, i32) {
    %c0_i32 = arith.constant 0 : i32
    return %arg2, %arg1 : i32, i32
  }
  func.func @transform_2(%arg0: i32, %arg1: i32, %arg2: i32) -> (i32, i32) {
    %c0_i32 = arith.constant 0 : i32
    %c0_i32_0 = arith.constant 0 : i32
    return %c0_i32, %arg1 : i32, i32
  }
  func.func @transform_3(%arg0: i32, %arg1: i32, %arg2: i32) -> (i32, i32) {
    %c0_i32 = arith.constant 0 : i32
    return %arg0, %arg1 : i32, i32
  }
}

module attributes {stable_mosaic.version = 11 : i64} {
  func.func @_flash_kernel(%arg0: i32, %arg1: i32, %arg2: i32, %arg3: memref<1x8x16xf32, #tpu.memory_space<vmem>>, %arg4: memref<1x8x16xf32, #tpu.memory_space<vmem>>, %arg5: memref<1x8x16xf32, #tpu.memory_space<vmem>>, %arg6: memref<1x8x16xf32, #tpu.memory_space<vmem>>, %arg7: memref<1x8x1xf32, #tpu.memory_space<vmem>>, %arg8: memref<1x8x1xf32, #tpu.memory_space<vmem>>, %arg9: memref<1x8x16xf32, #tpu.memory_space<vmem>>) attributes {dimension_semantics = [#tpu.dimension_semantics<parallel>, #tpu.dimension_semantics<parallel>, #tpu.dimension_semantics<arbitrary>], iteration_bounds = array<i64: 16, 1, 1>, scalar_prefetch = 0 : i64, scratch_operands = 3 : i64, tpu.core_type = #tpu.core_type<tc>, window_params = [{transform_indices = @transform_0, window_bounds = array<i64: 1, 8, 16>}, {transform_indices = @transform_1, window_bounds = array<i64: 1, 8, 16>}, {transform_indices = @transform_2, window_bounds = array<i64: 1, 8, 16>}, {transform_indices = @transform_3, window_bounds = array<i64: 1, 8, 16>}]} {
    %c0_i32 = arith.constant 0 : i32
    %0 = arith.cmpi eq, %arg2, %c0_i32 : i32
    %1 = arith.extui %0 : i1 to i32
    %c0_i32_0 = arith.constant 0 : i32
    %2 = arith.cmpi ne, %1, %c0_i32_0 : i32
    scf.if %2 {
      %cst_33 = arith.constant 0xFF800000 : f32
      %34 = vector.broadcast %cst_33 : f32 to vector<1x8x1xf32>
      %c0_34 = arith.constant 0 : index
      %c0_35 = arith.constant 0 : index
      %c0_36 = arith.constant 0 : index
      %35 = vector.load %arg7[%c0_34, %c0_35, %c0_36] : memref<1x8x1xf32, #tpu.memory_space<vmem>>, vector<1x8x1xf32>
      tpu.vector_store %arg7[%c0_34, %c0_35, %c0_36], %34 {strides = array<i32>} : memref<1x8x1xf32, #tpu.memory_space<vmem>>, vector<1x8x1xf32>,
      %cst_37 = arith.constant 0.000000e+00 : f32
      %36 = vector.broadcast %cst_37 : f32 to vector<1x8x1xf32>
      %c0_38 = arith.constant 0 : index
      %c0_39 = arith.constant 0 : index
      %c0_40 = arith.constant 0 : index
      %37 = vector.load %arg8[%c0_38, %c0_39, %c0_40] : memref<1x8x1xf32, #tpu.memory_space<vmem>>, vector<1x8x1xf32>
      tpu.vector_store %arg8[%c0_38, %c0_39, %c0_40], %36 {strides = array<i32>} : memref<1x8x1xf32, #tpu.memory_space<vmem>>, vector<1x8x1xf32>,
      %cst_41 = arith.constant 0.000000e+00 : f32
      %38 = vector.broadcast %cst_41 : f32 to vector<1x8x16xf32>
      %c0_42 = arith.constant 0 : index
      %c0_43 = arith.constant 0 : index
      %c0_44 = arith.constant 0 : index
      %39 = vector.load %arg9[%c0_42, %c0_43, %c0_44] : memref<1x8x16xf32, #tpu.memory_space<vmem>>, vector<1x8x16xf32>
      tpu.vector_store %arg9[%c0_42, %c0_43, %c0_44], %38 {strides = array<i32>} : memref<1x8x16xf32, #tpu.memory_space<vmem>>, vector<1x8x16xf32>,
    } else {
    }
    %c0 = arith.constant 0 : index
    %c0_1 = arith.constant 0 : index
    %c0_2 = arith.constant 0 : index
    %3 = vector.load %arg3[%c0, %c0_1, %c0_2] : memref<1x8x16xf32, #tpu.memory_space<vmem>>, vector<1x8x16xf32>
    %c0_3 = arith.constant 0 : index
    %c0_4 = arith.constant 0 : index
    %c0_5 = arith.constant 0 : index
    %4 = vector.load %arg4[%c0_3, %c0_4, %c0_5] : memref<1x8x16xf32, #tpu.memory_space<vmem>>, vector<1x8x16xf32>
    %c0_6 = arith.constant 0 : index
    %c0_7 = arith.constant 0 : index
    %c0_8 = arith.constant 0 : index
    %5 = vector.load %arg5[%c0_6, %c0_7, %c0_8] : memref<1x8x16xf32, #tpu.memory_space<vmem>>, vector<1x8x16xf32>
    "tpu.trace_start"() <{level = 10 : i32, message = "bqd,bkd->bqk"}> : () -> ()
    %cst = arith.constant dense<0.000000e+00> : vector<1x8x8xf32>
    %6 = tpu.matmul %3, %4, %cst {dimension_numbers = #tpu.dot_dimension_numbers<[2], [2], [1], [1], [0, 0, 0, 1, 1, 1], [0], [0]>} : vector<1x8x16xf32>, vector<1x8x16xf32>, vector<1x8x8xf32> -> vector<1x8x8xf32>
    "tpu.trace_stop"() : () -> ()
    %cst_9 = arith.constant 2.500000e-01 : f32
    %7 = vector.broadcast %cst_9 : f32 to vector<1x8x8xf32>
    %8 = arith.mulf %6, %7 : vector<1x8x8xf32>
    %c0_10 = arith.constant 0 : index
    %c0_11 = arith.constant 0 : index
    %c0_12 = arith.constant 0 : index
    %9 = vector.load %arg7[%c0_10, %c0_11, %c0_12] : memref<1x8x1xf32, #tpu.memory_space<vmem>>, vector<1x8x1xf32>
    %cst_13 = arith.constant dense<0xFF800000> : vector<1x8xf32>
    %10 = vector.multi_reduction <maximumf>, %8, %cst_13 [2] : vector<1x8x8xf32> to vector<1x8xf32>
    %11 = vector.shape_cast %10 : vector<1x8xf32> to vector<1x8x1xf32>
    %12 = arith.maximumf %9, %11 : vector<1x8x1xf32>
    %13 = arith.subf %9, %12 : vector<1x8x1xf32>
    %14 = math.exp %13 : vector<1x8x1xf32>
    %15 = vector.broadcast %12 : vector<1x8x1xf32> to vector<1x8x8xf32>
    %16 = arith.subf %8, %15 : vector<1x8x8xf32>
    %17 = math.exp %16 : vector<1x8x8xf32>
    %c0_14 = arith.constant 0 : index
    %c0_15 = arith.constant 0 : index
    %c0_16 = arith.constant 0 : index
    %18 = vector.load %arg8[%c0_14, %c0_15, %c0_16] : memref<1x8x1xf32, #tpu.memory_space<vmem>>, vector<1x8x1xf32>
    %19 = arith.mulf %14, %18 : vector<1x8x1xf32>
    %cst_17 = arith.constant dense<0.000000e+00> : vector<1x8xf32>
    %20 = vector.multi_reduction <add>, %17, %cst_17 [2] : vector<1x8x8xf32> to vector<1x8xf32>
    %21 = vector.shape_cast %20 : vector<1x8xf32> to vector<1x8x1xf32>
    %22 = arith.addf %19, %21 : vector<1x8x1xf32>
    %c0_18 = arith.constant 0 : index
    %c0_19 = arith.constant 0 : index
    %c0_20 = arith.constant 0 : index
    %23 = vector.load %arg8[%c0_18, %c0_19, %c0_20] : memref<1x8x1xf32, #tpu.memory_space<vmem>>, vector<1x8x1xf32>
    tpu.vector_store %arg8[%c0_18, %c0_19, %c0_20], %22 {strides = array<i32>} : memref<1x8x1xf32, #tpu.memory_space<vmem>>, vector<1x8x1xf32>,
    %c0_21 = arith.constant 0 : index
    %c0_22 = arith.constant 0 : index
    %c0_23 = arith.constant 0 : index
    %24 = vector.load %arg9[%c0_21, %c0_22, %c0_23] : memref<1x8x16xf32, #tpu.memory_space<vmem>>, vector<1x8x16xf32>
    %25 = vector.broadcast %14 : vector<1x8x1xf32> to vector<1x8x16xf32>
    %26 = arith.mulf %25, %24 : vector<1x8x16xf32>
    "tpu.trace_start"() <{level = 10 : i32, message = "bqk,bkd->bqd"}> : () -> ()
    %cst_24 = arith.constant dense<0.000000e+00> : vector<1x8x16xf32>
    %27 = tpu.matmul %17, %5, %cst_24 {dimension_numbers = #tpu.dot_dimension_numbers<[2], [1], [1], [2], [0, 0, 0, 1, 1, 2], [0], [0]>} : vector<1x8x8xf32>, vector<1x8x16xf32>, vector<1x8x16xf32> -> vector<1x8x16xf32>
    "tpu.trace_stop"() : () -> ()
    %28 = arith.addf %26, %27 : vector<1x8x16xf32>
    %c0_25 = arith.constant 0 : index
    %c0_26 = arith.constant 0 : index
    %c0_27 = arith.constant 0 : index
    %29 = vector.load %arg9[%c0_25, %c0_26, %c0_27] : memref<1x8x16xf32, #tpu.memory_space<vmem>>, vector<1x8x16xf32>
    tpu.vector_store %arg9[%c0_25, %c0_26, %c0_27], %28 {strides = array<i32>} : memref<1x8x16xf32, #tpu.memory_space<vmem>>, vector<1x8x16xf32>,
    %c0_28 = arith.constant 0 : index
    %c0_29 = arith.constant 0 : index
    %c0_30 = arith.constant 0 : index
    %30 = vector.load %arg7[%c0_28, %c0_29, %c0_30] : memref<1x8x1xf32, #tpu.memory_space<vmem>>, vector<1x8x1xf32>
    tpu.vector_store %arg7[%c0_28, %c0_29, %c0_30], %12 {strides = array<i32>} : memref<1x8x1xf32, #tpu.memory_space<vmem>>, vector<1x8x1xf32>,
    %c0_i32_31 = arith.constant 0 : i32
    %31 = arith.cmpi eq, %arg2, %c0_i32_31 : i32
    %32 = arith.extui %31 : i1 to i32
    %c0_i32_32 = arith.constant 0 : i32
    %33 = arith.cmpi ne, %32, %c0_i32_32 : i32
    scf.if %33 {
      %c0_33 = arith.constant 0 : index
      %c0_34 = arith.constant 0 : index
      %c0_35 = arith.constant 0 : index
      %34 = vector.load %arg9[%c0_33, %c0_34, %c0_35] : memref<1x8x16xf32, #tpu.memory_space<vmem>>, vector<1x8x16xf32>
      %c0_36 = arith.constant 0 : index
      %c0_37 = arith.constant 0 : index
      %c0_38 = arith.constant 0 : index
      %35 = vector.load %arg8[%c0_36, %c0_37, %c0_38] : memref<1x8x1xf32, #tpu.memory_space<vmem>>, vector<1x8x1xf32>
      %36 = tpu.reciprocal %35 {approx = true} : vector<1x8x1xf32> -> vector<1x8x1xf32>
      %37 = vector.broadcast %36 : vector<1x8x1xf32> to vector<1x8x16xf32>
      %38 = arith.mulf %34, %37 : vector<1x8x16xf32>
      %c0_39 = arith.constant 0 : index
      %c0_40 = arith.constant 0 : index
      %c0_41 = arith.constant 0 : index
      %39 = vector.load %arg6[%c0_39, %c0_40, %c0_41] : memref<1x8x16xf32, #tpu.memory_space<vmem>>, vector<1x8x16xf32>
      tpu.vector_store %arg6[%c0_39, %c0_40, %c0_41], %38 {strides = array<i32>} : memref<1x8x16xf32, #tpu.memory_space<vmem>>, vector<1x8x16xf32>,
    } else {
    }
    return
  }
  func.func @transform_0(%arg0: i32, %arg1: i32, %arg2: i32) -> (i32, i32, i32) {
    %c0_i32 = arith.constant 0 : i32
    %c0_i32_0 = arith.constant 0 : i32
    return %arg0, %arg1, %c0_i32 : i32, i32, i32
  }
  func.func @transform_1(%arg0: i32, %arg1: i32, %arg2: i32) -> (i32, i32, i32) {
    %c0_i32 = arith.constant 0 : i32
    %c0_i32_0 = arith.constant 0 : i32
    return %arg0, %arg2, %c0_i32 : i32, i32, i32
  }
  func.func @transform_2(%arg0: i32, %arg1: i32, %arg2: i32) -> (i32, i32, i32) {
    %c0_i32 = arith.constant 0 : i32
    %c0_i32_0 = arith.constant 0 : i32
    return %arg0, %arg2, %c0_i32 : i32, i32, i32
  }
  func.func @transform_3(%arg0: i32, %arg1: i32, %arg2: i32) -> (i32, i32, i32) {
    %c0_i32 = arith.constant 0 : i32
    %c0_i32_0 = arith.constant 0 : i32
    return %arg0, %arg1, %c0_i32 : i32, i32, i32
  }
}

module attributes {stable_mosaic.version = 11 : i64} {
  func.func @_ln_res_kernel(%arg0: i32, %arg1: memref<16x128xf32, #tpu.memory_space<vmem>>, %arg2: memref<16x128xf32, #tpu.memory_space<vmem>>, %arg3: memref<1x128xf32, #tpu.memory_space<vmem>>, %arg4: memref<1x128xf32, #tpu.memory_space<vmem>>, %arg5: memref<16x128xf32, #tpu.memory_space<vmem>>) attributes {dimension_semantics = [#tpu.dimension_semantics<parallel>], iteration_bounds = array<i64: 1>, scalar_prefetch = 0 : i64, scratch_operands = 0 : i64, tpu.core_type = #tpu.core_type<tc>, window_params = [{transform_indices = @transform_0, window_bounds = array<i64: 16, 128>}, {transform_indices = @transform_1, window_bounds = array<i64: 16, 128>}, {pipeline_mode = #tpu.pipeline_mode<synchronous>, transform_indices = @transform_2, window_bounds = array<i64: 1, 128>}, {pipeline_mode = #tpu.pipeline_mode<synchronous>, transform_indices = @transform_3, window_bounds = array<i64: 1, 128>}, {transform_indices = @transform_4, window_bounds = array<i64: 16, 128>}]} {
    %c0 = arith.constant 0 : index
    %c0_0 = arith.constant 0 : index
    %0 = vector.load %arg1[%c0, %c0_0] : memref<16x128xf32, #tpu.memory_space<vmem>>, vector<16x128xf32>
    %c0_1 = arith.constant 0 : index
    %c0_2 = arith.constant 0 : index
    %1 = vector.load %arg2[%c0_1, %c0_2] : memref<16x128xf32, #tpu.memory_space<vmem>>, vector<16x128xf32>
    %2 = arith.addf %0, %1 : vector<16x128xf32>
    %cst = arith.constant dense<0.000000e+00> : vector<16xf32>
    %3 = vector.multi_reduction <add>, %2, %cst [1] : vector<16x128xf32> to vector<16xf32>
    %4 = vector.shape_cast %3 : vector<16xf32> to vector<16x1xf32>
    %cst_3 = arith.constant 1.280000e+02 : f32
    %5 = vector.broadcast %cst_3 : f32 to vector<16x1xf32>
    %6 = arith.divf %4, %5 : vector<16x1xf32>
    %7 = vector.broadcast %6 : vector<16x1xf32> to vector<16x128xf32>
    %8 = arith.subf %2, %7 : vector<16x128xf32>
    %9 = arith.mulf %8, %8 : vector<16x128xf32>
    %cst_4 = arith.constant dense<0.000000e+00> : vector<16xf32>
    %10 = vector.multi_reduction <add>, %9, %cst_4 [1] : vector<16x128xf32> to vector<16xf32>
    %11 = vector.shape_cast %10 : vector<16xf32> to vector<16x1xf32>
    %cst_5 = arith.constant 1.280000e+02 : f32
    %12 = vector.broadcast %cst_5 : f32 to vector<16x1xf32>
    %13 = arith.divf %11, %12 : vector<16x1xf32>
    %14 = vector.broadcast %6 : vector<16x1xf32> to vector<16x128xf32>
    %15 = arith.subf %2, %14 : vector<16x128xf32>
    %cst_6 = arith.constant 9.99999974E-6 : f32
    %16 = vector.broadcast %cst_6 : f32 to vector<16x1xf32>
    %17 = arith.addf %13, %16 : vector<16x1xf32>
    %18 = math.rsqrt %17 : vector<16x1xf32>
    %19 = vector.broadcast %18 : vector<16x1xf32> to vector<16x128xf32>
    %20 = arith.mulf %15, %19 : vector<16x128xf32>
    %c0_7 = arith.constant 0 : index
    %c0_8 = arith.constant 0 : index
    %21 = vector.load %arg3[%c0_7, %c0_8] : memref<1x128xf32, #tpu.memory_space<vmem>>, vector<1x128xf32>
    %22 = vector.broadcast %21 : vector<1x128xf32> to vector<16x128xf32>
    %23 = arith.mulf %20, %22 : vector<16x128xf32>
    %c0_9 = arith.constant 0 : index
    %c0_10 = arith.constant 0 : index
    %24 = vector.load %arg4[%c0_9, %c0_10] : memref<1x128xf32, #tpu.memory_space<vmem>>, vector<1x128xf32>
    %25 = vector.broadcast %24 : vector<1x128xf32> to vector<16x128xf32>
    %26 = arith.addf %23, %25 : vector<16x128xf32>
    %c0_11 = arith.constant 0 : index
    %c0_12 = arith.constant 0 : index
    %27 = vector.load %arg5[%c0_11, %c0_12] : memref<16x128xf32, #tpu.memory_space<vmem>>, vector<16x128xf32>
    tpu.vector_store %arg5[%c0_11, %c0_12], %26 {strides = array<i32>} : memref<16x128xf32, #tpu.memory_space<vmem>>, vector<16x128xf32>,
    return
  }
  func.func @transform_0(%arg0: i32) -> (i32, i32) {
    %c0_i32 = arith.constant 0 : i32
    %c0_i32_0 = arith.constant 0 : i32
    return %arg0, %c0_i32 : i32, i32
  }
  func.func @transform_1(%arg0: i32) -> (i32, i32) {
    %c0_i32 = arith.constant 0 : i32
    %c0_i32_0 = arith.constant 0 : i32
    return %arg0, %c0_i32 : i32, i32
  }
  func.func @transform_2(%arg0: i32) -> (i32, i32) {
    %c0_i32 = arith.constant 0 : i32
    %c0_i32_0 = arith.constant 0 : i32
    %c0_i32_1 = arith.constant 0 : i32
    return %c0_i32, %c0_i32_0 : i32, i32
  }
  func.func @transform_3(%arg0: i32) -> (i32, i32) {
    %c0_i32 = arith.constant 0 : i32
    %c0_i32_0 = arith.constant 0 : i32
    %c0_i32_1 = arith.constant 0 : i32
    return %c0_i32, %c0_i32_0 : i32, i32
  }
  func.func @transform_4(%arg0: i32) -> (i32, i32) {
    %c0_i32 = arith.constant 0 : i32
    %c0_i32_0 = arith.constant 0 : i32
    return %arg0, %c0_i32 : i32, i32
  }
}

module attributes {stable_mosaic.version = 11 : i64} {
  func.func @_flash_kernel(%arg0: i32, %arg1: i32, %arg2: i32, %arg3: memref<1x8x16xf32, #tpu.memory_space<vmem>>, %arg4: memref<1x64x16xf32, #tpu.memory_space<vmem>>, %arg5: memref<1x64x16xf32, #tpu.memory_space<vmem>>, %arg6: memref<1x8x16xf32, #tpu.memory_space<vmem>>, %arg7: memref<1x8x1xf32, #tpu.memory_space<vmem>>, %arg8: memref<1x8x1xf32, #tpu.memory_space<vmem>>, %arg9: memref<1x8x16xf32, #tpu.memory_space<vmem>>) attributes {dimension_semantics = [#tpu.dimension_semantics<parallel>, #tpu.dimension_semantics<parallel>, #tpu.dimension_semantics<arbitrary>], iteration_bounds = array<i64: 16, 1, 1>, scalar_prefetch = 0 : i64, scratch_operands = 3 : i64, tpu.core_type = #tpu.core_type<tc>, window_params = [{transform_indices = @transform_0, window_bounds = array<i64: 1, 8, 16>}, {transform_indices = @transform_1, window_bounds = array<i64: 1, 64, 16>}, {transform_indices = @transform_2, window_bounds = array<i64: 1, 64, 16>}, {transform_indices = @transform_3, window_bounds = array<i64: 1, 8, 16>}]} {
    %c0_i32 = arith.constant 0 : i32
    %0 = arith.cmpi eq, %arg2, %c0_i32 : i32
    %1 = arith.extui %0 : i1 to i32
    %c0_i32_0 = arith.constant 0 : i32
    %2 = arith.cmpi ne, %1, %c0_i32_0 : i32
    scf.if %2 {
      %cst_33 = arith.constant 0xFF800000 : f32
      %34 = vector.broadcast %cst_33 : f32 to vector<1x8x1xf32>
      %c0_34 = arith.constant 0 : index
      %c0_35 = arith.constant 0 : index
      %c0_36 = arith.constant 0 : index
      %35 = vector.load %arg7[%c0_34, %c0_35, %c0_36] : memref<1x8x1xf32, #tpu.memory_space<vmem>>, vector<1x8x1xf32>
      tpu.vector_store %arg7[%c0_34, %c0_35, %c0_36], %34 {strides = array<i32>} : memref<1x8x1xf32, #tpu.memory_space<vmem>>, vector<1x8x1xf32>,
      %cst_37 = arith.constant 0.000000e+00 : f32
      %36 = vector.broadcast %cst_37 : f32 to vector<1x8x1xf32>
      %c0_38 = arith.constant 0 : index
      %c0_39 = arith.constant 0 : index
      %c0_40 = arith.constant 0 : index
      %37 = vector.load %arg8[%c0_38, %c0_39, %c0_40] : memref<1x8x1xf32, #tpu.memory_space<vmem>>, vector<1x8x1xf32>
      tpu.vector_store %arg8[%c0_38, %c0_39, %c0_40], %36 {strides = array<i32>} : memref<1x8x1xf32, #tpu.memory_space<vmem>>, vector<1x8x1xf32>,
      %cst_41 = arith.constant 0.000000e+00 : f32
      %38 = vector.broadcast %cst_41 : f32 to vector<1x8x16xf32>
      %c0_42 = arith.constant 0 : index
      %c0_43 = arith.constant 0 : index
      %c0_44 = arith.constant 0 : index
      %39 = vector.load %arg9[%c0_42, %c0_43, %c0_44] : memref<1x8x16xf32, #tpu.memory_space<vmem>>, vector<1x8x16xf32>
      tpu.vector_store %arg9[%c0_42, %c0_43, %c0_44], %38 {strides = array<i32>} : memref<1x8x16xf32, #tpu.memory_space<vmem>>, vector<1x8x16xf32>,
    } else {
    }
    %c0 = arith.constant 0 : index
    %c0_1 = arith.constant 0 : index
    %c0_2 = arith.constant 0 : index
    %3 = vector.load %arg3[%c0, %c0_1, %c0_2] : memref<1x8x16xf32, #tpu.memory_space<vmem>>, vector<1x8x16xf32>
    %c0_3 = arith.constant 0 : index
    %c0_4 = arith.constant 0 : index
    %c0_5 = arith.constant 0 : index
    %4 = vector.load %arg4[%c0_3, %c0_4, %c0_5] : memref<1x64x16xf32, #tpu.memory_space<vmem>>, vector<1x64x16xf32>
    %c0_6 = arith.constant 0 : index
    %c0_7 = arith.constant 0 : index
    %c0_8 = arith.constant 0 : index
    %5 = vector.load %arg5[%c0_6, %c0_7, %c0_8] : memref<1x64x16xf32, #tpu.memory_space<vmem>>, vector<1x64x16xf32>
    "tpu.trace_start"() <{level = 10 : i32, message = "bqd,bkd->bqk"}> : () -> ()
    %cst = arith.constant dense<0.000000e+00> : vector<1x8x64xf32>
    %6 = tpu.matmul %3, %4, %cst {dimension_numbers = #tpu.dot_dimension_numbers<[2], [2], [1], [1], [0, 0, 0, 1, 1, 1], [0], [0]>} : vector<1x8x16xf32>, vector<1x64x16xf32>, vector<1x8x64xf32> -> vector<1x8x64xf32>
    "tpu.trace_stop"() : () -> ()
    %cst_9 = arith.constant 2.500000e-01 : f32
    %7 = vector.broadcast %cst_9 : f32 to vector<1x8x64xf32>
    %8 = arith.mulf %6, %7 : vector<1x8x64xf32>
    %c0_10 = arith.constant 0 : index
    %c0_11 = arith.constant 0 : index
    %c0_12 = arith.constant 0 : index
    %9 = vector.load %arg7[%c0_10, %c0_11, %c0_12] : memref<1x8x1xf32, #tpu.memory_space<vmem>>, vector<1x8x1xf32>
    %cst_13 = arith.constant dense<0xFF800000> : vector<1x8xf32>
    %10 = vector.multi_reduction <maximumf>, %8, %cst_13 [2] : vector<1x8x64xf32> to vector<1x8xf32>
    %11 = vector.shape_cast %10 : vector<1x8xf32> to vector<1x8x1xf32>
    %12 = arith.maximumf %9, %11 : vector<1x8x1xf32>
    %13 = arith.subf %9, %12 : vector<1x8x1xf32>
    %14 = math.exp %13 : vector<1x8x1xf32>
    %15 = vector.broadcast %12 : vector<1x8x1xf32> to vector<1x8x64xf32>
    %16 = arith.subf %8, %15 : vector<1x8x64xf32>
    %17 = math.exp %16 : vector<1x8x64xf32>
    %c0_14 = arith.constant 0 : index
    %c0_15 = arith.constant 0 : index
    %c0_16 = arith.constant 0 : index
    %18 = vector.load %arg8[%c0_14, %c0_15, %c0_16] : memref<1x8x1xf32, #tpu.memory_space<vmem>>, vector<1x8x1xf32>
    %19 = arith.mulf %14, %18 : vector<1x8x1xf32>
    %cst_17 = arith.constant dense<0.000000e+00> : vector<1x8xf32>
    %20 = vector.multi_reduction <add>, %17, %cst_17 [2] : vector<1x8x64xf32> to vector<1x8xf32>
    %21 = vector.shape_cast %20 : vector<1x8xf32> to vector<1x8x1xf32>
    %22 = arith.addf %19, %21 : vector<1x8x1xf32>
    %c0_18 = arith.constant 0 : index
    %c0_19 = arith.constant 0 : index
    %c0_20 = arith.constant 0 : index
    %23 = vector.load %arg8[%c0_18, %c0_19, %c0_20] : memref<1x8x1xf32, #tpu.memory_space<vmem>>, vector<1x8x1xf32>
    tpu.vector_store %arg8[%c0_18, %c0_19, %c0_20], %22 {strides = array<i32>} : memref<1x8x1xf32, #tpu.memory_space<vmem>>, vector<1x8x1xf32>,
    %c0_21 = arith.constant 0 : index
    %c0_22 = arith.constant 0 : index
    %c0_23 = arith.constant 0 : index
    %24 = vector.load %arg9[%c0_21, %c0_22, %c0_23] : memref<1x8x16xf32, #tpu.memory_space<vmem>>, vector<1x8x16xf32>
    %25 = vector.broadcast %14 : vector<1x8x1xf32> to vector<1x8x16xf32>
    %26 = arith.mulf %25, %24 : vector<1x8x16xf32>
    "tpu.trace_start"() <{level = 10 : i32, message = "bqk,bkd->bqd"}> : () -> ()
    %cst_24 = arith.constant dense<0.000000e+00> : vector<1x8x16xf32>
    %27 = tpu.matmul %17, %5, %cst_24 {dimension_numbers = #tpu.dot_dimension_numbers<[2], [1], [1], [2], [0, 0, 0, 1, 1, 2], [0], [0]>} : vector<1x8x64xf32>, vector<1x64x16xf32>, vector<1x8x16xf32> -> vector<1x8x16xf32>
    "tpu.trace_stop"() : () -> ()
    %28 = arith.addf %26, %27 : vector<1x8x16xf32>
    %c0_25 = arith.constant 0 : index
    %c0_26 = arith.constant 0 : index
    %c0_27 = arith.constant 0 : index
    %29 = vector.load %arg9[%c0_25, %c0_26, %c0_27] : memref<1x8x16xf32, #tpu.memory_space<vmem>>, vector<1x8x16xf32>
    tpu.vector_store %arg9[%c0_25, %c0_26, %c0_27], %28 {strides = array<i32>} : memref<1x8x16xf32, #tpu.memory_space<vmem>>, vector<1x8x16xf32>,
    %c0_28 = arith.constant 0 : index
    %c0_29 = arith.constant 0 : index
    %c0_30 = arith.constant 0 : index
    %30 = vector.load %arg7[%c0_28, %c0_29, %c0_30] : memref<1x8x1xf32, #tpu.memory_space<vmem>>, vector<1x8x1xf32>
    tpu.vector_store %arg7[%c0_28, %c0_29, %c0_30], %12 {strides = array<i32>} : memref<1x8x1xf32, #tpu.memory_space<vmem>>, vector<1x8x1xf32>,
    %c0_i32_31 = arith.constant 0 : i32
    %31 = arith.cmpi eq, %arg2, %c0_i32_31 : i32
    %32 = arith.extui %31 : i1 to i32
    %c0_i32_32 = arith.constant 0 : i32
    %33 = arith.cmpi ne, %32, %c0_i32_32 : i32
    scf.if %33 {
      %c0_33 = arith.constant 0 : index
      %c0_34 = arith.constant 0 : index
      %c0_35 = arith.constant 0 : index
      %34 = vector.load %arg9[%c0_33, %c0_34, %c0_35] : memref<1x8x16xf32, #tpu.memory_space<vmem>>, vector<1x8x16xf32>
      %c0_36 = arith.constant 0 : index
      %c0_37 = arith.constant 0 : index
      %c0_38 = arith.constant 0 : index
      %35 = vector.load %arg8[%c0_36, %c0_37, %c0_38] : memref<1x8x1xf32, #tpu.memory_space<vmem>>, vector<1x8x1xf32>
      %36 = tpu.reciprocal %35 {approx = true} : vector<1x8x1xf32> -> vector<1x8x1xf32>
      %37 = vector.broadcast %36 : vector<1x8x1xf32> to vector<1x8x16xf32>
      %38 = arith.mulf %34, %37 : vector<1x8x16xf32>
      %c0_39 = arith.constant 0 : index
      %c0_40 = arith.constant 0 : index
      %c0_41 = arith.constant 0 : index
      %39 = vector.load %arg6[%c0_39, %c0_40, %c0_41] : memref<1x8x16xf32, #tpu.memory_space<vmem>>, vector<1x8x16xf32>
      tpu.vector_store %arg6[%c0_39, %c0_40, %c0_41], %38 {strides = array<i32>} : memref<1x8x16xf32, #tpu.memory_space<vmem>>, vector<1x8x16xf32>,
    } else {
    }
    return
  }
  func.func @transform_0(%arg0: i32, %arg1: i32, %arg2: i32) -> (i32, i32, i32) {
    %c0_i32 = arith.constant 0 : i32
    %c0_i32_0 = arith.constant 0 : i32
    return %arg0, %arg1, %c0_i32 : i32, i32, i32
  }
  func.func @transform_1(%arg0: i32, %arg1: i32, %arg2: i32) -> (i32, i32, i32) {
    %c0_i32 = arith.constant 0 : i32
    %c0_i32_0 = arith.constant 0 : i32
    return %arg0, %arg2, %c0_i32 : i32, i32, i32
  }
  func.func @transform_2(%arg0: i32, %arg1: i32, %arg2: i32) -> (i32, i32, i32) {
    %c0_i32 = arith.constant 0 : i32
    %c0_i32_0 = arith.constant 0 : i32
    return %arg0, %arg2, %c0_i32 : i32, i32, i32
  }
  func.func @transform_3(%arg0: i32, %arg1: i32, %arg2: i32) -> (i32, i32, i32) {
    %c0_i32 = arith.constant 0 : i32
    %c0_i32_0 = arith.constant 0 : i32
    return %arg0, %arg1, %c0_i32 : i32, i32, i32
  }
}

module attributes {stable_mosaic.version = 11 : i64} {
  func.func @_linear_kernel(%arg0: i32, %arg1: i32, %arg2: i32, %arg3: memref<16x128xf32, #tpu.memory_space<vmem>>, %arg4: memref<128x256xf32, #tpu.memory_space<vmem>>, %arg5: memref<1x256xf32, #tpu.memory_space<vmem>>, %arg6: memref<16x256xf32, #tpu.memory_space<vmem>>, %arg7: memref<16x256xf32, #tpu.memory_space<vmem>>) attributes {dimension_semantics = [#tpu.dimension_semantics<parallel>, #tpu.dimension_semantics<parallel>, #tpu.dimension_semantics<arbitrary>], iteration_bounds = array<i64: 1, 1, 1>, scalar_prefetch = 0 : i64, scratch_operands = 1 : i64, tpu.core_type = #tpu.core_type<tc>, window_params = [{transform_indices = @transform_0, window_bounds = array<i64: 16, 128>}, {transform_indices = @transform_1, window_bounds = array<i64: 128, 256>}, {transform_indices = @transform_2, window_bounds = array<i64: 1, 256>}, {transform_indices = @transform_3, window_bounds = array<i64: 16, 256>}]} {
    %c0_i32 = arith.constant 0 : i32
    %0 = arith.cmpi eq, %arg2, %c0_i32 : i32
    %1 = arith.extui %0 : i1 to i32
    %c0_i32_0 = arith.constant 0 : i32
    %2 = arith.cmpi ne, %1, %c0_i32_0 : i32
    scf.if %2 {
      %cst_10 = arith.constant 0.000000e+00 : f32
      %12 = vector.broadcast %cst_10 : f32 to vector<16x256xf32>
      %c0_11 = arith.constant 0 : index
      %c0_12 = arith.constant 0 : index
      %13 = vector.load %arg7[%c0_11, %c0_12] : memref<16x256xf32, #tpu.memory_space<vmem>>, vector<16x256xf32>
      tpu.vector_store %arg7[%c0_11, %c0_12], %12 {strides = array<i32>} : memref<16x256xf32, #tpu.memory_space<vmem>>, vector<16x256xf32>,
    } else {
    }
    %c0 = arith.constant 0 : index
    %c0_1 = arith.constant 0 : index
    %3 = vector.load %arg7[%c0, %c0_1] : memref<16x256xf32, #tpu.memory_space<vmem>>, vector<16x256xf32>
    %c0_2 = arith.constant 0 : index
    %c0_3 = arith.constant 0 : index
    %4 = vector.load %arg3[%c0_2, %c0_3] : memref<16x128xf32, #tpu.memory_space<vmem>>, vector<16x128xf32>
    %c0_4 = arith.constant 0 : index
    %c0_5 = arith.constant 0 : index
    %5 = vector.load %arg4[%c0_4, %c0_5] : memref<128x256xf32, #tpu.memory_space<vmem>>, vector<128x256xf32>
    %cst = arith.constant dense<0.000000e+00> : vector<16x256xf32>
    %6 = tpu.matmul %4, %5, %cst {dimension_numbers = #tpu.dot_dimension_numbers<[1], [0], [0], [1], [0, 0, 1, 1], [], []>} : vector<16x128xf32>, vector<128x256xf32>, vector<16x256xf32> -> vector<16x256xf32>
    %7 = arith.addf %3, %6 : vector<16x256xf32>
    %c0_6 = arith.constant 0 : index
    %c0_7 = arith.constant 0 : index
    %8 = vector.load %arg7[%c0_6, %c0_7] : memref<16x256xf32, #tpu.memory_space<vmem>>, vector<16x256xf32>
    tpu.vector_store %arg7[%c0_6, %c0_7], %7 {strides = array<i32>} : memref<16x256xf32, #tpu.memory_space<vmem>>, vector<16x256xf32>,
    %c0_i32_8 = arith.constant 0 : i32
    %9 = arith.cmpi eq, %arg2, %c0_i32_8 : i32
    %10 = arith.extui %9 : i1 to i32
    %c0_i32_9 = arith.constant 0 : i32
    %11 = arith.cmpi ne, %10, %c0_i32_9 : i32
    scf.if %11 {
      %c0_10 = arith.constant 0 : index
      %c0_11 = arith.constant 0 : index
      %12 = vector.load %arg7[%c0_10, %c0_11] : memref<16x256xf32, #tpu.memory_space<vmem>>, vector<16x256xf32>
      %c0_12 = arith.constant 0 : index
      %c0_13 = arith.constant 0 : index
      %13 = vector.load %arg5[%c0_12, %c0_13] : memref<1x256xf32, #tpu.memory_space<vmem>>, vector<1x256xf32>
      %14 = vector.broadcast %13 : vector<1x256xf32> to vector<16x256xf32>
      %15 = arith.addf %12, %14 : vector<16x256xf32>
      %cst_14 = arith.constant 0.000000e+00 : f32
      %16 = vector.broadcast %cst_14 : f32 to vector<16x256xf32>
      %17 = arith.maximumf %15, %16 : vector<16x256xf32>
      %c0_15 = arith.constant 0 : index
      %c0_16 = arith.constant 0 : index
      %18 = vector.load %arg6[%c0_15, %c0_16] : memref<16x256xf32, #tpu.memory_space<vmem>>, vector<16x256xf32>
      tpu.vector_store %arg6[%c0_15, %c0_16], %17 {strides = array<i32>} : memref<16x256xf32, #tpu.memory_space<vmem>>, vector<16x256xf32>,
    } else {
    }
    return
  }
  func.func @transform_0(%arg0: i32, %arg1: i32, %arg2: i32) -> (i32, i32) {
    %c0_i32 = arith.constant 0 : i32
    return %arg0, %arg2 : i32, i32
  }
  func.func @transform_1(%arg0: i32, %arg1: i32, %arg2: i32) -> (i32, i32) {
    %c0_i32 = arith.constant 0 : i32
    return %arg2, %arg1 : i32, i32
  }
  func.func @transform_2(%arg0: i32, %arg1: i32, %arg2: i32) -> (i32, i32) {
    %c0_i32 = arith.constant 0 : i32
    %c0_i32_0 = arith.constant 0 : i32
    return %c0_i32, %arg1 : i32, i32
  }
  func.func @transform_3(%arg0: i32, %arg1: i32, %arg2: i32) -> (i32, i32) {
    %c0_i32 = arith.constant 0 : i32
    return %arg0, %arg1 : i32, i32
  }
}

module attributes {stable_mosaic.version = 11 : i64} {
  func.func @_linear_kernel(%arg0: i32, %arg1: i32, %arg2: i32, %arg3: memref<16x256xf32, #tpu.memory_space<vmem>>, %arg4: memref<256x128xf32, #tpu.memory_space<vmem>>, %arg5: memref<1x128xf32, #tpu.memory_space<vmem>>, %arg6: memref<16x128xf32, #tpu.memory_space<vmem>>, %arg7: memref<16x128xf32, #tpu.memory_space<vmem>>) attributes {dimension_semantics = [#tpu.dimension_semantics<parallel>, #tpu.dimension_semantics<parallel>, #tpu.dimension_semantics<arbitrary>], iteration_bounds = array<i64: 1, 1, 1>, scalar_prefetch = 0 : i64, scratch_operands = 1 : i64, tpu.core_type = #tpu.core_type<tc>, window_params = [{transform_indices = @transform_0, window_bounds = array<i64: 16, 256>}, {transform_indices = @transform_1, window_bounds = array<i64: 256, 128>}, {transform_indices = @transform_2, window_bounds = array<i64: 1, 128>}, {transform_indices = @transform_3, window_bounds = array<i64: 16, 128>}]} {
    %c0_i32 = arith.constant 0 : i32
    %0 = arith.cmpi eq, %arg2, %c0_i32 : i32
    %1 = arith.extui %0 : i1 to i32
    %c0_i32_0 = arith.constant 0 : i32
    %2 = arith.cmpi ne, %1, %c0_i32_0 : i32
    scf.if %2 {
      %cst_10 = arith.constant 0.000000e+00 : f32
      %12 = vector.broadcast %cst_10 : f32 to vector<16x128xf32>
      %c0_11 = arith.constant 0 : index
      %c0_12 = arith.constant 0 : index
      %13 = vector.load %arg7[%c0_11, %c0_12] : memref<16x128xf32, #tpu.memory_space<vmem>>, vector<16x128xf32>
      tpu.vector_store %arg7[%c0_11, %c0_12], %12 {strides = array<i32>} : memref<16x128xf32, #tpu.memory_space<vmem>>, vector<16x128xf32>,
    } else {
    }
    %c0 = arith.constant 0 : index
    %c0_1 = arith.constant 0 : index
    %3 = vector.load %arg7[%c0, %c0_1] : memref<16x128xf32, #tpu.memory_space<vmem>>, vector<16x128xf32>
    %c0_2 = arith.constant 0 : index
    %c0_3 = arith.constant 0 : index
    %4 = vector.load %arg3[%c0_2, %c0_3] : memref<16x256xf32, #tpu.memory_space<vmem>>, vector<16x256xf32>
    %c0_4 = arith.constant 0 : index
    %c0_5 = arith.constant 0 : index
    %5 = vector.load %arg4[%c0_4, %c0_5] : memref<256x128xf32, #tpu.memory_space<vmem>>, vector<256x128xf32>
    %cst = arith.constant dense<0.000000e+00> : vector<16x128xf32>
    %6 = tpu.matmul %4, %5, %cst {dimension_numbers = #tpu.dot_dimension_numbers<[1], [0], [0], [1], [0, 0, 1, 1], [], []>} : vector<16x256xf32>, vector<256x128xf32>, vector<16x128xf32> -> vector<16x128xf32>
    %7 = arith.addf %3, %6 : vector<16x128xf32>
    %c0_6 = arith.constant 0 : index
    %c0_7 = arith.constant 0 : index
    %8 = vector.load %arg7[%c0_6, %c0_7] : memref<16x128xf32, #tpu.memory_space<vmem>>, vector<16x128xf32>
    tpu.vector_store %arg7[%c0_6, %c0_7], %7 {strides = array<i32>} : memref<16x128xf32, #tpu.memory_space<vmem>>, vector<16x128xf32>,
    %c0_i32_8 = arith.constant 0 : i32
    %9 = arith.cmpi eq, %arg2, %c0_i32_8 : i32
    %10 = arith.extui %9 : i1 to i32
    %c0_i32_9 = arith.constant 0 : i32
    %11 = arith.cmpi ne, %10, %c0_i32_9 : i32
    scf.if %11 {
      %c0_10 = arith.constant 0 : index
      %c0_11 = arith.constant 0 : index
      %12 = vector.load %arg7[%c0_10, %c0_11] : memref<16x128xf32, #tpu.memory_space<vmem>>, vector<16x128xf32>
      %c0_12 = arith.constant 0 : index
      %c0_13 = arith.constant 0 : index
      %13 = vector.load %arg5[%c0_12, %c0_13] : memref<1x128xf32, #tpu.memory_space<vmem>>, vector<1x128xf32>
      %14 = vector.broadcast %13 : vector<1x128xf32> to vector<16x128xf32>
      %15 = arith.addf %12, %14 : vector<16x128xf32>
      %c0_14 = arith.constant 0 : index
      %c0_15 = arith.constant 0 : index
      %16 = vector.load %arg6[%c0_14, %c0_15] : memref<16x128xf32, #tpu.memory_space<vmem>>, vector<16x128xf32>
      tpu.vector_store %arg6[%c0_14, %c0_15], %15 {strides = array<i32>} : memref<16x128xf32, #tpu.memory_space<vmem>>, vector<16x128xf32>,
    } else {
    }
    return
  }
  func.func @transform_0(%arg0: i32, %arg1: i32, %arg2: i32) -> (i32, i32) {
    %c0_i32 = arith.constant 0 : i32
    return %arg0, %arg2 : i32, i32
  }
  func.func @transform_1(%arg0: i32, %arg1: i32, %arg2: i32) -> (i32, i32) {
    %c0_i32 = arith.constant 0 : i32
    return %arg2, %arg1 : i32, i32
  }
  func.func @transform_2(%arg0: i32, %arg1: i32, %arg2: i32) -> (i32, i32) {
    %c0_i32 = arith.constant 0 : i32
    %c0_i32_0 = arith.constant 0 : i32
    return %c0_i32, %arg1 : i32, i32
  }
  func.func @transform_3(%arg0: i32, %arg1: i32, %arg2: i32) -> (i32, i32) {
    %c0_i32 = arith.constant 0 : i32
    return %arg0, %arg1 : i32, i32
  }
}

module attributes {stable_mosaic.version = 11 : i64} {
  func.func @_linear_kernel(%arg0: i32, %arg1: i32, %arg2: i32, %arg3: memref<16x128xf32, #tpu.memory_space<vmem>>, %arg4: memref<128x128xf32, #tpu.memory_space<vmem>>, %arg5: memref<1x128xf32, #tpu.memory_space<vmem>>, %arg6: memref<16x128xf32, #tpu.memory_space<vmem>>, %arg7: memref<16x128xf32, #tpu.memory_space<vmem>>) attributes {dimension_semantics = [#tpu.dimension_semantics<parallel>, #tpu.dimension_semantics<parallel>, #tpu.dimension_semantics<arbitrary>], iteration_bounds = array<i64: 1, 1, 1>, scalar_prefetch = 0 : i64, scratch_operands = 1 : i64, tpu.core_type = #tpu.core_type<tc>, window_params = [{transform_indices = @transform_0, window_bounds = array<i64: 16, 128>}, {transform_indices = @transform_1, window_bounds = array<i64: 128, 128>}, {transform_indices = @transform_2, window_bounds = array<i64: 1, 128>}, {transform_indices = @transform_3, window_bounds = array<i64: 16, 128>}]} {
    %c0_i32 = arith.constant 0 : i32
    %0 = arith.cmpi eq, %arg2, %c0_i32 : i32
    %1 = arith.extui %0 : i1 to i32
    %c0_i32_0 = arith.constant 0 : i32
    %2 = arith.cmpi ne, %1, %c0_i32_0 : i32
    scf.if %2 {
      %cst_10 = arith.constant 0.000000e+00 : f32
      %12 = vector.broadcast %cst_10 : f32 to vector<16x128xf32>
      %c0_11 = arith.constant 0 : index
      %c0_12 = arith.constant 0 : index
      %13 = vector.load %arg7[%c0_11, %c0_12] : memref<16x128xf32, #tpu.memory_space<vmem>>, vector<16x128xf32>
      tpu.vector_store %arg7[%c0_11, %c0_12], %12 {strides = array<i32>} : memref<16x128xf32, #tpu.memory_space<vmem>>, vector<16x128xf32>,
    } else {
    }
    %c0 = arith.constant 0 : index
    %c0_1 = arith.constant 0 : index
    %3 = vector.load %arg7[%c0, %c0_1] : memref<16x128xf32, #tpu.memory_space<vmem>>, vector<16x128xf32>
    %c0_2 = arith.constant 0 : index
    %c0_3 = arith.constant 0 : index
    %4 = vector.load %arg3[%c0_2, %c0_3] : memref<16x128xf32, #tpu.memory_space<vmem>>, vector<16x128xf32>
    %c0_4 = arith.constant 0 : index
    %c0_5 = arith.constant 0 : index
    %5 = vector.load %arg4[%c0_4, %c0_5] : memref<128x128xf32, #tpu.memory_space<vmem>>, vector<128x128xf32>
    %cst = arith.constant dense<0.000000e+00> : vector<16x128xf32>
    %6 = tpu.matmul %4, %5, %cst {dimension_numbers = #tpu.dot_dimension_numbers<[1], [0], [0], [1], [0, 0, 1, 1], [], []>} : vector<16x128xf32>, vector<128x128xf32>, vector<16x128xf32> -> vector<16x128xf32>
    %7 = arith.addf %3, %6 : vector<16x128xf32>
    %c0_6 = arith.constant 0 : index
    %c0_7 = arith.constant 0 : index
    %8 = vector.load %arg7[%c0_6, %c0_7] : memref<16x128xf32, #tpu.memory_space<vmem>>, vector<16x128xf32>
    tpu.vector_store %arg7[%c0_6, %c0_7], %7 {strides = array<i32>} : memref<16x128xf32, #tpu.memory_space<vmem>>, vector<16x128xf32>,
    %c0_i32_8 = arith.constant 0 : i32
    %9 = arith.cmpi eq, %arg2, %c0_i32_8 : i32
    %10 = arith.extui %9 : i1 to i32
    %c0_i32_9 = arith.constant 0 : i32
    %11 = arith.cmpi ne, %10, %c0_i32_9 : i32
    scf.if %11 {
      %c0_10 = arith.constant 0 : index
      %c0_11 = arith.constant 0 : index
      %12 = vector.load %arg7[%c0_10, %c0_11] : memref<16x128xf32, #tpu.memory_space<vmem>>, vector<16x128xf32>
      %c0_12 = arith.constant 0 : index
      %c0_13 = arith.constant 0 : index
      %13 = vector.load %arg5[%c0_12, %c0_13] : memref<1x128xf32, #tpu.memory_space<vmem>>, vector<1x128xf32>
      %14 = vector.broadcast %13 : vector<1x128xf32> to vector<16x128xf32>
      %15 = arith.addf %12, %14 : vector<16x128xf32>
      %cst_14 = arith.constant 0.000000e+00 : f32
      %16 = vector.broadcast %cst_14 : f32 to vector<16x128xf32>
      %17 = arith.maximumf %15, %16 : vector<16x128xf32>
      %c0_15 = arith.constant 0 : index
      %c0_16 = arith.constant 0 : index
      %18 = vector.load %arg6[%c0_15, %c0_16] : memref<16x128xf32, #tpu.memory_space<vmem>>, vector<16x128xf32>
      tpu.vector_store %arg6[%c0_15, %c0_16], %17 {strides = array<i32>} : memref<16x128xf32, #tpu.memory_space<vmem>>, vector<16x128xf32>,
    } else {
    }
    return
  }
  func.func @transform_0(%arg0: i32, %arg1: i32, %arg2: i32) -> (i32, i32) {
    %c0_i32 = arith.constant 0 : i32
    return %arg0, %arg2 : i32, i32
  }
  func.func @transform_1(%arg0: i32, %arg1: i32, %arg2: i32) -> (i32, i32) {
    %c0_i32 = arith.constant 0 : i32
    return %arg2, %arg1 : i32, i32
  }
  func.func @transform_2(%arg0: i32, %arg1: i32, %arg2: i32) -> (i32, i32) {
    %c0_i32 = arith.constant 0 : i32
    %c0_i32_0 = arith.constant 0 : i32
    return %c0_i32, %arg1 : i32, i32
  }
  func.func @transform_3(%arg0: i32, %arg1: i32, %arg2: i32) -> (i32, i32) {
    %c0_i32 = arith.constant 0 : i32
    return %arg0, %arg1 : i32, i32
  }
}

module attributes {stable_mosaic.version = 11 : i64} {
  func.func @_linear_kernel(%arg0: i32, %arg1: i32, %arg2: i32, %arg3: memref<16x128xf32, #tpu.memory_space<vmem>>, %arg4: memref<128x256xf32, #tpu.memory_space<vmem>>, %arg5: memref<1x256xf32, #tpu.memory_space<vmem>>, %arg6: memref<16x256xf32, #tpu.memory_space<vmem>>, %arg7: memref<16x256xf32, #tpu.memory_space<vmem>>) attributes {dimension_semantics = [#tpu.dimension_semantics<parallel>, #tpu.dimension_semantics<parallel>, #tpu.dimension_semantics<arbitrary>], iteration_bounds = array<i64: 1, 1, 1>, scalar_prefetch = 0 : i64, scratch_operands = 1 : i64, tpu.core_type = #tpu.core_type<tc>, window_params = [{transform_indices = @transform_0, window_bounds = array<i64: 16, 128>}, {transform_indices = @transform_1, window_bounds = array<i64: 128, 256>}, {transform_indices = @transform_2, window_bounds = array<i64: 1, 256>}, {transform_indices = @transform_3, window_bounds = array<i64: 16, 256>}]} {
    %c0_i32 = arith.constant 0 : i32
    %0 = arith.cmpi eq, %arg2, %c0_i32 : i32
    %1 = arith.extui %0 : i1 to i32
    %c0_i32_0 = arith.constant 0 : i32
    %2 = arith.cmpi ne, %1, %c0_i32_0 : i32
    scf.if %2 {
      %cst_10 = arith.constant 0.000000e+00 : f32
      %12 = vector.broadcast %cst_10 : f32 to vector<16x256xf32>
      %c0_11 = arith.constant 0 : index
      %c0_12 = arith.constant 0 : index
      %13 = vector.load %arg7[%c0_11, %c0_12] : memref<16x256xf32, #tpu.memory_space<vmem>>, vector<16x256xf32>
      tpu.vector_store %arg7[%c0_11, %c0_12], %12 {strides = array<i32>} : memref<16x256xf32, #tpu.memory_space<vmem>>, vector<16x256xf32>,
    } else {
    }
    %c0 = arith.constant 0 : index
    %c0_1 = arith.constant 0 : index
    %3 = vector.load %arg7[%c0, %c0_1] : memref<16x256xf32, #tpu.memory_space<vmem>>, vector<16x256xf32>
    %c0_2 = arith.constant 0 : index
    %c0_3 = arith.constant 0 : index
    %4 = vector.load %arg3[%c0_2, %c0_3] : memref<16x128xf32, #tpu.memory_space<vmem>>, vector<16x128xf32>
    %c0_4 = arith.constant 0 : index
    %c0_5 = arith.constant 0 : index
    %5 = vector.load %arg4[%c0_4, %c0_5] : memref<128x256xf32, #tpu.memory_space<vmem>>, vector<128x256xf32>
    %cst = arith.constant dense<0.000000e+00> : vector<16x256xf32>
    %6 = tpu.matmul %4, %5, %cst {dimension_numbers = #tpu.dot_dimension_numbers<[1], [0], [0], [1], [0, 0, 1, 1], [], []>} : vector<16x128xf32>, vector<128x256xf32>, vector<16x256xf32> -> vector<16x256xf32>
    %7 = arith.addf %3, %6 : vector<16x256xf32>
    %c0_6 = arith.constant 0 : index
    %c0_7 = arith.constant 0 : index
    %8 = vector.load %arg7[%c0_6, %c0_7] : memref<16x256xf32, #tpu.memory_space<vmem>>, vector<16x256xf32>
    tpu.vector_store %arg7[%c0_6, %c0_7], %7 {strides = array<i32>} : memref<16x256xf32, #tpu.memory_space<vmem>>, vector<16x256xf32>,
    %c0_i32_8 = arith.constant 0 : i32
    %9 = arith.cmpi eq, %arg2, %c0_i32_8 : i32
    %10 = arith.extui %9 : i1 to i32
    %c0_i32_9 = arith.constant 0 : i32
    %11 = arith.cmpi ne, %10, %c0_i32_9 : i32
    scf.if %11 {
      %c0_10 = arith.constant 0 : index
      %c0_11 = arith.constant 0 : index
      %12 = vector.load %arg7[%c0_10, %c0_11] : memref<16x256xf32, #tpu.memory_space<vmem>>, vector<16x256xf32>
      %c0_12 = arith.constant 0 : index
      %c0_13 = arith.constant 0 : index
      %13 = vector.load %arg5[%c0_12, %c0_13] : memref<1x256xf32, #tpu.memory_space<vmem>>, vector<1x256xf32>
      %14 = vector.broadcast %13 : vector<1x256xf32> to vector<16x256xf32>
      %15 = arith.addf %12, %14 : vector<16x256xf32>
      %16 = math.tanh %15 : vector<16x256xf32>
      %c0_14 = arith.constant 0 : index
      %c0_15 = arith.constant 0 : index
      %17 = vector.load %arg6[%c0_14, %c0_15] : memref<16x256xf32, #tpu.memory_space<vmem>>, vector<16x256xf32>
      tpu.vector_store %arg6[%c0_14, %c0_15], %16 {strides = array<i32>} : memref<16x256xf32, #tpu.memory_space<vmem>>, vector<16x256xf32>,
    } else {
    }
    return
  }
  func.func @transform_0(%arg0: i32, %arg1: i32, %arg2: i32) -> (i32, i32) {
    %c0_i32 = arith.constant 0 : i32
    return %arg0, %arg2 : i32, i32
  }
  func.func @transform_1(%arg0: i32, %arg1: i32, %arg2: i32) -> (i32, i32) {
    %c0_i32 = arith.constant 0 : i32
    return %arg2, %arg1 : i32, i32
  }
  func.func @transform_2(%arg0: i32, %arg1: i32, %arg2: i32) -> (i32, i32) {
    %c0_i32 = arith.constant 0 : i32
    %c0_i32_0 = arith.constant 0 : i32
    return %c0_i32, %arg1 : i32, i32
  }
  func.func @transform_3(%arg0: i32, %arg1: i32, %arg2: i32) -> (i32, i32) {
    %c0_i32 = arith.constant 0 : i32
    return %arg0, %arg1 : i32, i32
  }
}

</mosaic_0001>

<llo_original>
// kernel: _lambda_.47
$region0: #{_lambda_.47}
  #allocation0 [shape = 'u32[]', space=smem, size = 0x4, offset = 0x4, fixed_abs, tag = 'smem constant byte address 0x4 - core index']
  #allocation1 [shape = 'u32[144,128]{1,0:T(1,128)}', space=vmem, size = 0x12000, scoped, tag = 'internal scratch']
  #allocation2 [shape = 'f32[1,64,1]{2,1,0:T(8,128)}', space=vmem, size = 0x8000, scoped, tag = 'scratch operand']
  #allocation3 [shape = 'f32[1,64,1]{2,1,0:T(8,128)}', space=vmem, size = 0x8000, scoped, tag = 'scratch operand']
  #allocation4 [shape = 'f32[1,64,16]{2,1,0:T(8,128)}', space=vmem, size = 0x8000, scoped, tag = 'scratch operand']
  %s0 = inlined_call_operand.vmem [shape: f32[16,64,16], index: 0, kind: input, shape index: {}]
  %s1 = inlined_call_operand.vmem [shape: f32[16,64,16], index: 1, kind: input, shape index: {}]
  %s2 = inlined_call_operand.vmem [shape: f32[16,64,16], index: 2, kind: input, shape index: {}]
  %s3 = inlined_call_operand.vmem [shape: f32[16,64,16], index: 3, kind: output, shape index: {}]
  %s4 = sld [smem:[#allocation0]]
  $region53: #{_lambda_.47} parent=0
    _
  %s6 = ssub.s32 1, %s4
  %s7 = scalar_select 0, %s6, %s4
  loop: start=0, step=1, limit=18
  $region2: #{_lambda_.47} parent=0 // loop_pre_header
    _
  $region3: #{_lambda_.47} parent=0 // loop_header
    %s9 = sphi 0, %s13
    %p10 = scmp.ge.s32.totalorder %s9, 18
    %s16 = sphi 0, %s35
    %s17 = sphi 0, %s31
    %s18 = sphi 0, %s27
    %s19 = sphi 0, %s16
    %s20 = sphi 0, %s17
    %s21 = sphi 0, %s18
    %s22 = sphi 0, %s19
    %s23 = sphi 0, %s20
    %s24 = sphi 0, %s21
    %s40 = sphi 0, %s42
    %s43 = sphi 0, %s40
    %s44 = sphi 0, %s43
    %s60 = sphi 0, %s44
    %s68 = sphi 0, %s70
    %s71 = sphi 0, %s68
    %s72 = sphi 0, %s71
    %s88 = sphi 0, %s72
    %s96 = sphi 0, %s98
    %s99 = sphi 0, %s96
    %s100 = sphi 0, %s99
    %s116 = sphi 0, %s100
    %s124 = sphi 0, %s126
    %s127 = sphi 0, %s124
    %s128 = sphi 0, %s127
    %s144 = sphi 0, %s128
  $region4: #{_lambda_.47} parent=0 // loop_header_branch
    %12 = sbr.rel (%p10) target = $region8
  $region5: #{_lambda_.47} parent=0 // loop_body
    %s14 = ssub.s32 %s9, 1
    %s15 = ssub.s32 %s9, 2
    %s25 = sadd.s32 1, %s18
    %p26 = scmp.ge.s32.totalorder %s25, 1
    %s27 = scalar_select %p26, 0, %s25
    %s28 = sadd.s32 1, %s17
    %s29 = scalar_select %p26, %s28, %s17
    %p30 = scmp.ge.s32.totalorder %s29, 1
    %s31 = scalar_select %p30, 0, %s29
    %s32 = sadd.s32 1, %s16
    %s33 = scalar_select %p30, %s32, %s16
    %p34 = scmp.ge.s32.totalorder %s33, 16
    %s35 = scalar_select %p34, 0, %s33
    %s36 = ssub.s32 %s16, %s35
    %s37 = ssub.s32 %s17, %s31
    %s38 = sor.u32 %s36, %s37
    %p39 = scmp.eq.s32.totalorder %s38, 0
    %s41 = sadd.s32 %s40, 1
    %s42 = scalar_select %p39, %s40, %s41
    %p45 = pneg %p39
    %p46 = scmp.eq.s32.totalorder %s9, 15
    %p47 = por %p45, %p46
    %p48 = scmp.ne.s32.totalorder %s40, %s43
    %p49 = scmp.eq.s32.totalorder %s9, 0
    %p50 = por %p48, %p49
    %p51 = scmp.ne.s32.totalorder %s40, %s43
    %p52 = scmp.eq.s32.totalorder %s14, 15
    %p53 = por %p51, %p52
    %p54 = scmp.ne.s32.totalorder %s43, %s44
    %p55 = scmp.eq.s32.totalorder %s14, 0
    %p56 = por %p54, %p55
    %p57 = scmp.ne.s32.totalorder %s43, %s44
    %p58 = scmp.eq.s32.totalorder %s15, 15
    %p59 = por %p57, %p58
    %p61 = scmp.ne.s32.totalorder %s44, %s60
    %p62 = scmp.eq.s32.totalorder %s15, 0
    %p63 = por %p61, %p62
    %s64 = ssub.s32 %s16, %s35
    %s65 = ssub.s32 %s18, %s27
    %s66 = sor.u32 %s64, %s65
    %p67 = scmp.eq.s32.totalorder %s66, 0
    %s69 = sadd.s32 %s68, 1
    %s70 = scalar_select %p67, %s68, %s69
    %p73 = pneg %p67
    %p74 = scmp.eq.s32.totalorder %s9, 15
    %p75 = por %p73, %p74
    %p76 = scmp.ne.s32.totalorder %s68, %s71
    %p77 = scmp.eq.s32.totalorder %s9, 0
    %p78 = por %p76, %p77
    %p79 = scmp.ne.s32.totalorder %s68, %s71
    %p80 = scmp.eq.s32.totalorder %s14, 15
    %p81 = por %p79, %p80
    %p82 = scmp.ne.s32.totalorder %s71, %s72
    %p83 = scmp.eq.s32.totalorder %s14, 0
    %p84 = por %p82, %p83
    %p85 = scmp.ne.s32.totalorder %s71, %s72
    %p86 = scmp.eq.s32.totalorder %s15, 15
    %p87 = por %p85, %p86
    %p89 = scmp.ne.s32.totalorder %s72, %s88
    %p90 = scmp.eq.s32.totalorder %s15, 0
    %p91 = por %p89, %p90
    %s92 = ssub.s32 %s16, %s35
    %s93 = ssub.s32 %s18, %s27
    %s94 = sor.u32 %s92, %s93
    %p95 = scmp.eq.s32.totalorder %s94, 0
    %s97 = sadd.s32 %s96, 1
    %s98 = scalar_select %p95, %s96, %s97
    %p101 = pneg %p95
    %p102 = scmp.eq.s32.totalorder %s9, 15
    %p103 = por %p101, %p102
    %p104 = scmp.ne.s32.totalorder %s96, %s99
    %p105 = scmp.eq.s32.totalorder %s9, 0
    %p106 = por %p104, %p105
    %p107 = scmp.ne.s32.totalorder %s96, %s99
    %p108 = scmp.eq.s32.totalorder %s14, 15
    %p109 = por %p107, %p108
    %p110 = scmp.ne.s32.totalorder %s99, %s100
    %p111 = scmp.eq.s32.totalorder %s14, 0
    %p112 = por %p110, %p111
    %p113 = scmp.ne.s32.totalorder %s99, %s100
    %p114 = scmp.eq.s32.totalorder %s15, 15
    %p115 = por %p113, %p114
    %p117 = scmp.ne.s32.totalorder %s100, %s116
    %p118 = scmp.eq.s32.totalorder %s15, 0
    %p119 = por %p117, %p118
    %s120 = ssub.s32 %s16, %s35
    %s121 = ssub.s32 %s17, %s31
    %s122 = sor.u32 %s120, %s121
    %p123 = scmp.eq.s32.totalorder %s122, 0
    %s125 = sadd.s32 %s124, 1
    %s126 = scalar_select %p123, %s124, %s125
    %p129 = pneg %p123
    %p130 = scmp.eq.s32.totalorder %s9, 15
    %p131 = por %p129, %p130
    %p132 = scmp.ne.s32.totalorder %s124, %s127
    %p133 = scmp.eq.s32.totalorder %s9, 0
    %p134 = por %p132, %p133
    %p135 = scmp.ne.s32.totalorder %s124, %s127
    %p136 = scmp.eq.s32.totalorder %s14, 15
    %p137 = por %p135, %p136
    %p138 = scmp.ne.s32.totalorder %s127, %s128
    %p139 = scmp.eq.s32.totalorder %s14, 0
    %p140 = por %p138, %p139
    %p141 = scmp.ne.s32.totalorder %s127, %s128
    %p142 = scmp.eq.s32.totalorder %s15, 15
    %p143 = por %p141, %p142
    %p145 = scmp.ne.s32.totalorder %s128, %s144
    %p146 = scmp.eq.s32.totalorder %s15, 0
    %p147 = por %p145, %p146
    %p148 = scmp.le.s32.totalorder 1, %s9
    %p149 = scmp.lt.s32.totalorder %s9, 17
    %p150 = pnand %p148, %p149
    %p151 = pneg %p150
    // Predicated region
    $region9: #{_lambda_.47} parent=5 // pred_check
      _
    $region10: #{_lambda_.47} parent=5 // pred_check_branch
      %153 = sbr.rel (%p150) target = $region12
    $region11: #{_lambda_.47} parent=5 // pred_region
      %s154 = ssub.s32 %s9, 1
    $region12: #{_lambda_.47} parent=5 // pred_fallthru
      _
    %p155 = scmp.lt.s32.totalorder %s9, 16
    // Predicated region
    $region13: #{_lambda_.47} parent=5 // pred_check
      %p156 = pneg %p155
    $region14: #{_lambda_.47} parent=5 // pred_check_branch
      %158 = sbr.rel (%p156) target = $region16
    $region15: #{_lambda_.47} parent=5 // pred_region
      // Predicated region
      $region17: #{_lambda_.47} parent=15 // pred_check
        %p159 = pneg %p50
      $region18: #{_lambda_.47} parent=15 // pred_check_branch
        %161 = sbr.rel (%p159) target = $region20
      $region19: #{_lambda_.47} parent=15 // pred_region
        %s162 = smul.u32 8, %s17
        %p163 = scmp.lt.s32.totalorder %s16, 15
        %s164 = scalar_select %p163, %s16, 15
        %p165 = scmp.lt.s32.totalorder %s162, 7
        %s166 = scalar_select %p165, %s162, 7
        %s167 = smul.addr %s164, 8
        %s168 = sadd.s32 %s166, %s167
        %s169 = smul.addr %s168, 8
        %s170 = scalar_lea.vmem %s0, %s169
        %s171 = smul.u32 8, %s17
      $region20: #{_lambda_.47} parent=15 // pred_fallthru
        _
      // Predicated region
      $region21: #{_lambda_.47} parent=15 // pred_check
        %p172 = pneg %p78
      $region22: #{_lambda_.47} parent=15 // pred_check_branch
        %174 = sbr.rel (%p172) target = $region24
      $region23: #{_lambda_.47} parent=15 // pred_region
        %s175 = smul.u32 8, %s18
        %p176 = scmp.lt.s32.totalorder %s16, 15
        %s177 = scalar_select %p176, %s16, 15
        %p178 = scmp.lt.s32.totalorder %s175, 7
        %s179 = scalar_select %p178, %s175, 7
        %s180 = smul.addr %s177, 8
        %s181 = sadd.s32 %s179, %s180
        %s182 = smul.addr %s181, 8
        %s183 = scalar_lea.vmem %s1, %s182
        %s184 = smul.u32 8, %s18
      $region24: #{_lambda_.47} parent=15 // pred_fallthru
        _
      // Predicated region
      $region25: #{_lambda_.47} parent=15 // pred_check
        %p185 = pneg %p106
      $region26: #{_lambda_.47} parent=15 // pred_check_branch
        %187 = sbr.rel (%p185) target = $region28
      $region27: #{_lambda_.47} parent=15 // pred_region
        %s188 = smul.u32 8, %s18
        %p189 = scmp.lt.s32.totalorder %s16, 15
        %s190 = scalar_select %p189, %s16, 15
        %p191 = scmp.lt.s32.totalorder %s188, 7
        %s192 = scalar_select %p191, %s188, 7
        %s193 = smul.addr %s190, 8
        %s194 = sadd.s32 %s192, %s193
        %s195 = smul.addr %s194, 8
        %s196 = scalar_lea.vmem %s2, %s195
        %s197 = smul.u32 8, %s18
      $region28: #{_lambda_.47} parent=15 // pred_fallthru
        _
    $region16: #{_lambda_.47} parent=5 // pred_fallthru
      _
    %p198 = scmp.le.s32.totalorder 1, %s9
    %p199 = scmp.lt.s32.totalorder %s9, 17
    %p200 = pnand %p198, %p199
    %p201 = pneg %p200
    // Predicated region
    $region29: #{_lambda_.47} parent=5 // pred_check
      _
    $region30: #{_lambda_.47} parent=5 // pred_check_branch
      %203 = sbr.rel (%p200) target = $region32
    $region31: #{_lambda_.47} parent=5 // pred_region
      %s204 = ssub.s32 %s9, 1
      %s205 = smul.u32 8, %s20
      %p206 = scmp.lt.s32.totalorder %s19, 15
      %s207 = scalar_select %p206, %s19, 15
      %p208 = scmp.lt.s32.totalorder %s205, 7
      %s209 = scalar_select %p208, %s205, 7
      %s210 = smul.addr %s207, 8
      %s211 = sadd.s32 %s209, %s210
      %s212 = smul.addr %s211, 8
      %s213 = scalar_lea.vmem %s0, %s212
      %p214 = pneg %p56
      %p215 = pneg %p53
      %s216 = smul.u32 8, %s21
      %p217 = scmp.lt.s32.totalorder %s19, 15
      %s218 = scalar_select %p217, %s19, 15
      %p219 = scmp.lt.s32.totalorder %s216, 7
      %s220 = scalar_select %p219, %s216, 7
      %s221 = smul.addr %s218, 8
      %s222 = sadd.s32 %s220, %s221
      %s223 = smul.addr %s222, 8
      %s224 = scalar_lea.vmem %s1, %s223
      %p225 = pneg %p84
      %p226 = pneg %p81
      %s227 = smul.u32 8, %s21
      %p228 = scmp.lt.s32.totalorder %s19, 15
      %s229 = scalar_select %p228, %s19, 15
      %p230 = scmp.lt.s32.totalorder %s227, 7
      %s231 = scalar_select %p230, %s227, 7
      %s232 = smul.addr %s229, 8
      %s233 = sadd.s32 %s231, %s232
      %s234 = smul.addr %s233, 8
      %s235 = scalar_lea.vmem %s2, %s234
      %p236 = pneg %p112
      %p237 = pneg %p109
      %p238 = pneg %p140
      %p239 = pneg %p137
      %s240 = smul.u32 8, %s20
      %p241 = scmp.lt.s32.totalorder %s19, 15
      %s242 = scalar_select %p241, %s19, 15
      %p243 = scmp.lt.s32.totalorder %s240, 7
      %s244 = scalar_select %p243, %s240, 7
      %s245 = smul.addr %s242, 8
      %s246 = sadd.s32 %s244, %s245
      %s247 = smul.addr %s246, 8
      %s248 = scalar_lea.vmem %s3, %s247
      %s249 = smul.u32 8, %s20
      %p250 = scmp.lt.s32.totalorder %s19, 15
      %s251 = scalar_select %p250, %s19, 15
      %p252 = scmp.lt.s32.totalorder %s249, 7
      %s253 = scalar_select %p252, %s249, 7
      %s254 = smul.addr %s251, 8
      %s255 = sadd.s32 %s253, %s254
      %s256 = smul.addr %s255, 8
      %s257 = scalar_lea.vmem %s0, %s256
      %s258 = smul.u32 8, %s20
      %s259 = smul.u32 8, %s21
      %p260 = scmp.lt.s32.totalorder %s19, 15
      %s261 = scalar_select %p260, %s19, 15
      %p262 = scmp.lt.s32.totalorder %s259, 7
      %s263 = scalar_select %p262, %s259, 7
      %s264 = smul.addr %s261, 8
      %s265 = sadd.s32 %s263, %s264
      %s266 = smul.addr %s265, 8
      %s267 = scalar_lea.vmem %s1, %s266
      %s268 = smul.u32 8, %s21
      %s269 = smul.u32 8, %s21
      %p270 = scmp.lt.s32.totalorder %s19, 15
      %s271 = scalar_select %p270, %s19, 15
      %p272 = scmp.lt.s32.totalorder %s269, 7
      %s273 = scalar_select %p272, %s269, 7
      %s274 = smul.addr %s271, 8
      %s275 = sadd.s32 %s273, %s274
      %s276 = smul.addr %s275, 8
      %s277 = scalar_lea.vmem %s2, %s276
      %s278 = smul.u32 8, %s21
      %s279 = smul.u32 8, %s20
      %p280 = scmp.lt.s32.totalorder %s19, 15
      %s281 = scalar_select %p280, %s19, 15
      %p282 = scmp.lt.s32.totalorder %s279, 7
      %s283 = scalar_select %p282, %s279, 7
      %s284 = smul.addr %s281, 8
      %s285 = sadd.s32 %s283, %s284
      %s286 = smul.addr %s285, 8
      %s287 = scalar_lea.vmem %s3, %s286
      %s288 = smul.u32 8, %s20
      %p289 = scmp.eq.s32.totalorder %s21, 0
      // Predicated region
      $region33: #{_lambda_.47} parent=31 // pred_check
        %p290 = pneg %p289
      $region34: #{_lambda_.47} parent=31 // pred_check_branch
        %292 = sbr.rel (%p290) target = $region36
      $region35: #{_lambda_.47} parent=31 // pred_region
        %vm293 = vcmask 7168
        %294 = vst.msk [vmem:[#allocation2] sm:$0xff] %vm293, -inf
        %295 = vst.msk [vmem:[#allocation2 + $0x8] sm:$0xff] %vm293, -inf
        %296 = vst.msk [vmem:[#allocation2 + $0x10] sm:$0xff] %vm293, -inf
        %297 = vst.msk [vmem:[#allocation2 + $0x18] sm:$0xff] %vm293, -inf
        %298 = vst.msk [vmem:[#allocation2 + $0x20] sm:$0xff] %vm293, -inf
        %299 = vst.msk [vmem:[#allocation2 + $0x28] sm:$0xff] %vm293, -inf
        %300 = vst.msk [vmem:[#allocation2 + $0x30] sm:$0xff] %vm293, -inf
        %301 = vst.msk [vmem:[#allocation2 + $0x38] sm:$0xff] %vm293, -inf
        %302 = vst.msk [vmem:[#allocation3] sm:$0xff] %vm293, 0.0
        %303 = vst.msk [vmem:[#allocation3 + $0x8] sm:$0xff] %vm293, 0.0
        %304 = vst.msk [vmem:[#allocation3 + $0x10] sm:$0xff] %vm293, 0.0
        %305 = vst.msk [vmem:[#allocation3 + $0x18] sm:$0xff] %vm293, 0.0
        %306 = vst.msk [vmem:[#allocation3 + $0x20] sm:$0xff] %vm293, 0.0
        %307 = vst.msk [vmem:[#allocation3 + $0x28] sm:$0xff] %vm293, 0.0
        %308 = vst.msk [vmem:[#allocation3 + $0x30] sm:$0xff] %vm293, 0.0
        %309 = vst.msk [vmem:[#allocation3 + $0x38] sm:$0xff] %vm293, 0.0
        %vm310 = vcmask 130048
        %311 = vst.msk [vmem:[#allocation4] sm:$0xff] %vm310, 0.0
        %312 = vst.msk [vmem:[#allocation4 + $0x8] sm:$0xff] %vm310, 0.0
        %313 = vst.msk [vmem:[#allocation4 + $0x10] sm:$0xff] %vm310, 0.0
        %314 = vst.msk [vmem:[#allocation4 + $0x18] sm:$0xff] %vm310, 0.0
        %315 = vst.msk [vmem:[#allocation4 + $0x20] sm:$0xff] %vm310, 0.0
        %316 = vst.msk [vmem:[#allocation4 + $0x28] sm:$0xff] %vm310, 0.0
        %317 = vst.msk [vmem:[#allocation4 + $0x30] sm:$0xff] %vm310, 0.0
        %318 = vst.msk [vmem:[#allocation4 + $0x38] sm:$0xff] %vm310, 0.0
      $region36: #{_lambda_.47} parent=31 // pred_fallthru
        _
      %v319 = vld [vmem:[%s257] sm:$0xff]
      %v320 = vld [vmem:[%s257 + $0x8] sm:$0xff]
      %v321 = vld [vmem:[%s257 + $0x10] sm:$0xff]
      %v322 = vld [vmem:[%s257 + $0x18] sm:$0xff]
      %v323 = vld [vmem:[%s257 + $0x20] sm:$0xff]
      %v324 = vld [vmem:[%s257 + $0x28] sm:$0xff]
      %v325 = vld [vmem:[%s257 + $0x30] sm:$0xff]
      %v326 = vld [vmem:[%s257 + $0x38] sm:$0xff]
      %v327 = vld [vmem:[%s267] sm:$0xff]
      %v328 = vld [vmem:[%s267 + $0x8] sm:$0xff]
      %v329 = vld [vmem:[%s267 + $0x10] sm:$0xff]
      %v330 = vld [vmem:[%s267 + $0x18] sm:$0xff]
      %v331 = vld [vmem:[%s267 + $0x20] sm:$0xff]
      %v332 = vld [vmem:[%s267 + $0x28] sm:$0xff]
      %v333 = vld [vmem:[%s267 + $0x30] sm:$0xff]
      %v334 = vld [vmem:[%s267 + $0x38] sm:$0xff]
      %v335 = vld [vmem:[%s277] sm:$0xff]
      %v336 = vld [vmem:[%s277 + $0x8] sm:$0xff]
      %v337 = vld [vmem:[%s277 + $0x10] sm:$0xff]
      %v338 = vld [vmem:[%s277 + $0x18] sm:$0xff]
      %v339 = vld [vmem:[%s277 + $0x20] sm:$0xff]
      %v340 = vld [vmem:[%s277 + $0x28] sm:$0xff]
      %v341 = vld [vmem:[%s277 + $0x30] sm:$0xff]
      %v342 = vld [vmem:[%s277 + $0x38] sm:$0xff]
      %vm343 = vcmask 130048
      %v345 = vsel %vm343, %v319, 0
      %v348 = vsel %vm343, %v320, 0
      %v351 = vsel %vm343, %v321, 0
      %v354 = vsel %vm343, %v322, 0
      %v357 = vsel %vm343, %v323, 0
      %v360 = vsel %vm343, %v324, 0
      %v363 = vsel %vm343, %v325, 0
      %v366 = vsel %vm343, %v326, 0
      %v369 = vsel %vm343, %v327, 0
      %v372 = vsel %vm343, %v328, 0
      %v375 = vsel %vm343, %v329, 0
      %v378 = vsel %vm343, %v330, 0
      %v381 = vsel %vm343, %v331, 0
      %v384 = vsel %vm343, %v332, 0
      %v387 = vsel %vm343, %v333, 0
      %v390 = vsel %vm343, %v334, 0
      %392 = vmatprep.subr.mxu0 0.0
      %393 = vmatpush1.xpose.msra.mxu0 %v369
      %394 = vmatprep.subr.mxu0 0.0
      %395 = vmatpush1.xpose.msra.mxu0 %v372
      %396 = vmatprep.subr.mxu0 0.0
      %397 = vmatpush1.xpose.msra.mxu0 %v375
      %398 = vmatprep.subr.mxu0 0.0
      %399 = vmatpush1.xpose.msra.mxu0 %v378
      %400 = vmatprep.subr.mxu0 0.0
      %401 = vmatpush1.xpose.msra.mxu0 %v381
      %402 = vmatprep.subr.mxu0 0.0
      %403 = vmatpush1.xpose.msra.mxu0 %v384
      %404 = vmatprep.subr.mxu0 0.0
      %405 = vmatpush1.xpose.msra.mxu0 %v387
      %406 = vmatprep.subr.mxu0 0.0
      %407 = vmatpush1.xpose.msra.mxu0 %v390
      %408 = vmatprep.subr.mxu0 0.0
      %409 = vmatpush1.xpose.msra.mxu0 0.0
      %410 = vmatprep.subr.mxu0 0.0
      %411 = vmatpush1.xpose.msra.mxu0 0.0
      %412 = vmatprep.subr.mxu0 0.0
      %413 = vmatpush1.xpose.msra.mxu0 0.0
      %414 = vmatprep.subr.mxu0 0.0
      %415 = vmatpush1.xpose.msra.mxu0 0.0
      %416 = vmatprep.subr.mxu0 0.0
      %417 = vmatpush1.xpose.msra.mxu0 0.0
      %418 = vmatprep.subr.mxu0 0.0
      %419 = vmatpush1.xpose.msra.mxu0 0.0
      %420 = vmatprep.subr.mxu0 0.0
      %421 = vmatpush1.xpose.msra.mxu0 0.0
      %422 = vmatprep.subr.mxu0 0.0
      %423 = vmatpush1.xpose.msra.mxu0 0.0
      %424 = vmatprep.subr.mxu0 0.0
      %425 = vmatpush1.xpose.msra.mxu0 0.0
      %426 = vmatprep.subr.mxu0 0.0
      %427 = vmatpush1.xpose.msra.mxu0 0.0
      %428 = vmatprep.subr.mxu0 0.0
      %429 = vmatpush1.xpose.msra.mxu0 0.0
      %430 = vmatprep.subr.mxu0 0.0
      %431 = vmatpush1.xpose.msra.mxu0 0.0
      %432 = vmatprep.subr.mxu0 0.0
      %433 = vmatpush1.xpose.msra.mxu0 0.0
      %434 = vmatprep.subr.mxu0 0.0
      %435 = vmatpush1.xpose.msra.mxu0 0.0
      %436 = vmatprep.subr.mxu0 0.0
      %437 = vmatpush1.xpose.msra.mxu0 0.0
      %438 = vmatprep.subr.mxu0 0.0
      %439 = vmatpush1.xpose.msra.mxu0 0.0
      %440 = vmatprep.subr.mxu0 0.0
      %441 = vmatpush1.xpose.msra.mxu0 0.0
      %442 = vmatprep.subr.mxu0 0.0
      %443 = vmatpush1.xpose.msra.mxu0 0.0
      %444 = vmatprep.subr.mxu0 0.0
      %445 = vmatpush1.xpose.msra.mxu0 0.0
      %446 = vmatprep.subr.mxu0 0.0
      %447 = vmatpush1.xpose.msra.mxu0 0.0
      %448 = vmatprep.subr.mxu0 0.0
      %449 = vmatpush1.xpose.msra.mxu0 0.0
      %450 = vmatprep.subr.mxu0 0.0
      %451 = vmatpush1.xpose.msra.mxu0 0.0
      %452 = vmatprep.subr.mxu0 0.0
      %453 = vmatpush1.xpose.msra.mxu0 0.0
      %454 = vmatprep.subr.mxu0 0.0
      %455 = vmatpush1.xpose.msra.mxu0 0.0
      %456 = vmatprep.mubr.f32.mxu0 0.0
      %457 = vmatmul.mubr.f32.gmra.mrb[0].mxu0 %v345
      %v458 = vpop.f32.mrb[0].mxu0
      %v459 = vadd.f32 0.0, %v458
      %v460 = vpop.f32.mrb[0].mxu0
      %461 = vmatprep.mubr.f32.mxu0 0.0
      %462 = vmatmul.mubr.f32.gmra.mrb[0].mxu0 %v348
      %v463 = vpop.f32.mrb[0].mxu0
      %v464 = vadd.f32 0.0, %v463
      %v465 = vpop.f32.mrb[0].mxu0
      %466 = vmatprep.mubr.f32.mxu0 0.0
      %467 = vmatmul.mubr.f32.gmra.mrb[0].mxu0 %v351
      %v468 = vpop.f32.mrb[0].mxu0
      %v469 = vadd.f32 0.0, %v468
      %v470 = vpop.f32.mrb[0].mxu0
      %471 = vmatprep.mubr.f32.mxu0 0.0
      %472 = vmatmul.mubr.f32.gmra.mrb[0].mxu0 %v354
      %v473 = vpop.f32.mrb[0].mxu0
      %v474 = vadd.f32 0.0, %v473
      %v475 = vpop.f32.mrb[0].mxu0
      %476 = vmatprep.mubr.f32.mxu0 0.0
      %477 = vmatmul.mubr.f32.gmra.mrb[0].mxu0 %v357
      %v478 = vpop.f32.mrb[0].mxu0
      %v479 = vadd.f32 0.0, %v478
      %v480 = vpop.f32.mrb[0].mxu0
      %481 = vmatprep.mubr.f32.mxu0 0.0
      %482 = vmatmul.mubr.f32.gmra.mrb[0].mxu0 %v360
      %v483 = vpop.f32.mrb[0].mxu0
      %v484 = vadd.f32 0.0, %v483
      %v485 = vpop.f32.mrb[0].mxu0
      %486 = vmatprep.mubr.f32.mxu0 0.0
      %487 = vmatmul.mubr.f32.gmra.mrb[0].mxu0 %v363
      %v488 = vpop.f32.mrb[0].mxu0
      %v489 = vadd.f32 0.0, %v488
      %v490 = vpop.f32.mrb[0].mxu0
      %491 = vmatprep.mubr.f32.mxu0 0.0
      %492 = vmatmul.mubr.f32.gmra.mrb[0].mxu0 %v366
      %v493 = vpop.f32.mrb[0].mxu0
      %v494 = vadd.f32 0.0, %v493
      %v495 = vpop.f32.mrb[0].mxu0
      %496 = vdwg.mxu0
      %v497 = vmul.f32 %v459, 0.25
      %v498 = vmul.f32 %v464, 0.25
      %v499 = vmul.f32 %v469, 0.25
      %v500 = vmul.f32 %v474, 0.25
      %v501 = vmul.f32 %v479, 0.25
      %v502 = vmul.f32 %v484, 0.25
      %v503 = vmul.f32 %v489, 0.25
      %v504 = vmul.f32 %v494, 0.25
      %v505 = vld [vmem:[#allocation2] sm:$0xff]
      %v506 = vld [vmem:[#allocation2 + $0x8] sm:$0xff]
      %v507 = vld [vmem:[#allocation2 + $0x10] sm:$0xff]
      %v508 = vld [vmem:[#allocation2 + $0x18] sm:$0xff]
      %v509 = vld [vmem:[#allocation2 + $0x20] sm:$0xff]
      %v510 = vld [vmem:[#allocation2 + $0x28] sm:$0xff]
      %v511 = vld [vmem:[#allocation2 + $0x30] sm:$0xff]
      %v512 = vld [vmem:[#allocation2 + $0x38] sm:$0xff]
      %vm513 = vcmask 523264
      %v514 = vsel %vm513, %v497, -inf
      %515 = vmax.xlane.f32.xlu0 %v514
      %v516 = vpop.xlane.xlu0 %515
      %v517 = vsel %vm513, %v498, -inf
      %518 = vmax.xlane.f32.xlu0 %v517
      %v519 = vpop.xlane.xlu0 %518
      %v520 = vsel %vm513, %v499, -inf
      %521 = vmax.xlane.f32.xlu0 %v520
      %v522 = vpop.xlane.xlu0 %521
      %v523 = vsel %vm513, %v500, -inf
      %524 = vmax.xlane.f32.xlu0 %v523
      %v525 = vpop.xlane.xlu0 %524
      %v526 = vsel %vm513, %v501, -inf
      %527 = vmax.xlane.f32.xlu0 %v526
      %v528 = vpop.xlane.xlu0 %527
      %v529 = vsel %vm513, %v502, -inf
      %530 = vmax.xlane.f32.xlu0 %v529
      %v531 = vpop.xlane.xlu0 %530
      %v532 = vsel %vm513, %v503, -inf
      %533 = vmax.xlane.f32.xlu0 %v532
      %v534 = vpop.xlane.xlu0 %533
      %v535 = vsel %vm513, %v504, -inf
      %536 = vmax.xlane.f32.xlu0 %v535
      %v537 = vpop.xlane.xlu0 %536
      %v538 = vmax.f32 %v505, %v516
      %v539 = vmax.f32 %v506, %v519
      %v540 = vmax.f32 %v507, %v522
      %v541 = vmax.f32 %v508, %v525
      %v542 = vmax.f32 %v509, %v528
      %v543 = vmax.f32 %v510, %v531
      %v544 = vmax.f32 %v511, %v534
      %v545 = vmax.f32 %v512, %v537
      %v546 = vsub.f32 %v505, %v538
      %v547 = vsub.f32 %v506, %v539
      %v548 = vsub.f32 %v507, %v540
      %v549 = vsub.f32 %v508, %v541
      %v550 = vsub.f32 %v509, %v542
      %v551 = vsub.f32 %v510, %v543
      %v552 = vsub.f32 %v511, %v544
      %v553 = vsub.f32 %v512, %v545
      %v554 = vmul.f32 %v546, 1.442695
      %v555 = vpow.pop %v554
      %v556 = vmul.f32 %v547, 1.442695
      %v557 = vpow.pop %v556
      %v558 = vmul.f32 %v548, 1.442695
      %v559 = vpow.pop %v558
      %v560 = vmul.f32 %v549, 1.442695
      %v561 = vpow.pop %v560
      %v562 = vmul.f32 %v550, 1.442695
      %v563 = vpow.pop %v562
      %v564 = vmul.f32 %v551, 1.442695
      %v565 = vpow.pop %v564
      %v566 = vmul.f32 %v552, 1.442695
      %v567 = vpow.pop %v566
      %v568 = vmul.f32 %v553, 1.442695
      %v569 = vpow.pop %v568
      %571 = vset.pattern.permute.xlu0 0
      %572 = vperm.xlu0 %571, %v538
      %v573 = vpop.permute.xlu0 %572
      %576 = vset.pattern.permute.xlu0 0
      %577 = vperm.xlu0 %576, %v539
      %v578 = vpop.permute.xlu0 %577
      %581 = vset.pattern.permute.xlu0 0
      %582 = vperm.xlu0 %581, %v540
      %v583 = vpop.permute.xlu0 %582
      %586 = vset.pattern.permute.xlu0 0
      %587 = vperm.xlu0 %586, %v541
      %v588 = vpop.permute.xlu0 %587
      %591 = vset.pattern.permute.xlu0 0
      %592 = vperm.xlu0 %591, %v542
      %v593 = vpop.permute.xlu0 %592
      %596 = vset.pattern.permute.xlu0 0
      %597 = vperm.xlu0 %596, %v543
      %v598 = vpop.permute.xlu0 %597
      %601 = vset.pattern.permute.xlu0 0
      %602 = vperm.xlu0 %601, %v544
      %v603 = vpop.permute.xlu0 %602
      %606 = vset.pattern.permute.xlu0 0
      %607 = vperm.xlu0 %606, %v545
      %v608 = vpop.permute.xlu0 %607
      %v610 = vsub.f32 %v497, %v573
      %v611 = vsub.f32 %v498, %v578
      %v612 = vsub.f32 %v499, %v583
      %v613 = vsub.f32 %v500, %v588
      %v614 = vsub.f32 %v501, %v593
      %v615 = vsub.f32 %v502, %v598
      %v616 = vsub.f32 %v503, %v603
      %v617 = vsub.f32 %v504, %v608
      %v618 = vmul.f32 %v610, 1.442695
      %v619 = vpow.pop %v618
      %v620 = vmul.f32 %v611, 1.442695
      %v621 = vpow.pop %v620
      %v622 = vmul.f32 %v612, 1.442695
      %v623 = vpow.pop %v622
      %v624 = vmul.f32 %v613, 1.442695
      %v625 = vpow.pop %v624
      %v626 = vmul.f32 %v614, 1.442695
      %v627 = vpow.pop %v626
      %v628 = vmul.f32 %v615, 1.442695
      %v629 = vpow.pop %v628
      %v630 = vmul.f32 %v616, 1.442695
      %v631 = vpow.pop %v630
      %v632 = vmul.f32 %v617, 1.442695
      %v633 = vpow.pop %v632
      %v634 = vld [vmem:[#allocation3] sm:$0xff]
      %v635 = vld [vmem:[#allocation3 + $0x8] sm:$0xff]
      %v636 = vld [vmem:[#allocation3 + $0x10] sm:$0xff]
      %v637 = vld [vmem:[#allocation3 + $0x18] sm:$0xff]
      %v638 = vld [vmem:[#allocation3 + $0x20] sm:$0xff]
      %v639 = vld [vmem:[#allocation3 + $0x28] sm:$0xff]
      %v640 = vld [vmem:[#allocation3 + $0x30] sm:$0xff]
      %v641 = vld [vmem:[#allocation3 + $0x38] sm:$0xff]
      %v642 = vmul.f32 %v555, %v634
      %v643 = vmul.f32 %v557, %v635
      %v644 = vmul.f32 %v559, %v636
      %v645 = vmul.f32 %v561, %v637
      %v646 = vmul.f32 %v563, %v638
      %v647 = vmul.f32 %v565, %v639
      %v648 = vmul.f32 %v567, %v640
      %v649 = vmul.f32 %v569, %v641
      %v650 = vsel %vm513, %v619, 0.0
      %651 = vadd.xlane.f32.xlu0 %v650
      %v652 = vpop.xlane.xlu0 %651
      %v653 = vsel %vm513, %v621, 0.0
      %654 = vadd.xlane.f32.xlu0 %v653
      %v655 = vpop.xlane.xlu0 %654
      %v656 = vsel %vm513, %v623, 0.0
      %657 = vadd.xlane.f32.xlu0 %v656
      %v658 = vpop.xlane.xlu0 %657
      %v659 = vsel %vm513, %v625, 0.0
      %660 = vadd.xlane.f32.xlu0 %v659
      %v661 = vpop.xlane.xlu0 %660
      %v662 = vsel %vm513, %v627, 0.0
      %663 = vadd.xlane.f32.xlu0 %v662
      %v664 = vpop.xlane.xlu0 %663
      %v665 = vsel %vm513, %v629, 0.0
      %666 = vadd.xlane.f32.xlu0 %v665
      %v667 = vpop.xlane.xlu0 %666
      %v668 = vsel %vm513, %v631, 0.0
      %669 = vadd.xlane.f32.xlu0 %v668
      %v670 = vpop.xlane.xlu0 %669
      %v671 = vsel %vm513, %v633, 0.0
      %672 = vadd.xlane.f32.xlu0 %v671
      %v673 = vpop.xlane.xlu0 %672
      %v674 = vadd.f32 %v642, %v652
      %v675 = vadd.f32 %v643, %v655
      %v676 = vadd.f32 %v644, %v658
      %v677 = vadd.f32 %v645, %v661
      %v678 = vadd.f32 %v646, %v664
      %v679 = vadd.f32 %v647, %v667
      %v680 = vadd.f32 %v648, %v670
      %v681 = vadd.f32 %v649, %v673
      %vm682 = vcmask 7168
      %683 = vst.msk [vmem:[#allocation3] sm:$0xff] %vm682, %v674
      %684 = vst.msk [vmem:[#allocation3 + $0x8] sm:$0xff] %vm682, %v675
      %685 = vst.msk [vmem:[#allocation3 + $0x10] sm:$0xff] %vm682, %v676
      %686 = vst.msk [vmem:[#allocation3 + $0x18] sm:$0xff] %vm682, %v677
      %687 = vst.msk [vmem:[#allocation3 + $0x20] sm:$0xff] %vm682, %v678
      %688 = vst.msk [vmem:[#allocation3 + $0x28] sm:$0xff] %vm682, %v679
      %689 = vst.msk [vmem:[#allocation3 + $0x30] sm:$0xff] %vm682, %v680
      %690 = vst.msk [vmem:[#allocation3 + $0x38] sm:$0xff] %vm682, %v681
      %v691 = vld [vmem:[#allocation4] sm:$0xff]
      %v692 = vld [vmem:[#allocation4 + $0x8] sm:$0xff]
      %v693 = vld [vmem:[#allocation4 + $0x10] sm:$0xff]
      %v694 = vld [vmem:[#allocation4 + $0x18] sm:$0xff]
      %v695 = vld [vmem:[#allocation4 + $0x20] sm:$0xff]
      %v696 = vld [vmem:[#allocation4 + $0x28] sm:$0xff]
      %v697 = vld [vmem:[#allocation4 + $0x30] sm:$0xff]
      %v698 = vld [vmem:[#allocation4 + $0x38] sm:$0xff]
      %700 = vset.pattern.permute.xlu0 0
      %701 = vperm.xlu0 %700, %v555
      %v702 = vpop.permute.xlu0 %701
      %705 = vset.pattern.permute.xlu0 0
      %706 = vperm.xlu0 %705, %v557
      %v707 = vpop.permute.xlu0 %706
      %710 = vset.pattern.permute.xlu0 0
      %711 = vperm.xlu0 %710, %v559
      %v712 = vpop.permute.xlu0 %711
      %715 = vset.pattern.permute.xlu0 0
      %716 = vperm.xlu0 %715, %v561
      %v717 = vpop.permute.xlu0 %716
      %720 = vset.pattern.permute.xlu0 0
      %721 = vperm.xlu0 %720, %v563
      %v722 = vpop.permute.xlu0 %721
      %725 = vset.pattern.permute.xlu0 0
      %726 = vperm.xlu0 %725, %v565
      %v727 = vpop.permute.xlu0 %726
      %730 = vset.pattern.permute.xlu0 0
      %731 = vperm.xlu0 %730, %v567
      %v732 = vpop.permute.xlu0 %731
      %735 = vset.pattern.permute.xlu0 0
      %736 = vperm.xlu0 %735, %v569
      %v737 = vpop.permute.xlu0 %736
      %v739 = vmul.f32 %v702, %v691
      %v740 = vmul.f32 %v707, %v692
      %v741 = vmul.f32 %v712, %v693
      %v742 = vmul.f32 %v717, %v694
      %v743 = vmul.f32 %v722, %v695
      %v744 = vmul.f32 %v727, %v696
      %v745 = vmul.f32 %v732, %v697
      %v746 = vmul.f32 %v737, %v698
      %v748 = vsel %vm513, %v619, 0
      %v751 = vsel %vm513, %v621, 0
      %v754 = vsel %vm513, %v623, 0
      %v757 = vsel %vm513, %v625, 0
      %v760 = vsel %vm513, %v627, 0
      %v763 = vsel %vm513, %v629, 0
      %v766 = vsel %vm513, %v631, 0
      %v769 = vsel %vm513, %v633, 0
      %771 = vmatprep.subr.mxu0 0.0
      %772 = vmatpush1.msra.mxu0 %v335
      %773 = vmatprep.subr.mxu0 0.0
      %774 = vmatpush1.msra.mxu0 %v336
      %775 = vmatprep.subr.mxu0 0.0
      %776 = vmatpush1.msra.mxu0 %v337
      %777 = vmatprep.subr.mxu0 0.0
      %778 = vmatpush1.msra.mxu0 %v338
      %779 = vmatprep.subr.mxu0 0.0
      %780 = vmatpush1.msra.mxu0 %v339
      %781 = vmatprep.subr.mxu0 0.0
      %782 = vmatpush1.msra.mxu0 %v340
      %783 = vmatprep.subr.mxu0 0.0
      %784 = vmatpush1.msra.mxu0 %v341
      %785 = vmatprep.subr.mxu0 0.0
      %786 = vmatpush1.msra.mxu0 %v342
      %787 = vmatprep.subr.mxu0 0.0
      %788 = vmatpush1.msra.mxu0 0.0
      %789 = vmatprep.subr.mxu0 0.0
      %790 = vmatpush1.msra.mxu0 0.0
      %791 = vmatprep.subr.mxu0 0.0
      %792 = vmatpush1.msra.mxu0 0.0
      %793 = vmatprep.subr.mxu0 0.0
      %794 = vmatpush1.msra.mxu0 0.0
      %795 = vmatprep.subr.mxu0 0.0
      %796 = vmatpush1.msra.mxu0 0.0
      %797 = vmatprep.subr.mxu0 0.0
      %798 = vmatpush1.msra.mxu0 0.0
      %799 = vmatprep.subr.mxu0 0.0
      %800 = vmatpush1.msra.mxu0 0.0
      %801 = vmatprep.subr.mxu0 0.0
      %802 = vmatpush1.msra.mxu0 0.0
      %803 = vmatprep.subr.mxu0 0.0
      %804 = vmatpush1.msra.mxu0 0.0
      %805 = vmatprep.subr.mxu0 0.0
      %806 = vmatpush1.msra.mxu0 0.0
      %807 = vmatprep.subr.mxu0 0.0
      %808 = vmatpush1.msra.mxu0 0.0
      %809 = vmatprep.subr.mxu0 0.0
      %810 = vmatpush1.msra.mxu0 0.0
      %811 = vmatprep.subr.mxu0 0.0
      %812 = vmatpush1.msra.mxu0 0.0
      %813 = vmatprep.subr.mxu0 0.0
      %814 = vmatpush1.msra.mxu0 0.0
      %815 = vmatprep.subr.mxu0 0.0
      %816 = vmatpush1.msra.mxu0 0.0
      %817 = vmatprep.subr.mxu0 0.0
      %818 = vmatpush1.msra.mxu0 0.0
      %819 = vmatprep.subr.mxu0 0.0
      %820 = vmatpush1.msra.mxu0 0.0
      %821 = vmatprep.subr.mxu0 0.0
      %822 = vmatpush1.msra.mxu0 0.0
      %823 = vmatprep.subr.mxu0 0.0
      %824 = vmatpush1.msra.mxu0 0.0
      %825 = vmatprep.subr.mxu0 0.0
      %826 = vmatpush1.msra.mxu0 0.0
      %827 = vmatprep.subr.mxu0 0.0
      %828 = vmatpush1.msra.mxu0 0.0
      %829 = vmatprep.subr.mxu0 0.0
      %830 = vmatpush1.msra.mxu0 0.0
      %831 = vmatprep.subr.mxu0 0.0
      %832 = vmatpush1.msra.mxu0 0.0
      %833 = vmatprep.subr.mxu0 0.0
      %834 = vmatpush1.msra.mxu0 0.0
      %835 = vmatprep.mubr.f32.mxu0 0.0
      %836 = vmatmul.mubr.f32.gmra.mrb[0].mxu0 %v748
      %v837 = vpop.f32.mrb[0].mxu0
      %v838 = vadd.f32 0.0, %v837
      %v839 = vpop.f32.mrb[0].mxu0
      %840 = vmatprep.mubr.f32.mxu0 0.0
      %841 = vmatmul.mubr.f32.gmra.mrb[0].mxu0 %v751
      %v842 = vpop.f32.mrb[0].mxu0
      %v843 = vadd.f32 0.0, %v842
      %v844 = vpop.f32.mrb[0].mxu0
      %845 = vmatprep.mubr.f32.mxu0 0.0
      %846 = vmatmul.mubr.f32.gmra.mrb[0].mxu0 %v754
      %v847 = vpop.f32.mrb[0].mxu0
      %v848 = vadd.f32 0.0, %v847
      %v849 = vpop.f32.mrb[0].mxu0
      %850 = vmatprep.mubr.f32.mxu0 0.0
      %851 = vmatmul.mubr.f32.gmra.mrb[0].mxu0 %v757
      %v852 = vpop.f32.mrb[0].mxu0
      %v853 = vadd.f32 0.0, %v852
      %v854 = vpop.f32.mrb[0].mxu0
      %855 = vmatprep.mubr.f32.mxu0 0.0
      %856 = vmatmul.mubr.f32.gmra.mrb[0].mxu0 %v760
      %v857 = vpop.f32.mrb[0].mxu0
      %v858 = vadd.f32 0.0, %v857
      %v859 = vpop.f32.mrb[0].mxu0
      %860 = vmatprep.mubr.f32.mxu0 0.0
      %861 = vmatmul.mubr.f32.gmra.mrb[0].mxu0 %v763
      %v862 = vpop.f32.mrb[0].mxu0
      %v863 = vadd.f32 0.0, %v862
      %v864 = vpop.f32.mrb[0].mxu0
      %865 = vmatprep.mubr.f32.mxu0 0.0
      %866 = vmatmul.mubr.f32.gmra.mrb[0].mxu0 %v766
      %v867 = vpop.f32.mrb[0].mxu0
      %v868 = vadd.f32 0.0, %v867
      %v869 = vpop.f32.mrb[0].mxu0
      %870 = vmatprep.mubr.f32.mxu0 0.0
      %871 = vmatmul.mubr.f32.gmra.mrb[0].mxu0 %v769
      %v872 = vpop.f32.mrb[0].mxu0
      %v873 = vadd.f32 0.0, %v872
      %v874 = vpop.f32.mrb[0].mxu0
      %875 = vdwg.mxu0
      %v876 = vadd.f32 %v739, %v838
      %v877 = vadd.f32 %v740, %v843
      %v878 = vadd.f32 %v741, %v848
      %v879 = vadd.f32 %v742, %v853
      %v880 = vadd.f32 %v743, %v858
      %v881 = vadd.f32 %v744, %v863
      %v882 = vadd.f32 %v745, %v868
      %v883 = vadd.f32 %v746, %v873
      %884 = vst.msk [vmem:[#allocation4] sm:$0xff] %vm343, %v876
      %885 = vst.msk [vmem:[#allocation4 + $0x8] sm:$0xff] %vm343, %v877
      %886 = vst.msk [vmem:[#allocation4 + $0x10] sm:$0xff] %vm343, %v878
      %887 = vst.msk [vmem:[#allocation4 + $0x18] sm:$0xff] %vm343, %v879
      %888 = vst.msk [vmem:[#allocation4 + $0x20] sm:$0xff] %vm343, %v880
      %889 = vst.msk [vmem:[#allocation4 + $0x28] sm:$0xff] %vm343, %v881
      %890 = vst.msk [vmem:[#allocation4 + $0x30] sm:$0xff] %vm343, %v882
      %891 = vst.msk [vmem:[#allocation4 + $0x38] sm:$0xff] %vm343, %v883
      %892 = vst.msk [vmem:[#allocation2] sm:$0xff] %vm682, %v538
      %893 = vst.msk [vmem:[#allocation2 + $0x8] sm:$0xff] %vm682, %v539
      %894 = vst.msk [vmem:[#allocation2 + $0x10] sm:$0xff] %vm682, %v540
      %895 = vst.msk [vmem:[#allocation2 + $0x18] sm:$0xff] %vm682, %v541
      %896 = vst.msk [vmem:[#allocation2 + $0x20] sm:$0xff] %vm682, %v542
      %897 = vst.msk [vmem:[#allocation2 + $0x28] sm:$0xff] %vm682, %v543
      %898 = vst.msk [vmem:[#allocation2 + $0x30] sm:$0xff] %vm682, %v544
      %899 = vst.msk [vmem:[#allocation2 + $0x38] sm:$0xff] %vm682, %v545
      // Predicated region
      $region37: #{_lambda_.47} parent=31 // pred_check
        %p900 = pneg %p289
      $region38: #{_lambda_.47} parent=31 // pred_check_branch
        %902 = sbr.rel (%p900) target = $region40
      $region39: #{_lambda_.47} parent=31 // pred_region
        %v903 = vld [vmem:[#allocation4] sm:$0xff]
        %v904 = vld [vmem:[#allocation4 + $0x8] sm:$0xff]
        %v905 = vld [vmem:[#allocation4 + $0x10] sm:$0xff]
        %v906 = vld [vmem:[#allocation4 + $0x18] sm:$0xff]
        %v907 = vld [vmem:[#allocation4 + $0x20] sm:$0xff]
        %v908 = vld [vmem:[#allocation4 + $0x28] sm:$0xff]
        %v909 = vld [vmem:[#allocation4 + $0x30] sm:$0xff]
        %v910 = vld [vmem:[#allocation4 + $0x38] sm:$0xff]
        %v911 = vld [vmem:[#allocation3] sm:$0xff]
        %v912 = vld [vmem:[#allocation3 + $0x8] sm:$0xff]
        %v913 = vld [vmem:[#allocation3 + $0x10] sm:$0xff]
        %v914 = vld [vmem:[#allocation3 + $0x18] sm:$0xff]
        %v915 = vld [vmem:[#allocation3 + $0x20] sm:$0xff]
        %v916 = vld [vmem:[#allocation3 + $0x28] sm:$0xff]
        %v917 = vld [vmem:[#allocation3 + $0x30] sm:$0xff]
        %v918 = vld [vmem:[#allocation3 + $0x38] sm:$0xff]
        %v919 = vrcp.pop %v911
        %v920 = vrcp.pop %v912
        %v921 = vrcp.pop %v913
        %v922 = vrcp.pop %v914
        %v923 = vrcp.pop %v915
        %v924 = vrcp.pop %v916
        %v925 = vrcp.pop %v917
        %v926 = vrcp.pop %v918
        %928 = vset.pattern.permute.xlu0 0
        %929 = vperm.xlu0 %928, %v919
        %v930 = vpop.permute.xlu0 %929
        %933 = vset.pattern.permute.xlu0 0
        %934 = vperm.xlu0 %933, %v920
        %v935 = vpop.permute.xlu0 %934
        %938 = vset.pattern.permute.xlu0 0
        %939 = vperm.xlu0 %938, %v921
        %v940 = vpop.permute.xlu0 %939
        %943 = vset.pattern.permute.xlu0 0
        %944 = vperm.xlu0 %943, %v922
        %v945 = vpop.permute.xlu0 %944
        %948 = vset.pattern.permute.xlu0 0
        %949 = vperm.xlu0 %948, %v923
        %v950 = vpop.permute.xlu0 %949
        %953 = vset.pattern.permute.xlu0 0
        %954 = vperm.xlu0 %953, %v924
        %v955 = vpop.permute.xlu0 %954
        %958 = vset.pattern.permute.xlu0 0
        %959 = vperm.xlu0 %958, %v925
        %v960 = vpop.permute.xlu0 %959
        %963 = vset.pattern.permute.xlu0 0
        %964 = vperm.xlu0 %963, %v926
        %v965 = vpop.permute.xlu0 %964
        %v967 = vmul.f32 %v903, %v930
        %v968 = vmul.f32 %v904, %v935
        %v969 = vmul.f32 %v905, %v940
        %v970 = vmul.f32 %v906, %v945
        %v971 = vmul.f32 %v907, %v950
        %v972 = vmul.f32 %v908, %v955
        %v973 = vmul.f32 %v909, %v960
        %v974 = vmul.f32 %v910, %v965
        %975 = vst.msk [vmem:[%s287] sm:$0xff] %vm343, %v967
        %976 = vst.msk [vmem:[%s287 + $0x8] sm:$0xff] %vm343, %v968
        %977 = vst.msk [vmem:[%s287 + $0x10] sm:$0xff] %vm343, %v969
        %978 = vst.msk [vmem:[%s287 + $0x18] sm:$0xff] %vm343, %v970
        %979 = vst.msk [vmem:[%s287 + $0x20] sm:$0xff] %vm343, %v971
        %980 = vst.msk [vmem:[%s287 + $0x28] sm:$0xff] %vm343, %v972
        %981 = vst.msk [vmem:[%s287 + $0x30] sm:$0xff] %vm343, %v973
        %982 = vst.msk [vmem:[%s287 + $0x38] sm:$0xff] %vm343, %v974
      $region40: #{_lambda_.47} parent=31 // pred_fallthru
        _
      %s983 = smul.u32 8, %s20
      %p984 = scmp.lt.s32.totalorder %s19, 15
      %s985 = scalar_select %p984, %s19, 15
      %p986 = scmp.lt.s32.totalorder %s983, 7
      %s987 = scalar_select %p986, %s983, 7
      %s988 = smul.addr %s985, 8
      %s989 = sadd.s32 %s987, %s988
      %s990 = smul.addr %s989, 8
      %s991 = scalar_lea.vmem %s3, %s990
      // Predicated region
      $region41: #{_lambda_.47} parent=31 // pred_check
        %p992 = pneg %p137
      $region42: #{_lambda_.47} parent=31 // pred_check_branch
        %994 = sbr.rel (%p992) target = $region44
      $region43: #{_lambda_.47} parent=31 // pred_region
        %s995 = smul.u32 8, %s20
      $region44: #{_lambda_.47} parent=31 // pred_fallthru
        _
    $region32: #{_lambda_.47} parent=5 // pred_fallthru
      _
    %p996 = scmp.le.s32.totalorder 2, %s9
    // Predicated region
    $region45: #{_lambda_.47} parent=5 // pred_check
      %p997 = pneg %p996
    $region46: #{_lambda_.47} parent=5 // pred_check_branch
      %999 = sbr.rel (%p997) target = $region48
    $region47: #{_lambda_.47} parent=5 // pred_region
      %s1000 = ssub.s32 %s9, 2
      // Predicated region
      $region49: #{_lambda_.47} parent=47 // pred_check
        %p1001 = pneg %p143
      $region50: #{_lambda_.47} parent=47 // pred_check_branch
        %1003 = sbr.rel (%p1001) target = $region52
      $region51: #{_lambda_.47} parent=47 // pred_region
        %s1004 = smul.u32 8, %s23
        %p1005 = scmp.lt.s32.totalorder %s22, 15
        %s1006 = scalar_select %p1005, %s22, 15
        %p1007 = scmp.lt.s32.totalorder %s1004, 7
        %s1008 = scalar_select %p1007, %s1004, 7
        %s1009 = smul.addr %s1006, 8
        %s1010 = sadd.s32 %s1008, %s1009
        %s1011 = smul.addr %s1010, 8
        %s1012 = scalar_lea.vmem %s3, %s1011
      $region52: #{_lambda_.47} parent=47 // pred_fallthru
        _
    $region48: #{_lambda_.47} parent=5 // pred_fallthru
      _
  $region6: #{_lambda_.47} parent=0 // loop_footer
    %s13 = sadd.s32 1, %s9
  $region7: #{_lambda_.47} parent=0 // loop_footer_branch
    %8 = sbr.rel target = $region3
  $region8: #{_lambda_.47} parent=0 // loop_exit
    _

// kernel: _lambda_.46
$region0: #{_lambda_.46}
  #allocation0 [shape = 'u32[]', space=smem, size = 0x4, offset = 0x4, fixed_abs, tag = 'smem constant byte address 0x4 - core index']
  #allocation1 [shape = 'u32[144,128]{1,0:T(1,128)}', space=vmem, size = 0x12000, scoped, tag = 'internal scratch']
  #allocation2 [shape = 'f32[128,384]{1,0:T(8,128)}', space=vmem, size = 0x30000, scoped, tag = 'scratch operand']
  %s0 = inlined_call_operand.vmem [shape: f32[128,128], index: 0, kind: input, shape index: {}]
  %s1 = inlined_call_operand.hbm [shape: f32[128,384], index: 1, kind: input, shape index: {}]
  %s2 = inlined_call_operand.vmem [shape: f32[1,384], index: 2, kind: input, shape index: {}]
  %s3 = inlined_call_operand.vmem [shape: f32[128,384], index: 3, kind: output, shape index: {}]
  %s4 = sld [smem:[#allocation0]]
  $region34: #{_lambda_.46} parent=0
    _
  %s6 = ssub.s32 1, %s4
  %s7 = scalar_select 0, %s6, %s4
  $region1: #{_lambda_.46} parent=0
    #allocation3 [shape = 'u8[196608]{0}', space=vmem, size = 0x30000, scoped, tag = 'input window, operand 1, single buffered']
    #allocation4 [shape = 's32[1]{0}', space=sflag, size = 0x4, scoped, tag = 'scoped memory for _lambda_.46']
    %8 = vsyncpa [#allocation4], 0
    // Predicated region
    $region2: #{_lambda_.46} parent=1 // pred_check
      _
    $region3: #{_lambda_.46} parent=1 // pred_check_branch
      %10 = sbr.rel (0) target = $region5
    $region4: #{_lambda_.46} parent=1 // pred_region
      _
    $region5: #{_lambda_.46} parent=1 // pred_fallthru
      _
    // Predicated region
    $region6: #{_lambda_.46} parent=1 // pred_check
      _
    $region7: #{_lambda_.46} parent=1 // pred_check_branch
      %12 = sbr.rel (0) target = $region9
    $region8: #{_lambda_.46} parent=1 // pred_region
      %s14 = ssub.s32 6144, 6144
      %15 = vsyncadd [#allocation4], %s14
      %s16 = sshll.u32 [#allocation3], 4
      %s17 = int_to_ptr.vmem [resolvable:$true] %s16
      %22 = dma.hbm_to_vmem [thread:$0]  %s1, 6144, %s17, [#allocation4], 384, 384, 24
    $region9: #{_lambda_.46} parent=1 // pred_fallthru
      _
    // Predicated region
    $region10: #{_lambda_.46} parent=1 // pred_check
      _
    $region11: #{_lambda_.46} parent=1 // pred_check_branch
      %24 = sbr.rel (0) target = $region13
    $region12: #{_lambda_.46} parent=1 // pred_region
      _
    $region13: #{_lambda_.46} parent=1 // pred_fallthru
      _
    // Predicated region
    $region14: #{_lambda_.46} parent=1 // pred_check
      _
    $region15: #{_lambda_.46} parent=1 // pred_check_branch
      %26 = sbr.rel (0) target = $region17
    $region16: #{_lambda_.46} parent=1 // pred_region
      %27 = dma.done [#allocation4], 6144
    $region17: #{_lambda_.46} parent=1 // pred_fallthru
      _
    %p28 = scmp.eq.s32.totalorder 0, 0
    // Predicated region
    $region18: #{_lambda_.46} parent=1 // pred_check
      %p29 = pneg %p28
    $region19: #{_lambda_.46} parent=1 // pred_check_branch
      %31 = sbr.rel (%p29) target = $region21
    $region20: #{_lambda_.46} parent=1 // pred_region
      %32 = vst [vmem:[#allocation2] sm:$0xff] 0.0
      %33 = vst [vmem:[#allocation2 + $0x8] sm:$0xff] 0.0
      %34 = vst [vmem:[#allocation2 + $0x10] sm:$0xff] 0.0
      %35 = vst [vmem:[#allocation2 + $0x18] sm:$0xff] 0.0
      %36 = vst [vmem:[#allocation2 + $0x20] sm:$0xff] 0.0
      %37 = vst [vmem:[#allocation2 + $0x28] sm:$0xff] 0.0
      %38 = vst [vmem:[#allocation2 + $0x30] sm:$0xff] 0.0
      %39 = vst [vmem:[#allocation2 + $0x38] sm:$0xff] 0.0
      %40 = vst [vmem:[#allocation2 + $0x40] sm:$0xff] 0.0
      %41 = vst [vmem:[#allocation2 + $0x48] sm:$0xff] 0.0
      %42 = vst [vmem:[#allocation2 + $0x50] sm:$0xff] 0.0
      %43 = vst [vmem:[#allocation2 + $0x58] sm:$0xff] 0.0
      %44 = vst [vmem:[#allocation2 + $0x60] sm:$0xff] 0.0
      %45 = vst [vmem:[#allocation2 + $0x68] sm:$0xff] 0.0
      %46 = vst [vmem:[#allocation2 + $0x70] sm:$0xff] 0.0
      %47 = vst [vmem:[#allocation2 + $0x78] sm:$0xff] 0.0
      %48 = vst [vmem:[#allocation2 + $0x80] sm:$0xff] 0.0
      %49 = vst [vmem:[#allocation2 + $0x88] sm:$0xff] 0.0
      %50 = vst [vmem:[#allocation2 + $0x90] sm:$0xff] 0.0
      %51 = vst [vmem:[#allocation2 + $0x98] sm:$0xff] 0.0
      %52 = vst [vmem:[#allocation2 + $0xa0] sm:$0xff] 0.0
      %53 = vst [vmem:[#allocation2 + $0xa8] sm:$0xff] 0.0
      %54 = vst [vmem:[#allocation2 + $0xb0] sm:$0xff] 0.0
      %55 = vst [vmem:[#allocation2 + $0xb8] sm:$0xff] 0.0
      %56 = vst [vmem:[#allocation2 + $0xc0] sm:$0xff] 0.0
      %57 = vst [vmem:[#allocation2 + $0xc8] sm:$0xff] 0.0
      %58 = vst [vmem:[#allocation2 + $0xd0] sm:$0xff] 0.0
      %59 = vst [vmem:[#allocation2 + $0xd8] sm:$0xff] 0.0
      %60 = vst [vmem:[#allocation2 + $0xe0] sm:$0xff] 0.0
      %61 = vst [vmem:[#allocation2 + $0xe8] sm:$0xff] 0.0
      %62 = vst [vmem:[#allocation2 + $0xf0] sm:$0xff] 0.0
      %63 = vst [vmem:[#allocation2 + $0xf8] sm:$0xff] 0.0
      %64 = vst [vmem:[#allocation2 + $0x100] sm:$0xff] 0.0
      %65 = vst [vmem:[#allocation2 + $0x108] sm:$0xff] 0.0
      %66 = vst [vmem:[#allocation2 + $0x110] sm:$0xff] 0.0
      %67 = vst [vmem:[#allocation2 + $0x118] sm:$0xff] 0.0
      %68 = vst [vmem:[#allocation2 + $0x120] sm:$0xff] 0.0
      %69 = vst [vmem:[#allocation2 + $0x128] sm:$0xff] 0.0
      %70 = vst [vmem:[#allocation2 + $0x130] sm:$0xff] 0.0
      %71 = vst [vmem:[#allocation2 + $0x138] sm:$0xff] 0.0
      %72 = vst [vmem:[#allocation2 + $0x140] sm:$0xff] 0.0
      %73 = vst [vmem:[#allocation2 + $0x148] sm:$0xff] 0.0
      %74 = vst [vmem:[#allocation2 + $0x150] sm:$0xff] 0.0
      %75 = vst [vmem:[#allocation2 + $0x158] sm:$0xff] 0.0
      %76 = vst [vmem:[#allocation2 + $0x160] sm:$0xff] 0.0
      %77 = vst [vmem:[#allocation2 + $0x168] sm:$0xff] 0.0
      %78 = vst [vmem:[#allocation2 + $0x170] sm:$0xff] 0.0
      %79 = vst [vmem:[#allocation2 + $0x178] sm:$0xff] 0.0
    $region21: #{_lambda_.46} parent=1 // pred_fallthru
      _
    %v80 = vld [vmem:[#allocation2] sm:$0xff]
    %v81 = vld [vmem:[#allocation2 + $0x8] sm:$0xff]
    %v82 = vld [vmem:[#allocation2 + $0x10] sm:$0xff]
    %v83 = vld [vmem:[#allocation2 + $0x18] sm:$0xff]
    %v84 = vld [vmem:[#allocation2 + $0x20] sm:$0xff]
    %v85 = vld [vmem:[#allocation2 + $0x28] sm:$0xff]
    %v86 = vld [vmem:[#allocation2 + $0x30] sm:$0xff]
    %v87 = vld [vmem:[#allocation2 + $0x38] sm:$0xff]
    %v88 = vld [vmem:[#allocation2 + $0x40] sm:$0xff]
    %v89 = vld [vmem:[#allocation2 + $0x48] sm:$0xff]
    %v90 = vld [vmem:[#allocation2 + $0x50] sm:$0xff]
    %v91 = vld [vmem:[#allocation2 + $0x58] sm:$0xff]
    %v92 = vld [vmem:[#allocation2 + $0x60] sm:$0xff]
    %v93 = vld [vmem:[#allocation2 + $0x68] sm:$0xff]
    %v94 = vld [vmem:[#allocation2 + $0x70] sm:$0xff]
    %v95 = vld [vmem:[#allocation2 + $0x78] sm:$0xff]
    %v96 = vld [vmem:[#allocation2 + $0x80] sm:$0xff]
    %v97 = vld [vmem:[#allocation2 + $0x88] sm:$0xff]
    %v98 = vld [vmem:[#allocation2 + $0x90] sm:$0xff]
    %v99 = vld [vmem:[#allocation2 + $0x98] sm:$0xff]
    %v100 = vld [vmem:[#allocation2 + $0xa0] sm:$0xff]
    %v101 = vld [vmem:[#allocation2 + $0xa8] sm:$0xff]
    %v102 = vld [vmem:[#allocation2 + $0xb0] sm:$0xff]
    %v103 = vld [vmem:[#allocation2 + $0xb8] sm:$0xff]
    %v104 = vld [vmem:[#allocation2 + $0xc0] sm:$0xff]
    %v105 = vld [vmem:[#allocation2 + $0xc8] sm:$0xff]
    %v106 = vld [vmem:[#allocation2 + $0xd0] sm:$0xff]
    %v107 = vld [vmem:[#allocation2 + $0xd8] sm:$0xff]
    %v108 = vld [vmem:[#allocation2 + $0xe0] sm:$0xff]
    %v109 = vld [vmem:[#allocation2 + $0xe8] sm:$0xff]
    %v110 = vld [vmem:[#allocation2 + $0xf0] sm:$0xff]
    %v111 = vld [vmem:[#allocation2 + $0xf8] sm:$0xff]
    %v112 = vld [vmem:[#allocation2 + $0x100] sm:$0xff]
    %v113 = vld [vmem:[#allocation2 + $0x108] sm:$0xff]
    %v114 = vld [vmem:[#allocation2 + $0x110] sm:$0xff]
    %v115 = vld [vmem:[#allocation2 + $0x118] sm:$0xff]
    %v116 = vld [vmem:[#allocation2 + $0x120] sm:$0xff]
    %v117 = vld [vmem:[#allocation2 + $0x128] sm:$0xff]
    %v118 = vld [vmem:[#allocation2 + $0x130] sm:$0xff]
    %v119 = vld [vmem:[#allocation2 + $0x138] sm:$0xff]
    %v120 = vld [vmem:[#allocation2 + $0x140] sm:$0xff]
    %v121 = vld [vmem:[#allocation2 + $0x148] sm:$0xff]
    %v122 = vld [vmem:[#allocation2 + $0x150] sm:$0xff]
    %v123 = vld [vmem:[#allocation2 + $0x158] sm:$0xff]
    %v124 = vld [vmem:[#allocation2 + $0x160] sm:$0xff]
    %v125 = vld [vmem:[#allocation2 + $0x168] sm:$0xff]
    %v126 = vld [vmem:[#allocation2 + $0x170] sm:$0xff]
    %v127 = vld [vmem:[#allocation2 + $0x178] sm:$0xff]
    %v128 = vld [vmem:[%s0] sm:$0xff]
    %v129 = vld [vmem:[%s0 + $0x8] sm:$0xff]
    %v130 = vld [vmem:[%s0 + $0x10] sm:$0xff]
    %v131 = vld [vmem:[%s0 + $0x18] sm:$0xff]
    %v132 = vld [vmem:[%s0 + $0x20] sm:$0xff]
    %v133 = vld [vmem:[%s0 + $0x28] sm:$0xff]
    %v134 = vld [vmem:[%s0 + $0x30] sm:$0xff]
    %v135 = vld [vmem:[%s0 + $0x38] sm:$0xff]
    %v136 = vld [vmem:[%s0 + $0x40] sm:$0xff]
    %v137 = vld [vmem:[%s0 + $0x48] sm:$0xff]
    %v138 = vld [vmem:[%s0 + $0x50] sm:$0xff]
    %v139 = vld [vmem:[%s0 + $0x58] sm:$0xff]
    %v140 = vld [vmem:[%s0 + $0x60] sm:$0xff]
    %v141 = vld [vmem:[%s0 + $0x68] sm:$0xff]
    %v142 = vld [vmem:[%s0 + $0x70] sm:$0xff]
    %v143 = vld [vmem:[%s0 + $0x78] sm:$0xff]
    %v144 = vld [vmem:[#allocation3] sm:$0xff]
    %v145 = vld [vmem:[#allocation3 + $0x8] sm:$0xff]
    %v146 = vld [vmem:[#allocation3 + $0x10] sm:$0xff]
    %v147 = vld [vmem:[#allocation3 + $0x18] sm:$0xff]
    %v148 = vld [vmem:[#allocation3 + $0x20] sm:$0xff]
    %v149 = vld [vmem:[#allocation3 + $0x28] sm:$0xff]
    %v150 = vld [vmem:[#allocation3 + $0x30] sm:$0xff]
    %v151 = vld [vmem:[#allocation3 + $0x38] sm:$0xff]
    %v152 = vld [vmem:[#allocation3 + $0x40] sm:$0xff]
    %v153 = vld [vmem:[#allocation3 + $0x48] sm:$0xff]
    %v154 = vld [vmem:[#allocation3 + $0x50] sm:$0xff]
    %v155 = vld [vmem:[#allocation3 + $0x58] sm:$0xff]
    %v156 = vld [vmem:[#allocation3 + $0x60] sm:$0xff]
    %v157 = vld [vmem:[#allocation3 + $0x68] sm:$0xff]
    %v158 = vld [vmem:[#allocation3 + $0x70] sm:$0xff]
    %v159 = vld [vmem:[#allocation3 + $0x78] sm:$0xff]
    %v160 = vld [vmem:[#allocation3 + $0x80] sm:$0xff]
    %v161 = vld [vmem:[#allocation3 + $0x88] sm:$0xff]
    %v162 = vld [vmem:[#allocation3 + $0x90] sm:$0xff]
    %v163 = vld [vmem:[#allocation3 + $0x98] sm:$0xff]
    %v164 = vld [vmem:[#allocation3 + $0xa0] sm:$0xff]
    %v165 = vld [vmem:[#allocation3 + $0xa8] sm:$0xff]
    %v166 = vld [vmem:[#allocation3 + $0xb0] sm:$0xff]
    %v167 = vld [vmem:[#allocation3 + $0xb8] sm:$0xff]
    %v168 = vld [vmem:[#allocation3 + $0xc0] sm:$0xff]
    %v169 = vld [vmem:[#allocation3 + $0xc8] sm:$0xff]
    %v170 = vld [vmem:[#allocation3 + $0xd0] sm:$0xff]
    %v171 = vld [vmem:[#allocation3 + $0xd8] sm:$0xff]
    %v172 = vld [vmem:[#allocation3 + $0xe0] sm:$0xff]
    %v173 = vld [vmem:[#allocation3 + $0xe8] sm:$0xff]
    %v174 = vld [vmem:[#allocation3 + $0xf0] sm:$0xff]
    %v175 = vld [vmem:[#allocation3 + $0xf8] sm:$0xff]
    %v176 = vld [vmem:[#allocation3 + $0x100] sm:$0xff]
    %v177 = vld [vmem:[#allocation3 + $0x108] sm:$0xff]
    %v178 = vld [vmem:[#allocation3 + $0x110] sm:$0xff]
    %v179 = vld [vmem:[#allocation3 + $0x118] sm:$0xff]
    %v180 = vld [vmem:[#allocation3 + $0x120] sm:$0xff]
    %v181 = vld [vmem:[#allocation3 + $0x128] sm:$0xff]
    %v182 = vld [vmem:[#allocation3 + $0x130] sm:$0xff]
    %v183 = vld [vmem:[#allocation3 + $0x138] sm:$0xff]
    %v184 = vld [vmem:[#allocation3 + $0x140] sm:$0xff]
    %v185 = vld [vmem:[#allocation3 + $0x148] sm:$0xff]
    %v186 = vld [vmem:[#allocation3 + $0x150] sm:$0xff]
    %v187 = vld [vmem:[#allocation3 + $0x158] sm:$0xff]
    %v188 = vld [vmem:[#allocation3 + $0x160] sm:$0xff]
    %v189 = vld [vmem:[#allocation3 + $0x168] sm:$0xff]
    %v190 = vld [vmem:[#allocation3 + $0x170] sm:$0xff]
    %v191 = vld [vmem:[#allocation3 + $0x178] sm:$0xff]
    %192 = vmatprep.subr.mxu0 %v145
    %193 = vmatpush1.msra.mxu0 %v144
    %194 = vmatprep.subr.mxu0 %v148
    %195 = vmatpush1.msra.mxu0 %v147
    %196 = vmatprep.subr.mxu0 %v151
    %197 = vmatpush1.msra.mxu0 %v150
    %198 = vmatprep.subr.mxu0 %v154
    %199 = vmatpush1.msra.mxu0 %v153
    %200 = vmatprep.subr.mxu0 %v157
    %201 = vmatpush1.msra.mxu0 %v156
    %202 = vmatprep.subr.mxu0 %v160
    %203 = vmatpush1.msra.mxu0 %v159
    %204 = vmatprep.subr.mxu0 %v163
    %205 = vmatpush1.msra.mxu0 %v162
    %206 = vmatprep.subr.mxu0 %v166
    %207 = vmatpush1.msra.mxu0 %v165
    %208 = vmatprep.subr.mxu0 %v169
    %209 = vmatpush1.msra.mxu0 %v168
    %210 = vmatprep.subr.mxu0 %v172
    %211 = vmatpush1.msra.mxu0 %v171
    %212 = vmatprep.subr.mxu0 %v175
    %213 = vmatpush1.msra.mxu0 %v174
    %214 = vmatprep.subr.mxu0 %v178
    %215 = vmatpush1.msra.mxu0 %v177
    %216 = vmatprep.subr.mxu0 %v181
    %217 = vmatpush1.msra.mxu0 %v180
    %218 = vmatprep.subr.mxu0 %v184
    %219 = vmatpush1.msra.mxu0 %v183
    %220 = vmatprep.subr.mxu0 %v187
    %221 = vmatpush1.msra.mxu0 %v186
    %222 = vmatprep.subr.mxu0 %v190
    %223 = vmatpush1.msra.mxu0 %v189
    %224 = vmatprep.subr.mxu0 0.0
    %225 = vmatpush1.msra.mxu0 0.0
    %226 = vmatprep.subr.mxu0 0.0
    %227 = vmatpush1.msra.mxu0 0.0
    %228 = vmatprep.subr.mxu0 0.0
    %229 = vmatpush1.msra.mxu0 0.0
    %230 = vmatprep.subr.mxu0 0.0
    %231 = vmatpush1.msra.mxu0 0.0
    %232 = vmatprep.subr.mxu0 0.0
    %233 = vmatpush1.msra.mxu0 0.0
    %234 = vmatprep.subr.mxu0 0.0
    %235 = vmatpush1.msra.mxu0 0.0
    %236 = vmatprep.subr.mxu0 0.0
    %237 = vmatpush1.msra.mxu0 0.0
    %238 = vmatprep.subr.mxu0 0.0
    %239 = vmatpush1.msra.mxu0 0.0
    %240 = vmatprep.subr.mxu0 0.0
    %241 = vmatpush1.msra.mxu0 0.0
    %242 = vmatprep.subr.mxu0 0.0
    %243 = vmatpush1.msra.mxu0 0.0
    %244 = vmatprep.subr.mxu0 0.0
    %245 = vmatpush1.msra.mxu0 0.0
    %246 = vmatprep.subr.mxu0 0.0
    %247 = vmatpush1.msra.mxu0 0.0
    %248 = vmatprep.subr.mxu0 0.0
    %249 = vmatpush1.msra.mxu0 0.0
    %250 = vmatprep.subr.mxu0 0.0
    %251 = vmatpush1.msra.mxu0 0.0
    %252 = vmatprep.subr.mxu0 0.0
    %253 = vmatpush1.msra.mxu0 0.0
    %254 = vmatprep.subr.mxu0 0.0
    %255 = vmatpush1.msra.mxu0 0.0
    %256 = vmatprep.mubr.f32.mxu0 0.0
    %257 = vmatmul.mubr.f32.gmra.mrb[0].mxu0 %v128
    %v258 = vpop.f32.mrb[0].mxu0
    %v259 = vadd.f32 0.0, %v258
    %v260 = vpop.f32.mrb[0].mxu0
    %v261 = vadd.f32 0.0, %v260
    %262 = vmatprep.mubr.f32.mxu0 0.0
    %263 = vmatmul.mubr.f32.gmra.mrb[0].mxu0 %v129
    %v264 = vpop.f32.mrb[0].mxu0
    %v265 = vadd.f32 0.0, %v264
    %v266 = vpop.f32.mrb[0].mxu0
    %v267 = vadd.f32 0.0, %v266
    %268 = vmatprep.mubr.f32.mxu0 0.0
    %269 = vmatmul.mubr.f32.gmra.mrb[0].mxu0 %v130
    %v270 = vpop.f32.mrb[0].mxu0
    %v271 = vadd.f32 0.0, %v270
    %v272 = vpop.f32.mrb[0].mxu0
    %v273 = vadd.f32 0.0, %v272
    %274 = vmatprep.mubr.f32.mxu0 0.0
    %275 = vmatmul.mubr.f32.gmra.mrb[0].mxu0 %v131
    %v276 = vpop.f32.mrb[0].mxu0
    %v277 = vadd.f32 0.0, %v276
    %v278 = vpop.f32.mrb[0].mxu0
    %v279 = vadd.f32 0.0, %v278
    %280 = vmatprep.mubr.f32.mxu0 0.0
    %281 = vmatmul.mubr.f32.gmra.mrb[0].mxu0 %v132
    %v282 = vpop.f32.mrb[0].mxu0
    %v283 = vadd.f32 0.0, %v282
    %v284 = vpop.f32.mrb[0].mxu0
    %v285 = vadd.f32 0.0, %v284
    %286 = vmatprep.mubr.f32.mxu0 0.0
    %287 = vmatmul.mubr.f32.gmra.mrb[0].mxu0 %v133
    %v288 = vpop.f32.mrb[0].mxu0
    %v289 = vadd.f32 0.0, %v288
    %v290 = vpop.f32.mrb[0].mxu0
    %v291 = vadd.f32 0.0, %v290
    %292 = vmatprep.mubr.f32.mxu0 0.0
    %293 = vmatmul.mubr.f32.gmra.mrb[0].mxu0 %v134
    %v294 = vpop.f32.mrb[0].mxu0
    %v295 = vadd.f32 0.0, %v294
    %v296 = vpop.f32.mrb[0].mxu0
    %v297 = vadd.f32 0.0, %v296
    %298 = vmatprep.mubr.f32.mxu0 0.0
    %299 = vmatmul.mubr.f32.gmra.mrb[0].mxu0 %v135
    %v300 = vpop.f32.mrb[0].mxu0
    %v301 = vadd.f32 0.0, %v300
    %v302 = vpop.f32.mrb[0].mxu0
    %v303 = vadd.f32 0.0, %v302
    %304 = vmatprep.mubr.f32.mxu0 0.0
    %305 = vmatmul.mubr.f32.gmra.mrb[0].mxu0 %v136
    %v306 = vpop.f32.mrb[0].mxu0
    %v307 = vadd.f32 0.0, %v306
    %v308 = vpop.f32.mrb[0].mxu0
    %v309 = vadd.f32 0.0, %v308
    %310 = vmatprep.mubr.f32.mxu0 0.0
    %311 = vmatmul.mubr.f32.gmra.mrb[0].mxu0 %v137
    %v312 = vpop.f32.mrb[0].mxu0
    %v313 = vadd.f32 0.0, %v312
    %v314 = vpop.f32.mrb[0].mxu0
    %v315 = vadd.f32 0.0, %v314
    %316 = vmatprep.mubr.f32.mxu0 0.0
    %317 = vmatmul.mubr.f32.gmra.mrb[0].mxu0 %v138
    %v318 = vpop.f32.mrb[0].mxu0
    %v319 = vadd.f32 0.0, %v318
    %v320 = vpop.f32.mrb[0].mxu0
    %v321 = vadd.f32 0.0, %v320
    %322 = vmatprep.mubr.f32.mxu0 0.0
    %323 = vmatmul.mubr.f32.gmra.mrb[0].mxu0 %v139
    %v324 = vpop.f32.mrb[0].mxu0
    %v325 = vadd.f32 0.0, %v324
    %v326 = vpop.f32.mrb[0].mxu0
    %v327 = vadd.f32 0.0, %v326
    %328 = vmatprep.mubr.f32.mxu0 0.0
    %329 = vmatmul.mubr.f32.gmra.mrb[0].mxu0 %v140
    %v330 = vpop.f32.mrb[0].mxu0
    %v331 = vadd.f32 0.0, %v330
    %v332 = vpop.f32.mrb[0].mxu0
    %v333 = vadd.f32 0.0, %v332
    %334 = vmatprep.mubr.f32.mxu0 0.0
    %335 = vmatmul.mubr.f32.gmra.mrb[0].mxu0 %v141
    %v336 = vpop.f32.mrb[0].mxu0
    %v337 = vadd.f32 0.0, %v336
    %v338 = vpop.f32.mrb[0].mxu0
    %v339 = vadd.f32 0.0, %v338
    %340 = vmatprep.mubr.f32.mxu0 0.0
    %341 = vmatmul.mubr.f32.gmra.mrb[0].mxu0 %v142
    %v342 = vpop.f32.mrb[0].mxu0
    %v343 = vadd.f32 0.0, %v342
    %v344 = vpop.f32.mrb[0].mxu0
    %v345 = vadd.f32 0.0, %v344
    %346 = vmatprep.mubr.f32.mxu0 0.0
    %347 = vmatmul.mubr.f32.gmra.mrb[0].mxu0 %v143
    %v348 = vpop.f32.mrb[0].mxu0
    %v349 = vadd.f32 0.0, %v348
    %v350 = vpop.f32.mrb[0].mxu0
    %v351 = vadd.f32 0.0, %v350
    %352 = vdwg.mxu0
    %353 = vmatprep.subr.mxu0 0.0
    %354 = vmatpush1.msra.mxu0 %v146
    %355 = vmatprep.subr.mxu0 0.0
    %356 = vmatpush1.msra.mxu0 %v149
    %357 = vmatprep.subr.mxu0 0.0
    %358 = vmatpush1.msra.mxu0 %v152
    %359 = vmatprep.subr.mxu0 0.0
    %360 = vmatpush1.msra.mxu0 %v155
    %361 = vmatprep.subr.mxu0 0.0
    %362 = vmatpush1.msra.mxu0 %v158
    %363 = vmatprep.subr.mxu0 0.0
    %364 = vmatpush1.msra.mxu0 %v161
    %365 = vmatprep.subr.mxu0 0.0
    %366 = vmatpush1.msra.mxu0 %v164
    %367 = vmatprep.subr.mxu0 0.0
    %368 = vmatpush1.msra.mxu0 %v167
    %369 = vmatprep.subr.mxu0 0.0
    %370 = vmatpush1.msra.mxu0 %v170
    %371 = vmatprep.subr.mxu0 0.0
    %372 = vmatpush1.msra.mxu0 %v173
    %373 = vmatprep.subr.mxu0 0.0
    %374 = vmatpush1.msra.mxu0 %v176
    %375 = vmatprep.subr.mxu0 0.0
    %376 = vmatpush1.msra.mxu0 %v179
    %377 = vmatprep.subr.mxu0 0.0
    %378 = vmatpush1.msra.mxu0 %v182
    %379 = vmatprep.subr.mxu0 0.0
    %380 = vmatpush1.msra.mxu0 %v185
    %381 = vmatprep.subr.mxu0 0.0
    %382 = vmatpush1.msra.mxu0 %v188
    %383 = vmatprep.subr.mxu0 0.0
    %384 = vmatpush1.msra.mxu0 %v191
    %385 = vmatprep.subr.mxu0 0.0
    %386 = vmatpush1.msra.mxu0 0.0
    %387 = vmatprep.subr.mxu0 0.0
    %388 = vmatpush1.msra.mxu0 0.0
    %389 = vmatprep.subr.mxu0 0.0
    %390 = vmatpush1.msra.mxu0 0.0
    %391 = vmatprep.subr.mxu0 0.0
    %392 = vmatpush1.msra.mxu0 0.0
    %393 = vmatprep.subr.mxu0 0.0
    %394 = vmatpush1.msra.mxu0 0.0
    %395 = vmatprep.subr.mxu0 0.0
    %396 = vmatpush1.msra.mxu0 0.0
    %397 = vmatprep.subr.mxu0 0.0
    %398 = vmatpush1.msra.mxu0 0.0
    %399 = vmatprep.subr.mxu0 0.0
    %400 = vmatpush1.msra.mxu0 0.0
    %401 = vmatprep.subr.mxu0 0.0
    %402 = vmatpush1.msra.mxu0 0.0
    %403 = vmatprep.subr.mxu0 0.0
    %404 = vmatpush1.msra.mxu0 0.0
    %405 = vmatprep.subr.mxu0 0.0
    %406 = vmatpush1.msra.mxu0 0.0
    %407 = vmatprep.subr.mxu0 0.0
    %408 = vmatpush1.msra.mxu0 0.0
    %409 = vmatprep.subr.mxu0 0.0
    %410 = vmatpush1.msra.mxu0 0.0
    %411 = vmatprep.subr.mxu0 0.0
    %412 = vmatpush1.msra.mxu0 0.0
    %413 = vmatprep.subr.mxu0 0.0
    %414 = vmatpush1.msra.mxu0 0.0
    %415 = vmatprep.subr.mxu0 0.0
    %416 = vmatpush1.msra.mxu0 0.0
    %417 = vmatprep.mubr.f32.mxu0 0.0
    %418 = vmatmul.mubr.f32.gmra.mrb[0].mxu0 %v128
    %v419 = vpop.f32.mrb[0].mxu0
    %v420 = vadd.f32 0.0, %v419
    %v421 = vpop.f32.mrb[0].mxu0
    %422 = vmatprep.mubr.f32.mxu0 0.0
    %423 = vmatmul.mubr.f32.gmra.mrb[0].mxu0 %v129
    %v424 = vpop.f32.mrb[0].mxu0
    %v425 = vadd.f32 0.0, %v424
    %v426 = vpop.f32.mrb[0].mxu0
    %427 = vmatprep.mubr.f32.mxu0 0.0
    %428 = vmatmul.mubr.f32.gmra.mrb[0].mxu0 %v130
    %v429 = vpop.f32.mrb[0].mxu0
    %v430 = vadd.f32 0.0, %v429
    %v431 = vpop.f32.mrb[0].mxu0
    %432 = vmatprep.mubr.f32.mxu0 0.0
    %433 = vmatmul.mubr.f32.gmra.mrb[0].mxu0 %v131
    %v434 = vpop.f32.mrb[0].mxu0
    %v435 = vadd.f32 0.0, %v434
    %v436 = vpop.f32.mrb[0].mxu0
    %437 = vmatprep.mubr.f32.mxu0 0.0
    %438 = vmatmul.mubr.f32.gmra.mrb[0].mxu0 %v132
    %v439 = vpop.f32.mrb[0].mxu0
    %v440 = vadd.f32 0.0, %v439
    %v441 = vpop.f32.mrb[0].mxu0
    %442 = vmatprep.mubr.f32.mxu0 0.0
    %443 = vmatmul.mubr.f32.gmra.mrb[0].mxu0 %v133
    %v444 = vpop.f32.mrb[0].mxu0
    %v445 = vadd.f32 0.0, %v444
    %v446 = vpop.f32.mrb[0].mxu0
    %447 = vmatprep.mubr.f32.mxu0 0.0
    %448 = vmatmul.mubr.f32.gmra.mrb[0].mxu0 %v134
    %v449 = vpop.f32.mrb[0].mxu0
    %v450 = vadd.f32 0.0, %v449
    %v451 = vpop.f32.mrb[0].mxu0
    %452 = vmatprep.mubr.f32.mxu0 0.0
    %453 = vmatmul.mubr.f32.gmra.mrb[0].mxu0 %v135
    %v454 = vpop.f32.mrb[0].mxu0
    %v455 = vadd.f32 0.0, %v454
    %v456 = vpop.f32.mrb[0].mxu0
    %457 = vmatprep.mubr.f32.mxu0 0.0
    %458 = vmatmul.mubr.f32.gmra.mrb[0].mxu0 %v136
    %v459 = vpop.f32.mrb[0].mxu0
    %v460 = vadd.f32 0.0, %v459
    %v461 = vpop.f32.mrb[0].mxu0
    %462 = vmatprep.mubr.f32.mxu0 0.0
    %463 = vmatmul.mubr.f32.gmra.mrb[0].mxu0 %v137
    %v464 = vpop.f32.mrb[0].mxu0
    %v465 = vadd.f32 0.0, %v464
    %v466 = vpop.f32.mrb[0].mxu0
    %467 = vmatprep.mubr.f32.mxu0 0.0
    %468 = vmatmul.mubr.f32.gmra.mrb[0].mxu0 %v138
    %v469 = vpop.f32.mrb[0].mxu0
    %v470 = vadd.f32 0.0, %v469
    %v471 = vpop.f32.mrb[0].mxu0
    %472 = vmatprep.mubr.f32.mxu0 0.0
    %473 = vmatmul.mubr.f32.gmra.mrb[0].mxu0 %v139
    %v474 = vpop.f32.mrb[0].mxu0
    %v475 = vadd.f32 0.0, %v474
    %v476 = vpop.f32.mrb[0].mxu0
    %477 = vmatprep.mubr.f32.mxu0 0.0
    %478 = vmatmul.mubr.f32.gmra.mrb[0].mxu0 %v140
    %v479 = vpop.f32.mrb[0].mxu0
    %v480 = vadd.f32 0.0, %v479
    %v481 = vpop.f32.mrb[0].mxu0
    %482 = vmatprep.mubr.f32.mxu0 0.0
    %483 = vmatmul.mubr.f32.gmra.mrb[0].mxu0 %v141
    %v484 = vpop.f32.mrb[0].mxu0
    %v485 = vadd.f32 0.0, %v484
    %v486 = vpop.f32.mrb[0].mxu0
    %487 = vmatprep.mubr.f32.mxu0 0.0
    %488 = vmatmul.mubr.f32.gmra.mrb[0].mxu0 %v142
    %v489 = vpop.f32.mrb[0].mxu0
    %v490 = vadd.f32 0.0, %v489
    %v491 = vpop.f32.mrb[0].mxu0
    %492 = vmatprep.mubr.f32.mxu0 0.0
    %493 = vmatmul.mubr.f32.gmra.mrb[0].mxu0 %v143
    %v494 = vpop.f32.mrb[0].mxu0
    %v495 = vadd.f32 0.0, %v494
    %v496 = vpop.f32.mrb[0].mxu0
    %497 = vdwg.mxu0
    %v498 = vadd.f32 %v80, %v259
    %v499 = vadd.f32 %v81, %v261
    %v500 = vadd.f32 %v82, %v420
    %v501 = vadd.f32 %v83, %v265
    %v502 = vadd.f32 %v84, %v267
    %v503 = vadd.f32 %v85, %v425
    %v504 = vadd.f32 %v86, %v271
    %v505 = vadd.f32 %v87, %v273
    %v506 = vadd.f32 %v88, %v430
    %v507 = vadd.f32 %v89, %v277
    %v508 = vadd.f32 %v90, %v279
    %v509 = vadd.f32 %v91, %v435
    %v510 = vadd.f32 %v92, %v283
    %v511 = vadd.f32 %v93, %v285
    %v512 = vadd.f32 %v94, %v440
    %v513 = vadd.f32 %v95, %v289
    %v514 = vadd.f32 %v96, %v291
    %v515 = vadd.f32 %v97, %v445
    %v516 = vadd.f32 %v98, %v295
    %v517 = vadd.f32 %v99, %v297
    %v518 = vadd.f32 %v100, %v450
    %v519 = vadd.f32 %v101, %v301
    %v520 = vadd.f32 %v102, %v303
    %v521 = vadd.f32 %v103, %v455
    %v522 = vadd.f32 %v104, %v307
    %v523 = vadd.f32 %v105, %v309
    %v524 = vadd.f32 %v106, %v460
    %v525 = vadd.f32 %v107, %v313
    %v526 = vadd.f32 %v108, %v315
    %v527 = vadd.f32 %v109, %v465
    %v528 = vadd.f32 %v110, %v319
    %v529 = vadd.f32 %v111, %v321
    %v530 = vadd.f32 %v112, %v470
    %v531 = vadd.f32 %v113, %v325
    %v532 = vadd.f32 %v114, %v327
    %v533 = vadd.f32 %v115, %v475
    %v534 = vadd.f32 %v116, %v331
    %v535 = vadd.f32 %v117, %v333
    %v536 = vadd.f32 %v118, %v480
    %v537 = vadd.f32 %v119, %v337
    %v538 = vadd.f32 %v120, %v339
    %v539 = vadd.f32 %v121, %v485
    %v540 = vadd.f32 %v122, %v343
    %v541 = vadd.f32 %v123, %v345
    %v542 = vadd.f32 %v124, %v490
    %v543 = vadd.f32 %v125, %v349
    %v544 = vadd.f32 %v126, %v351
    %v545 = vadd.f32 %v127, %v495
    %546 = vst [vmem:[#allocation2] sm:$0xff] %v498
    %547 = vst [vmem:[#allocation2 + $0x8] sm:$0xff] %v499
    %548 = vst [vmem:[#allocation2 + $0x10] sm:$0xff] %v500
    %549 = vst [vmem:[#allocation2 + $0x18] sm:$0xff] %v501
    %550 = vst [vmem:[#allocation2 + $0x20] sm:$0xff] %v502
    %551 = vst [vmem:[#allocation2 + $0x28] sm:$0xff] %v503
    %552 = vst [vmem:[#allocation2 + $0x30] sm:$0xff] %v504
    %553 = vst [vmem:[#allocation2 + $0x38] sm:$0xff] %v505
    %554 = vst [vmem:[#allocation2 + $0x40] sm:$0xff] %v506
    %555 = vst [vmem:[#allocation2 + $0x48] sm:$0xff] %v507
    %556 = vst [vmem:[#allocation2 + $0x50] sm:$0xff] %v508
    %557 = vst [vmem:[#allocation2 + $0x58] sm:$0xff] %v509
    %558 = vst [vmem:[#allocation2 + $0x60] sm:$0xff] %v510
    %559 = vst [vmem:[#allocation2 + $0x68] sm:$0xff] %v511
    %560 = vst [vmem:[#allocation2 + $0x70] sm:$0xff] %v512
    %561 = vst [vmem:[#allocation2 + $0x78] sm:$0xff] %v513
    %562 = vst [vmem:[#allocation2 + $0x80] sm:$0xff] %v514
    %563 = vst [vmem:[#allocation2 + $0x88] sm:$0xff] %v515
    %564 = vst [vmem:[#allocation2 + $0x90] sm:$0xff] %v516
    %565 = vst [vmem:[#allocation2 + $0x98] sm:$0xff] %v517
    %566 = vst [vmem:[#allocation2 + $0xa0] sm:$0xff] %v518
    %567 = vst [vmem:[#allocation2 + $0xa8] sm:$0xff] %v519
    %568 = vst [vmem:[#allocation2 + $0xb0] sm:$0xff] %v520
    %569 = vst [vmem:[#allocation2 + $0xb8] sm:$0xff] %v521
    %570 = vst [vmem:[#allocation2 + $0xc0] sm:$0xff] %v522
    %571 = vst [vmem:[#allocation2 + $0xc8] sm:$0xff] %v523
    %572 = vst [vmem:[#allocation2 + $0xd0] sm:$0xff] %v524
    %573 = vst [vmem:[#allocation2 + $0xd8] sm:$0xff] %v525
    %574 = vst [vmem:[#allocation2 + $0xe0] sm:$0xff] %v526
    %575 = vst [vmem:[#allocation2 + $0xe8] sm:$0xff] %v527
    %576 = vst [vmem:[#allocation2 + $0xf0] sm:$0xff] %v528
    %577 = vst [vmem:[#allocation2 + $0xf8] sm:$0xff] %v529
    %578 = vst [vmem:[#allocation2 + $0x100] sm:$0xff] %v530
    %579 = vst [vmem:[#allocation2 + $0x108] sm:$0xff] %v531
    %580 = vst [vmem:[#allocation2 + $0x110] sm:$0xff] %v532
    %581 = vst [vmem:[#allocation2 + $0x118] sm:$0xff] %v533
    %582 = vst [vmem:[#allocation2 + $0x120] sm:$0xff] %v534
    %583 = vst [vmem:[#allocation2 + $0x128] sm:$0xff] %v535
    %584 = vst [vmem:[#allocation2 + $0x130] sm:$0xff] %v536
    %585 = vst [vmem:[#allocation2 + $0x138] sm:$0xff] %v537
    %586 = vst [vmem:[#allocation2 + $0x140] sm:$0xff] %v538
    %587 = vst [vmem:[#allocation2 + $0x148] sm:$0xff] %v539
    %588 = vst [vmem:[#allocation2 + $0x150] sm:$0xff] %v540
    %589 = vst [vmem:[#allocation2 + $0x158] sm:$0xff] %v541
    %590 = vst [vmem:[#allocation2 + $0x160] sm:$0xff] %v542
    %591 = vst [vmem:[#allocation2 + $0x168] sm:$0xff] %v543
    %592 = vst [vmem:[#allocation2 + $0x170] sm:$0xff] %v544
    %593 = vst [vmem:[#allocation2 + $0x178] sm:$0xff] %v545
    // Predicated region
    $region22: #{_lambda_.46} parent=1 // pred_check
      %p594 = pneg %p28
    $region23: #{_lambda_.46} parent=1 // pred_check_branch
      %596 = sbr.rel (%p594) target = $region25
    $region24: #{_lambda_.46} parent=1 // pred_region
      %v597 = vld [vmem:[#allocation2] sm:$0xff]
      %v598 = vld [vmem:[#allocation2 + $0x8] sm:$0xff]
      %v599 = vld [vmem:[#allocation2 + $0x10] sm:$0xff]
      %v600 = vld [vmem:[#allocation2 + $0x18] sm:$0xff]
      %v601 = vld [vmem:[#allocation2 + $0x20] sm:$0xff]
      %v602 = vld [vmem:[#allocation2 + $0x28] sm:$0xff]
      %v603 = vld [vmem:[#allocation2 + $0x30] sm:$0xff]
      %v604 = vld [vmem:[#allocation2 + $0x38] sm:$0xff]
      %v605 = vld [vmem:[#allocation2 + $0x40] sm:$0xff]
      %v606 = vld [vmem:[#allocation2 + $0x48] sm:$0xff]
      %v607 = vld [vmem:[#allocation2 + $0x50] sm:$0xff]
      %v608 = vld [vmem:[#allocation2 + $0x58] sm:$0xff]
      %v609 = vld [vmem:[#allocation2 + $0x60] sm:$0xff]
      %v610 = vld [vmem:[#allocation2 + $0x68] sm:$0xff]
      %v611 = vld [vmem:[#allocation2 + $0x70] sm:$0xff]
      %v612 = vld [vmem:[#allocation2 + $0x78] sm:$0xff]
      %v613 = vld [vmem:[#allocation2 + $0x80] sm:$0xff]
      %v614 = vld [vmem:[#allocation2 + $0x88] sm:$0xff]
      %v615 = vld [vmem:[#allocation2 + $0x90] sm:$0xff]
      %v616 = vld [vmem:[#allocation2 + $0x98] sm:$0xff]
      %v617 = vld [vmem:[#allocation2 + $0xa0] sm:$0xff]
      %v618 = vld [vmem:[#allocation2 + $0xa8] sm:$0xff]
      %v619 = vld [vmem:[#allocation2 + $0xb0] sm:$0xff]
      %v620 = vld [vmem:[#allocation2 + $0xb8] sm:$0xff]
      %v621 = vld [vmem:[#allocation2 + $0xc0] sm:$0xff]
      %v622 = vld [vmem:[#allocation2 + $0xc8] sm:$0xff]
      %v623 = vld [vmem:[#allocation2 + $0xd0] sm:$0xff]
      %v624 = vld [vmem:[#allocation2 + $0xd8] sm:$0xff]
      %v625 = vld [vmem:[#allocation2 + $0xe0] sm:$0xff]
      %v626 = vld [vmem:[#allocation2 + $0xe8] sm:$0xff]
      %v627 = vld [vmem:[#allocation2 + $0xf0] sm:$0xff]
      %v628 = vld [vmem:[#allocation2 + $0xf8] sm:$0xff]
      %v629 = vld [vmem:[#allocation2 + $0x100] sm:$0xff]
      %v630 = vld [vmem:[#allocation2 + $0x108] sm:$0xff]
      %v631 = vld [vmem:[#allocation2 + $0x110] sm:$0xff]
      %v632 = vld [vmem:[#allocation2 + $0x118] sm:$0xff]
      %v633 = vld [vmem:[#allocation2 + $0x120] sm:$0xff]
      %v634 = vld [vmem:[#allocation2 + $0x128] sm:$0xff]
      %v635 = vld [vmem:[#allocation2 + $0x130] sm:$0xff]
      %v636 = vld [vmem:[#allocation2 + $0x138] sm:$0xff]
      %v637 = vld [vmem:[#allocation2 + $0x140] sm:$0xff]
      %v638 = vld [vmem:[#allocation2 + $0x148] sm:$0xff]
      %v639 = vld [vmem:[#allocation2 + $0x150] sm:$0xff]
      %v640 = vld [vmem:[#allocation2 + $0x158] sm:$0xff]
      %v641 = vld [vmem:[#allocation2 + $0x160] sm:$0xff]
      %v642 = vld [vmem:[#allocation2 + $0x168] sm:$0xff]
      %v643 = vld [vmem:[#allocation2 + $0x170] sm:$0xff]
      %v644 = vld [vmem:[#allocation2 + $0x178] sm:$0xff]
      %v645 = vld [vmem:[%s2] sm:$0x7]
      %v647 = vlaneseq
      %v648 = vshrl.u32 %v647, 7
      %v649 = vsub.s32 0, %v648
      %v650 = vrot.slane %v645, %v649
      %v651 = vlaneseq
      %v652 = vshrl.u32 %v651, 7
      %v653 = vsub.s32 1, %v652
      %v654 = vrot.slane %v645, %v653
      %v655 = vlaneseq
      %v656 = vshrl.u32 %v655, 7
      %v657 = vsub.s32 2, %v656
      %v658 = vrot.slane %v645, %v657
      %v662 = vadd.f32 %v597, %v650
      %v663 = vadd.f32 %v598, %v654
      %v664 = vadd.f32 %v599, %v658
      %v665 = vadd.f32 %v600, %v650
      %v666 = vadd.f32 %v601, %v654
      %v667 = vadd.f32 %v602, %v658
      %v668 = vadd.f32 %v603, %v650
      %v669 = vadd.f32 %v604, %v654
      %v670 = vadd.f32 %v605, %v658
      %v671 = vadd.f32 %v606, %v650
      %v672 = vadd.f32 %v607, %v654
      %v673 = vadd.f32 %v608, %v658
      %v674 = vadd.f32 %v609, %v650
      %v675 = vadd.f32 %v610, %v654
      %v676 = vadd.f32 %v611, %v658
      %v677 = vadd.f32 %v612, %v650
      %v678 = vadd.f32 %v613, %v654
      %v679 = vadd.f32 %v614, %v658
      %v680 = vadd.f32 %v615, %v650
      %v681 = vadd.f32 %v616, %v654
      %v682 = vadd.f32 %v617, %v658
      %v683 = vadd.f32 %v618, %v650
      %v684 = vadd.f32 %v619, %v654
      %v685 = vadd.f32 %v620, %v658
      %v686 = vadd.f32 %v621, %v650
      %v687 = vadd.f32 %v622, %v654
      %v688 = vadd.f32 %v623, %v658
      %v689 = vadd.f32 %v624, %v650
      %v690 = vadd.f32 %v625, %v654
      %v691 = vadd.f32 %v626, %v658
      %v692 = vadd.f32 %v627, %v650
      %v693 = vadd.f32 %v628, %v654
      %v694 = vadd.f32 %v629, %v658
      %v695 = vadd.f32 %v630, %v650
      %v696 = vadd.f32 %v631, %v654
      %v697 = vadd.f32 %v632, %v658
      %v698 = vadd.f32 %v633, %v650
      %v699 = vadd.f32 %v634, %v654
      %v700 = vadd.f32 %v635, %v658
      %v701 = vadd.f32 %v636, %v650
      %v702 = vadd.f32 %v637, %v654
      %v703 = vadd.f32 %v638, %v658
      %v704 = vadd.f32 %v639, %v650
      %v705 = vadd.f32 %v640, %v654
      %v706 = vadd.f32 %v641, %v658
      %v707 = vadd.f32 %v642, %v650
      %v708 = vadd.f32 %v643, %v654
      %v709 = vadd.f32 %v644, %v658
      %710 = vst [vmem:[%s3] sm:$0xff] %v662
      %711 = vst [vmem:[%s3 + $0x8] sm:$0xff] %v663
      %712 = vst [vmem:[%s3 + $0x10] sm:$0xff] %v664
      %713 = vst [vmem:[%s3 + $0x18] sm:$0xff] %v665
      %714 = vst [vmem:[%s3 + $0x20] sm:$0xff] %v666
      %715 = vst [vmem:[%s3 + $0x28] sm:$0xff] %v667
      %716 = vst [vmem:[%s3 + $0x30] sm:$0xff] %v668
      %717 = vst [vmem:[%s3 + $0x38] sm:$0xff] %v669
      %718 = vst [vmem:[%s3 + $0x40] sm:$0xff] %v670
      %719 = vst [vmem:[%s3 + $0x48] sm:$0xff] %v671
      %720 = vst [vmem:[%s3 + $0x50] sm:$0xff] %v672
      %721 = vst [vmem:[%s3 + $0x58] sm:$0xff] %v673
      %722 = vst [vmem:[%s3 + $0x60] sm:$0xff] %v674
      %723 = vst [vmem:[%s3 + $0x68] sm:$0xff] %v675
      %724 = vst [vmem:[%s3 + $0x70] sm:$0xff] %v676
      %725 = vst [vmem:[%s3 + $0x78] sm:$0xff] %v677
      %726 = vst [vmem:[%s3 + $0x80] sm:$0xff] %v678
      %727 = vst [vmem:[%s3 + $0x88] sm:$0xff] %v679
      %728 = vst [vmem:[%s3 + $0x90] sm:$0xff] %v680
      %729 = vst [vmem:[%s3 + $0x98] sm:$0xff] %v681
      %730 = vst [vmem:[%s3 + $0xa0] sm:$0xff] %v682
      %731 = vst [vmem:[%s3 + $0xa8] sm:$0xff] %v683
      %732 = vst [vmem:[%s3 + $0xb0] sm:$0xff] %v684
      %733 = vst [vmem:[%s3 + $0xb8] sm:$0xff] %v685
      %734 = vst [vmem:[%s3 + $0xc0] sm:$0xff] %v686
      %735 = vst [vmem:[%s3 + $0xc8] sm:$0xff] %v687
      %736 = vst [vmem:[%s3 + $0xd0] sm:$0xff] %v688
      %737 = vst [vmem:[%s3 + $0xd8] sm:$0xff] %v689
      %738 = vst [vmem:[%s3 + $0xe0] sm:$0xff] %v690
      %739 = vst [vmem:[%s3 + $0xe8] sm:$0xff] %v691
      %740 = vst [vmem:[%s3 + $0xf0] sm:$0xff] %v692
      %741 = vst [vmem:[%s3 + $0xf8] sm:$0xff] %v693
      %742 = vst [vmem:[%s3 + $0x100] sm:$0xff] %v694
      %743 = vst [vmem:[%s3 + $0x108] sm:$0xff] %v695
      %744 = vst [vmem:[%s3 + $0x110] sm:$0xff] %v696
      %745 = vst [vmem:[%s3 + $0x118] sm:$0xff] %v697
      %746 = vst [vmem:[%s3 + $0x120] sm:$0xff] %v698
      %747 = vst [vmem:[%s3 + $0x128] sm:$0xff] %v699
      %748 = vst [vmem:[%s3 + $0x130] sm:$0xff] %v700
      %749 = vst [vmem:[%s3 + $0x138] sm:$0xff] %v701
      %750 = vst [vmem:[%s3 + $0x140] sm:$0xff] %v702
      %751 = vst [vmem:[%s3 + $0x148] sm:$0xff] %v703
      %752 = vst [vmem:[%s3 + $0x150] sm:$0xff] %v704
      %753 = vst [vmem:[%s3 + $0x158] sm:$0xff] %v705
      %754 = vst [vmem:[%s3 + $0x160] sm:$0xff] %v706
      %755 = vst [vmem:[%s3 + $0x168] sm:$0xff] %v707
      %756 = vst [vmem:[%s3 + $0x170] sm:$0xff] %v708
      %757 = vst [vmem:[%s3 + $0x178] sm:$0xff] %v709
    $region25: #{_lambda_.46} parent=1 // pred_fallthru
      _
    // Predicated region
    $region26: #{_lambda_.46} parent=1 // pred_check
      _
    $region27: #{_lambda_.46} parent=1 // pred_check_branch
      %759 = sbr.rel (0) target = $region29
    $region28: #{_lambda_.46} parent=1 // pred_region
      _
    $region29: #{_lambda_.46} parent=1 // pred_fallthru
      _
    // Predicated region
    $region30: #{_lambda_.46} parent=1 // pred_check
      _
    $region31: #{_lambda_.46} parent=1 // pred_check_branch
      %761 = sbr.rel (0) target = $region33
    $region32: #{_lambda_.46} parent=1 // pred_region
      _
    $region33: #{_lambda_.46} parent=1 // pred_fallthru
      _
    %762 = vsyncpa [#allocation4], 1

// kernel: _lambda_.49
$region0: #{_lambda_.49}
  #allocation0 [shape = 'u32[]', space=smem, size = 0x4, offset = 0x4, fixed_abs, tag = 'smem constant byte address 0x4 - core index']
  #allocation1 [shape = 'u32[144,128]{1,0:T(1,128)}', space=vmem, size = 0x12000, scoped, tag = 'internal scratch']
  %s0 = inlined_call_operand.vmem [shape: f32[128,128], index: 0, kind: input, shape index: {}]
  %s1 = inlined_call_operand.vmem [shape: f32[128,128], index: 1, kind: input, shape index: {}]
  %s2 = inlined_call_operand.vmem [shape: f32[1,128], index: 2, kind: input, shape index: {}]
  %s3 = inlined_call_operand.vmem [shape: f32[1,128], index: 3, kind: input, shape index: {}]
  %s4 = inlined_call_operand.vmem [shape: f32[128,128], index: 4, kind: output, shape index: {}]
  %s5 = sld [smem:[#allocation0]]
  $region26: #{_lambda_.49} parent=0
    _
  %s7 = ssub.s32 1, %s5
  %s8 = scalar_select 0, %s7, %s5
  // Predicated region
  $region2: #{_lambda_.49} parent=0 // pred_check
    _
  $region3: #{_lambda_.49} parent=0 // pred_check_branch
    %10 = sbr.rel (0) target = $region5
  $region4: #{_lambda_.49} parent=0 // pred_region
    _
  $region5: #{_lambda_.49} parent=0 // pred_fallthru
    _
  // Predicated region
  $region6: #{_lambda_.49} parent=0 // pred_check
    _
  $region7: #{_lambda_.49} parent=0 // pred_check_branch
    %12 = sbr.rel (0) target = $region9
  $region8: #{_lambda_.49} parent=0 // pred_region
    _
  $region9: #{_lambda_.49} parent=0 // pred_fallthru
    _
  // Predicated region
  $region10: #{_lambda_.49} parent=0 // pred_check
    _
  $region11: #{_lambda_.49} parent=0 // pred_check_branch
    %14 = sbr.rel (0) target = $region13
  $region12: #{_lambda_.49} parent=0 // pred_region
    _
  $region13: #{_lambda_.49} parent=0 // pred_fallthru
    _
  // Predicated region
  $region14: #{_lambda_.49} parent=0 // pred_check
    _
  $region15: #{_lambda_.49} parent=0 // pred_check_branch
    %16 = sbr.rel (0) target = $region17
  $region16: #{_lambda_.49} parent=0 // pred_region
    _
  $region17: #{_lambda_.49} parent=0 // pred_fallthru
    _
  %v17 = vld [vmem:[%s0] sm:$0xff]
  %v18 = vld [vmem:[%s0 + $0x8] sm:$0xff]
  %v19 = vld [vmem:[%s0 + $0x10] sm:$0xff]
  %v20 = vld [vmem:[%s0 + $0x18] sm:$0xff]
  %v21 = vld [vmem:[%s0 + $0x20] sm:$0xff]
  %v22 = vld [vmem:[%s0 + $0x28] sm:$0xff]
  %v23 = vld [vmem:[%s0 + $0x30] sm:$0xff]
  %v24 = vld [vmem:[%s0 + $0x38] sm:$0xff]
  %v25 = vld [vmem:[%s0 + $0x40] sm:$0xff]
  %v26 = vld [vmem:[%s0 + $0x48] sm:$0xff]
  %v27 = vld [vmem:[%s0 + $0x50] sm:$0xff]
  %v28 = vld [vmem:[%s0 + $0x58] sm:$0xff]
  %v29 = vld [vmem:[%s0 + $0x60] sm:$0xff]
  %v30 = vld [vmem:[%s0 + $0x68] sm:$0xff]
  %v31 = vld [vmem:[%s0 + $0x70] sm:$0xff]
  %v32 = vld [vmem:[%s0 + $0x78] sm:$0xff]
  %v33 = vld [vmem:[%s1] sm:$0xff]
  %v34 = vld [vmem:[%s1 + $0x8] sm:$0xff]
  %v35 = vld [vmem:[%s1 + $0x10] sm:$0xff]
  %v36 = vld [vmem:[%s1 + $0x18] sm:$0xff]
  %v37 = vld [vmem:[%s1 + $0x20] sm:$0xff]
  %v38 = vld [vmem:[%s1 + $0x28] sm:$0xff]
  %v39 = vld [vmem:[%s1 + $0x30] sm:$0xff]
  %v40 = vld [vmem:[%s1 + $0x38] sm:$0xff]
  %v41 = vld [vmem:[%s1 + $0x40] sm:$0xff]
  %v42 = vld [vmem:[%s1 + $0x48] sm:$0xff]
  %v43 = vld [vmem:[%s1 + $0x50] sm:$0xff]
  %v44 = vld [vmem:[%s1 + $0x58] sm:$0xff]
  %v45 = vld [vmem:[%s1 + $0x60] sm:$0xff]
  %v46 = vld [vmem:[%s1 + $0x68] sm:$0xff]
  %v47 = vld [vmem:[%s1 + $0x70] sm:$0xff]
  %v48 = vld [vmem:[%s1 + $0x78] sm:$0xff]
  %v49 = vadd.f32 %v17, %v33
  %v50 = vadd.f32 %v18, %v34
  %v51 = vadd.f32 %v19, %v35
  %v52 = vadd.f32 %v20, %v36
  %v53 = vadd.f32 %v21, %v37
  %v54 = vadd.f32 %v22, %v38
  %v55 = vadd.f32 %v23, %v39
  %v56 = vadd.f32 %v24, %v40
  %v57 = vadd.f32 %v25, %v41
  %v58 = vadd.f32 %v26, %v42
  %v59 = vadd.f32 %v27, %v43
  %v60 = vadd.f32 %v28, %v44
  %v61 = vadd.f32 %v29, %v45
  %v62 = vadd.f32 %v30, %v46
  %v63 = vadd.f32 %v31, %v47
  %v64 = vadd.f32 %v32, %v48
  %65 = vadd.xlane.f32.xlu0 %v49
  %v66 = vpop.xlane.xlu0 %65
  %67 = vadd.xlane.f32.xlu0 %v50
  %v68 = vpop.xlane.xlu0 %67
  %69 = vadd.xlane.f32.xlu0 %v51
  %v70 = vpop.xlane.xlu0 %69
  %71 = vadd.xlane.f32.xlu0 %v52
  %v72 = vpop.xlane.xlu0 %71
  %73 = vadd.xlane.f32.xlu0 %v53
  %v74 = vpop.xlane.xlu0 %73
  %75 = vadd.xlane.f32.xlu0 %v54
  %v76 = vpop.xlane.xlu0 %75
  %77 = vadd.xlane.f32.xlu0 %v55
  %v78 = vpop.xlane.xlu0 %77
  %79 = vadd.xlane.f32.xlu0 %v56
  %v80 = vpop.xlane.xlu0 %79
  %81 = vadd.xlane.f32.xlu0 %v57
  %v82 = vpop.xlane.xlu0 %81
  %83 = vadd.xlane.f32.xlu0 %v58
  %v84 = vpop.xlane.xlu0 %83
  %85 = vadd.xlane.f32.xlu0 %v59
  %v86 = vpop.xlane.xlu0 %85
  %87 = vadd.xlane.f32.xlu0 %v60
  %v88 = vpop.xlane.xlu0 %87
  %89 = vadd.xlane.f32.xlu0 %v61
  %v90 = vpop.xlane.xlu0 %89
  %91 = vadd.xlane.f32.xlu0 %v62
  %v92 = vpop.xlane.xlu0 %91
  %93 = vadd.xlane.f32.xlu0 %v63
  %v94 = vpop.xlane.xlu0 %93
  %95 = vadd.xlane.f32.xlu0 %v64
  %v96 = vpop.xlane.xlu0 %95
  %v97 = vrcp.pop 128.0
  %v98 = vmul.f32 %v66, %v97
  %v99 = vmul.f32 %v68, %v97
  %v100 = vmul.f32 %v70, %v97
  %v101 = vmul.f32 %v72, %v97
  %v102 = vmul.f32 %v74, %v97
  %v103 = vmul.f32 %v76, %v97
  %v104 = vmul.f32 %v78, %v97
  %v105 = vmul.f32 %v80, %v97
  %v106 = vmul.f32 %v82, %v97
  %v107 = vmul.f32 %v84, %v97
  %v108 = vmul.f32 %v86, %v97
  %v109 = vmul.f32 %v88, %v97
  %v110 = vmul.f32 %v90, %v97
  %v111 = vmul.f32 %v92, %v97
  %v112 = vmul.f32 %v94, %v97
  %v113 = vmul.f32 %v96, %v97
  %v114 = vsub.f32 %v49, %v98
  %v115 = vsub.f32 %v50, %v99
  %v116 = vsub.f32 %v51, %v100
  %v117 = vsub.f32 %v52, %v101
  %v118 = vsub.f32 %v53, %v102
  %v119 = vsub.f32 %v54, %v103
  %v120 = vsub.f32 %v55, %v104
  %v121 = vsub.f32 %v56, %v105
  %v122 = vsub.f32 %v57, %v106
  %v123 = vsub.f32 %v58, %v107
  %v124 = vsub.f32 %v59, %v108
  %v125 = vsub.f32 %v60, %v109
  %v126 = vsub.f32 %v61, %v110
  %v127 = vsub.f32 %v62, %v111
  %v128 = vsub.f32 %v63, %v112
  %v129 = vsub.f32 %v64, %v113
  %v130 = vmul.f32 %v114, %v114
  %v131 = vmul.f32 %v115, %v115
  %v132 = vmul.f32 %v116, %v116
  %v133 = vmul.f32 %v117, %v117
  %v134 = vmul.f32 %v118, %v118
  %v135 = vmul.f32 %v119, %v119
  %v136 = vmul.f32 %v120, %v120
  %v137 = vmul.f32 %v121, %v121
  %v138 = vmul.f32 %v122, %v122
  %v139 = vmul.f32 %v123, %v123
  %v140 = vmul.f32 %v124, %v124
  %v141 = vmul.f32 %v125, %v125
  %v142 = vmul.f32 %v126, %v126
  %v143 = vmul.f32 %v127, %v127
  %v144 = vmul.f32 %v128, %v128
  %v145 = vmul.f32 %v129, %v129
  %146 = vadd.xlane.f32.xlu0 %v130
  %v147 = vpop.xlane.xlu0 %146
  %148 = vadd.xlane.f32.xlu0 %v131
  %v149 = vpop.xlane.xlu0 %148
  %150 = vadd.xlane.f32.xlu0 %v132
  %v151 = vpop.xlane.xlu0 %150
  %152 = vadd.xlane.f32.xlu0 %v133
  %v153 = vpop.xlane.xlu0 %152
  %154 = vadd.xlane.f32.xlu0 %v134
  %v155 = vpop.xlane.xlu0 %154
  %156 = vadd.xlane.f32.xlu0 %v135
  %v157 = vpop.xlane.xlu0 %156
  %158 = vadd.xlane.f32.xlu0 %v136
  %v159 = vpop.xlane.xlu0 %158
  %160 = vadd.xlane.f32.xlu0 %v137
  %v161 = vpop.xlane.xlu0 %160
  %162 = vadd.xlane.f32.xlu0 %v138
  %v163 = vpop.xlane.xlu0 %162
  %164 = vadd.xlane.f32.xlu0 %v139
  %v165 = vpop.xlane.xlu0 %164
  %166 = vadd.xlane.f32.xlu0 %v140
  %v167 = vpop.xlane.xlu0 %166
  %168 = vadd.xlane.f32.xlu0 %v141
  %v169 = vpop.xlane.xlu0 %168
  %170 = vadd.xlane.f32.xlu0 %v142
  %v171 = vpop.xlane.xlu0 %170
  %172 = vadd.xlane.f32.xlu0 %v143
  %v173 = vpop.xlane.xlu0 %172
  %174 = vadd.xlane.f32.xlu0 %v144
  %v175 = vpop.xlane.xlu0 %174
  %176 = vadd.xlane.f32.xlu0 %v145
  %v177 = vpop.xlane.xlu0 %176
  %v178 = vmul.f32 %v147, %v97
  %v179 = vmul.f32 %v149, %v97
  %v180 = vmul.f32 %v151, %v97
  %v181 = vmul.f32 %v153, %v97
  %v182 = vmul.f32 %v155, %v97
  %v183 = vmul.f32 %v157, %v97
  %v184 = vmul.f32 %v159, %v97
  %v185 = vmul.f32 %v161, %v97
  %v186 = vmul.f32 %v163, %v97
  %v187 = vmul.f32 %v165, %v97
  %v188 = vmul.f32 %v167, %v97
  %v189 = vmul.f32 %v169, %v97
  %v190 = vmul.f32 %v171, %v97
  %v191 = vmul.f32 %v173, %v97
  %v192 = vmul.f32 %v175, %v97
  %v193 = vmul.f32 %v177, %v97
  %v194 = vadd.f32 %v178, 1e-05
  %v195 = vadd.f32 %v179, 1e-05
  %v196 = vadd.f32 %v180, 1e-05
  %v197 = vadd.f32 %v181, 1e-05
  %v198 = vadd.f32 %v182, 1e-05
  %v199 = vadd.f32 %v183, 1e-05
  %v200 = vadd.f32 %v184, 1e-05
  %v201 = vadd.f32 %v185, 1e-05
  %v202 = vadd.f32 %v186, 1e-05
  %v203 = vadd.f32 %v187, 1e-05
  %v204 = vadd.f32 %v188, 1e-05
  %v205 = vadd.f32 %v189, 1e-05
  %v206 = vadd.f32 %v190, 1e-05
  %v207 = vadd.f32 %v191, 1e-05
  %v208 = vadd.f32 %v192, 1e-05
  %v209 = vadd.f32 %v193, 1e-05
  %v210 = vrsqrt.pop %v194
  %v211 = vrsqrt.pop %v195
  %v212 = vrsqrt.pop %v196
  %v213 = vrsqrt.pop %v197
  %v214 = vrsqrt.pop %v198
  %v215 = vrsqrt.pop %v199
  %v216 = vrsqrt.pop %v200
  %v217 = vrsqrt.pop %v201
  %v218 = vrsqrt.pop %v202
  %v219 = vrsqrt.pop %v203
  %v220 = vrsqrt.pop %v204
  %v221 = vrsqrt.pop %v205
  %v222 = vrsqrt.pop %v206
  %v223 = vrsqrt.pop %v207
  %v224 = vrsqrt.pop %v208
  %v225 = vrsqrt.pop %v209
  %v226 = vmul.f32 %v114, %v210
  %v227 = vmul.f32 %v115, %v211
  %v228 = vmul.f32 %v116, %v212
  %v229 = vmul.f32 %v117, %v213
  %v230 = vmul.f32 %v118, %v214
  %v231 = vmul.f32 %v119, %v215
  %v232 = vmul.f32 %v120, %v216
  %v233 = vmul.f32 %v121, %v217
  %v234 = vmul.f32 %v122, %v218
  %v235 = vmul.f32 %v123, %v219
  %v236 = vmul.f32 %v124, %v220
  %v237 = vmul.f32 %v125, %v221
  %v238 = vmul.f32 %v126, %v222
  %v239 = vmul.f32 %v127, %v223
  %v240 = vmul.f32 %v128, %v224
  %v241 = vmul.f32 %v129, %v225
  %v242 = vld [vmem:[%s2] sm:$0x1]
  %v244 = vlaneseq
  %v245 = vshrl.u32 %v244, 7
  %v246 = vsub.s32 0, %v245
  %v247 = vrot.slane %v242, %v246
  %v249 = vmul.f32 %v226, %v247
  %v250 = vmul.f32 %v227, %v247
  %v251 = vmul.f32 %v228, %v247
  %v252 = vmul.f32 %v229, %v247
  %v253 = vmul.f32 %v230, %v247
  %v254 = vmul.f32 %v231, %v247
  %v255 = vmul.f32 %v232, %v247
  %v256 = vmul.f32 %v233, %v247
  %v257 = vmul.f32 %v234, %v247
  %v258 = vmul.f32 %v235, %v247
  %v259 = vmul.f32 %v236, %v247
  %v260 = vmul.f32 %v237, %v247
  %v261 = vmul.f32 %v238, %v247
  %v262 = vmul.f32 %v239, %v247
  %v263 = vmul.f32 %v240, %v247
  %v264 = vmul.f32 %v241, %v247
  %v265 = vld [vmem:[%s3] sm:$0x1]
  %v267 = vlaneseq
  %v268 = vshrl.u32 %v267, 7
  %v269 = vsub.s32 0, %v268
  %v270 = vrot.slane %v265, %v269
  %v272 = vadd.f32 %v249, %v270
  %v273 = vadd.f32 %v250, %v270
  %v274 = vadd.f32 %v251, %v270
  %v275 = vadd.f32 %v252, %v270
  %v276 = vadd.f32 %v253, %v270
  %v277 = vadd.f32 %v254, %v270
  %v278 = vadd.f32 %v255, %v270
  %v279 = vadd.f32 %v256, %v270
  %v280 = vadd.f32 %v257, %v270
  %v281 = vadd.f32 %v258, %v270
  %v282 = vadd.f32 %v259, %v270
  %v283 = vadd.f32 %v260, %v270
  %v284 = vadd.f32 %v261, %v270
  %v285 = vadd.f32 %v262, %v270
  %v286 = vadd.f32 %v263, %v270
  %v287 = vadd.f32 %v264, %v270
  %288 = vst [vmem:[%s4] sm:$0xff] %v272
  %289 = vst [vmem:[%s4 + $0x8] sm:$0xff] %v273
  %290 = vst [vmem:[%s4 + $0x10] sm:$0xff] %v274
  %291 = vst [vmem:[%s4 + $0x18] sm:$0xff] %v275
  %292 = vst [vmem:[%s4 + $0x20] sm:$0xff] %v276
  %293 = vst [vmem:[%s4 + $0x28] sm:$0xff] %v277
  %294 = vst [vmem:[%s4 + $0x30] sm:$0xff] %v278
  %295 = vst [vmem:[%s4 + $0x38] sm:$0xff] %v279
  %296 = vst [vmem:[%s4 + $0x40] sm:$0xff] %v280
  %297 = vst [vmem:[%s4 + $0x48] sm:$0xff] %v281
  %298 = vst [vmem:[%s4 + $0x50] sm:$0xff] %v282
  %299 = vst [vmem:[%s4 + $0x58] sm:$0xff] %v283
  %300 = vst [vmem:[%s4 + $0x60] sm:$0xff] %v284
  %301 = vst [vmem:[%s4 + $0x68] sm:$0xff] %v285
  %302 = vst [vmem:[%s4 + $0x70] sm:$0xff] %v286
  %303 = vst [vmem:[%s4 + $0x78] sm:$0xff] %v287
  // Predicated region
  $region18: #{_lambda_.49} parent=0 // pred_check
    _
  $region19: #{_lambda_.49} parent=0 // pred_check_branch
    %305 = sbr.rel (0) target = $region21
  $region20: #{_lambda_.49} parent=0 // pred_region
    _
  $region21: #{_lambda_.49} parent=0 // pred_fallthru
    _
  // Predicated region
  $region22: #{_lambda_.49} parent=0 // pred_check
    _
  $region23: #{_lambda_.49} parent=0 // pred_check_branch
    %307 = sbr.rel (0) target = $region25
  $region24: #{_lambda_.49} parent=0 // pred_region
    _
  $region25: #{_lambda_.49} parent=0 // pred_fallthru
    _

// kernel: _lambda_.48
$region0: #{_lambda_.48}
  #allocation0 [shape = 'u32[]', space=smem, size = 0x4, offset = 0x4, fixed_abs, tag = 'smem constant byte address 0x4 - core index']
  #allocation1 [shape = 'u32[144,128]{1,0:T(1,128)}', space=vmem, size = 0x12000, scoped, tag = 'internal scratch']
  #allocation2 [shape = 'f32[128,128]{1,0:T(8,128)}', space=vmem, size = 0x10000, scoped, tag = 'scratch operand']
  %s0 = inlined_call_operand.vmem [shape: f32[128,128], index: 0, kind: input, shape index: {}]
  %s1 = inlined_call_operand.vmem [shape: f32[128,128], index: 1, kind: input, shape index: {}]
  %s2 = inlined_call_operand.vmem [shape: f32[1,128], index: 2, kind: input, shape index: {}]
  %s3 = inlined_call_operand.vmem [shape: f32[128,128], index: 3, kind: output, shape index: {}]
  %s4 = sld [smem:[#allocation0]]
  $region30: #{_lambda_.48} parent=0
    _
  %s6 = ssub.s32 1, %s4
  %s7 = scalar_select 0, %s6, %s4
  // Predicated region
  $region2: #{_lambda_.48} parent=0 // pred_check
    _
  $region3: #{_lambda_.48} parent=0 // pred_check_branch
    %9 = sbr.rel (0) target = $region5
  $region4: #{_lambda_.48} parent=0 // pred_region
    _
  $region5: #{_lambda_.48} parent=0 // pred_fallthru
    _
  // Predicated region
  $region6: #{_lambda_.48} parent=0 // pred_check
    _
  $region7: #{_lambda_.48} parent=0 // pred_check_branch
    %11 = sbr.rel (0) target = $region9
  $region8: #{_lambda_.48} parent=0 // pred_region
    _
  $region9: #{_lambda_.48} parent=0 // pred_fallthru
    _
  // Predicated region
  $region10: #{_lambda_.48} parent=0 // pred_check
    _
  $region11: #{_lambda_.48} parent=0 // pred_check_branch
    %13 = sbr.rel (0) target = $region13
  $region12: #{_lambda_.48} parent=0 // pred_region
    _
  $region13: #{_lambda_.48} parent=0 // pred_fallthru
    _
  %p14 = scmp.eq.s32.totalorder 0, 0
  // Predicated region
  $region14: #{_lambda_.48} parent=0 // pred_check
    %p15 = pneg %p14
  $region15: #{_lambda_.48} parent=0 // pred_check_branch
    %17 = sbr.rel (%p15) target = $region17
  $region16: #{_lambda_.48} parent=0 // pred_region
    %18 = vst [vmem:[#allocation2] sm:$0xff] 0.0
    %19 = vst [vmem:[#allocation2 + $0x8] sm:$0xff] 0.0
    %20 = vst [vmem:[#allocation2 + $0x10] sm:$0xff] 0.0
    %21 = vst [vmem:[#allocation2 + $0x18] sm:$0xff] 0.0
    %22 = vst [vmem:[#allocation2 + $0x20] sm:$0xff] 0.0
    %23 = vst [vmem:[#allocation2 + $0x28] sm:$0xff] 0.0
    %24 = vst [vmem:[#allocation2 + $0x30] sm:$0xff] 0.0
    %25 = vst [vmem:[#allocation2 + $0x38] sm:$0xff] 0.0
    %26 = vst [vmem:[#allocation2 + $0x40] sm:$0xff] 0.0
    %27 = vst [vmem:[#allocation2 + $0x48] sm:$0xff] 0.0
    %28 = vst [vmem:[#allocation2 + $0x50] sm:$0xff] 0.0
    %29 = vst [vmem:[#allocation2 + $0x58] sm:$0xff] 0.0
    %30 = vst [vmem:[#allocation2 + $0x60] sm:$0xff] 0.0
    %31 = vst [vmem:[#allocation2 + $0x68] sm:$0xff] 0.0
    %32 = vst [vmem:[#allocation2 + $0x70] sm:$0xff] 0.0
    %33 = vst [vmem:[#allocation2 + $0x78] sm:$0xff] 0.0
  $region17: #{_lambda_.48} parent=0 // pred_fallthru
    _
  %v34 = vld [vmem:[#allocation2] sm:$0xff]
  %v35 = vld [vmem:[#allocation2 + $0x8] sm:$0xff]
  %v36 = vld [vmem:[#allocation2 + $0x10] sm:$0xff]
  %v37 = vld [vmem:[#allocation2 + $0x18] sm:$0xff]
  %v38 = vld [vmem:[#allocation2 + $0x20] sm:$0xff]
  %v39 = vld [vmem:[#allocation2 + $0x28] sm:$0xff]
  %v40 = vld [vmem:[#allocation2 + $0x30] sm:$0xff]
  %v41 = vld [vmem:[#allocation2 + $0x38] sm:$0xff]
  %v42 = vld [vmem:[#allocation2 + $0x40] sm:$0xff]
  %v43 = vld [vmem:[#allocation2 + $0x48] sm:$0xff]
  %v44 = vld [vmem:[#allocation2 + $0x50] sm:$0xff]
  %v45 = vld [vmem:[#allocation2 + $0x58] sm:$0xff]
  %v46 = vld [vmem:[#allocation2 + $0x60] sm:$0xff]
  %v47 = vld [vmem:[#allocation2 + $0x68] sm:$0xff]
  %v48 = vld [vmem:[#allocation2 + $0x70] sm:$0xff]
  %v49 = vld [vmem:[#allocation2 + $0x78] sm:$0xff]
  %v50 = vld [vmem:[%s0] sm:$0xff]
  %v51 = vld [vmem:[%s0 + $0x8] sm:$0xff]
  %v52 = vld [vmem:[%s0 + $0x10] sm:$0xff]
  %v53 = vld [vmem:[%s0 + $0x18] sm:$0xff]
  %v54 = vld [vmem:[%s0 + $0x20] sm:$0xff]
  %v55 = vld [vmem:[%s0 + $0x28] sm:$0xff]
  %v56 = vld [vmem:[%s0 + $0x30] sm:$0xff]
  %v57 = vld [vmem:[%s0 + $0x38] sm:$0xff]
  %v58 = vld [vmem:[%s0 + $0x40] sm:$0xff]
  %v59 = vld [vmem:[%s0 + $0x48] sm:$0xff]
  %v60 = vld [vmem:[%s0 + $0x50] sm:$0xff]
  %v61 = vld [vmem:[%s0 + $0x58] sm:$0xff]
  %v62 = vld [vmem:[%s0 + $0x60] sm:$0xff]
  %v63 = vld [vmem:[%s0 + $0x68] sm:$0xff]
  %v64 = vld [vmem:[%s0 + $0x70] sm:$0xff]
  %v65 = vld [vmem:[%s0 + $0x78] sm:$0xff]
  %v66 = vld [vmem:[%s1] sm:$0xff]
  %v67 = vld [vmem:[%s1 + $0x8] sm:$0xff]
  %v68 = vld [vmem:[%s1 + $0x10] sm:$0xff]
  %v69 = vld [vmem:[%s1 + $0x18] sm:$0xff]
  %v70 = vld [vmem:[%s1 + $0x20] sm:$0xff]
  %v71 = vld [vmem:[%s1 + $0x28] sm:$0xff]
  %v72 = vld [vmem:[%s1 + $0x30] sm:$0xff]
  %v73 = vld [vmem:[%s1 + $0x38] sm:$0xff]
  %v74 = vld [vmem:[%s1 + $0x40] sm:$0xff]
  %v75 = vld [vmem:[%s1 + $0x48] sm:$0xff]
  %v76 = vld [vmem:[%s1 + $0x50] sm:$0xff]
  %v77 = vld [vmem:[%s1 + $0x58] sm:$0xff]
  %v78 = vld [vmem:[%s1 + $0x60] sm:$0xff]
  %v79 = vld [vmem:[%s1 + $0x68] sm:$0xff]
  %v80 = vld [vmem:[%s1 + $0x70] sm:$0xff]
  %v81 = vld [vmem:[%s1 + $0x78] sm:$0xff]
  %82 = vmatprep.subr.mxu0 0.0
  %83 = vmatpush1.msra.mxu0 %v66
  %84 = vmatprep.subr.mxu0 0.0
  %85 = vmatpush1.msra.mxu0 %v67
  %86 = vmatprep.subr.mxu0 0.0
  %87 = vmatpush1.msra.mxu0 %v68
  %88 = vmatprep.subr.mxu0 0.0
  %89 = vmatpush1.msra.mxu0 %v69
  %90 = vmatprep.subr.mxu0 0.0
  %91 = vmatpush1.msra.mxu0 %v70
  %92 = vmatprep.subr.mxu0 0.0
  %93 = vmatpush1.msra.mxu0 %v71
  %94 = vmatprep.subr.mxu0 0.0
  %95 = vmatpush1.msra.mxu0 %v72
  %96 = vmatprep.subr.mxu0 0.0
  %97 = vmatpush1.msra.mxu0 %v73
  %98 = vmatprep.subr.mxu0 0.0
  %99 = vmatpush1.msra.mxu0 %v74
  %100 = vmatprep.subr.mxu0 0.0
  %101 = vmatpush1.msra.mxu0 %v75
  %102 = vmatprep.subr.mxu0 0.0
  %103 = vmatpush1.msra.mxu0 %v76
  %104 = vmatprep.subr.mxu0 0.0
  %105 = vmatpush1.msra.mxu0 %v77
  %106 = vmatprep.subr.mxu0 0.0
  %107 = vmatpush1.msra.mxu0 %v78
  %108 = vmatprep.subr.mxu0 0.0
  %109 = vmatpush1.msra.mxu0 %v79
  %110 = vmatprep.subr.mxu0 0.0
  %111 = vmatpush1.msra.mxu0 %v80
  %112 = vmatprep.subr.mxu0 0.0
  %113 = vmatpush1.msra.mxu0 %v81
  %114 = vmatprep.subr.mxu0 0.0
  %115 = vmatpush1.msra.mxu0 0.0
  %116 = vmatprep.subr.mxu0 0.0
  %117 = vmatpush1.msra.mxu0 0.0
  %118 = vmatprep.subr.mxu0 0.0
  %119 = vmatpush1.msra.mxu0 0.0
  %120 = vmatprep.subr.mxu0 0.0
  %121 = vmatpush1.msra.mxu0 0.0
  %122 = vmatprep.subr.mxu0 0.0
  %123 = vmatpush1.msra.mxu0 0.0
  %124 = vmatprep.subr.mxu0 0.0
  %125 = vmatpush1.msra.mxu0 0.0
  %126 = vmatprep.subr.mxu0 0.0
  %127 = vmatpush1.msra.mxu0 0.0
  %128 = vmatprep.subr.mxu0 0.0
  %129 = vmatpush1.msra.mxu0 0.0
  %130 = vmatprep.subr.mxu0 0.0
  %131 = vmatpush1.msra.mxu0 0.0
  %132 = vmatprep.subr.mxu0 0.0
  %133 = vmatpush1.msra.mxu0 0.0
  %134 = vmatprep.subr.mxu0 0.0
  %135 = vmatpush1.msra.mxu0 0.0
  %136 = vmatprep.subr.mxu0 0.0
  %137 = vmatpush1.msra.mxu0 0.0
  %138 = vmatprep.subr.mxu0 0.0
  %139 = vmatpush1.msra.mxu0 0.0
  %140 = vmatprep.subr.mxu0 0.0
  %141 = vmatpush1.msra.mxu0 0.0
  %142 = vmatprep.subr.mxu0 0.0
  %143 = vmatpush1.msra.mxu0 0.0
  %144 = vmatprep.subr.mxu0 0.0
  %145 = vmatpush1.msra.mxu0 0.0
  %146 = vmatprep.mubr.f32.mxu0 0.0
  %147 = vmatmul.mubr.f32.gmra.mrb[0].mxu0 %v50
  %v148 = vpop.f32.mrb[0].mxu0
  %v149 = vadd.f32 0.0, %v148
  %v150 = vpop.f32.mrb[0].mxu0
  %151 = vmatprep.mubr.f32.mxu0 0.0
  %152 = vmatmul.mubr.f32.gmra.mrb[0].mxu0 %v51
  %v153 = vpop.f32.mrb[0].mxu0
  %v154 = vadd.f32 0.0, %v153
  %v155 = vpop.f32.mrb[0].mxu0
  %156 = vmatprep.mubr.f32.mxu0 0.0
  %157 = vmatmul.mubr.f32.gmra.mrb[0].mxu0 %v52
  %v158 = vpop.f32.mrb[0].mxu0
  %v159 = vadd.f32 0.0, %v158
  %v160 = vpop.f32.mrb[0].mxu0
  %161 = vmatprep.mubr.f32.mxu0 0.0
  %162 = vmatmul.mubr.f32.gmra.mrb[0].mxu0 %v53
  %v163 = vpop.f32.mrb[0].mxu0
  %v164 = vadd.f32 0.0, %v163
  %v165 = vpop.f32.mrb[0].mxu0
  %166 = vmatprep.mubr.f32.mxu0 0.0
  %167 = vmatmul.mubr.f32.gmra.mrb[0].mxu0 %v54
  %v168 = vpop.f32.mrb[0].mxu0
  %v169 = vadd.f32 0.0, %v168
  %v170 = vpop.f32.mrb[0].mxu0
  %171 = vmatprep.mubr.f32.mxu0 0.0
  %172 = vmatmul.mubr.f32.gmra.mrb[0].mxu0 %v55
  %v173 = vpop.f32.mrb[0].mxu0
  %v174 = vadd.f32 0.0, %v173
  %v175 = vpop.f32.mrb[0].mxu0
  %176 = vmatprep.mubr.f32.mxu0 0.0
  %177 = vmatmul.mubr.f32.gmra.mrb[0].mxu0 %v56
  %v178 = vpop.f32.mrb[0].mxu0
  %v179 = vadd.f32 0.0, %v178
  %v180 = vpop.f32.mrb[0].mxu0
  %181 = vmatprep.mubr.f32.mxu0 0.0
  %182 = vmatmul.mubr.f32.gmra.mrb[0].mxu0 %v57
  %v183 = vpop.f32.mrb[0].mxu0
  %v184 = vadd.f32 0.0, %v183
  %v185 = vpop.f32.mrb[0].mxu0
  %186 = vmatprep.mubr.f32.mxu0 0.0
  %187 = vmatmul.mubr.f32.gmra.mrb[0].mxu0 %v58
  %v188 = vpop.f32.mrb[0].mxu0
  %v189 = vadd.f32 0.0, %v188
  %v190 = vpop.f32.mrb[0].mxu0
  %191 = vmatprep.mubr.f32.mxu0 0.0
  %192 = vmatmul.mubr.f32.gmra.mrb[0].mxu0 %v59
  %v193 = vpop.f32.mrb[0].mxu0
  %v194 = vadd.f32 0.0, %v193
  %v195 = vpop.f32.mrb[0].mxu0
  %196 = vmatprep.mubr.f32.mxu0 0.0
  %197 = vmatmul.mubr.f32.gmra.mrb[0].mxu0 %v60
  %v198 = vpop.f32.mrb[0].mxu0
  %v199 = vadd.f32 0.0, %v198
  %v200 = vpop.f32.mrb[0].mxu0
  %201 = vmatprep.mubr.f32.mxu0 0.0
  %202 = vmatmul.mubr.f32.gmra.mrb[0].mxu0 %v61
  %v203 = vpop.f32.mrb[0].mxu0
  %v204 = vadd.f32 0.0, %v203
  %v205 = vpop.f32.mrb[0].mxu0
  %206 = vmatprep.mubr.f32.mxu0 0.0
  %207 = vmatmul.mubr.f32.gmra.mrb[0].mxu0 %v62
  %v208 = vpop.f32.mrb[0].mxu0
  %v209 = vadd.f32 0.0, %v208
  %v210 = vpop.f32.mrb[0].mxu0
  %211 = vmatprep.mubr.f32.mxu0 0.0
  %212 = vmatmul.mubr.f32.gmra.mrb[0].mxu0 %v63
  %v213 = vpop.f32.mrb[0].mxu0
  %v214 = vadd.f32 0.0, %v213
  %v215 = vpop.f32.mrb[0].mxu0
  %216 = vmatprep.mubr.f32.mxu0 0.0
  %217 = vmatmul.mubr.f32.gmra.mrb[0].mxu0 %v64
  %v218 = vpop.f32.mrb[0].mxu0
  %v219 = vadd.f32 0.0, %v218
  %v220 = vpop.f32.mrb[0].mxu0
  %221 = vmatprep.mubr.f32.mxu0 0.0
  %222 = vmatmul.mubr.f32.gmra.mrb[0].mxu0 %v65
  %v223 = vpop.f32.mrb[0].mxu0
  %v224 = vadd.f32 0.0, %v223
  %v225 = vpop.f32.mrb[0].mxu0
  %226 = vdwg.mxu0
  %v227 = vadd.f32 %v34, %v149
  %v228 = vadd.f32 %v35, %v154
  %v229 = vadd.f32 %v36, %v159
  %v230 = vadd.f32 %v37, %v164
  %v231 = vadd.f32 %v38, %v169
  %v232 = vadd.f32 %v39, %v174
  %v233 = vadd.f32 %v40, %v179
  %v234 = vadd.f32 %v41, %v184
  %v235 = vadd.f32 %v42, %v189
  %v236 = vadd.f32 %v43, %v194
  %v237 = vadd.f32 %v44, %v199
  %v238 = vadd.f32 %v45, %v204
  %v239 = vadd.f32 %v46, %v209
  %v240 = vadd.f32 %v47, %v214
  %v241 = vadd.f32 %v48, %v219
  %v242 = vadd.f32 %v49, %v224
  %243 = vst [vmem:[#allocation2] sm:$0xff] %v227
  %244 = vst [vmem:[#allocation2 + $0x8] sm:$0xff] %v228
  %245 = vst [vmem:[#allocation2 + $0x10] sm:$0xff] %v229
  %246 = vst [vmem:[#allocation2 + $0x18] sm:$0xff] %v230
  %247 = vst [vmem:[#allocation2 + $0x20] sm:$0xff] %v231
  %248 = vst [vmem:[#allocation2 + $0x28] sm:$0xff] %v232
  %249 = vst [vmem:[#allocation2 + $0x30] sm:$0xff] %v233
  %250 = vst [vmem:[#allocation2 + $0x38] sm:$0xff] %v234
  %251 = vst [vmem:[#allocation2 + $0x40] sm:$0xff] %v235
  %252 = vst [vmem:[#allocation2 + $0x48] sm:$0xff] %v236
  %253 = vst [vmem:[#allocation2 + $0x50] sm:$0xff] %v237
  %254 = vst [vmem:[#allocation2 + $0x58] sm:$0xff] %v238
  %255 = vst [vmem:[#allocation2 + $0x60] sm:$0xff] %v239
  %256 = vst [vmem:[#allocation2 + $0x68] sm:$0xff] %v240
  %257 = vst [vmem:[#allocation2 + $0x70] sm:$0xff] %v241
  %258 = vst [vmem:[#allocation2 + $0x78] sm:$0xff] %v242
  // Predicated region
  $region18: #{_lambda_.48} parent=0 // pred_check
    %p259 = pneg %p14
  $region19: #{_lambda_.48} parent=0 // pred_check_branch
    %261 = sbr.rel (%p259) target = $region21
  $region20: #{_lambda_.48} parent=0 // pred_region
    %v262 = vld [vmem:[#allocation2] sm:$0xff]
    %v263 = vld [vmem:[#allocation2 + $0x8] sm:$0xff]
    %v264 = vld [vmem:[#allocation2 + $0x10] sm:$0xff]
    %v265 = vld [vmem:[#allocation2 + $0x18] sm:$0xff]
    %v266 = vld [vmem:[#allocation2 + $0x20] sm:$0xff]
    %v267 = vld [vmem:[#allocation2 + $0x28] sm:$0xff]
    %v268 = vld [vmem:[#allocation2 + $0x30] sm:$0xff]
    %v269 = vld [vmem:[#allocation2 + $0x38] sm:$0xff]
    %v270 = vld [vmem:[#allocation2 + $0x40] sm:$0xff]
    %v271 = vld [vmem:[#allocation2 + $0x48] sm:$0xff]
    %v272 = vld [vmem:[#allocation2 + $0x50] sm:$0xff]
    %v273 = vld [vmem:[#allocation2 + $0x58] sm:$0xff]
    %v274 = vld [vmem:[#allocation2 + $0x60] sm:$0xff]
    %v275 = vld [vmem:[#allocation2 + $0x68] sm:$0xff]
    %v276 = vld [vmem:[#allocation2 + $0x70] sm:$0xff]
    %v277 = vld [vmem:[#allocation2 + $0x78] sm:$0xff]
    %v278 = vld [vmem:[%s2] sm:$0x1]
    %v280 = vlaneseq
    %v281 = vshrl.u32 %v280, 7
    %v282 = vsub.s32 0, %v281
    %v283 = vrot.slane %v278, %v282
    %v285 = vadd.f32 %v262, %v283
    %v286 = vadd.f32 %v263, %v283
    %v287 = vadd.f32 %v264, %v283
    %v288 = vadd.f32 %v265, %v283
    %v289 = vadd.f32 %v266, %v283
    %v290 = vadd.f32 %v267, %v283
    %v291 = vadd.f32 %v268, %v283
    %v292 = vadd.f32 %v269, %v283
    %v293 = vadd.f32 %v270, %v283
    %v294 = vadd.f32 %v271, %v283
    %v295 = vadd.f32 %v272, %v283
    %v296 = vadd.f32 %v273, %v283
    %v297 = vadd.f32 %v274, %v283
    %v298 = vadd.f32 %v275, %v283
    %v299 = vadd.f32 %v276, %v283
    %v300 = vadd.f32 %v277, %v283
    %301 = vst [vmem:[%s3] sm:$0xff] %v285
    %302 = vst [vmem:[%s3 + $0x8] sm:$0xff] %v286
    %303 = vst [vmem:[%s3 + $0x10] sm:$0xff] %v287
    %304 = vst [vmem:[%s3 + $0x18] sm:$0xff] %v288
    %305 = vst [vmem:[%s3 + $0x20] sm:$0xff] %v289
    %306 = vst [vmem:[%s3 + $0x28] sm:$0xff] %v290
    %307 = vst [vmem:[%s3 + $0x30] sm:$0xff] %v291
    %308 = vst [vmem:[%s3 + $0x38] sm:$0xff] %v292
    %309 = vst [vmem:[%s3 + $0x40] sm:$0xff] %v293
    %310 = vst [vmem:[%s3 + $0x48] sm:$0xff] %v294
    %311 = vst [vmem:[%s3 + $0x50] sm:$0xff] %v295
    %312 = vst [vmem:[%s3 + $0x58] sm:$0xff] %v296
    %313 = vst [vmem:[%s3 + $0x60] sm:$0xff] %v297
    %314 = vst [vmem:[%s3 + $0x68] sm:$0xff] %v298
    %315 = vst [vmem:[%s3 + $0x70] sm:$0xff] %v299
    %316 = vst [vmem:[%s3 + $0x78] sm:$0xff] %v300
  $region21: #{_lambda_.48} parent=0 // pred_fallthru
    _
  // Predicated region
  $region22: #{_lambda_.48} parent=0 // pred_check
    _
  $region23: #{_lambda_.48} parent=0 // pred_check_branch
    %318 = sbr.rel (0) target = $region25
  $region24: #{_lambda_.48} parent=0 // pred_region
    _
  $region25: #{_lambda_.48} parent=0 // pred_fallthru
    _
  // Predicated region
  $region26: #{_lambda_.48} parent=0 // pred_check
    _
  $region27: #{_lambda_.48} parent=0 // pred_check_branch
    %320 = sbr.rel (0) target = $region29
  $region28: #{_lambda_.48} parent=0 // pred_region
    _
  $region29: #{_lambda_.48} parent=0 // pred_fallthru
    _

// kernel: _lambda_.51
$region0: #{_lambda_.51}
  #allocation0 [shape = 'u32[]', space=smem, size = 0x4, offset = 0x4, fixed_abs, tag = 'smem constant byte address 0x4 - core index']
  #allocation1 [shape = 'u32[144,128]{1,0:T(1,128)}', space=vmem, size = 0x12000, scoped, tag = 'internal scratch']
  #allocation2 [shape = 'f32[128,128]{1,0:T(8,128)}', space=vmem, size = 0x10000, scoped, tag = 'scratch operand']
  %s0 = inlined_call_operand.vmem [shape: f32[128,256], index: 0, kind: input, shape index: {}]
  %s1 = inlined_call_operand.vmem [shape: f32[256,128], index: 1, kind: input, shape index: {}]
  %s2 = inlined_call_operand.vmem [shape: f32[1,128], index: 2, kind: input, shape index: {}]
  %s3 = inlined_call_operand.vmem [shape: f32[128,128], index: 3, kind: output, shape index: {}]
  %s4 = sld [smem:[#allocation0]]
  $region30: #{_lambda_.51} parent=0
    _
  %s6 = ssub.s32 1, %s4
  %s7 = scalar_select 0, %s6, %s4
  // Predicated region
  $region2: #{_lambda_.51} parent=0 // pred_check
    _
  $region3: #{_lambda_.51} parent=0 // pred_check_branch
    %9 = sbr.rel (0) target = $region5
  $region4: #{_lambda_.51} parent=0 // pred_region
    _
  $region5: #{_lambda_.51} parent=0 // pred_fallthru
    _
  // Predicated region
  $region6: #{_lambda_.51} parent=0 // pred_check
    _
  $region7: #{_lambda_.51} parent=0 // pred_check_branch
    %11 = sbr.rel (0) target = $region9
  $region8: #{_lambda_.51} parent=0 // pred_region
    _
  $region9: #{_lambda_.51} parent=0 // pred_fallthru
    _
  // Predicated region
  $region10: #{_lambda_.51} parent=0 // pred_check
    _
  $region11: #{_lambda_.51} parent=0 // pred_check_branch
    %13 = sbr.rel (0) target = $region13
  $region12: #{_lambda_.51} parent=0 // pred_region
    _
  $region13: #{_lambda_.51} parent=0 // pred_fallthru
    _
  %p14 = scmp.eq.s32.totalorder 0, 0
  // Predicated region
  $region14: #{_lambda_.51} parent=0 // pred_check
    %p15 = pneg %p14
  $region15: #{_lambda_.51} parent=0 // pred_check_branch
    %17 = sbr.rel (%p15) target = $region17
  $region16: #{_lambda_.51} parent=0 // pred_region
    %18 = vst [vmem:[#allocation2] sm:$0xff] 0.0
    %19 = vst [vmem:[#allocation2 + $0x8] sm:$0xff] 0.0
    %20 = vst [vmem:[#allocation2 + $0x10] sm:$0xff] 0.0
    %21 = vst [vmem:[#allocation2 + $0x18] sm:$0xff] 0.0
    %22 = vst [vmem:[#allocation2 + $0x20] sm:$0xff] 0.0
    %23 = vst [vmem:[#allocation2 + $0x28] sm:$0xff] 0.0
    %24 = vst [vmem:[#allocation2 + $0x30] sm:$0xff] 0.0
    %25 = vst [vmem:[#allocation2 + $0x38] sm:$0xff] 0.0
    %26 = vst [vmem:[#allocation2 + $0x40] sm:$0xff] 0.0
    %27 = vst [vmem:[#allocation2 + $0x48] sm:$0xff] 0.0
    %28 = vst [vmem:[#allocation2 + $0x50] sm:$0xff] 0.0
    %29 = vst [vmem:[#allocation2 + $0x58] sm:$0xff] 0.0
    %30 = vst [vmem:[#allocation2 + $0x60] sm:$0xff] 0.0
    %31 = vst [vmem:[#allocation2 + $0x68] sm:$0xff] 0.0
    %32 = vst [vmem:[#allocation2 + $0x70] sm:$0xff] 0.0
    %33 = vst [vmem:[#allocation2 + $0x78] sm:$0xff] 0.0
  $region17: #{_lambda_.51} parent=0 // pred_fallthru
    _
  %v34 = vld [vmem:[#allocation2] sm:$0xff]
  %v35 = vld [vmem:[#allocation2 + $0x8] sm:$0xff]
  %v36 = vld [vmem:[#allocation2 + $0x10] sm:$0xff]
  %v37 = vld [vmem:[#allocation2 + $0x18] sm:$0xff]
  %v38 = vld [vmem:[#allocation2 + $0x20] sm:$0xff]
  %v39 = vld [vmem:[#allocation2 + $0x28] sm:$0xff]
  %v40 = vld [vmem:[#allocation2 + $0x30] sm:$0xff]
  %v41 = vld [vmem:[#allocation2 + $0x38] sm:$0xff]
  %v42 = vld [vmem:[#allocation2 + $0x40] sm:$0xff]
  %v43 = vld [vmem:[#allocation2 + $0x48] sm:$0xff]
  %v44 = vld [vmem:[#allocation2 + $0x50] sm:$0xff]
  %v45 = vld [vmem:[#allocation2 + $0x58] sm:$0xff]
  %v46 = vld [vmem:[#allocation2 + $0x60] sm:$0xff]
  %v47 = vld [vmem:[#allocation2 + $0x68] sm:$0xff]
  %v48 = vld [vmem:[#allocation2 + $0x70] sm:$0xff]
  %v49 = vld [vmem:[#allocation2 + $0x78] sm:$0xff]
  %v50 = vld [vmem:[%s0] sm:$0xff]
  %v51 = vld [vmem:[%s0 + $0x8] sm:$0xff]
  %v52 = vld [vmem:[%s0 + $0x10] sm:$0xff]
  %v53 = vld [vmem:[%s0 + $0x18] sm:$0xff]
  %v54 = vld [vmem:[%s0 + $0x20] sm:$0xff]
  %v55 = vld [vmem:[%s0 + $0x28] sm:$0xff]
  %v56 = vld [vmem:[%s0 + $0x30] sm:$0xff]
  %v57 = vld [vmem:[%s0 + $0x38] sm:$0xff]
  %v58 = vld [vmem:[%s0 + $0x40] sm:$0xff]
  %v59 = vld [vmem:[%s0 + $0x48] sm:$0xff]
  %v60 = vld [vmem:[%s0 + $0x50] sm:$0xff]
  %v61 = vld [vmem:[%s0 + $0x58] sm:$0xff]
  %v62 = vld [vmem:[%s0 + $0x60] sm:$0xff]
  %v63 = vld [vmem:[%s0 + $0x68] sm:$0xff]
  %v64 = vld [vmem:[%s0 + $0x70] sm:$0xff]
  %v65 = vld [vmem:[%s0 + $0x78] sm:$0xff]
  %v66 = vld [vmem:[%s0 + $0x80] sm:$0xff]
  %v67 = vld [vmem:[%s0 + $0x88] sm:$0xff]
  %v68 = vld [vmem:[%s0 + $0x90] sm:$0xff]
  %v69 = vld [vmem:[%s0 + $0x98] sm:$0xff]
  %v70 = vld [vmem:[%s0 + $0xa0] sm:$0xff]
  %v71 = vld [vmem:[%s0 + $0xa8] sm:$0xff]
  %v72 = vld [vmem:[%s0 + $0xb0] sm:$0xff]
  %v73 = vld [vmem:[%s0 + $0xb8] sm:$0xff]
  %v74 = vld [vmem:[%s0 + $0xc0] sm:$0xff]
  %v75 = vld [vmem:[%s0 + $0xc8] sm:$0xff]
  %v76 = vld [vmem:[%s0 + $0xd0] sm:$0xff]
  %v77 = vld [vmem:[%s0 + $0xd8] sm:$0xff]
  %v78 = vld [vmem:[%s0 + $0xe0] sm:$0xff]
  %v79 = vld [vmem:[%s0 + $0xe8] sm:$0xff]
  %v80 = vld [vmem:[%s0 + $0xf0] sm:$0xff]
  %v81 = vld [vmem:[%s0 + $0xf8] sm:$0xff]
  %v82 = vld [vmem:[%s1] sm:$0xff]
  %v83 = vld [vmem:[%s1 + $0x8] sm:$0xff]
  %v84 = vld [vmem:[%s1 + $0x10] sm:$0xff]
  %v85 = vld [vmem:[%s1 + $0x18] sm:$0xff]
  %v86 = vld [vmem:[%s1 + $0x20] sm:$0xff]
  %v87 = vld [vmem:[%s1 + $0x28] sm:$0xff]
  %v88 = vld [vmem:[%s1 + $0x30] sm:$0xff]
  %v89 = vld [vmem:[%s1 + $0x38] sm:$0xff]
  %v90 = vld [vmem:[%s1 + $0x40] sm:$0xff]
  %v91 = vld [vmem:[%s1 + $0x48] sm:$0xff]
  %v92 = vld [vmem:[%s1 + $0x50] sm:$0xff]
  %v93 = vld [vmem:[%s1 + $0x58] sm:$0xff]
  %v94 = vld [vmem:[%s1 + $0x60] sm:$0xff]
  %v95 = vld [vmem:[%s1 + $0x68] sm:$0xff]
  %v96 = vld [vmem:[%s1 + $0x70] sm:$0xff]
  %v97 = vld [vmem:[%s1 + $0x78] sm:$0xff]
  %v98 = vld [vmem:[%s1 + $0x80] sm:$0xff]
  %v99 = vld [vmem:[%s1 + $0x88] sm:$0xff]
  %v100 = vld [vmem:[%s1 + $0x90] sm:$0xff]
  %v101 = vld [vmem:[%s1 + $0x98] sm:$0xff]
  %v102 = vld [vmem:[%s1 + $0xa0] sm:$0xff]
  %v103 = vld [vmem:[%s1 + $0xa8] sm:$0xff]
  %v104 = vld [vmem:[%s1 + $0xb0] sm:$0xff]
  %v105 = vld [vmem:[%s1 + $0xb8] sm:$0xff]
  %v106 = vld [vmem:[%s1 + $0xc0] sm:$0xff]
  %v107 = vld [vmem:[%s1 + $0xc8] sm:$0xff]
  %v108 = vld [vmem:[%s1 + $0xd0] sm:$0xff]
  %v109 = vld [vmem:[%s1 + $0xd8] sm:$0xff]
  %v110 = vld [vmem:[%s1 + $0xe0] sm:$0xff]
  %v111 = vld [vmem:[%s1 + $0xe8] sm:$0xff]
  %v112 = vld [vmem:[%s1 + $0xf0] sm:$0xff]
  %v113 = vld [vmem:[%s1 + $0xf8] sm:$0xff]
  %114 = vmatprep.subr.mxu0 0.0
  %115 = vmatpush1.msra.mxu0 %v82
  %116 = vmatprep.subr.mxu0 0.0
  %117 = vmatpush1.msra.mxu0 %v83
  %118 = vmatprep.subr.mxu0 0.0
  %119 = vmatpush1.msra.mxu0 %v84
  %120 = vmatprep.subr.mxu0 0.0
  %121 = vmatpush1.msra.mxu0 %v85
  %122 = vmatprep.subr.mxu0 0.0
  %123 = vmatpush1.msra.mxu0 %v86
  %124 = vmatprep.subr.mxu0 0.0
  %125 = vmatpush1.msra.mxu0 %v87
  %126 = vmatprep.subr.mxu0 0.0
  %127 = vmatpush1.msra.mxu0 %v88
  %128 = vmatprep.subr.mxu0 0.0
  %129 = vmatpush1.msra.mxu0 %v89
  %130 = vmatprep.subr.mxu0 0.0
  %131 = vmatpush1.msra.mxu0 %v90
  %132 = vmatprep.subr.mxu0 0.0
  %133 = vmatpush1.msra.mxu0 %v91
  %134 = vmatprep.subr.mxu0 0.0
  %135 = vmatpush1.msra.mxu0 %v92
  %136 = vmatprep.subr.mxu0 0.0
  %137 = vmatpush1.msra.mxu0 %v93
  %138 = vmatprep.subr.mxu0 0.0
  %139 = vmatpush1.msra.mxu0 %v94
  %140 = vmatprep.subr.mxu0 0.0
  %141 = vmatpush1.msra.mxu0 %v95
  %142 = vmatprep.subr.mxu0 0.0
  %143 = vmatpush1.msra.mxu0 %v96
  %144 = vmatprep.subr.mxu0 0.0
  %145 = vmatpush1.msra.mxu0 %v97
  %146 = vmatprep.subr.mxu0 0.0
  %147 = vmatpush1.msra.mxu0 %v98
  %148 = vmatprep.subr.mxu0 0.0
  %149 = vmatpush1.msra.mxu0 %v99
  %150 = vmatprep.subr.mxu0 0.0
  %151 = vmatpush1.msra.mxu0 %v100
  %152 = vmatprep.subr.mxu0 0.0
  %153 = vmatpush1.msra.mxu0 %v101
  %154 = vmatprep.subr.mxu0 0.0
  %155 = vmatpush1.msra.mxu0 %v102
  %156 = vmatprep.subr.mxu0 0.0
  %157 = vmatpush1.msra.mxu0 %v103
  %158 = vmatprep.subr.mxu0 0.0
  %159 = vmatpush1.msra.mxu0 %v104
  %160 = vmatprep.subr.mxu0 0.0
  %161 = vmatpush1.msra.mxu0 %v105
  %162 = vmatprep.subr.mxu0 0.0
  %163 = vmatpush1.msra.mxu0 %v106
  %164 = vmatprep.subr.mxu0 0.0
  %165 = vmatpush1.msra.mxu0 %v107
  %166 = vmatprep.subr.mxu0 0.0
  %167 = vmatpush1.msra.mxu0 %v108
  %168 = vmatprep.subr.mxu0 0.0
  %169 = vmatpush1.msra.mxu0 %v109
  %170 = vmatprep.subr.mxu0 0.0
  %171 = vmatpush1.msra.mxu0 %v110
  %172 = vmatprep.subr.mxu0 0.0
  %173 = vmatpush1.msra.mxu0 %v111
  %174 = vmatprep.subr.mxu0 0.0
  %175 = vmatpush1.msra.mxu0 %v112
  %176 = vmatprep.subr.mxu0 0.0
  %177 = vmatpush1.msra.mxu0 %v113
  %178 = vmatprep.mubr.f32.mxu0 %v51
  %179 = vmatmul.mubr.f32.gmra.mrb[0].mxu0 %v50
  %v180 = vpop.f32.mrb[0].mxu0
  %v181 = vadd.f32 0.0, %v180
  %v182 = vpop.f32.mrb[0].mxu0
  %183 = vmatprep.mubr.f32.mxu0 %v53
  %184 = vmatmul.mubr.f32.gmra.mrb[0].mxu0 %v52
  %v185 = vpop.f32.mrb[0].mxu0
  %v186 = vadd.f32 0.0, %v185
  %v187 = vpop.f32.mrb[0].mxu0
  %188 = vmatprep.mubr.f32.mxu0 %v55
  %189 = vmatmul.mubr.f32.gmra.mrb[0].mxu0 %v54
  %v190 = vpop.f32.mrb[0].mxu0
  %v191 = vadd.f32 0.0, %v190
  %v192 = vpop.f32.mrb[0].mxu0
  %193 = vmatprep.mubr.f32.mxu0 %v57
  %194 = vmatmul.mubr.f32.gmra.mrb[0].mxu0 %v56
  %v195 = vpop.f32.mrb[0].mxu0
  %v196 = vadd.f32 0.0, %v195
  %v197 = vpop.f32.mrb[0].mxu0
  %198 = vmatprep.mubr.f32.mxu0 %v59
  %199 = vmatmul.mubr.f32.gmra.mrb[0].mxu0 %v58
  %v200 = vpop.f32.mrb[0].mxu0
  %v201 = vadd.f32 0.0, %v200
  %v202 = vpop.f32.mrb[0].mxu0
  %203 = vmatprep.mubr.f32.mxu0 %v61
  %204 = vmatmul.mubr.f32.gmra.mrb[0].mxu0 %v60
  %v205 = vpop.f32.mrb[0].mxu0
  %v206 = vadd.f32 0.0, %v205
  %v207 = vpop.f32.mrb[0].mxu0
  %208 = vmatprep.mubr.f32.mxu0 %v63
  %209 = vmatmul.mubr.f32.gmra.mrb[0].mxu0 %v62
  %v210 = vpop.f32.mrb[0].mxu0
  %v211 = vadd.f32 0.0, %v210
  %v212 = vpop.f32.mrb[0].mxu0
  %213 = vmatprep.mubr.f32.mxu0 %v65
  %214 = vmatmul.mubr.f32.gmra.mrb[0].mxu0 %v64
  %v215 = vpop.f32.mrb[0].mxu0
  %v216 = vadd.f32 0.0, %v215
  %v217 = vpop.f32.mrb[0].mxu0
  %218 = vmatprep.mubr.f32.mxu0 %v67
  %219 = vmatmul.mubr.f32.gmra.mrb[0].mxu0 %v66
  %v220 = vpop.f32.mrb[0].mxu0
  %v221 = vadd.f32 0.0, %v220
  %v222 = vpop.f32.mrb[0].mxu0
  %223 = vmatprep.mubr.f32.mxu0 %v69
  %224 = vmatmul.mubr.f32.gmra.mrb[0].mxu0 %v68
  %v225 = vpop.f32.mrb[0].mxu0
  %v226 = vadd.f32 0.0, %v225
  %v227 = vpop.f32.mrb[0].mxu0
  %228 = vmatprep.mubr.f32.mxu0 %v71
  %229 = vmatmul.mubr.f32.gmra.mrb[0].mxu0 %v70
  %v230 = vpop.f32.mrb[0].mxu0
  %v231 = vadd.f32 0.0, %v230
  %v232 = vpop.f32.mrb[0].mxu0
  %233 = vmatprep.mubr.f32.mxu0 %v73
  %234 = vmatmul.mubr.f32.gmra.mrb[0].mxu0 %v72
  %v235 = vpop.f32.mrb[0].mxu0
  %v236 = vadd.f32 0.0, %v235
  %v237 = vpop.f32.mrb[0].mxu0
  %238 = vmatprep.mubr.f32.mxu0 %v75
  %239 = vmatmul.mubr.f32.gmra.mrb[0].mxu0 %v74
  %v240 = vpop.f32.mrb[0].mxu0
  %v241 = vadd.f32 0.0, %v240
  %v242 = vpop.f32.mrb[0].mxu0
  %243 = vmatprep.mubr.f32.mxu0 %v77
  %244 = vmatmul.mubr.f32.gmra.mrb[0].mxu0 %v76
  %v245 = vpop.f32.mrb[0].mxu0
  %v246 = vadd.f32 0.0, %v245
  %v247 = vpop.f32.mrb[0].mxu0
  %248 = vmatprep.mubr.f32.mxu0 %v79
  %249 = vmatmul.mubr.f32.gmra.mrb[0].mxu0 %v78
  %v250 = vpop.f32.mrb[0].mxu0
  %v251 = vadd.f32 0.0, %v250
  %v252 = vpop.f32.mrb[0].mxu0
  %253 = vmatprep.mubr.f32.mxu0 %v81
  %254 = vmatmul.mubr.f32.gmra.mrb[0].mxu0 %v80
  %v255 = vpop.f32.mrb[0].mxu0
  %v256 = vadd.f32 0.0, %v255
  %v257 = vpop.f32.mrb[0].mxu0
  %258 = vdwg.mxu0
  %v259 = vadd.f32 %v34, %v181
  %v260 = vadd.f32 %v35, %v186
  %v261 = vadd.f32 %v36, %v191
  %v262 = vadd.f32 %v37, %v196
  %v263 = vadd.f32 %v38, %v201
  %v264 = vadd.f32 %v39, %v206
  %v265 = vadd.f32 %v40, %v211
  %v266 = vadd.f32 %v41, %v216
  %v267 = vadd.f32 %v42, %v221
  %v268 = vadd.f32 %v43, %v226
  %v269 = vadd.f32 %v44, %v231
  %v270 = vadd.f32 %v45, %v236
  %v271 = vadd.f32 %v46, %v241
  %v272 = vadd.f32 %v47, %v246
  %v273 = vadd.f32 %v48, %v251
  %v274 = vadd.f32 %v49, %v256
  %275 = vst [vmem:[#allocation2] sm:$0xff] %v259
  %276 = vst [vmem:[#allocation2 + $0x8] sm:$0xff] %v260
  %277 = vst [vmem:[#allocation2 + $0x10] sm:$0xff] %v261
  %278 = vst [vmem:[#allocation2 + $0x18] sm:$0xff] %v262
  %279 = vst [vmem:[#allocation2 + $0x20] sm:$0xff] %v263
  %280 = vst [vmem:[#allocation2 + $0x28] sm:$0xff] %v264
  %281 = vst [vmem:[#allocation2 + $0x30] sm:$0xff] %v265
  %282 = vst [vmem:[#allocation2 + $0x38] sm:$0xff] %v266
  %283 = vst [vmem:[#allocation2 + $0x40] sm:$0xff] %v267
  %284 = vst [vmem:[#allocation2 + $0x48] sm:$0xff] %v268
  %285 = vst [vmem:[#allocation2 + $0x50] sm:$0xff] %v269
  %286 = vst [vmem:[#allocation2 + $0x58] sm:$0xff] %v270
  %287 = vst [vmem:[#allocation2 + $0x60] sm:$0xff] %v271
  %288 = vst [vmem:[#allocation2 + $0x68] sm:$0xff] %v272
  %289 = vst [vmem:[#allocation2 + $0x70] sm:$0xff] %v273
  %290 = vst [vmem:[#allocation2 + $0x78] sm:$0xff] %v274
  // Predicated region
  $region18: #{_lambda_.51} parent=0 // pred_check
    %p291 = pneg %p14
  $region19: #{_lambda_.51} parent=0 // pred_check_branch
    %293 = sbr.rel (%p291) target = $region21
  $region20: #{_lambda_.51} parent=0 // pred_region
    %v294 = vld [vmem:[#allocation2] sm:$0xff]
    %v295 = vld [vmem:[#allocation2 + $0x8] sm:$0xff]
    %v296 = vld [vmem:[#allocation2 + $0x10] sm:$0xff]
    %v297 = vld [vmem:[#allocation2 + $0x18] sm:$0xff]
    %v298 = vld [vmem:[#allocation2 + $0x20] sm:$0xff]
    %v299 = vld [vmem:[#allocation2 + $0x28] sm:$0xff]
    %v300 = vld [vmem:[#allocation2 + $0x30] sm:$0xff]
    %v301 = vld [vmem:[#allocation2 + $0x38] sm:$0xff]
    %v302 = vld [vmem:[#allocation2 + $0x40] sm:$0xff]
    %v303 = vld [vmem:[#allocation2 + $0x48] sm:$0xff]
    %v304 = vld [vmem:[#allocation2 + $0x50] sm:$0xff]
    %v305 = vld [vmem:[#allocation2 + $0x58] sm:$0xff]
    %v306 = vld [vmem:[#allocation2 + $0x60] sm:$0xff]
    %v307 = vld [vmem:[#allocation2 + $0x68] sm:$0xff]
    %v308 = vld [vmem:[#allocation2 + $0x70] sm:$0xff]
    %v309 = vld [vmem:[#allocation2 + $0x78] sm:$0xff]
    %v310 = vld [vmem:[%s2] sm:$0x1]
    %v312 = vlaneseq
    %v313 = vshrl.u32 %v312, 7
    %v314 = vsub.s32 0, %v313
    %v315 = vrot.slane %v310, %v314
    %v317 = vadd.f32 %v294, %v315
    %v318 = vadd.f32 %v295, %v315
    %v319 = vadd.f32 %v296, %v315
    %v320 = vadd.f32 %v297, %v315
    %v321 = vadd.f32 %v298, %v315
    %v322 = vadd.f32 %v299, %v315
    %v323 = vadd.f32 %v300, %v315
    %v324 = vadd.f32 %v301, %v315
    %v325 = vadd.f32 %v302, %v315
    %v326 = vadd.f32 %v303, %v315
    %v327 = vadd.f32 %v304, %v315
    %v328 = vadd.f32 %v305, %v315
    %v329 = vadd.f32 %v306, %v315
    %v330 = vadd.f32 %v307, %v315
    %v331 = vadd.f32 %v308, %v315
    %v332 = vadd.f32 %v309, %v315
    %333 = vst [vmem:[%s3] sm:$0xff] %v317
    %334 = vst [vmem:[%s3 + $0x8] sm:$0xff] %v318
    %335 = vst [vmem:[%s3 + $0x10] sm:$0xff] %v319
    %336 = vst [vmem:[%s3 + $0x18] sm:$0xff] %v320
    %337 = vst [vmem:[%s3 + $0x20] sm:$0xff] %v321
    %338 = vst [vmem:[%s3 + $0x28] sm:$0xff] %v322
    %339 = vst [vmem:[%s3 + $0x30] sm:$0xff] %v323
    %340 = vst [vmem:[%s3 + $0x38] sm:$0xff] %v324
    %341 = vst [vmem:[%s3 + $0x40] sm:$0xff] %v325
    %342 = vst [vmem:[%s3 + $0x48] sm:$0xff] %v326
    %343 = vst [vmem:[%s3 + $0x50] sm:$0xff] %v327
    %344 = vst [vmem:[%s3 + $0x58] sm:$0xff] %v328
    %345 = vst [vmem:[%s3 + $0x60] sm:$0xff] %v329
    %346 = vst [vmem:[%s3 + $0x68] sm:$0xff] %v330
    %347 = vst [vmem:[%s3 + $0x70] sm:$0xff] %v331
    %348 = vst [vmem:[%s3 + $0x78] sm:$0xff] %v332
  $region21: #{_lambda_.51} parent=0 // pred_fallthru
    _
  // Predicated region
  $region22: #{_lambda_.51} parent=0 // pred_check
    _
  $region23: #{_lambda_.51} parent=0 // pred_check_branch
    %350 = sbr.rel (0) target = $region25
  $region24: #{_lambda_.51} parent=0 // pred_region
    _
  $region25: #{_lambda_.51} parent=0 // pred_fallthru
    _
  // Predicated region
  $region26: #{_lambda_.51} parent=0 // pred_check
    _
  $region27: #{_lambda_.51} parent=0 // pred_check_branch
    %352 = sbr.rel (0) target = $region29
  $region28: #{_lambda_.51} parent=0 // pred_region
    _
  $region29: #{_lambda_.51} parent=0 // pred_fallthru
    _

// kernel: _lambda_.50
$region0: #{_lambda_.50}
  #allocation0 [shape = 'u32[]', space=smem, size = 0x4, offset = 0x4, fixed_abs, tag = 'smem constant byte address 0x4 - core index']
  #allocation1 [shape = 'u32[144,128]{1,0:T(1,128)}', space=vmem, size = 0x12000, scoped, tag = 'internal scratch']
  #allocation2 [shape = 'f32[128,256]{1,0:T(8,128)}', space=vmem, size = 0x20000, scoped, tag = 'scratch operand']
  %s0 = inlined_call_operand.vmem [shape: f32[128,128], index: 0, kind: input, shape index: {}]
  %s1 = inlined_call_operand.vmem [shape: f32[128,256], index: 1, kind: input, shape index: {}]
  %s2 = inlined_call_operand.vmem [shape: f32[1,256], index: 2, kind: input, shape index: {}]
  %s3 = inlined_call_operand.vmem [shape: f32[128,256], index: 3, kind: output, shape index: {}]
  %s4 = sld [smem:[#allocation0]]
  $region30: #{_lambda_.50} parent=0
    _
  %s6 = ssub.s32 1, %s4
  %s7 = scalar_select 0, %s6, %s4
  // Predicated region
  $region2: #{_lambda_.50} parent=0 // pred_check
    _
  $region3: #{_lambda_.50} parent=0 // pred_check_branch
    %9 = sbr.rel (0) target = $region5
  $region4: #{_lambda_.50} parent=0 // pred_region
    _
  $region5: #{_lambda_.50} parent=0 // pred_fallthru
    _
  // Predicated region
  $region6: #{_lambda_.50} parent=0 // pred_check
    _
  $region7: #{_lambda_.50} parent=0 // pred_check_branch
    %11 = sbr.rel (0) target = $region9
  $region8: #{_lambda_.50} parent=0 // pred_region
    _
  $region9: #{_lambda_.50} parent=0 // pred_fallthru
    _
  // Predicated region
  $region10: #{_lambda_.50} parent=0 // pred_check
    _
  $region11: #{_lambda_.50} parent=0 // pred_check_branch
    %13 = sbr.rel (0) target = $region13
  $region12: #{_lambda_.50} parent=0 // pred_region
    _
  $region13: #{_lambda_.50} parent=0 // pred_fallthru
    _
  %p14 = scmp.eq.s32.totalorder 0, 0
  // Predicated region
  $region14: #{_lambda_.50} parent=0 // pred_check
    %p15 = pneg %p14
  $region15: #{_lambda_.50} parent=0 // pred_check_branch
    %17 = sbr.rel (%p15) target = $region17
  $region16: #{_lambda_.50} parent=0 // pred_region
    %18 = vst [vmem:[#allocation2] sm:$0xff] 0.0
    %19 = vst [vmem:[#allocation2 + $0x8] sm:$0xff] 0.0
    %20 = vst [vmem:[#allocation2 + $0x10] sm:$0xff] 0.0
    %21 = vst [vmem:[#allocation2 + $0x18] sm:$0xff] 0.0
    %22 = vst [vmem:[#allocation2 + $0x20] sm:$0xff] 0.0
    %23 = vst [vmem:[#allocation2 + $0x28] sm:$0xff] 0.0
    %24 = vst [vmem:[#allocation2 + $0x30] sm:$0xff] 0.0
    %25 = vst [vmem:[#allocation2 + $0x38] sm:$0xff] 0.0
    %26 = vst [vmem:[#allocation2 + $0x40] sm:$0xff] 0.0
    %27 = vst [vmem:[#allocation2 + $0x48] sm:$0xff] 0.0
    %28 = vst [vmem:[#allocation2 + $0x50] sm:$0xff] 0.0
    %29 = vst [vmem:[#allocation2 + $0x58] sm:$0xff] 0.0
    %30 = vst [vmem:[#allocation2 + $0x60] sm:$0xff] 0.0
    %31 = vst [vmem:[#allocation2 + $0x68] sm:$0xff] 0.0
    %32 = vst [vmem:[#allocation2 + $0x70] sm:$0xff] 0.0
    %33 = vst [vmem:[#allocation2 + $0x78] sm:$0xff] 0.0
    %34 = vst [vmem:[#allocation2 + $0x80] sm:$0xff] 0.0
    %35 = vst [vmem:[#allocation2 + $0x88] sm:$0xff] 0.0
    %36 = vst [vmem:[#allocation2 + $0x90] sm:$0xff] 0.0
    %37 = vst [vmem:[#allocation2 + $0x98] sm:$0xff] 0.0
    %38 = vst [vmem:[#allocation2 + $0xa0] sm:$0xff] 0.0
    %39 = vst [vmem:[#allocation2 + $0xa8] sm:$0xff] 0.0
    %40 = vst [vmem:[#allocation2 + $0xb0] sm:$0xff] 0.0
    %41 = vst [vmem:[#allocation2 + $0xb8] sm:$0xff] 0.0
    %42 = vst [vmem:[#allocation2 + $0xc0] sm:$0xff] 0.0
    %43 = vst [vmem:[#allocation2 + $0xc8] sm:$0xff] 0.0
    %44 = vst [vmem:[#allocation2 + $0xd0] sm:$0xff] 0.0
    %45 = vst [vmem:[#allocation2 + $0xd8] sm:$0xff] 0.0
    %46 = vst [vmem:[#allocation2 + $0xe0] sm:$0xff] 0.0
    %47 = vst [vmem:[#allocation2 + $0xe8] sm:$0xff] 0.0
    %48 = vst [vmem:[#allocation2 + $0xf0] sm:$0xff] 0.0
    %49 = vst [vmem:[#allocation2 + $0xf8] sm:$0xff] 0.0
  $region17: #{_lambda_.50} parent=0 // pred_fallthru
    _
  %v50 = vld [vmem:[#allocation2] sm:$0xff]
  %v51 = vld [vmem:[#allocation2 + $0x8] sm:$0xff]
  %v52 = vld [vmem:[#allocation2 + $0x10] sm:$0xff]
  %v53 = vld [vmem:[#allocation2 + $0x18] sm:$0xff]
  %v54 = vld [vmem:[#allocation2 + $0x20] sm:$0xff]
  %v55 = vld [vmem:[#allocation2 + $0x28] sm:$0xff]
  %v56 = vld [vmem:[#allocation2 + $0x30] sm:$0xff]
  %v57 = vld [vmem:[#allocation2 + $0x38] sm:$0xff]
  %v58 = vld [vmem:[#allocation2 + $0x40] sm:$0xff]
  %v59 = vld [vmem:[#allocation2 + $0x48] sm:$0xff]
  %v60 = vld [vmem:[#allocation2 + $0x50] sm:$0xff]
  %v61 = vld [vmem:[#allocation2 + $0x58] sm:$0xff]
  %v62 = vld [vmem:[#allocation2 + $0x60] sm:$0xff]
  %v63 = vld [vmem:[#allocation2 + $0x68] sm:$0xff]
  %v64 = vld [vmem:[#allocation2 + $0x70] sm:$0xff]
  %v65 = vld [vmem:[#allocation2 + $0x78] sm:$0xff]
  %v66 = vld [vmem:[#allocation2 + $0x80] sm:$0xff]
  %v67 = vld [vmem:[#allocation2 + $0x88] sm:$0xff]
  %v68 = vld [vmem:[#allocation2 + $0x90] sm:$0xff]
  %v69 = vld [vmem:[#allocation2 + $0x98] sm:$0xff]
  %v70 = vld [vmem:[#allocation2 + $0xa0] sm:$0xff]
  %v71 = vld [vmem:[#allocation2 + $0xa8] sm:$0xff]
  %v72 = vld [vmem:[#allocation2 + $0xb0] sm:$0xff]
  %v73 = vld [vmem:[#allocation2 + $0xb8] sm:$0xff]
  %v74 = vld [vmem:[#allocation2 + $0xc0] sm:$0xff]
  %v75 = vld [vmem:[#allocation2 + $0xc8] sm:$0xff]
  %v76 = vld [vmem:[#allocation2 + $0xd0] sm:$0xff]
  %v77 = vld [vmem:[#allocation2 + $0xd8] sm:$0xff]
  %v78 = vld [vmem:[#allocation2 + $0xe0] sm:$0xff]
  %v79 = vld [vmem:[#allocation2 + $0xe8] sm:$0xff]
  %v80 = vld [vmem:[#allocation2 + $0xf0] sm:$0xff]
  %v81 = vld [vmem:[#allocation2 + $0xf8] sm:$0xff]
  %v82 = vld [vmem:[%s0] sm:$0xff]
  %v83 = vld [vmem:[%s0 + $0x8] sm:$0xff]
  %v84 = vld [vmem:[%s0 + $0x10] sm:$0xff]
  %v85 = vld [vmem:[%s0 + $0x18] sm:$0xff]
  %v86 = vld [vmem:[%s0 + $0x20] sm:$0xff]
  %v87 = vld [vmem:[%s0 + $0x28] sm:$0xff]
  %v88 = vld [vmem:[%s0 + $0x30] sm:$0xff]
  %v89 = vld [vmem:[%s0 + $0x38] sm:$0xff]
  %v90 = vld [vmem:[%s0 + $0x40] sm:$0xff]
  %v91 = vld [vmem:[%s0 + $0x48] sm:$0xff]
  %v92 = vld [vmem:[%s0 + $0x50] sm:$0xff]
  %v93 = vld [vmem:[%s0 + $0x58] sm:$0xff]
  %v94 = vld [vmem:[%s0 + $0x60] sm:$0xff]
  %v95 = vld [vmem:[%s0 + $0x68] sm:$0xff]
  %v96 = vld [vmem:[%s0 + $0x70] sm:$0xff]
  %v97 = vld [vmem:[%s0 + $0x78] sm:$0xff]
  %v98 = vld [vmem:[%s1] sm:$0xff]
  %v99 = vld [vmem:[%s1 + $0x8] sm:$0xff]
  %v100 = vld [vmem:[%s1 + $0x10] sm:$0xff]
  %v101 = vld [vmem:[%s1 + $0x18] sm:$0xff]
  %v102 = vld [vmem:[%s1 + $0x20] sm:$0xff]
  %v103 = vld [vmem:[%s1 + $0x28] sm:$0xff]
  %v104 = vld [vmem:[%s1 + $0x30] sm:$0xff]
  %v105 = vld [vmem:[%s1 + $0x38] sm:$0xff]
  %v106 = vld [vmem:[%s1 + $0x40] sm:$0xff]
  %v107 = vld [vmem:[%s1 + $0x48] sm:$0xff]
  %v108 = vld [vmem:[%s1 + $0x50] sm:$0xff]
  %v109 = vld [vmem:[%s1 + $0x58] sm:$0xff]
  %v110 = vld [vmem:[%s1 + $0x60] sm:$0xff]
  %v111 = vld [vmem:[%s1 + $0x68] sm:$0xff]
  %v112 = vld [vmem:[%s1 + $0x70] sm:$0xff]
  %v113 = vld [vmem:[%s1 + $0x78] sm:$0xff]
  %v114 = vld [vmem:[%s1 + $0x80] sm:$0xff]
  %v115 = vld [vmem:[%s1 + $0x88] sm:$0xff]
  %v116 = vld [vmem:[%s1 + $0x90] sm:$0xff]
  %v117 = vld [vmem:[%s1 + $0x98] sm:$0xff]
  %v118 = vld [vmem:[%s1 + $0xa0] sm:$0xff]
  %v119 = vld [vmem:[%s1 + $0xa8] sm:$0xff]
  %v120 = vld [vmem:[%s1 + $0xb0] sm:$0xff]
  %v121 = vld [vmem:[%s1 + $0xb8] sm:$0xff]
  %v122 = vld [vmem:[%s1 + $0xc0] sm:$0xff]
  %v123 = vld [vmem:[%s1 + $0xc8] sm:$0xff]
  %v124 = vld [vmem:[%s1 + $0xd0] sm:$0xff]
  %v125 = vld [vmem:[%s1 + $0xd8] sm:$0xff]
  %v126 = vld [vmem:[%s1 + $0xe0] sm:$0xff]
  %v127 = vld [vmem:[%s1 + $0xe8] sm:$0xff]
  %v128 = vld [vmem:[%s1 + $0xf0] sm:$0xff]
  %v129 = vld [vmem:[%s1 + $0xf8] sm:$0xff]
  %130 = vmatprep.subr.mxu0 %v99
  %131 = vmatpush1.msra.mxu0 %v98
  %132 = vmatprep.subr.mxu0 %v101
  %133 = vmatpush1.msra.mxu0 %v100
  %134 = vmatprep.subr.mxu0 %v103
  %135 = vmatpush1.msra.mxu0 %v102
  %136 = vmatprep.subr.mxu0 %v105
  %137 = vmatpush1.msra.mxu0 %v104
  %138 = vmatprep.subr.mxu0 %v107
  %139 = vmatpush1.msra.mxu0 %v106
  %140 = vmatprep.subr.mxu0 %v109
  %141 = vmatpush1.msra.mxu0 %v108
  %142 = vmatprep.subr.mxu0 %v111
  %143 = vmatpush1.msra.mxu0 %v110
  %144 = vmatprep.subr.mxu0 %v113
  %145 = vmatpush1.msra.mxu0 %v112
  %146 = vmatprep.subr.mxu0 %v115
  %147 = vmatpush1.msra.mxu0 %v114
  %148 = vmatprep.subr.mxu0 %v117
  %149 = vmatpush1.msra.mxu0 %v116
  %150 = vmatprep.subr.mxu0 %v119
  %151 = vmatpush1.msra.mxu0 %v118
  %152 = vmatprep.subr.mxu0 %v121
  %153 = vmatpush1.msra.mxu0 %v120
  %154 = vmatprep.subr.mxu0 %v123
  %155 = vmatpush1.msra.mxu0 %v122
  %156 = vmatprep.subr.mxu0 %v125
  %157 = vmatpush1.msra.mxu0 %v124
  %158 = vmatprep.subr.mxu0 %v127
  %159 = vmatpush1.msra.mxu0 %v126
  %160 = vmatprep.subr.mxu0 %v129
  %161 = vmatpush1.msra.mxu0 %v128
  %162 = vmatprep.subr.mxu0 0.0
  %163 = vmatpush1.msra.mxu0 0.0
  %164 = vmatprep.subr.mxu0 0.0
  %165 = vmatpush1.msra.mxu0 0.0
  %166 = vmatprep.subr.mxu0 0.0
  %167 = vmatpush1.msra.mxu0 0.0
  %168 = vmatprep.subr.mxu0 0.0
  %169 = vmatpush1.msra.mxu0 0.0
  %170 = vmatprep.subr.mxu0 0.0
  %171 = vmatpush1.msra.mxu0 0.0
  %172 = vmatprep.subr.mxu0 0.0
  %173 = vmatpush1.msra.mxu0 0.0
  %174 = vmatprep.subr.mxu0 0.0
  %175 = vmatpush1.msra.mxu0 0.0
  %176 = vmatprep.subr.mxu0 0.0
  %177 = vmatpush1.msra.mxu0 0.0
  %178 = vmatprep.subr.mxu0 0.0
  %179 = vmatpush1.msra.mxu0 0.0
  %180 = vmatprep.subr.mxu0 0.0
  %181 = vmatpush1.msra.mxu0 0.0
  %182 = vmatprep.subr.mxu0 0.0
  %183 = vmatpush1.msra.mxu0 0.0
  %184 = vmatprep.subr.mxu0 0.0
  %185 = vmatpush1.msra.mxu0 0.0
  %186 = vmatprep.subr.mxu0 0.0
  %187 = vmatpush1.msra.mxu0 0.0
  %188 = vmatprep.subr.mxu0 0.0
  %189 = vmatpush1.msra.mxu0 0.0
  %190 = vmatprep.subr.mxu0 0.0
  %191 = vmatpush1.msra.mxu0 0.0
  %192 = vmatprep.subr.mxu0 0.0
  %193 = vmatpush1.msra.mxu0 0.0
  %194 = vmatprep.mubr.f32.mxu0 0.0
  %195 = vmatmul.mubr.f32.gmra.mrb[0].mxu0 %v82
  %v196 = vpop.f32.mrb[0].mxu0
  %v197 = vadd.f32 0.0, %v196
  %v198 = vpop.f32.mrb[0].mxu0
  %v199 = vadd.f32 0.0, %v198
  %200 = vmatprep.mubr.f32.mxu0 0.0
  %201 = vmatmul.mubr.f32.gmra.mrb[0].mxu0 %v83
  %v202 = vpop.f32.mrb[0].mxu0
  %v203 = vadd.f32 0.0, %v202
  %v204 = vpop.f32.mrb[0].mxu0
  %v205 = vadd.f32 0.0, %v204
  %206 = vmatprep.mubr.f32.mxu0 0.0
  %207 = vmatmul.mubr.f32.gmra.mrb[0].mxu0 %v84
  %v208 = vpop.f32.mrb[0].mxu0
  %v209 = vadd.f32 0.0, %v208
  %v210 = vpop.f32.mrb[0].mxu0
  %v211 = vadd.f32 0.0, %v210
  %212 = vmatprep.mubr.f32.mxu0 0.0
  %213 = vmatmul.mubr.f32.gmra.mrb[0].mxu0 %v85
  %v214 = vpop.f32.mrb[0].mxu0
  %v215 = vadd.f32 0.0, %v214
  %v216 = vpop.f32.mrb[0].mxu0
  %v217 = vadd.f32 0.0, %v216
  %218 = vmatprep.mubr.f32.mxu0 0.0
  %219 = vmatmul.mubr.f32.gmra.mrb[0].mxu0 %v86
  %v220 = vpop.f32.mrb[0].mxu0
  %v221 = vadd.f32 0.0, %v220
  %v222 = vpop.f32.mrb[0].mxu0
  %v223 = vadd.f32 0.0, %v222
  %224 = vmatprep.mubr.f32.mxu0 0.0
  %225 = vmatmul.mubr.f32.gmra.mrb[0].mxu0 %v87
  %v226 = vpop.f32.mrb[0].mxu0
  %v227 = vadd.f32 0.0, %v226
  %v228 = vpop.f32.mrb[0].mxu0
  %v229 = vadd.f32 0.0, %v228
  %230 = vmatprep.mubr.f32.mxu0 0.0
  %231 = vmatmul.mubr.f32.gmra.mrb[0].mxu0 %v88
  %v232 = vpop.f32.mrb[0].mxu0
  %v233 = vadd.f32 0.0, %v232
  %v234 = vpop.f32.mrb[0].mxu0
  %v235 = vadd.f32 0.0, %v234
  %236 = vmatprep.mubr.f32.mxu0 0.0
  %237 = vmatmul.mubr.f32.gmra.mrb[0].mxu0 %v89
  %v238 = vpop.f32.mrb[0].mxu0
  %v239 = vadd.f32 0.0, %v238
  %v240 = vpop.f32.mrb[0].mxu0
  %v241 = vadd.f32 0.0, %v240
  %242 = vmatprep.mubr.f32.mxu0 0.0
  %243 = vmatmul.mubr.f32.gmra.mrb[0].mxu0 %v90
  %v244 = vpop.f32.mrb[0].mxu0
  %v245 = vadd.f32 0.0, %v244
  %v246 = vpop.f32.mrb[0].mxu0
  %v247 = vadd.f32 0.0, %v246
  %248 = vmatprep.mubr.f32.mxu0 0.0
  %249 = vmatmul.mubr.f32.gmra.mrb[0].mxu0 %v91
  %v250 = vpop.f32.mrb[0].mxu0
  %v251 = vadd.f32 0.0, %v250
  %v252 = vpop.f32.mrb[0].mxu0
  %v253 = vadd.f32 0.0, %v252
  %254 = vmatprep.mubr.f32.mxu0 0.0
  %255 = vmatmul.mubr.f32.gmra.mrb[0].mxu0 %v92
  %v256 = vpop.f32.mrb[0].mxu0
  %v257 = vadd.f32 0.0, %v256
  %v258 = vpop.f32.mrb[0].mxu0
  %v259 = vadd.f32 0.0, %v258
  %260 = vmatprep.mubr.f32.mxu0 0.0
  %261 = vmatmul.mubr.f32.gmra.mrb[0].mxu0 %v93
  %v262 = vpop.f32.mrb[0].mxu0
  %v263 = vadd.f32 0.0, %v262
  %v264 = vpop.f32.mrb[0].mxu0
  %v265 = vadd.f32 0.0, %v264
  %266 = vmatprep.mubr.f32.mxu0 0.0
  %267 = vmatmul.mubr.f32.gmra.mrb[0].mxu0 %v94
  %v268 = vpop.f32.mrb[0].mxu0
  %v269 = vadd.f32 0.0, %v268
  %v270 = vpop.f32.mrb[0].mxu0
  %v271 = vadd.f32 0.0, %v270
  %272 = vmatprep.mubr.f32.mxu0 0.0
  %273 = vmatmul.mubr.f32.gmra.mrb[0].mxu0 %v95
  %v274 = vpop.f32.mrb[0].mxu0
  %v275 = vadd.f32 0.0, %v274
  %v276 = vpop.f32.mrb[0].mxu0
  %v277 = vadd.f32 0.0, %v276
  %278 = vmatprep.mubr.f32.mxu0 0.0
  %279 = vmatmul.mubr.f32.gmra.mrb[0].mxu0 %v96
  %v280 = vpop.f32.mrb[0].mxu0
  %v281 = vadd.f32 0.0, %v280
  %v282 = vpop.f32.mrb[0].mxu0
  %v283 = vadd.f32 0.0, %v282
  %284 = vmatprep.mubr.f32.mxu0 0.0
  %285 = vmatmul.mubr.f32.gmra.mrb[0].mxu0 %v97
  %v286 = vpop.f32.mrb[0].mxu0
  %v287 = vadd.f32 0.0, %v286
  %v288 = vpop.f32.mrb[0].mxu0
  %v289 = vadd.f32 0.0, %v288
  %290 = vdwg.mxu0
  %v291 = vadd.f32 %v50, %v197
  %v292 = vadd.f32 %v51, %v199
  %v293 = vadd.f32 %v52, %v203
  %v294 = vadd.f32 %v53, %v205
  %v295 = vadd.f32 %v54, %v209
  %v296 = vadd.f32 %v55, %v211
  %v297 = vadd.f32 %v56, %v215
  %v298 = vadd.f32 %v57, %v217
  %v299 = vadd.f32 %v58, %v221
  %v300 = vadd.f32 %v59, %v223
  %v301 = vadd.f32 %v60, %v227
  %v302 = vadd.f32 %v61, %v229
  %v303 = vadd.f32 %v62, %v233
  %v304 = vadd.f32 %v63, %v235
  %v305 = vadd.f32 %v64, %v239
  %v306 = vadd.f32 %v65, %v241
  %v307 = vadd.f32 %v66, %v245
  %v308 = vadd.f32 %v67, %v247
  %v309 = vadd.f32 %v68, %v251
  %v310 = vadd.f32 %v69, %v253
  %v311 = vadd.f32 %v70, %v257
  %v312 = vadd.f32 %v71, %v259
  %v313 = vadd.f32 %v72, %v263
  %v314 = vadd.f32 %v73, %v265
  %v315 = vadd.f32 %v74, %v269
  %v316 = vadd.f32 %v75, %v271
  %v317 = vadd.f32 %v76, %v275
  %v318 = vadd.f32 %v77, %v277
  %v319 = vadd.f32 %v78, %v281
  %v320 = vadd.f32 %v79, %v283
  %v321 = vadd.f32 %v80, %v287
  %v322 = vadd.f32 %v81, %v289
  %323 = vst [vmem:[#allocation2] sm:$0xff] %v291
  %324 = vst [vmem:[#allocation2 + $0x8] sm:$0xff] %v292
  %325 = vst [vmem:[#allocation2 + $0x10] sm:$0xff] %v293
  %326 = vst [vmem:[#allocation2 + $0x18] sm:$0xff] %v294
  %327 = vst [vmem:[#allocation2 + $0x20] sm:$0xff] %v295
  %328 = vst [vmem:[#allocation2 + $0x28] sm:$0xff] %v296
  %329 = vst [vmem:[#allocation2 + $0x30] sm:$0xff] %v297
  %330 = vst [vmem:[#allocation2 + $0x38] sm:$0xff] %v298
  %331 = vst [vmem:[#allocation2 + $0x40] sm:$0xff] %v299
  %332 = vst [vmem:[#allocation2 + $0x48] sm:$0xff] %v300
  %333 = vst [vmem:[#allocation2 + $0x50] sm:$0xff] %v301
  %334 = vst [vmem:[#allocation2 + $0x58] sm:$0xff] %v302
  %335 = vst [vmem:[#allocation2 + $0x60] sm:$0xff] %v303
  %336 = vst [vmem:[#allocation2 + $0x68] sm:$0xff] %v304
  %337 = vst [vmem:[#allocation2 + $0x70] sm:$0xff] %v305
  %338 = vst [vmem:[#allocation2 + $0x78] sm:$0xff] %v306
  %339 = vst [vmem:[#allocation2 + $0x80] sm:$0xff] %v307
  %340 = vst [vmem:[#allocation2 + $0x88] sm:$0xff] %v308
  %341 = vst [vmem:[#allocation2 + $0x90] sm:$0xff] %v309
  %342 = vst [vmem:[#allocation2 + $0x98] sm:$0xff] %v310
  %343 = vst [vmem:[#allocation2 + $0xa0] sm:$0xff] %v311
  %344 = vst [vmem:[#allocation2 + $0xa8] sm:$0xff] %v312
  %345 = vst [vmem:[#allocation2 + $0xb0] sm:$0xff] %v313
  %346 = vst [vmem:[#allocation2 + $0xb8] sm:$0xff] %v314
  %347 = vst [vmem:[#allocation2 + $0xc0] sm:$0xff] %v315
  %348 = vst [vmem:[#allocation2 + $0xc8] sm:$0xff] %v316
  %349 = vst [vmem:[#allocation2 + $0xd0] sm:$0xff] %v317
  %350 = vst [vmem:[#allocation2 + $0xd8] sm:$0xff] %v318
  %351 = vst [vmem:[#allocation2 + $0xe0] sm:$0xff] %v319
  %352 = vst [vmem:[#allocation2 + $0xe8] sm:$0xff] %v320
  %353 = vst [vmem:[#allocation2 + $0xf0] sm:$0xff] %v321
  %354 = vst [vmem:[#allocation2 + $0xf8] sm:$0xff] %v322
  // Predicated region
  $region18: #{_lambda_.50} parent=0 // pred_check
    %p355 = pneg %p14
  $region19: #{_lambda_.50} parent=0 // pred_check_branch
    %357 = sbr.rel (%p355) target = $region21
  $region20: #{_lambda_.50} parent=0 // pred_region
    %v358 = vld [vmem:[#allocation2] sm:$0xff]
    %v359 = vld [vmem:[#allocation2 + $0x8] sm:$0xff]
    %v360 = vld [vmem:[#allocation2 + $0x10] sm:$0xff]
    %v361 = vld [vmem:[#allocation2 + $0x18] sm:$0xff]
    %v362 = vld [vmem:[#allocation2 + $0x20] sm:$0xff]
    %v363 = vld [vmem:[#allocation2 + $0x28] sm:$0xff]
    %v364 = vld [vmem:[#allocation2 + $0x30] sm:$0xff]
    %v365 = vld [vmem:[#allocation2 + $0x38] sm:$0xff]
    %v366 = vld [vmem:[#allocation2 + $0x40] sm:$0xff]
    %v367 = vld [vmem:[#allocation2 + $0x48] sm:$0xff]
    %v368 = vld [vmem:[#allocation2 + $0x50] sm:$0xff]
    %v369 = vld [vmem:[#allocation2 + $0x58] sm:$0xff]
    %v370 = vld [vmem:[#allocation2 + $0x60] sm:$0xff]
    %v371 = vld [vmem:[#allocation2 + $0x68] sm:$0xff]
    %v372 = vld [vmem:[#allocation2 + $0x70] sm:$0xff]
    %v373 = vld [vmem:[#allocation2 + $0x78] sm:$0xff]
    %v374 = vld [vmem:[#allocation2 + $0x80] sm:$0xff]
    %v375 = vld [vmem:[#allocation2 + $0x88] sm:$0xff]
    %v376 = vld [vmem:[#allocation2 + $0x90] sm:$0xff]
    %v377 = vld [vmem:[#allocation2 + $0x98] sm:$0xff]
    %v378 = vld [vmem:[#allocation2 + $0xa0] sm:$0xff]
    %v379 = vld [vmem:[#allocation2 + $0xa8] sm:$0xff]
    %v380 = vld [vmem:[#allocation2 + $0xb0] sm:$0xff]
    %v381 = vld [vmem:[#allocation2 + $0xb8] sm:$0xff]
    %v382 = vld [vmem:[#allocation2 + $0xc0] sm:$0xff]
    %v383 = vld [vmem:[#allocation2 + $0xc8] sm:$0xff]
    %v384 = vld [vmem:[#allocation2 + $0xd0] sm:$0xff]
    %v385 = vld [vmem:[#allocation2 + $0xd8] sm:$0xff]
    %v386 = vld [vmem:[#allocation2 + $0xe0] sm:$0xff]
    %v387 = vld [vmem:[#allocation2 + $0xe8] sm:$0xff]
    %v388 = vld [vmem:[#allocation2 + $0xf0] sm:$0xff]
    %v389 = vld [vmem:[#allocation2 + $0xf8] sm:$0xff]
    %v390 = vld [vmem:[%s2] sm:$0x3]
    %v392 = vlaneseq
    %v393 = vshrl.u32 %v392, 7
    %v394 = vsub.s32 0, %v393
    %v395 = vrot.slane %v390, %v394
    %v396 = vlaneseq
    %v397 = vshrl.u32 %v396, 7
    %v398 = vsub.s32 1, %v397
    %v399 = vrot.slane %v390, %v398
    %v402 = vadd.f32 %v358, %v395
    %v403 = vadd.f32 %v359, %v399
    %v404 = vadd.f32 %v360, %v395
    %v405 = vadd.f32 %v361, %v399
    %v406 = vadd.f32 %v362, %v395
    %v407 = vadd.f32 %v363, %v399
    %v408 = vadd.f32 %v364, %v395
    %v409 = vadd.f32 %v365, %v399
    %v410 = vadd.f32 %v366, %v395
    %v411 = vadd.f32 %v367, %v399
    %v412 = vadd.f32 %v368, %v395
    %v413 = vadd.f32 %v369, %v399
    %v414 = vadd.f32 %v370, %v395
    %v415 = vadd.f32 %v371, %v399
    %v416 = vadd.f32 %v372, %v395
    %v417 = vadd.f32 %v373, %v399
    %v418 = vadd.f32 %v374, %v395
    %v419 = vadd.f32 %v375, %v399
    %v420 = vadd.f32 %v376, %v395
    %v421 = vadd.f32 %v377, %v399
    %v422 = vadd.f32 %v378, %v395
    %v423 = vadd.f32 %v379, %v399
    %v424 = vadd.f32 %v380, %v395
    %v425 = vadd.f32 %v381, %v399
    %v426 = vadd.f32 %v382, %v395
    %v427 = vadd.f32 %v383, %v399
    %v428 = vadd.f32 %v384, %v395
    %v429 = vadd.f32 %v385, %v399
    %v430 = vadd.f32 %v386, %v395
    %v431 = vadd.f32 %v387, %v399
    %v432 = vadd.f32 %v388, %v395
    %v433 = vadd.f32 %v389, %v399
    %v434 = vmax.f32 %v402, 0.0
    %v435 = vmax.f32 %v403, 0.0
    %v436 = vmax.f32 %v404, 0.0
    %v437 = vmax.f32 %v405, 0.0
    %v438 = vmax.f32 %v406, 0.0
    %v439 = vmax.f32 %v407, 0.0
    %v440 = vmax.f32 %v408, 0.0
    %v441 = vmax.f32 %v409, 0.0
    %v442 = vmax.f32 %v410, 0.0
    %v443 = vmax.f32 %v411, 0.0
    %v444 = vmax.f32 %v412, 0.0
    %v445 = vmax.f32 %v413, 0.0
    %v446 = vmax.f32 %v414, 0.0
    %v447 = vmax.f32 %v415, 0.0
    %v448 = vmax.f32 %v416, 0.0
    %v449 = vmax.f32 %v417, 0.0
    %v450 = vmax.f32 %v418, 0.0
    %v451 = vmax.f32 %v419, 0.0
    %v452 = vmax.f32 %v420, 0.0
    %v453 = vmax.f32 %v421, 0.0
    %v454 = vmax.f32 %v422, 0.0
    %v455 = vmax.f32 %v423, 0.0
    %v456 = vmax.f32 %v424, 0.0
    %v457 = vmax.f32 %v425, 0.0
    %v458 = vmax.f32 %v426, 0.0
    %v459 = vmax.f32 %v427, 0.0
    %v460 = vmax.f32 %v428, 0.0
    %v461 = vmax.f32 %v429, 0.0
    %v462 = vmax.f32 %v430, 0.0
    %v463 = vmax.f32 %v431, 0.0
    %v464 = vmax.f32 %v432, 0.0
    %v465 = vmax.f32 %v433, 0.0
    %466 = vst [vmem:[%s3] sm:$0xff] %v434
    %467 = vst [vmem:[%s3 + $0x8] sm:$0xff] %v435
    %468 = vst [vmem:[%s3 + $0x10] sm:$0xff] %v436
    %469 = vst [vmem:[%s3 + $0x18] sm:$0xff] %v437
    %470 = vst [vmem:[%s3 + $0x20] sm:$0xff] %v438
    %471 = vst [vmem:[%s3 + $0x28] sm:$0xff] %v439
    %472 = vst [vmem:[%s3 + $0x30] sm:$0xff] %v440
    %473 = vst [vmem:[%s3 + $0x38] sm:$0xff] %v441
    %474 = vst [vmem:[%s3 + $0x40] sm:$0xff] %v442
    %475 = vst [vmem:[%s3 + $0x48] sm:$0xff] %v443
    %476 = vst [vmem:[%s3 + $0x50] sm:$0xff] %v444
    %477 = vst [vmem:[%s3 + $0x58] sm:$0xff] %v445
    %478 = vst [vmem:[%s3 + $0x60] sm:$0xff] %v446
    %479 = vst [vmem:[%s3 + $0x68] sm:$0xff] %v447
    %480 = vst [vmem:[%s3 + $0x70] sm:$0xff] %v448
    %481 = vst [vmem:[%s3 + $0x78] sm:$0xff] %v449
    %482 = vst [vmem:[%s3 + $0x80] sm:$0xff] %v450
    %483 = vst [vmem:[%s3 + $0x88] sm:$0xff] %v451
    %484 = vst [vmem:[%s3 + $0x90] sm:$0xff] %v452
    %485 = vst [vmem:[%s3 + $0x98] sm:$0xff] %v453
    %486 = vst [vmem:[%s3 + $0xa0] sm:$0xff] %v454
    %487 = vst [vmem:[%s3 + $0xa8] sm:$0xff] %v455
    %488 = vst [vmem:[%s3 + $0xb0] sm:$0xff] %v456
    %489 = vst [vmem:[%s3 + $0xb8] sm:$0xff] %v457
    %490 = vst [vmem:[%s3 + $0xc0] sm:$0xff] %v458
    %491 = vst [vmem:[%s3 + $0xc8] sm:$0xff] %v459
    %492 = vst [vmem:[%s3 + $0xd0] sm:$0xff] %v460
    %493 = vst [vmem:[%s3 + $0xd8] sm:$0xff] %v461
    %494 = vst [vmem:[%s3 + $0xe0] sm:$0xff] %v462
    %495 = vst [vmem:[%s3 + $0xe8] sm:$0xff] %v463
    %496 = vst [vmem:[%s3 + $0xf0] sm:$0xff] %v464
    %497 = vst [vmem:[%s3 + $0xf8] sm:$0xff] %v465
  $region21: #{_lambda_.50} parent=0 // pred_fallthru
    _
  // Predicated region
  $region22: #{_lambda_.50} parent=0 // pred_check
    _
  $region23: #{_lambda_.50} parent=0 // pred_check_branch
    %499 = sbr.rel (0) target = $region25
  $region24: #{_lambda_.50} parent=0 // pred_region
    _
  $region25: #{_lambda_.50} parent=0 // pred_fallthru
    _
  // Predicated region
  $region26: #{_lambda_.50} parent=0 // pred_check
    _
  $region27: #{_lambda_.50} parent=0 // pred_check_branch
    %501 = sbr.rel (0) target = $region29
  $region28: #{_lambda_.50} parent=0 // pred_region
    _
  $region29: #{_lambda_.50} parent=0 // pred_fallthru
    _

// kernel: _lambda_.53
$region0: #{_lambda_.53}
  #allocation0 [shape = 'u32[]', space=smem, size = 0x4, offset = 0x4, fixed_abs, tag = 'smem constant byte address 0x4 - core index']
  #allocation1 [shape = 'u32[144,128]{1,0:T(1,128)}', space=vmem, size = 0x12000, scoped, tag = 'internal scratch']
  #allocation2 [shape = 'f32[128,384]{1,0:T(8,128)}', space=vmem, size = 0x30000, scoped, tag = 'scratch operand']
  %s0 = inlined_call_operand.vmem [shape: f32[128,128], index: 0, kind: input, shape index: {}]
  %s1 = inlined_call_operand.vmem [shape: f32[128,384], index: 1, kind: input, shape index: {}]
  %s2 = inlined_call_operand.vmem [shape: f32[1,384], index: 2, kind: input, shape index: {}]
  %s3 = inlined_call_operand.vmem [shape: f32[128,384], index: 3, kind: output, shape index: {}]
  %s4 = sld [smem:[#allocation0]]
  $region30: #{_lambda_.53} parent=0
    _
  %s6 = ssub.s32 1, %s4
  %s7 = scalar_select 0, %s6, %s4
  // Predicated region
  $region2: #{_lambda_.53} parent=0 // pred_check
    _
  $region3: #{_lambda_.53} parent=0 // pred_check_branch
    %9 = sbr.rel (0) target = $region5
  $region4: #{_lambda_.53} parent=0 // pred_region
    _
  $region5: #{_lambda_.53} parent=0 // pred_fallthru
    _
  // Predicated region
  $region6: #{_lambda_.53} parent=0 // pred_check
    _
  $region7: #{_lambda_.53} parent=0 // pred_check_branch
    %11 = sbr.rel (0) target = $region9
  $region8: #{_lambda_.53} parent=0 // pred_region
    _
  $region9: #{_lambda_.53} parent=0 // pred_fallthru
    _
  // Predicated region
  $region10: #{_lambda_.53} parent=0 // pred_check
    _
  $region11: #{_lambda_.53} parent=0 // pred_check_branch
    %13 = sbr.rel (0) target = $region13
  $region12: #{_lambda_.53} parent=0 // pred_region
    _
  $region13: #{_lambda_.53} parent=0 // pred_fallthru
    _
  %p14 = scmp.eq.s32.totalorder 0, 0
  // Predicated region
  $region14: #{_lambda_.53} parent=0 // pred_check
    %p15 = pneg %p14
  $region15: #{_lambda_.53} parent=0 // pred_check_branch
    %17 = sbr.rel (%p15) target = $region17
  $region16: #{_lambda_.53} parent=0 // pred_region
    %18 = vst [vmem:[#allocation2] sm:$0xff] 0.0
    %19 = vst [vmem:[#allocation2 + $0x8] sm:$0xff] 0.0
    %20 = vst [vmem:[#allocation2 + $0x10] sm:$0xff] 0.0
    %21 = vst [vmem:[#allocation2 + $0x18] sm:$0xff] 0.0
    %22 = vst [vmem:[#allocation2 + $0x20] sm:$0xff] 0.0
    %23 = vst [vmem:[#allocation2 + $0x28] sm:$0xff] 0.0
    %24 = vst [vmem:[#allocation2 + $0x30] sm:$0xff] 0.0
    %25 = vst [vmem:[#allocation2 + $0x38] sm:$0xff] 0.0
    %26 = vst [vmem:[#allocation2 + $0x40] sm:$0xff] 0.0
    %27 = vst [vmem:[#allocation2 + $0x48] sm:$0xff] 0.0
    %28 = vst [vmem:[#allocation2 + $0x50] sm:$0xff] 0.0
    %29 = vst [vmem:[#allocation2 + $0x58] sm:$0xff] 0.0
    %30 = vst [vmem:[#allocation2 + $0x60] sm:$0xff] 0.0
    %31 = vst [vmem:[#allocation2 + $0x68] sm:$0xff] 0.0
    %32 = vst [vmem:[#allocation2 + $0x70] sm:$0xff] 0.0
    %33 = vst [vmem:[#allocation2 + $0x78] sm:$0xff] 0.0
    %34 = vst [vmem:[#allocation2 + $0x80] sm:$0xff] 0.0
    %35 = vst [vmem:[#allocation2 + $0x88] sm:$0xff] 0.0
    %36 = vst [vmem:[#allocation2 + $0x90] sm:$0xff] 0.0
    %37 = vst [vmem:[#allocation2 + $0x98] sm:$0xff] 0.0
    %38 = vst [vmem:[#allocation2 + $0xa0] sm:$0xff] 0.0
    %39 = vst [vmem:[#allocation2 + $0xa8] sm:$0xff] 0.0
    %40 = vst [vmem:[#allocation2 + $0xb0] sm:$0xff] 0.0
    %41 = vst [vmem:[#allocation2 + $0xb8] sm:$0xff] 0.0
    %42 = vst [vmem:[#allocation2 + $0xc0] sm:$0xff] 0.0
    %43 = vst [vmem:[#allocation2 + $0xc8] sm:$0xff] 0.0
    %44 = vst [vmem:[#allocation2 + $0xd0] sm:$0xff] 0.0
    %45 = vst [vmem:[#allocation2 + $0xd8] sm:$0xff] 0.0
    %46 = vst [vmem:[#allocation2 + $0xe0] sm:$0xff] 0.0
    %47 = vst [vmem:[#allocation2 + $0xe8] sm:$0xff] 0.0
    %48 = vst [vmem:[#allocation2 + $0xf0] sm:$0xff] 0.0
    %49 = vst [vmem:[#allocation2 + $0xf8] sm:$0xff] 0.0
    %50 = vst [vmem:[#allocation2 + $0x100] sm:$0xff] 0.0
    %51 = vst [vmem:[#allocation2 + $0x108] sm:$0xff] 0.0
    %52 = vst [vmem:[#allocation2 + $0x110] sm:$0xff] 0.0
    %53 = vst [vmem:[#allocation2 + $0x118] sm:$0xff] 0.0
    %54 = vst [vmem:[#allocation2 + $0x120] sm:$0xff] 0.0
    %55 = vst [vmem:[#allocation2 + $0x128] sm:$0xff] 0.0
    %56 = vst [vmem:[#allocation2 + $0x130] sm:$0xff] 0.0
    %57 = vst [vmem:[#allocation2 + $0x138] sm:$0xff] 0.0
    %58 = vst [vmem:[#allocation2 + $0x140] sm:$0xff] 0.0
    %59 = vst [vmem:[#allocation2 + $0x148] sm:$0xff] 0.0
    %60 = vst [vmem:[#allocation2 + $0x150] sm:$0xff] 0.0
    %61 = vst [vmem:[#allocation2 + $0x158] sm:$0xff] 0.0
    %62 = vst [vmem:[#allocation2 + $0x160] sm:$0xff] 0.0
    %63 = vst [vmem:[#allocation2 + $0x168] sm:$0xff] 0.0
    %64 = vst [vmem:[#allocation2 + $0x170] sm:$0xff] 0.0
    %65 = vst [vmem:[#allocation2 + $0x178] sm:$0xff] 0.0
  $region17: #{_lambda_.53} parent=0 // pred_fallthru
    _
  %v66 = vld [vmem:[#allocation2] sm:$0xff]
  %v67 = vld [vmem:[#allocation2 + $0x8] sm:$0xff]
  %v68 = vld [vmem:[#allocation2 + $0x10] sm:$0xff]
  %v69 = vld [vmem:[#allocation2 + $0x18] sm:$0xff]
  %v70 = vld [vmem:[#allocation2 + $0x20] sm:$0xff]
  %v71 = vld [vmem:[#allocation2 + $0x28] sm:$0xff]
  %v72 = vld [vmem:[#allocation2 + $0x30] sm:$0xff]
  %v73 = vld [vmem:[#allocation2 + $0x38] sm:$0xff]
  %v74 = vld [vmem:[#allocation2 + $0x40] sm:$0xff]
  %v75 = vld [vmem:[#allocation2 + $0x48] sm:$0xff]
  %v76 = vld [vmem:[#allocation2 + $0x50] sm:$0xff]
  %v77 = vld [vmem:[#allocation2 + $0x58] sm:$0xff]
  %v78 = vld [vmem:[#allocation2 + $0x60] sm:$0xff]
  %v79 = vld [vmem:[#allocation2 + $0x68] sm:$0xff]
  %v80 = vld [vmem:[#allocation2 + $0x70] sm:$0xff]
  %v81 = vld [vmem:[#allocation2 + $0x78] sm:$0xff]
  %v82 = vld [vmem:[#allocation2 + $0x80] sm:$0xff]
  %v83 = vld [vmem:[#allocation2 + $0x88] sm:$0xff]
  %v84 = vld [vmem:[#allocation2 + $0x90] sm:$0xff]
  %v85 = vld [vmem:[#allocation2 + $0x98] sm:$0xff]
  %v86 = vld [vmem:[#allocation2 + $0xa0] sm:$0xff]
  %v87 = vld [vmem:[#allocation2 + $0xa8] sm:$0xff]
  %v88 = vld [vmem:[#allocation2 + $0xb0] sm:$0xff]
  %v89 = vld [vmem:[#allocation2 + $0xb8] sm:$0xff]
  %v90 = vld [vmem:[#allocation2 + $0xc0] sm:$0xff]
  %v91 = vld [vmem:[#allocation2 + $0xc8] sm:$0xff]
  %v92 = vld [vmem:[#allocation2 + $0xd0] sm:$0xff]
  %v93 = vld [vmem:[#allocation2 + $0xd8] sm:$0xff]
  %v94 = vld [vmem:[#allocation2 + $0xe0] sm:$0xff]
  %v95 = vld [vmem:[#allocation2 + $0xe8] sm:$0xff]
  %v96 = vld [vmem:[#allocation2 + $0xf0] sm:$0xff]
  %v97 = vld [vmem:[#allocation2 + $0xf8] sm:$0xff]
  %v98 = vld [vmem:[#allocation2 + $0x100] sm:$0xff]
  %v99 = vld [vmem:[#allocation2 + $0x108] sm:$0xff]
  %v100 = vld [vmem:[#allocation2 + $0x110] sm:$0xff]
  %v101 = vld [vmem:[#allocation2 + $0x118] sm:$0xff]
  %v102 = vld [vmem:[#allocation2 + $0x120] sm:$0xff]
  %v103 = vld [vmem:[#allocation2 + $0x128] sm:$0xff]
  %v104 = vld [vmem:[#allocation2 + $0x130] sm:$0xff]
  %v105 = vld [vmem:[#allocation2 + $0x138] sm:$0xff]
  %v106 = vld [vmem:[#allocation2 + $0x140] sm:$0xff]
  %v107 = vld [vmem:[#allocation2 + $0x148] sm:$0xff]
  %v108 = vld [vmem:[#allocation2 + $0x150] sm:$0xff]
  %v109 = vld [vmem:[#allocation2 + $0x158] sm:$0xff]
  %v110 = vld [vmem:[#allocation2 + $0x160] sm:$0xff]
  %v111 = vld [vmem:[#allocation2 + $0x168] sm:$0xff]
  %v112 = vld [vmem:[#allocation2 + $0x170] sm:$0xff]
  %v113 = vld [vmem:[#allocation2 + $0x178] sm:$0xff]
  %v114 = vld [vmem:[%s0] sm:$0xff]
  %v115 = vld [vmem:[%s0 + $0x8] sm:$0xff]
  %v116 = vld [vmem:[%s0 + $0x10] sm:$0xff]
  %v117 = vld [vmem:[%s0 + $0x18] sm:$0xff]
  %v118 = vld [vmem:[%s0 + $0x20] sm:$0xff]
  %v119 = vld [vmem:[%s0 + $0x28] sm:$0xff]
  %v120 = vld [vmem:[%s0 + $0x30] sm:$0xff]
  %v121 = vld [vmem:[%s0 + $0x38] sm:$0xff]
  %v122 = vld [vmem:[%s0 + $0x40] sm:$0xff]
  %v123 = vld [vmem:[%s0 + $0x48] sm:$0xff]
  %v124 = vld [vmem:[%s0 + $0x50] sm:$0xff]
  %v125 = vld [vmem:[%s0 + $0x58] sm:$0xff]
  %v126 = vld [vmem:[%s0 + $0x60] sm:$0xff]
  %v127 = vld [vmem:[%s0 + $0x68] sm:$0xff]
  %v128 = vld [vmem:[%s0 + $0x70] sm:$0xff]
  %v129 = vld [vmem:[%s0 + $0x78] sm:$0xff]
  %v130 = vld [vmem:[%s1] sm:$0xff]
  %v131 = vld [vmem:[%s1 + $0x8] sm:$0xff]
  %v132 = vld [vmem:[%s1 + $0x10] sm:$0xff]
  %v133 = vld [vmem:[%s1 + $0x18] sm:$0xff]
  %v134 = vld [vmem:[%s1 + $0x20] sm:$0xff]
  %v135 = vld [vmem:[%s1 + $0x28] sm:$0xff]
  %v136 = vld [vmem:[%s1 + $0x30] sm:$0xff]
  %v137 = vld [vmem:[%s1 + $0x38] sm:$0xff]
  %v138 = vld [vmem:[%s1 + $0x40] sm:$0xff]
  %v139 = vld [vmem:[%s1 + $0x48] sm:$0xff]
  %v140 = vld [vmem:[%s1 + $0x50] sm:$0xff]
  %v141 = vld [vmem:[%s1 + $0x58] sm:$0xff]
  %v142 = vld [vmem:[%s1 + $0x60] sm:$0xff]
  %v143 = vld [vmem:[%s1 + $0x68] sm:$0xff]
  %v144 = vld [vmem:[%s1 + $0x70] sm:$0xff]
  %v145 = vld [vmem:[%s1 + $0x78] sm:$0xff]
  %v146 = vld [vmem:[%s1 + $0x80] sm:$0xff]
  %v147 = vld [vmem:[%s1 + $0x88] sm:$0xff]
  %v148 = vld [vmem:[%s1 + $0x90] sm:$0xff]
  %v149 = vld [vmem:[%s1 + $0x98] sm:$0xff]
  %v150 = vld [vmem:[%s1 + $0xa0] sm:$0xff]
  %v151 = vld [vmem:[%s1 + $0xa8] sm:$0xff]
  %v152 = vld [vmem:[%s1 + $0xb0] sm:$0xff]
  %v153 = vld [vmem:[%s1 + $0xb8] sm:$0xff]
  %v154 = vld [vmem:[%s1 + $0xc0] sm:$0xff]
  %v155 = vld [vmem:[%s1 + $0xc8] sm:$0xff]
  %v156 = vld [vmem:[%s1 + $0xd0] sm:$0xff]
  %v157 = vld [vmem:[%s1 + $0xd8] sm:$0xff]
  %v158 = vld [vmem:[%s1 + $0xe0] sm:$0xff]
  %v159 = vld [vmem:[%s1 + $0xe8] sm:$0xff]
  %v160 = vld [vmem:[%s1 + $0xf0] sm:$0xff]
  %v161 = vld [vmem:[%s1 + $0xf8] sm:$0xff]
  %v162 = vld [vmem:[%s1 + $0x100] sm:$0xff]
  %v163 = vld [vmem:[%s1 + $0x108] sm:$0xff]
  %v164 = vld [vmem:[%s1 + $0x110] sm:$0xff]
  %v165 = vld [vmem:[%s1 + $0x118] sm:$0xff]
  %v166 = vld [vmem:[%s1 + $0x120] sm:$0xff]
  %v167 = vld [vmem:[%s1 + $0x128] sm:$0xff]
  %v168 = vld [vmem:[%s1 + $0x130] sm:$0xff]
  %v169 = vld [vmem:[%s1 + $0x138] sm:$0xff]
  %v170 = vld [vmem:[%s1 + $0x140] sm:$0xff]
  %v171 = vld [vmem:[%s1 + $0x148] sm:$0xff]
  %v172 = vld [vmem:[%s1 + $0x150] sm:$0xff]
  %v173 = vld [vmem:[%s1 + $0x158] sm:$0xff]
  %v174 = vld [vmem:[%s1 + $0x160] sm:$0xff]
  %v175 = vld [vmem:[%s1 + $0x168] sm:$0xff]
  %v176 = vld [vmem:[%s1 + $0x170] sm:$0xff]
  %v177 = vld [vmem:[%s1 + $0x178] sm:$0xff]
  %178 = vmatprep.subr.mxu0 %v131
  %179 = vmatpush1.msra.mxu0 %v130
  %180 = vmatprep.subr.mxu0 %v134
  %181 = vmatpush1.msra.mxu0 %v133
  %182 = vmatprep.subr.mxu0 %v137
  %183 = vmatpush1.msra.mxu0 %v136
  %184 = vmatprep.subr.mxu0 %v140
  %185 = vmatpush1.msra.mxu0 %v139
  %186 = vmatprep.subr.mxu0 %v143
  %187 = vmatpush1.msra.mxu0 %v142
  %188 = vmatprep.subr.mxu0 %v146
  %189 = vmatpush1.msra.mxu0 %v145
  %190 = vmatprep.subr.mxu0 %v149
  %191 = vmatpush1.msra.mxu0 %v148
  %192 = vmatprep.subr.mxu0 %v152
  %193 = vmatpush1.msra.mxu0 %v151
  %194 = vmatprep.subr.mxu0 %v155
  %195 = vmatpush1.msra.mxu0 %v154
  %196 = vmatprep.subr.mxu0 %v158
  %197 = vmatpush1.msra.mxu0 %v157
  %198 = vmatprep.subr.mxu0 %v161
  %199 = vmatpush1.msra.mxu0 %v160
  %200 = vmatprep.subr.mxu0 %v164
  %201 = vmatpush1.msra.mxu0 %v163
  %202 = vmatprep.subr.mxu0 %v167
  %203 = vmatpush1.msra.mxu0 %v166
  %204 = vmatprep.subr.mxu0 %v170
  %205 = vmatpush1.msra.mxu0 %v169
  %206 = vmatprep.subr.mxu0 %v173
  %207 = vmatpush1.msra.mxu0 %v172
  %208 = vmatprep.subr.mxu0 %v176
  %209 = vmatpush1.msra.mxu0 %v175
  %210 = vmatprep.subr.mxu0 0.0
  %211 = vmatpush1.msra.mxu0 0.0
  %212 = vmatprep.subr.mxu0 0.0
  %213 = vmatpush1.msra.mxu0 0.0
  %214 = vmatprep.subr.mxu0 0.0
  %215 = vmatpush1.msra.mxu0 0.0
  %216 = vmatprep.subr.mxu0 0.0
  %217 = vmatpush1.msra.mxu0 0.0
  %218 = vmatprep.subr.mxu0 0.0
  %219 = vmatpush1.msra.mxu0 0.0
  %220 = vmatprep.subr.mxu0 0.0
  %221 = vmatpush1.msra.mxu0 0.0
  %222 = vmatprep.subr.mxu0 0.0
  %223 = vmatpush1.msra.mxu0 0.0
  %224 = vmatprep.subr.mxu0 0.0
  %225 = vmatpush1.msra.mxu0 0.0
  %226 = vmatprep.subr.mxu0 0.0
  %227 = vmatpush1.msra.mxu0 0.0
  %228 = vmatprep.subr.mxu0 0.0
  %229 = vmatpush1.msra.mxu0 0.0
  %230 = vmatprep.subr.mxu0 0.0
  %231 = vmatpush1.msra.mxu0 0.0
  %232 = vmatprep.subr.mxu0 0.0
  %233 = vmatpush1.msra.mxu0 0.0
  %234 = vmatprep.subr.mxu0 0.0
  %235 = vmatpush1.msra.mxu0 0.0
  %236 = vmatprep.subr.mxu0 0.0
  %237 = vmatpush1.msra.mxu0 0.0
  %238 = vmatprep.subr.mxu0 0.0
  %239 = vmatpush1.msra.mxu0 0.0
  %240 = vmatprep.subr.mxu0 0.0
  %241 = vmatpush1.msra.mxu0 0.0
  %242 = vmatprep.mubr.f32.mxu0 0.0
  %243 = vmatmul.mubr.f32.gmra.mrb[0].mxu0 %v114
  %v244 = vpop.f32.mrb[0].mxu0
  %v245 = vadd.f32 0.0, %v244
  %v246 = vpop.f32.mrb[0].mxu0
  %v247 = vadd.f32 0.0, %v246
  %248 = vmatprep.mubr.f32.mxu0 0.0
  %249 = vmatmul.mubr.f32.gmra.mrb[0].mxu0 %v115
  %v250 = vpop.f32.mrb[0].mxu0
  %v251 = vadd.f32 0.0, %v250
  %v252 = vpop.f32.mrb[0].mxu0
  %v253 = vadd.f32 0.0, %v252
  %254 = vmatprep.mubr.f32.mxu0 0.0
  %255 = vmatmul.mubr.f32.gmra.mrb[0].mxu0 %v116
  %v256 = vpop.f32.mrb[0].mxu0
  %v257 = vadd.f32 0.0, %v256
  %v258 = vpop.f32.mrb[0].mxu0
  %v259 = vadd.f32 0.0, %v258
  %260 = vmatprep.mubr.f32.mxu0 0.0
  %261 = vmatmul.mubr.f32.gmra.mrb[0].mxu0 %v117
  %v262 = vpop.f32.mrb[0].mxu0
  %v263 = vadd.f32 0.0, %v262
  %v264 = vpop.f32.mrb[0].mxu0
  %v265 = vadd.f32 0.0, %v264
  %266 = vmatprep.mubr.f32.mxu0 0.0
  %267 = vmatmul.mubr.f32.gmra.mrb[0].mxu0 %v118
  %v268 = vpop.f32.mrb[0].mxu0
  %v269 = vadd.f32 0.0, %v268
  %v270 = vpop.f32.mrb[0].mxu0
  %v271 = vadd.f32 0.0, %v270
  %272 = vmatprep.mubr.f32.mxu0 0.0
  %273 = vmatmul.mubr.f32.gmra.mrb[0].mxu0 %v119
  %v274 = vpop.f32.mrb[0].mxu0
  %v275 = vadd.f32 0.0, %v274
  %v276 = vpop.f32.mrb[0].mxu0
  %v277 = vadd.f32 0.0, %v276
  %278 = vmatprep.mubr.f32.mxu0 0.0
  %279 = vmatmul.mubr.f32.gmra.mrb[0].mxu0 %v120
  %v280 = vpop.f32.mrb[0].mxu0
  %v281 = vadd.f32 0.0, %v280
  %v282 = vpop.f32.mrb[0].mxu0
  %v283 = vadd.f32 0.0, %v282
  %284 = vmatprep.mubr.f32.mxu0 0.0
  %285 = vmatmul.mubr.f32.gmra.mrb[0].mxu0 %v121
  %v286 = vpop.f32.mrb[0].mxu0
  %v287 = vadd.f32 0.0, %v286
  %v288 = vpop.f32.mrb[0].mxu0
  %v289 = vadd.f32 0.0, %v288
  %290 = vmatprep.mubr.f32.mxu0 0.0
  %291 = vmatmul.mubr.f32.gmra.mrb[0].mxu0 %v122
  %v292 = vpop.f32.mrb[0].mxu0
  %v293 = vadd.f32 0.0, %v292
  %v294 = vpop.f32.mrb[0].mxu0
  %v295 = vadd.f32 0.0, %v294
  %296 = vmatprep.mubr.f32.mxu0 0.0
  %297 = vmatmul.mubr.f32.gmra.mrb[0].mxu0 %v123
  %v298 = vpop.f32.mrb[0].mxu0
  %v299 = vadd.f32 0.0, %v298
  %v300 = vpop.f32.mrb[0].mxu0
  %v301 = vadd.f32 0.0, %v300
  %302 = vmatprep.mubr.f32.mxu0 0.0
  %303 = vmatmul.mubr.f32.gmra.mrb[0].mxu0 %v124
  %v304 = vpop.f32.mrb[0].mxu0
  %v305 = vadd.f32 0.0, %v304
  %v306 = vpop.f32.mrb[0].mxu0
  %v307 = vadd.f32 0.0, %v306
  %308 = vmatprep.mubr.f32.mxu0 0.0
  %309 = vmatmul.mubr.f32.gmra.mrb[0].mxu0 %v125
  %v310 = vpop.f32.mrb[0].mxu0
  %v311 = vadd.f32 0.0, %v310
  %v312 = vpop.f32.mrb[0].mxu0
  %v313 = vadd.f32 0.0, %v312
  %314 = vmatprep.mubr.f32.mxu0 0.0
  %315 = vmatmul.mubr.f32.gmra.mrb[0].mxu0 %v126
  %v316 = vpop.f32.mrb[0].mxu0
  %v317 = vadd.f32 0.0, %v316
  %v318 = vpop.f32.mrb[0].mxu0
  %v319 = vadd.f32 0.0, %v318
  %320 = vmatprep.mubr.f32.mxu0 0.0
  %321 = vmatmul.mubr.f32.gmra.mrb[0].mxu0 %v127
  %v322 = vpop.f32.mrb[0].mxu0
  %v323 = vadd.f32 0.0, %v322
  %v324 = vpop.f32.mrb[0].mxu0
  %v325 = vadd.f32 0.0, %v324
  %326 = vmatprep.mubr.f32.mxu0 0.0
  %327 = vmatmul.mubr.f32.gmra.mrb[0].mxu0 %v128
  %v328 = vpop.f32.mrb[0].mxu0
  %v329 = vadd.f32 0.0, %v328
  %v330 = vpop.f32.mrb[0].mxu0
  %v331 = vadd.f32 0.0, %v330
  %332 = vmatprep.mubr.f32.mxu0 0.0
  %333 = vmatmul.mubr.f32.gmra.mrb[0].mxu0 %v129
  %v334 = vpop.f32.mrb[0].mxu0
  %v335 = vadd.f32 0.0, %v334
  %v336 = vpop.f32.mrb[0].mxu0
  %v337 = vadd.f32 0.0, %v336
  %338 = vdwg.mxu0
  %339 = vmatprep.subr.mxu0 0.0
  %340 = vmatpush1.msra.mxu0 %v132
  %341 = vmatprep.subr.mxu0 0.0
  %342 = vmatpush1.msra.mxu0 %v135
  %343 = vmatprep.subr.mxu0 0.0
  %344 = vmatpush1.msra.mxu0 %v138
  %345 = vmatprep.subr.mxu0 0.0
  %346 = vmatpush1.msra.mxu0 %v141
  %347 = vmatprep.subr.mxu0 0.0
  %348 = vmatpush1.msra.mxu0 %v144
  %349 = vmatprep.subr.mxu0 0.0
  %350 = vmatpush1.msra.mxu0 %v147
  %351 = vmatprep.subr.mxu0 0.0
  %352 = vmatpush1.msra.mxu0 %v150
  %353 = vmatprep.subr.mxu0 0.0
  %354 = vmatpush1.msra.mxu0 %v153
  %355 = vmatprep.subr.mxu0 0.0
  %356 = vmatpush1.msra.mxu0 %v156
  %357 = vmatprep.subr.mxu0 0.0
  %358 = vmatpush1.msra.mxu0 %v159
  %359 = vmatprep.subr.mxu0 0.0
  %360 = vmatpush1.msra.mxu0 %v162
  %361 = vmatprep.subr.mxu0 0.0
  %362 = vmatpush1.msra.mxu0 %v165
  %363 = vmatprep.subr.mxu0 0.0
  %364 = vmatpush1.msra.mxu0 %v168
  %365 = vmatprep.subr.mxu0 0.0
  %366 = vmatpush1.msra.mxu0 %v171
  %367 = vmatprep.subr.mxu0 0.0
  %368 = vmatpush1.msra.mxu0 %v174
  %369 = vmatprep.subr.mxu0 0.0
  %370 = vmatpush1.msra.mxu0 %v177
  %371 = vmatprep.subr.mxu0 0.0
  %372 = vmatpush1.msra.mxu0 0.0
  %373 = vmatprep.subr.mxu0 0.0
  %374 = vmatpush1.msra.mxu0 0.0
  %375 = vmatprep.subr.mxu0 0.0
  %376 = vmatpush1.msra.mxu0 0.0
  %377 = vmatprep.subr.mxu0 0.0
  %378 = vmatpush1.msra.mxu0 0.0
  %379 = vmatprep.subr.mxu0 0.0
  %380 = vmatpush1.msra.mxu0 0.0
  %381 = vmatprep.subr.mxu0 0.0
  %382 = vmatpush1.msra.mxu0 0.0
  %383 = vmatprep.subr.mxu0 0.0
  %384 = vmatpush1.msra.mxu0 0.0
  %385 = vmatprep.subr.mxu0 0.0
  %386 = vmatpush1.msra.mxu0 0.0
  %387 = vmatprep.subr.mxu0 0.0
  %388 = vmatpush1.msra.mxu0 0.0
  %389 = vmatprep.subr.mxu0 0.0
  %390 = vmatpush1.msra.mxu0 0.0
  %391 = vmatprep.subr.mxu0 0.0
  %392 = vmatpush1.msra.mxu0 0.0
  %393 = vmatprep.subr.mxu0 0.0
  %394 = vmatpush1.msra.mxu0 0.0
  %395 = vmatprep.subr.mxu0 0.0
  %396 = vmatpush1.msra.mxu0 0.0
  %397 = vmatprep.subr.mxu0 0.0
  %398 = vmatpush1.msra.mxu0 0.0
  %399 = vmatprep.subr.mxu0 0.0
  %400 = vmatpush1.msra.mxu0 0.0
  %401 = vmatprep.subr.mxu0 0.0
  %402 = vmatpush1.msra.mxu0 0.0
  %403 = vmatprep.mubr.f32.mxu0 0.0
  %404 = vmatmul.mubr.f32.gmra.mrb[0].mxu0 %v114
  %v405 = vpop.f32.mrb[0].mxu0
  %v406 = vadd.f32 0.0, %v405
  %v407 = vpop.f32.mrb[0].mxu0
  %408 = vmatprep.mubr.f32.mxu0 0.0
  %409 = vmatmul.mubr.f32.gmra.mrb[0].mxu0 %v115
  %v410 = vpop.f32.mrb[0].mxu0
  %v411 = vadd.f32 0.0, %v410
  %v412 = vpop.f32.mrb[0].mxu0
  %413 = vmatprep.mubr.f32.mxu0 0.0
  %414 = vmatmul.mubr.f32.gmra.mrb[0].mxu0 %v116
  %v415 = vpop.f32.mrb[0].mxu0
  %v416 = vadd.f32 0.0, %v415
  %v417 = vpop.f32.mrb[0].mxu0
  %418 = vmatprep.mubr.f32.mxu0 0.0
  %419 = vmatmul.mubr.f32.gmra.mrb[0].mxu0 %v117
  %v420 = vpop.f32.mrb[0].mxu0
  %v421 = vadd.f32 0.0, %v420
  %v422 = vpop.f32.mrb[0].mxu0
  %423 = vmatprep.mubr.f32.mxu0 0.0
  %424 = vmatmul.mubr.f32.gmra.mrb[0].mxu0 %v118
  %v425 = vpop.f32.mrb[0].mxu0
  %v426 = vadd.f32 0.0, %v425
  %v427 = vpop.f32.mrb[0].mxu0
  %428 = vmatprep.mubr.f32.mxu0 0.0
  %429 = vmatmul.mubr.f32.gmra.mrb[0].mxu0 %v119
  %v430 = vpop.f32.mrb[0].mxu0
  %v431 = vadd.f32 0.0, %v430
  %v432 = vpop.f32.mrb[0].mxu0
  %433 = vmatprep.mubr.f32.mxu0 0.0
  %434 = vmatmul.mubr.f32.gmra.mrb[0].mxu0 %v120
  %v435 = vpop.f32.mrb[0].mxu0
  %v436 = vadd.f32 0.0, %v435
  %v437 = vpop.f32.mrb[0].mxu0
  %438 = vmatprep.mubr.f32.mxu0 0.0
  %439 = vmatmul.mubr.f32.gmra.mrb[0].mxu0 %v121
  %v440 = vpop.f32.mrb[0].mxu0
  %v441 = vadd.f32 0.0, %v440
  %v442 = vpop.f32.mrb[0].mxu0
  %443 = vmatprep.mubr.f32.mxu0 0.0
  %444 = vmatmul.mubr.f32.gmra.mrb[0].mxu0 %v122
  %v445 = vpop.f32.mrb[0].mxu0
  %v446 = vadd.f32 0.0, %v445
  %v447 = vpop.f32.mrb[0].mxu0
  %448 = vmatprep.mubr.f32.mxu0 0.0
  %449 = vmatmul.mubr.f32.gmra.mrb[0].mxu0 %v123
  %v450 = vpop.f32.mrb[0].mxu0
  %v451 = vadd.f32 0.0, %v450
  %v452 = vpop.f32.mrb[0].mxu0
  %453 = vmatprep.mubr.f32.mxu0 0.0
  %454 = vmatmul.mubr.f32.gmra.mrb[0].mxu0 %v124
  %v455 = vpop.f32.mrb[0].mxu0
  %v456 = vadd.f32 0.0, %v455
  %v457 = vpop.f32.mrb[0].mxu0
  %458 = vmatprep.mubr.f32.mxu0 0.0
  %459 = vmatmul.mubr.f32.gmra.mrb[0].mxu0 %v125
  %v460 = vpop.f32.mrb[0].mxu0
  %v461 = vadd.f32 0.0, %v460
  %v462 = vpop.f32.mrb[0].mxu0
  %463 = vmatprep.mubr.f32.mxu0 0.0
  %464 = vmatmul.mubr.f32.gmra.mrb[0].mxu0 %v126
  %v465 = vpop.f32.mrb[0].mxu0
  %v466 = vadd.f32 0.0, %v465
  %v467 = vpop.f32.mrb[0].mxu0
  %468 = vmatprep.mubr.f32.mxu0 0.0
  %469 = vmatmul.mubr.f32.gmra.mrb[0].mxu0 %v127
  %v470 = vpop.f32.mrb[0].mxu0
  %v471 = vadd.f32 0.0, %v470
  %v472 = vpop.f32.mrb[0].mxu0
  %473 = vmatprep.mubr.f32.mxu0 0.0
  %474 = vmatmul.mubr.f32.gmra.mrb[0].mxu0 %v128
  %v475 = vpop.f32.mrb[0].mxu0
  %v476 = vadd.f32 0.0, %v475
  %v477 = vpop.f32.mrb[0].mxu0
  %478 = vmatprep.mubr.f32.mxu0 0.0
  %479 = vmatmul.mubr.f32.gmra.mrb[0].mxu0 %v129
  %v480 = vpop.f32.mrb[0].mxu0
  %v481 = vadd.f32 0.0, %v480
  %v482 = vpop.f32.mrb[0].mxu0
  %483 = vdwg.mxu0
  %v484 = vadd.f32 %v66, %v245
  %v485 = vadd.f32 %v67, %v247
  %v486 = vadd.f32 %v68, %v406
  %v487 = vadd.f32 %v69, %v251
  %v488 = vadd.f32 %v70, %v253
  %v489 = vadd.f32 %v71, %v411
  %v490 = vadd.f32 %v72, %v257
  %v491 = vadd.f32 %v73, %v259
  %v492 = vadd.f32 %v74, %v416
  %v493 = vadd.f32 %v75, %v263
  %v494 = vadd.f32 %v76, %v265
  %v495 = vadd.f32 %v77, %v421
  %v496 = vadd.f32 %v78, %v269
  %v497 = vadd.f32 %v79, %v271
  %v498 = vadd.f32 %v80, %v426
  %v499 = vadd.f32 %v81, %v275
  %v500 = vadd.f32 %v82, %v277
  %v501 = vadd.f32 %v83, %v431
  %v502 = vadd.f32 %v84, %v281
  %v503 = vadd.f32 %v85, %v283
  %v504 = vadd.f32 %v86, %v436
  %v505 = vadd.f32 %v87, %v287
  %v506 = vadd.f32 %v88, %v289
  %v507 = vadd.f32 %v89, %v441
  %v508 = vadd.f32 %v90, %v293
  %v509 = vadd.f32 %v91, %v295
  %v510 = vadd.f32 %v92, %v446
  %v511 = vadd.f32 %v93, %v299
  %v512 = vadd.f32 %v94, %v301
  %v513 = vadd.f32 %v95, %v451
  %v514 = vadd.f32 %v96, %v305
  %v515 = vadd.f32 %v97, %v307
  %v516 = vadd.f32 %v98, %v456
  %v517 = vadd.f32 %v99, %v311
  %v518 = vadd.f32 %v100, %v313
  %v519 = vadd.f32 %v101, %v461
  %v520 = vadd.f32 %v102, %v317
  %v521 = vadd.f32 %v103, %v319
  %v522 = vadd.f32 %v104, %v466
  %v523 = vadd.f32 %v105, %v323
  %v524 = vadd.f32 %v106, %v325
  %v525 = vadd.f32 %v107, %v471
  %v526 = vadd.f32 %v108, %v329
  %v527 = vadd.f32 %v109, %v331
  %v528 = vadd.f32 %v110, %v476
  %v529 = vadd.f32 %v111, %v335
  %v530 = vadd.f32 %v112, %v337
  %v531 = vadd.f32 %v113, %v481
  %532 = vst [vmem:[#allocation2] sm:$0xff] %v484
  %533 = vst [vmem:[#allocation2 + $0x8] sm:$0xff] %v485
  %534 = vst [vmem:[#allocation2 + $0x10] sm:$0xff] %v486
  %535 = vst [vmem:[#allocation2 + $0x18] sm:$0xff] %v487
  %536 = vst [vmem:[#allocation2 + $0x20] sm:$0xff] %v488
  %537 = vst [vmem:[#allocation2 + $0x28] sm:$0xff] %v489
  %538 = vst [vmem:[#allocation2 + $0x30] sm:$0xff] %v490
  %539 = vst [vmem:[#allocation2 + $0x38] sm:$0xff] %v491
  %540 = vst [vmem:[#allocation2 + $0x40] sm:$0xff] %v492
  %541 = vst [vmem:[#allocation2 + $0x48] sm:$0xff] %v493
  %542 = vst [vmem:[#allocation2 + $0x50] sm:$0xff] %v494
  %543 = vst [vmem:[#allocation2 + $0x58] sm:$0xff] %v495
  %544 = vst [vmem:[#allocation2 + $0x60] sm:$0xff] %v496
  %545 = vst [vmem:[#allocation2 + $0x68] sm:$0xff] %v497
  %546 = vst [vmem:[#allocation2 + $0x70] sm:$0xff] %v498
  %547 = vst [vmem:[#allocation2 + $0x78] sm:$0xff] %v499
  %548 = vst [vmem:[#allocation2 + $0x80] sm:$0xff] %v500
  %549 = vst [vmem:[#allocation2 + $0x88] sm:$0xff] %v501
  %550 = vst [vmem:[#allocation2 + $0x90] sm:$0xff] %v502
  %551 = vst [vmem:[#allocation2 + $0x98] sm:$0xff] %v503
  %552 = vst [vmem:[#allocation2 + $0xa0] sm:$0xff] %v504
  %553 = vst [vmem:[#allocation2 + $0xa8] sm:$0xff] %v505
  %554 = vst [vmem:[#allocation2 + $0xb0] sm:$0xff] %v506
  %555 = vst [vmem:[#allocation2 + $0xb8] sm:$0xff] %v507
  %556 = vst [vmem:[#allocation2 + $0xc0] sm:$0xff] %v508
  %557 = vst [vmem:[#allocation2 + $0xc8] sm:$0xff] %v509
  %558 = vst [vmem:[#allocation2 + $0xd0] sm:$0xff] %v510
  %559 = vst [vmem:[#allocation2 + $0xd8] sm:$0xff] %v511
  %560 = vst [vmem:[#allocation2 + $0xe0] sm:$0xff] %v512
  %561 = vst [vmem:[#allocation2 + $0xe8] sm:$0xff] %v513
  %562 = vst [vmem:[#allocation2 + $0xf0] sm:$0xff] %v514
  %563 = vst [vmem:[#allocation2 + $0xf8] sm:$0xff] %v515
  %564 = vst [vmem:[#allocation2 + $0x100] sm:$0xff] %v516
  %565 = vst [vmem:[#allocation2 + $0x108] sm:$0xff] %v517
  %566 = vst [vmem:[#allocation2 + $0x110] sm:$0xff] %v518
  %567 = vst [vmem:[#allocation2 + $0x118] sm:$0xff] %v519
  %568 = vst [vmem:[#allocation2 + $0x120] sm:$0xff] %v520
  %569 = vst [vmem:[#allocation2 + $0x128] sm:$0xff] %v521
  %570 = vst [vmem:[#allocation2 + $0x130] sm:$0xff] %v522
  %571 = vst [vmem:[#allocation2 + $0x138] sm:$0xff] %v523
  %572 = vst [vmem:[#allocation2 + $0x140] sm:$0xff] %v524
  %573 = vst [vmem:[#allocation2 + $0x148] sm:$0xff] %v525
  %574 = vst [vmem:[#allocation2 + $0x150] sm:$0xff] %v526
  %575 = vst [vmem:[#allocation2 + $0x158] sm:$0xff] %v527
  %576 = vst [vmem:[#allocation2 + $0x160] sm:$0xff] %v528
  %577 = vst [vmem:[#allocation2 + $0x168] sm:$0xff] %v529
  %578 = vst [vmem:[#allocation2 + $0x170] sm:$0xff] %v530
  %579 = vst [vmem:[#allocation2 + $0x178] sm:$0xff] %v531
  // Predicated region
  $region18: #{_lambda_.53} parent=0 // pred_check
    %p580 = pneg %p14
  $region19: #{_lambda_.53} parent=0 // pred_check_branch
    %582 = sbr.rel (%p580) target = $region21
  $region20: #{_lambda_.53} parent=0 // pred_region
    %v583 = vld [vmem:[#allocation2] sm:$0xff]
    %v584 = vld [vmem:[#allocation2 + $0x8] sm:$0xff]
    %v585 = vld [vmem:[#allocation2 + $0x10] sm:$0xff]
    %v586 = vld [vmem:[#allocation2 + $0x18] sm:$0xff]
    %v587 = vld [vmem:[#allocation2 + $0x20] sm:$0xff]
    %v588 = vld [vmem:[#allocation2 + $0x28] sm:$0xff]
    %v589 = vld [vmem:[#allocation2 + $0x30] sm:$0xff]
    %v590 = vld [vmem:[#allocation2 + $0x38] sm:$0xff]
    %v591 = vld [vmem:[#allocation2 + $0x40] sm:$0xff]
    %v592 = vld [vmem:[#allocation2 + $0x48] sm:$0xff]
    %v593 = vld [vmem:[#allocation2 + $0x50] sm:$0xff]
    %v594 = vld [vmem:[#allocation2 + $0x58] sm:$0xff]
    %v595 = vld [vmem:[#allocation2 + $0x60] sm:$0xff]
    %v596 = vld [vmem:[#allocation2 + $0x68] sm:$0xff]
    %v597 = vld [vmem:[#allocation2 + $0x70] sm:$0xff]
    %v598 = vld [vmem:[#allocation2 + $0x78] sm:$0xff]
    %v599 = vld [vmem:[#allocation2 + $0x80] sm:$0xff]
    %v600 = vld [vmem:[#allocation2 + $0x88] sm:$0xff]
    %v601 = vld [vmem:[#allocation2 + $0x90] sm:$0xff]
    %v602 = vld [vmem:[#allocation2 + $0x98] sm:$0xff]
    %v603 = vld [vmem:[#allocation2 + $0xa0] sm:$0xff]
    %v604 = vld [vmem:[#allocation2 + $0xa8] sm:$0xff]
    %v605 = vld [vmem:[#allocation2 + $0xb0] sm:$0xff]
    %v606 = vld [vmem:[#allocation2 + $0xb8] sm:$0xff]
    %v607 = vld [vmem:[#allocation2 + $0xc0] sm:$0xff]
    %v608 = vld [vmem:[#allocation2 + $0xc8] sm:$0xff]
    %v609 = vld [vmem:[#allocation2 + $0xd0] sm:$0xff]
    %v610 = vld [vmem:[#allocation2 + $0xd8] sm:$0xff]
    %v611 = vld [vmem:[#allocation2 + $0xe0] sm:$0xff]
    %v612 = vld [vmem:[#allocation2 + $0xe8] sm:$0xff]
    %v613 = vld [vmem:[#allocation2 + $0xf0] sm:$0xff]
    %v614 = vld [vmem:[#allocation2 + $0xf8] sm:$0xff]
    %v615 = vld [vmem:[#allocation2 + $0x100] sm:$0xff]
    %v616 = vld [vmem:[#allocation2 + $0x108] sm:$0xff]
    %v617 = vld [vmem:[#allocation2 + $0x110] sm:$0xff]
    %v618 = vld [vmem:[#allocation2 + $0x118] sm:$0xff]
    %v619 = vld [vmem:[#allocation2 + $0x120] sm:$0xff]
    %v620 = vld [vmem:[#allocation2 + $0x128] sm:$0xff]
    %v621 = vld [vmem:[#allocation2 + $0x130] sm:$0xff]
    %v622 = vld [vmem:[#allocation2 + $0x138] sm:$0xff]
    %v623 = vld [vmem:[#allocation2 + $0x140] sm:$0xff]
    %v624 = vld [vmem:[#allocation2 + $0x148] sm:$0xff]
    %v625 = vld [vmem:[#allocation2 + $0x150] sm:$0xff]
    %v626 = vld [vmem:[#allocation2 + $0x158] sm:$0xff]
    %v627 = vld [vmem:[#allocation2 + $0x160] sm:$0xff]
    %v628 = vld [vmem:[#allocation2 + $0x168] sm:$0xff]
    %v629 = vld [vmem:[#allocation2 + $0x170] sm:$0xff]
    %v630 = vld [vmem:[#allocation2 + $0x178] sm:$0xff]
    %v631 = vld [vmem:[%s2] sm:$0x7]
    %v633 = vlaneseq
    %v634 = vshrl.u32 %v633, 7
    %v635 = vsub.s32 0, %v634
    %v636 = vrot.slane %v631, %v635
    %v637 = vlaneseq
    %v638 = vshrl.u32 %v637, 7
    %v639 = vsub.s32 1, %v638
    %v640 = vrot.slane %v631, %v639
    %v641 = vlaneseq
    %v642 = vshrl.u32 %v641, 7
    %v643 = vsub.s32 2, %v642
    %v644 = vrot.slane %v631, %v643
    %v648 = vadd.f32 %v583, %v636
    %v649 = vadd.f32 %v584, %v640
    %v650 = vadd.f32 %v585, %v644
    %v651 = vadd.f32 %v586, %v636
    %v652 = vadd.f32 %v587, %v640
    %v653 = vadd.f32 %v588, %v644
    %v654 = vadd.f32 %v589, %v636
    %v655 = vadd.f32 %v590, %v640
    %v656 = vadd.f32 %v591, %v644
    %v657 = vadd.f32 %v592, %v636
    %v658 = vadd.f32 %v593, %v640
    %v659 = vadd.f32 %v594, %v644
    %v660 = vadd.f32 %v595, %v636
    %v661 = vadd.f32 %v596, %v640
    %v662 = vadd.f32 %v597, %v644
    %v663 = vadd.f32 %v598, %v636
    %v664 = vadd.f32 %v599, %v640
    %v665 = vadd.f32 %v600, %v644
    %v666 = vadd.f32 %v601, %v636
    %v667 = vadd.f32 %v602, %v640
    %v668 = vadd.f32 %v603, %v644
    %v669 = vadd.f32 %v604, %v636
    %v670 = vadd.f32 %v605, %v640
    %v671 = vadd.f32 %v606, %v644
    %v672 = vadd.f32 %v607, %v636
    %v673 = vadd.f32 %v608, %v640
    %v674 = vadd.f32 %v609, %v644
    %v675 = vadd.f32 %v610, %v636
    %v676 = vadd.f32 %v611, %v640
    %v677 = vadd.f32 %v612, %v644
    %v678 = vadd.f32 %v613, %v636
    %v679 = vadd.f32 %v614, %v640
    %v680 = vadd.f32 %v615, %v644
    %v681 = vadd.f32 %v616, %v636
    %v682 = vadd.f32 %v617, %v640
    %v683 = vadd.f32 %v618, %v644
    %v684 = vadd.f32 %v619, %v636
    %v685 = vadd.f32 %v620, %v640
    %v686 = vadd.f32 %v621, %v644
    %v687 = vadd.f32 %v622, %v636
    %v688 = vadd.f32 %v623, %v640
    %v689 = vadd.f32 %v624, %v644
    %v690 = vadd.f32 %v625, %v636
    %v691 = vadd.f32 %v626, %v640
    %v692 = vadd.f32 %v627, %v644
    %v693 = vadd.f32 %v628, %v636
    %v694 = vadd.f32 %v629, %v640
    %v695 = vadd.f32 %v630, %v644
    %696 = vst [vmem:[%s3] sm:$0xff] %v648
    %697 = vst [vmem:[%s3 + $0x8] sm:$0xff] %v649
    %698 = vst [vmem:[%s3 + $0x10] sm:$0xff] %v650
    %699 = vst [vmem:[%s3 + $0x18] sm:$0xff] %v651
    %700 = vst [vmem:[%s3 + $0x20] sm:$0xff] %v652
    %701 = vst [vmem:[%s3 + $0x28] sm:$0xff] %v653
    %702 = vst [vmem:[%s3 + $0x30] sm:$0xff] %v654
    %703 = vst [vmem:[%s3 + $0x38] sm:$0xff] %v655
    %704 = vst [vmem:[%s3 + $0x40] sm:$0xff] %v656
    %705 = vst [vmem:[%s3 + $0x48] sm:$0xff] %v657
    %706 = vst [vmem:[%s3 + $0x50] sm:$0xff] %v658
    %707 = vst [vmem:[%s3 + $0x58] sm:$0xff] %v659
    %708 = vst [vmem:[%s3 + $0x60] sm:$0xff] %v660
    %709 = vst [vmem:[%s3 + $0x68] sm:$0xff] %v661
    %710 = vst [vmem:[%s3 + $0x70] sm:$0xff] %v662
    %711 = vst [vmem:[%s3 + $0x78] sm:$0xff] %v663
    %712 = vst [vmem:[%s3 + $0x80] sm:$0xff] %v664
    %713 = vst [vmem:[%s3 + $0x88] sm:$0xff] %v665
    %714 = vst [vmem:[%s3 + $0x90] sm:$0xff] %v666
    %715 = vst [vmem:[%s3 + $0x98] sm:$0xff] %v667
    %716 = vst [vmem:[%s3 + $0xa0] sm:$0xff] %v668
    %717 = vst [vmem:[%s3 + $0xa8] sm:$0xff] %v669
    %718 = vst [vmem:[%s3 + $0xb0] sm:$0xff] %v670
    %719 = vst [vmem:[%s3 + $0xb8] sm:$0xff] %v671
    %720 = vst [vmem:[%s3 + $0xc0] sm:$0xff] %v672
    %721 = vst [vmem:[%s3 + $0xc8] sm:$0xff] %v673
    %722 = vst [vmem:[%s3 + $0xd0] sm:$0xff] %v674
    %723 = vst [vmem:[%s3 + $0xd8] sm:$0xff] %v675
    %724 = vst [vmem:[%s3 + $0xe0] sm:$0xff] %v676
    %725 = vst [vmem:[%s3 + $0xe8] sm:$0xff] %v677
    %726 = vst [vmem:[%s3 + $0xf0] sm:$0xff] %v678
    %727 = vst [vmem:[%s3 + $0xf8] sm:$0xff] %v679
    %728 = vst [vmem:[%s3 + $0x100] sm:$0xff] %v680
    %729 = vst [vmem:[%s3 + $0x108] sm:$0xff] %v681
    %730 = vst [vmem:[%s3 + $0x110] sm:$0xff] %v682
    %731 = vst [vmem:[%s3 + $0x118] sm:$0xff] %v683
    %732 = vst [vmem:[%s3 + $0x120] sm:$0xff] %v684
    %733 = vst [vmem:[%s3 + $0x128] sm:$0xff] %v685
    %734 = vst [vmem:[%s3 + $0x130] sm:$0xff] %v686
    %735 = vst [vmem:[%s3 + $0x138] sm:$0xff] %v687
    %736 = vst [vmem:[%s3 + $0x140] sm:$0xff] %v688
    %737 = vst [vmem:[%s3 + $0x148] sm:$0xff] %v689
    %738 = vst [vmem:[%s3 + $0x150] sm:$0xff] %v690
    %739 = vst [vmem:[%s3 + $0x158] sm:$0xff] %v691
    %740 = vst [vmem:[%s3 + $0x160] sm:$0xff] %v692
    %741 = vst [vmem:[%s3 + $0x168] sm:$0xff] %v693
    %742 = vst [vmem:[%s3 + $0x170] sm:$0xff] %v694
    %743 = vst [vmem:[%s3 + $0x178] sm:$0xff] %v695
  $region21: #{_lambda_.53} parent=0 // pred_fallthru
    _
  // Predicated region
  $region22: #{_lambda_.53} parent=0 // pred_check
    _
  $region23: #{_lambda_.53} parent=0 // pred_check_branch
    %745 = sbr.rel (0) target = $region25
  $region24: #{_lambda_.53} parent=0 // pred_region
    _
  $region25: #{_lambda_.53} parent=0 // pred_fallthru
    _
  // Predicated region
  $region26: #{_lambda_.53} parent=0 // pred_check
    _
  $region27: #{_lambda_.53} parent=0 // pred_check_branch
    %747 = sbr.rel (0) target = $region29
  $region28: #{_lambda_.53} parent=0 // pred_region
    _
  $region29: #{_lambda_.53} parent=0 // pred_fallthru
    _

// kernel: _lambda_.60
$region0: #{_lambda_.60}
  #allocation0 [shape = 'u32[]', space=smem, size = 0x4, offset = 0x4, fixed_abs, tag = 'smem constant byte address 0x4 - core index']
  #allocation1 [shape = 'u32[144,128]{1,0:T(1,128)}', space=vmem, size = 0x12000, scoped, tag = 'internal scratch']
  %s0 = inlined_call_operand.vmem [shape: f32[128,128], index: 0, kind: input, shape index: {}]
  %s1 = inlined_call_operand.vmem [shape: f32[1,128], index: 1, kind: input, shape index: {}]
  %s2 = inlined_call_operand.vmem [shape: f32[1,128], index: 2, kind: input, shape index: {}]
  %s3 = inlined_call_operand.vmem [shape: f32[128,128], index: 3, kind: output, shape index: {}]
  %s4 = sld [smem:[#allocation0]]
  $region22: #{_lambda_.60} parent=0
    _
  %s6 = ssub.s32 1, %s4
  %s7 = scalar_select 0, %s6, %s4
  // Predicated region
  $region2: #{_lambda_.60} parent=0 // pred_check
    _
  $region3: #{_lambda_.60} parent=0 // pred_check_branch
    %9 = sbr.rel (0) target = $region5
  $region4: #{_lambda_.60} parent=0 // pred_region
    _
  $region5: #{_lambda_.60} parent=0 // pred_fallthru
    _
  // Predicated region
  $region6: #{_lambda_.60} parent=0 // pred_check
    _
  $region7: #{_lambda_.60} parent=0 // pred_check_branch
    %11 = sbr.rel (0) target = $region9
  $region8: #{_lambda_.60} parent=0 // pred_region
    _
  $region9: #{_lambda_.60} parent=0 // pred_fallthru
    _
  // Predicated region
  $region10: #{_lambda_.60} parent=0 // pred_check
    _
  $region11: #{_lambda_.60} parent=0 // pred_check_branch
    %13 = sbr.rel (0) target = $region13
  $region12: #{_lambda_.60} parent=0 // pred_region
    _
  $region13: #{_lambda_.60} parent=0 // pred_fallthru
    _
  %v14 = vld [vmem:[%s0] sm:$0xff]
  %v15 = vld [vmem:[%s0 + $0x8] sm:$0xff]
  %v16 = vld [vmem:[%s0 + $0x10] sm:$0xff]
  %v17 = vld [vmem:[%s0 + $0x18] sm:$0xff]
  %v18 = vld [vmem:[%s0 + $0x20] sm:$0xff]
  %v19 = vld [vmem:[%s0 + $0x28] sm:$0xff]
  %v20 = vld [vmem:[%s0 + $0x30] sm:$0xff]
  %v21 = vld [vmem:[%s0 + $0x38] sm:$0xff]
  %v22 = vld [vmem:[%s0 + $0x40] sm:$0xff]
  %v23 = vld [vmem:[%s0 + $0x48] sm:$0xff]
  %v24 = vld [vmem:[%s0 + $0x50] sm:$0xff]
  %v25 = vld [vmem:[%s0 + $0x58] sm:$0xff]
  %v26 = vld [vmem:[%s0 + $0x60] sm:$0xff]
  %v27 = vld [vmem:[%s0 + $0x68] sm:$0xff]
  %v28 = vld [vmem:[%s0 + $0x70] sm:$0xff]
  %v29 = vld [vmem:[%s0 + $0x78] sm:$0xff]
  %30 = vadd.xlane.f32.xlu0 %v14
  %v31 = vpop.xlane.xlu0 %30
  %32 = vadd.xlane.f32.xlu0 %v15
  %v33 = vpop.xlane.xlu0 %32
  %34 = vadd.xlane.f32.xlu0 %v16
  %v35 = vpop.xlane.xlu0 %34
  %36 = vadd.xlane.f32.xlu0 %v17
  %v37 = vpop.xlane.xlu0 %36
  %38 = vadd.xlane.f32.xlu0 %v18
  %v39 = vpop.xlane.xlu0 %38
  %40 = vadd.xlane.f32.xlu0 %v19
  %v41 = vpop.xlane.xlu0 %40
  %42 = vadd.xlane.f32.xlu0 %v20
  %v43 = vpop.xlane.xlu0 %42
  %44 = vadd.xlane.f32.xlu0 %v21
  %v45 = vpop.xlane.xlu0 %44
  %46 = vadd.xlane.f32.xlu0 %v22
  %v47 = vpop.xlane.xlu0 %46
  %48 = vadd.xlane.f32.xlu0 %v23
  %v49 = vpop.xlane.xlu0 %48
  %50 = vadd.xlane.f32.xlu0 %v24
  %v51 = vpop.xlane.xlu0 %50
  %52 = vadd.xlane.f32.xlu0 %v25
  %v53 = vpop.xlane.xlu0 %52
  %54 = vadd.xlane.f32.xlu0 %v26
  %v55 = vpop.xlane.xlu0 %54
  %56 = vadd.xlane.f32.xlu0 %v27
  %v57 = vpop.xlane.xlu0 %56
  %58 = vadd.xlane.f32.xlu0 %v28
  %v59 = vpop.xlane.xlu0 %58
  %60 = vadd.xlane.f32.xlu0 %v29
  %v61 = vpop.xlane.xlu0 %60
  %v62 = vrcp.pop 128.0
  %v63 = vmul.f32 %v31, %v62
  %v64 = vmul.f32 %v33, %v62
  %v65 = vmul.f32 %v35, %v62
  %v66 = vmul.f32 %v37, %v62
  %v67 = vmul.f32 %v39, %v62
  %v68 = vmul.f32 %v41, %v62
  %v69 = vmul.f32 %v43, %v62
  %v70 = vmul.f32 %v45, %v62
  %v71 = vmul.f32 %v47, %v62
  %v72 = vmul.f32 %v49, %v62
  %v73 = vmul.f32 %v51, %v62
  %v74 = vmul.f32 %v53, %v62
  %v75 = vmul.f32 %v55, %v62
  %v76 = vmul.f32 %v57, %v62
  %v77 = vmul.f32 %v59, %v62
  %v78 = vmul.f32 %v61, %v62
  %v79 = vsub.f32 %v14, %v63
  %v80 = vsub.f32 %v15, %v64
  %v81 = vsub.f32 %v16, %v65
  %v82 = vsub.f32 %v17, %v66
  %v83 = vsub.f32 %v18, %v67
  %v84 = vsub.f32 %v19, %v68
  %v85 = vsub.f32 %v20, %v69
  %v86 = vsub.f32 %v21, %v70
  %v87 = vsub.f32 %v22, %v71
  %v88 = vsub.f32 %v23, %v72
  %v89 = vsub.f32 %v24, %v73
  %v90 = vsub.f32 %v25, %v74
  %v91 = vsub.f32 %v26, %v75
  %v92 = vsub.f32 %v27, %v76
  %v93 = vsub.f32 %v28, %v77
  %v94 = vsub.f32 %v29, %v78
  %v95 = vmul.f32 %v79, %v79
  %v96 = vmul.f32 %v80, %v80
  %v97 = vmul.f32 %v81, %v81
  %v98 = vmul.f32 %v82, %v82
  %v99 = vmul.f32 %v83, %v83
  %v100 = vmul.f32 %v84, %v84
  %v101 = vmul.f32 %v85, %v85
  %v102 = vmul.f32 %v86, %v86
  %v103 = vmul.f32 %v87, %v87
  %v104 = vmul.f32 %v88, %v88
  %v105 = vmul.f32 %v89, %v89
  %v106 = vmul.f32 %v90, %v90
  %v107 = vmul.f32 %v91, %v91
  %v108 = vmul.f32 %v92, %v92
  %v109 = vmul.f32 %v93, %v93
  %v110 = vmul.f32 %v94, %v94
  %111 = vadd.xlane.f32.xlu0 %v95
  %v112 = vpop.xlane.xlu0 %111
  %113 = vadd.xlane.f32.xlu0 %v96
  %v114 = vpop.xlane.xlu0 %113
  %115 = vadd.xlane.f32.xlu0 %v97
  %v116 = vpop.xlane.xlu0 %115
  %117 = vadd.xlane.f32.xlu0 %v98
  %v118 = vpop.xlane.xlu0 %117
  %119 = vadd.xlane.f32.xlu0 %v99
  %v120 = vpop.xlane.xlu0 %119
  %121 = vadd.xlane.f32.xlu0 %v100
  %v122 = vpop.xlane.xlu0 %121
  %123 = vadd.xlane.f32.xlu0 %v101
  %v124 = vpop.xlane.xlu0 %123
  %125 = vadd.xlane.f32.xlu0 %v102
  %v126 = vpop.xlane.xlu0 %125
  %127 = vadd.xlane.f32.xlu0 %v103
  %v128 = vpop.xlane.xlu0 %127
  %129 = vadd.xlane.f32.xlu0 %v104
  %v130 = vpop.xlane.xlu0 %129
  %131 = vadd.xlane.f32.xlu0 %v105
  %v132 = vpop.xlane.xlu0 %131
  %133 = vadd.xlane.f32.xlu0 %v106
  %v134 = vpop.xlane.xlu0 %133
  %135 = vadd.xlane.f32.xlu0 %v107
  %v136 = vpop.xlane.xlu0 %135
  %137 = vadd.xlane.f32.xlu0 %v108
  %v138 = vpop.xlane.xlu0 %137
  %139 = vadd.xlane.f32.xlu0 %v109
  %v140 = vpop.xlane.xlu0 %139
  %141 = vadd.xlane.f32.xlu0 %v110
  %v142 = vpop.xlane.xlu0 %141
  %v143 = vmul.f32 %v112, %v62
  %v144 = vmul.f32 %v114, %v62
  %v145 = vmul.f32 %v116, %v62
  %v146 = vmul.f32 %v118, %v62
  %v147 = vmul.f32 %v120, %v62
  %v148 = vmul.f32 %v122, %v62
  %v149 = vmul.f32 %v124, %v62
  %v150 = vmul.f32 %v126, %v62
  %v151 = vmul.f32 %v128, %v62
  %v152 = vmul.f32 %v130, %v62
  %v153 = vmul.f32 %v132, %v62
  %v154 = vmul.f32 %v134, %v62
  %v155 = vmul.f32 %v136, %v62
  %v156 = vmul.f32 %v138, %v62
  %v157 = vmul.f32 %v140, %v62
  %v158 = vmul.f32 %v142, %v62
  %v159 = vadd.f32 %v143, 1e-05
  %v160 = vadd.f32 %v144, 1e-05
  %v161 = vadd.f32 %v145, 1e-05
  %v162 = vadd.f32 %v146, 1e-05
  %v163 = vadd.f32 %v147, 1e-05
  %v164 = vadd.f32 %v148, 1e-05
  %v165 = vadd.f32 %v149, 1e-05
  %v166 = vadd.f32 %v150, 1e-05
  %v167 = vadd.f32 %v151, 1e-05
  %v168 = vadd.f32 %v152, 1e-05
  %v169 = vadd.f32 %v153, 1e-05
  %v170 = vadd.f32 %v154, 1e-05
  %v171 = vadd.f32 %v155, 1e-05
  %v172 = vadd.f32 %v156, 1e-05
  %v173 = vadd.f32 %v157, 1e-05
  %v174 = vadd.f32 %v158, 1e-05
  %v175 = vrsqrt.pop %v159
  %v176 = vrsqrt.pop %v160
  %v177 = vrsqrt.pop %v161
  %v178 = vrsqrt.pop %v162
  %v179 = vrsqrt.pop %v163
  %v180 = vrsqrt.pop %v164
  %v181 = vrsqrt.pop %v165
  %v182 = vrsqrt.pop %v166
  %v183 = vrsqrt.pop %v167
  %v184 = vrsqrt.pop %v168
  %v185 = vrsqrt.pop %v169
  %v186 = vrsqrt.pop %v170
  %v187 = vrsqrt.pop %v171
  %v188 = vrsqrt.pop %v172
  %v189 = vrsqrt.pop %v173
  %v190 = vrsqrt.pop %v174
  %v191 = vmul.f32 %v79, %v175
  %v192 = vmul.f32 %v80, %v176
  %v193 = vmul.f32 %v81, %v177
  %v194 = vmul.f32 %v82, %v178
  %v195 = vmul.f32 %v83, %v179
  %v196 = vmul.f32 %v84, %v180
  %v197 = vmul.f32 %v85, %v181
  %v198 = vmul.f32 %v86, %v182
  %v199 = vmul.f32 %v87, %v183
  %v200 = vmul.f32 %v88, %v184
  %v201 = vmul.f32 %v89, %v185
  %v202 = vmul.f32 %v90, %v186
  %v203 = vmul.f32 %v91, %v187
  %v204 = vmul.f32 %v92, %v188
  %v205 = vmul.f32 %v93, %v189
  %v206 = vmul.f32 %v94, %v190
  %v207 = vld [vmem:[%s1] sm:$0x1]
  %v209 = vlaneseq
  %v210 = vshrl.u32 %v209, 7
  %v211 = vsub.s32 0, %v210
  %v212 = vrot.slane %v207, %v211
  %v214 = vmul.f32 %v191, %v212
  %v215 = vmul.f32 %v192, %v212
  %v216 = vmul.f32 %v193, %v212
  %v217 = vmul.f32 %v194, %v212
  %v218 = vmul.f32 %v195, %v212
  %v219 = vmul.f32 %v196, %v212
  %v220 = vmul.f32 %v197, %v212
  %v221 = vmul.f32 %v198, %v212
  %v222 = vmul.f32 %v199, %v212
  %v223 = vmul.f32 %v200, %v212
  %v224 = vmul.f32 %v201, %v212
  %v225 = vmul.f32 %v202, %v212
  %v226 = vmul.f32 %v203, %v212
  %v227 = vmul.f32 %v204, %v212
  %v228 = vmul.f32 %v205, %v212
  %v229 = vmul.f32 %v206, %v212
  %v230 = vld [vmem:[%s2] sm:$0x1]
  %v232 = vlaneseq
  %v233 = vshrl.u32 %v232, 7
  %v234 = vsub.s32 0, %v233
  %v235 = vrot.slane %v230, %v234
  %v237 = vadd.f32 %v214, %v235
  %v238 = vadd.f32 %v215, %v235
  %v239 = vadd.f32 %v216, %v235
  %v240 = vadd.f32 %v217, %v235
  %v241 = vadd.f32 %v218, %v235
  %v242 = vadd.f32 %v219, %v235
  %v243 = vadd.f32 %v220, %v235
  %v244 = vadd.f32 %v221, %v235
  %v245 = vadd.f32 %v222, %v235
  %v246 = vadd.f32 %v223, %v235
  %v247 = vadd.f32 %v224, %v235
  %v248 = vadd.f32 %v225, %v235
  %v249 = vadd.f32 %v226, %v235
  %v250 = vadd.f32 %v227, %v235
  %v251 = vadd.f32 %v228, %v235
  %v252 = vadd.f32 %v229, %v235
  %253 = vst [vmem:[%s3] sm:$0xff] %v237
  %254 = vst [vmem:[%s3 + $0x8] sm:$0xff] %v238
  %255 = vst [vmem:[%s3 + $0x10] sm:$0xff] %v239
  %256 = vst [vmem:[%s3 + $0x18] sm:$0xff] %v240
  %257 = vst [vmem:[%s3 + $0x20] sm:$0xff] %v241
  %258 = vst [vmem:[%s3 + $0x28] sm:$0xff] %v242
  %259 = vst [vmem:[%s3 + $0x30] sm:$0xff] %v243
  %260 = vst [vmem:[%s3 + $0x38] sm:$0xff] %v244
  %261 = vst [vmem:[%s3 + $0x40] sm:$0xff] %v245
  %262 = vst [vmem:[%s3 + $0x48] sm:$0xff] %v246
  %263 = vst [vmem:[%s3 + $0x50] sm:$0xff] %v247
  %264 = vst [vmem:[%s3 + $0x58] sm:$0xff] %v248
  %265 = vst [vmem:[%s3 + $0x60] sm:$0xff] %v249
  %266 = vst [vmem:[%s3 + $0x68] sm:$0xff] %v250
  %267 = vst [vmem:[%s3 + $0x70] sm:$0xff] %v251
  %268 = vst [vmem:[%s3 + $0x78] sm:$0xff] %v252
  // Predicated region
  $region14: #{_lambda_.60} parent=0 // pred_check
    _
  $region15: #{_lambda_.60} parent=0 // pred_check_branch
    %270 = sbr.rel (0) target = $region17
  $region16: #{_lambda_.60} parent=0 // pred_region
    _
  $region17: #{_lambda_.60} parent=0 // pred_fallthru
    _
  // Predicated region
  $region18: #{_lambda_.60} parent=0 // pred_check
    _
  $region19: #{_lambda_.60} parent=0 // pred_check_branch
    %272 = sbr.rel (0) target = $region21
  $region20: #{_lambda_.60} parent=0 // pred_region
    _
  $region21: #{_lambda_.60} parent=0 // pred_fallthru
    _

// kernel: _lambda_.45
$region0: #{_lambda_.45}
  #allocation0 [shape = 'u32[]', space=smem, size = 0x4, offset = 0x4, fixed_abs, tag = 'smem constant byte address 0x4 - core index']
  #allocation1 [shape = 'u32[144,128]{1,0:T(1,128)}', space=vmem, size = 0x12000, scoped, tag = 'internal scratch']
  #allocation2 [shape = 'f32[16,128]{1,0:T(8,128)}', space=vmem, size = 0x2000, scoped, tag = 'scratch operand']
  %s0 = inlined_call_operand.vmem [shape: f32[16,128], index: 0, kind: input, shape index: {}]
  %s1 = inlined_call_operand.vmem [shape: f32[128,128], index: 1, kind: input, shape index: {}]
  %s2 = inlined_call_operand.vmem [shape: f32[1,128], index: 2, kind: input, shape index: {}]
  %s3 = inlined_call_operand.vmem [shape: f32[16,128], index: 3, kind: output, shape index: {}]
  %s4 = sld [smem:[#allocation0]]
  $region30: #{_lambda_.45} parent=0
    _
  %s6 = ssub.s32 1, %s4
  %s7 = scalar_select 0, %s6, %s4
  // Predicated region
  $region2: #{_lambda_.45} parent=0 // pred_check
    _
  $region3: #{_lambda_.45} parent=0 // pred_check_branch
    %9 = sbr.rel (0) target = $region5
  $region4: #{_lambda_.45} parent=0 // pred_region
    _
  $region5: #{_lambda_.45} parent=0 // pred_fallthru
    _
  // Predicated region
  $region6: #{_lambda_.45} parent=0 // pred_check
    _
  $region7: #{_lambda_.45} parent=0 // pred_check_branch
    %11 = sbr.rel (0) target = $region9
  $region8: #{_lambda_.45} parent=0 // pred_region
    _
  $region9: #{_lambda_.45} parent=0 // pred_fallthru
    _
  // Predicated region
  $region10: #{_lambda_.45} parent=0 // pred_check
    _
  $region11: #{_lambda_.45} parent=0 // pred_check_branch
    %13 = sbr.rel (0) target = $region13
  $region12: #{_lambda_.45} parent=0 // pred_region
    _
  $region13: #{_lambda_.45} parent=0 // pred_fallthru
    _
  %p14 = scmp.eq.s32.totalorder 0, 0
  // Predicated region
  $region14: #{_lambda_.45} parent=0 // pred_check
    %p15 = pneg %p14
  $region15: #{_lambda_.45} parent=0 // pred_check_branch
    %17 = sbr.rel (%p15) target = $region17
  $region16: #{_lambda_.45} parent=0 // pred_region
    %18 = vst [vmem:[#allocation2] sm:$0xff] 0.0
    %19 = vst [vmem:[#allocation2 + $0x8] sm:$0xff] 0.0
  $region17: #{_lambda_.45} parent=0 // pred_fallthru
    _
  %v20 = vld [vmem:[#allocation2] sm:$0xff]
  %v21 = vld [vmem:[#allocation2 + $0x8] sm:$0xff]
  %v22 = vld [vmem:[%s0] sm:$0xff]
  %v23 = vld [vmem:[%s0 + $0x8] sm:$0xff]
  %v24 = vld [vmem:[%s1] sm:$0xff]
  %v25 = vld [vmem:[%s1 + $0x8] sm:$0xff]
  %v26 = vld [vmem:[%s1 + $0x10] sm:$0xff]
  %v27 = vld [vmem:[%s1 + $0x18] sm:$0xff]
  %v28 = vld [vmem:[%s1 + $0x20] sm:$0xff]
  %v29 = vld [vmem:[%s1 + $0x28] sm:$0xff]
  %v30 = vld [vmem:[%s1 + $0x30] sm:$0xff]
  %v31 = vld [vmem:[%s1 + $0x38] sm:$0xff]
  %v32 = vld [vmem:[%s1 + $0x40] sm:$0xff]
  %v33 = vld [vmem:[%s1 + $0x48] sm:$0xff]
  %v34 = vld [vmem:[%s1 + $0x50] sm:$0xff]
  %v35 = vld [vmem:[%s1 + $0x58] sm:$0xff]
  %v36 = vld [vmem:[%s1 + $0x60] sm:$0xff]
  %v37 = vld [vmem:[%s1 + $0x68] sm:$0xff]
  %v38 = vld [vmem:[%s1 + $0x70] sm:$0xff]
  %v39 = vld [vmem:[%s1 + $0x78] sm:$0xff]
  %40 = vmatprep.subr.mxu0 0.0
  %41 = vmatpush1.msra.mxu0 %v24
  %42 = vmatprep.subr.mxu0 0.0
  %43 = vmatpush1.msra.mxu0 %v25
  %44 = vmatprep.subr.mxu0 0.0
  %45 = vmatpush1.msra.mxu0 %v26
  %46 = vmatprep.subr.mxu0 0.0
  %47 = vmatpush1.msra.mxu0 %v27
  %48 = vmatprep.subr.mxu0 0.0
  %49 = vmatpush1.msra.mxu0 %v28
  %50 = vmatprep.subr.mxu0 0.0
  %51 = vmatpush1.msra.mxu0 %v29
  %52 = vmatprep.subr.mxu0 0.0
  %53 = vmatpush1.msra.mxu0 %v30
  %54 = vmatprep.subr.mxu0 0.0
  %55 = vmatpush1.msra.mxu0 %v31
  %56 = vmatprep.subr.mxu0 0.0
  %57 = vmatpush1.msra.mxu0 %v32
  %58 = vmatprep.subr.mxu0 0.0
  %59 = vmatpush1.msra.mxu0 %v33
  %60 = vmatprep.subr.mxu0 0.0
  %61 = vmatpush1.msra.mxu0 %v34
  %62 = vmatprep.subr.mxu0 0.0
  %63 = vmatpush1.msra.mxu0 %v35
  %64 = vmatprep.subr.mxu0 0.0
  %65 = vmatpush1.msra.mxu0 %v36
  %66 = vmatprep.subr.mxu0 0.0
  %67 = vmatpush1.msra.mxu0 %v37
  %68 = vmatprep.subr.mxu0 0.0
  %69 = vmatpush1.msra.mxu0 %v38
  %70 = vmatprep.subr.mxu0 0.0
  %71 = vmatpush1.msra.mxu0 %v39
  %72 = vmatprep.subr.mxu0 0.0
  %73 = vmatpush1.msra.mxu0 0.0
  %74 = vmatprep.subr.mxu0 0.0
  %75 = vmatpush1.msra.mxu0 0.0
  %76 = vmatprep.subr.mxu0 0.0
  %77 = vmatpush1.msra.mxu0 0.0
  %78 = vmatprep.subr.mxu0 0.0
  %79 = vmatpush1.msra.mxu0 0.0
  %80 = vmatprep.subr.mxu0 0.0
  %81 = vmatpush1.msra.mxu0 0.0
  %82 = vmatprep.subr.mxu0 0.0
  %83 = vmatpush1.msra.mxu0 0.0
  %84 = vmatprep.subr.mxu0 0.0
  %85 = vmatpush1.msra.mxu0 0.0
  %86 = vmatprep.subr.mxu0 0.0
  %87 = vmatpush1.msra.mxu0 0.0
  %88 = vmatprep.subr.mxu0 0.0
  %89 = vmatpush1.msra.mxu0 0.0
  %90 = vmatprep.subr.mxu0 0.0
  %91 = vmatpush1.msra.mxu0 0.0
  %92 = vmatprep.subr.mxu0 0.0
  %93 = vmatpush1.msra.mxu0 0.0
  %94 = vmatprep.subr.mxu0 0.0
  %95 = vmatpush1.msra.mxu0 0.0
  %96 = vmatprep.subr.mxu0 0.0
  %97 = vmatpush1.msra.mxu0 0.0
  %98 = vmatprep.subr.mxu0 0.0
  %99 = vmatpush1.msra.mxu0 0.0
  %100 = vmatprep.subr.mxu0 0.0
  %101 = vmatpush1.msra.mxu0 0.0
  %102 = vmatprep.subr.mxu0 0.0
  %103 = vmatpush1.msra.mxu0 0.0
  %104 = vmatprep.mubr.f32.mxu0 0.0
  %105 = vmatmul.mubr.f32.gmra.mrb[0].mxu0 %v22
  %v106 = vpop.f32.mrb[0].mxu0
  %v107 = vadd.f32 0.0, %v106
  %v108 = vpop.f32.mrb[0].mxu0
  %109 = vmatprep.mubr.f32.mxu0 0.0
  %110 = vmatmul.mubr.f32.gmra.mrb[0].mxu0 %v23
  %v111 = vpop.f32.mrb[0].mxu0
  %v112 = vadd.f32 0.0, %v111
  %v113 = vpop.f32.mrb[0].mxu0
  %114 = vdwg.mxu0
  %v115 = vadd.f32 %v20, %v107
  %v116 = vadd.f32 %v21, %v112
  %117 = vst [vmem:[#allocation2] sm:$0xff] %v115
  %118 = vst [vmem:[#allocation2 + $0x8] sm:$0xff] %v116
  // Predicated region
  $region18: #{_lambda_.45} parent=0 // pred_check
    %p119 = pneg %p14
  $region19: #{_lambda_.45} parent=0 // pred_check_branch
    %121 = sbr.rel (%p119) target = $region21
  $region20: #{_lambda_.45} parent=0 // pred_region
    %v122 = vld [vmem:[#allocation2] sm:$0xff]
    %v123 = vld [vmem:[#allocation2 + $0x8] sm:$0xff]
    %v124 = vld [vmem:[%s2] sm:$0x1]
    %v126 = vlaneseq
    %v127 = vshrl.u32 %v126, 7
    %v128 = vsub.s32 0, %v127
    %v129 = vrot.slane %v124, %v128
    %v131 = vadd.f32 %v122, %v129
    %v132 = vadd.f32 %v123, %v129
    %133 = vst [vmem:[%s3] sm:$0xff] %v131
    %134 = vst [vmem:[%s3 + $0x8] sm:$0xff] %v132
  $region21: #{_lambda_.45} parent=0 // pred_fallthru
    _
  // Predicated region
  $region22: #{_lambda_.45} parent=0 // pred_check
    _
  $region23: #{_lambda_.45} parent=0 // pred_check_branch
    %136 = sbr.rel (0) target = $region25
  $region24: #{_lambda_.45} parent=0 // pred_region
    _
  $region25: #{_lambda_.45} parent=0 // pred_fallthru
    _
  // Predicated region
  $region26: #{_lambda_.45} parent=0 // pred_check
    _
  $region27: #{_lambda_.45} parent=0 // pred_check_branch
    %138 = sbr.rel (0) target = $region29
  $region28: #{_lambda_.45} parent=0 // pred_region
    _
  $region29: #{_lambda_.45} parent=0 // pred_fallthru
    _

// kernel: _lambda_.66
$region0: #{_lambda_.66}
  #allocation0 [shape = 'u32[]', space=smem, size = 0x4, offset = 0x4, fixed_abs, tag = 'smem constant byte address 0x4 - core index']
  #allocation1 [shape = 'u32[144,128]{1,0:T(1,128)}', space=vmem, size = 0x12000, scoped, tag = 'internal scratch']
  #allocation2 [shape = 'f32[128,256]{1,0:T(8,128)}', space=vmem, size = 0x20000, scoped, tag = 'scratch operand']
  %s0 = inlined_call_operand.vmem [shape: f32[128,128], index: 0, kind: input, shape index: {}]
  %s1 = inlined_call_operand.vmem [shape: f32[128,256], index: 1, kind: input, shape index: {}]
  %s2 = inlined_call_operand.vmem [shape: f32[1,256], index: 2, kind: input, shape index: {}]
  %s3 = inlined_call_operand.vmem [shape: f32[128,256], index: 3, kind: output, shape index: {}]
  %s4 = sld [smem:[#allocation0]]
  $region30: #{_lambda_.66} parent=0
    _
  %s6 = ssub.s32 1, %s4
  %s7 = scalar_select 0, %s6, %s4
  // Predicated region
  $region2: #{_lambda_.66} parent=0 // pred_check
    _
  $region3: #{_lambda_.66} parent=0 // pred_check_branch
    %9 = sbr.rel (0) target = $region5
  $region4: #{_lambda_.66} parent=0 // pred_region
    _
  $region5: #{_lambda_.66} parent=0 // pred_fallthru
    _
  // Predicated region
  $region6: #{_lambda_.66} parent=0 // pred_check
    _
  $region7: #{_lambda_.66} parent=0 // pred_check_branch
    %11 = sbr.rel (0) target = $region9
  $region8: #{_lambda_.66} parent=0 // pred_region
    _
  $region9: #{_lambda_.66} parent=0 // pred_fallthru
    _
  // Predicated region
  $region10: #{_lambda_.66} parent=0 // pred_check
    _
  $region11: #{_lambda_.66} parent=0 // pred_check_branch
    %13 = sbr.rel (0) target = $region13
  $region12: #{_lambda_.66} parent=0 // pred_region
    _
  $region13: #{_lambda_.66} parent=0 // pred_fallthru
    _
  %p14 = scmp.eq.s32.totalorder 0, 0
  // Predicated region
  $region14: #{_lambda_.66} parent=0 // pred_check
    %p15 = pneg %p14
  $region15: #{_lambda_.66} parent=0 // pred_check_branch
    %17 = sbr.rel (%p15) target = $region17
  $region16: #{_lambda_.66} parent=0 // pred_region
    %18 = vst [vmem:[#allocation2] sm:$0xff] 0.0
    %19 = vst [vmem:[#allocation2 + $0x8] sm:$0xff] 0.0
    %20 = vst [vmem:[#allocation2 + $0x10] sm:$0xff] 0.0
    %21 = vst [vmem:[#allocation2 + $0x18] sm:$0xff] 0.0
    %22 = vst [vmem:[#allocation2 + $0x20] sm:$0xff] 0.0
    %23 = vst [vmem:[#allocation2 + $0x28] sm:$0xff] 0.0
    %24 = vst [vmem:[#allocation2 + $0x30] sm:$0xff] 0.0
    %25 = vst [vmem:[#allocation2 + $0x38] sm:$0xff] 0.0
    %26 = vst [vmem:[#allocation2 + $0x40] sm:$0xff] 0.0
    %27 = vst [vmem:[#allocation2 + $0x48] sm:$0xff] 0.0
    %28 = vst [vmem:[#allocation2 + $0x50] sm:$0xff] 0.0
    %29 = vst [vmem:[#allocation2 + $0x58] sm:$0xff] 0.0
    %30 = vst [vmem:[#allocation2 + $0x60] sm:$0xff] 0.0
    %31 = vst [vmem:[#allocation2 + $0x68] sm:$0xff] 0.0
    %32 = vst [vmem:[#allocation2 + $0x70] sm:$0xff] 0.0
    %33 = vst [vmem:[#allocation2 + $0x78] sm:$0xff] 0.0
    %34 = vst [vmem:[#allocation2 + $0x80] sm:$0xff] 0.0
    %35 = vst [vmem:[#allocation2 + $0x88] sm:$0xff] 0.0
    %36 = vst [vmem:[#allocation2 + $0x90] sm:$0xff] 0.0
    %37 = vst [vmem:[#allocation2 + $0x98] sm:$0xff] 0.0
    %38 = vst [vmem:[#allocation2 + $0xa0] sm:$0xff] 0.0
    %39 = vst [vmem:[#allocation2 + $0xa8] sm:$0xff] 0.0
    %40 = vst [vmem:[#allocation2 + $0xb0] sm:$0xff] 0.0
    %41 = vst [vmem:[#allocation2 + $0xb8] sm:$0xff] 0.0
    %42 = vst [vmem:[#allocation2 + $0xc0] sm:$0xff] 0.0
    %43 = vst [vmem:[#allocation2 + $0xc8] sm:$0xff] 0.0
    %44 = vst [vmem:[#allocation2 + $0xd0] sm:$0xff] 0.0
    %45 = vst [vmem:[#allocation2 + $0xd8] sm:$0xff] 0.0
    %46 = vst [vmem:[#allocation2 + $0xe0] sm:$0xff] 0.0
    %47 = vst [vmem:[#allocation2 + $0xe8] sm:$0xff] 0.0
    %48 = vst [vmem:[#allocation2 + $0xf0] sm:$0xff] 0.0
    %49 = vst [vmem:[#allocation2 + $0xf8] sm:$0xff] 0.0
  $region17: #{_lambda_.66} parent=0 // pred_fallthru
    _
  %v50 = vld [vmem:[#allocation2] sm:$0xff]
  %v51 = vld [vmem:[#allocation2 + $0x8] sm:$0xff]
  %v52 = vld [vmem:[#allocation2 + $0x10] sm:$0xff]
  %v53 = vld [vmem:[#allocation2 + $0x18] sm:$0xff]
  %v54 = vld [vmem:[#allocation2 + $0x20] sm:$0xff]
  %v55 = vld [vmem:[#allocation2 + $0x28] sm:$0xff]
  %v56 = vld [vmem:[#allocation2 + $0x30] sm:$0xff]
  %v57 = vld [vmem:[#allocation2 + $0x38] sm:$0xff]
  %v58 = vld [vmem:[#allocation2 + $0x40] sm:$0xff]
  %v59 = vld [vmem:[#allocation2 + $0x48] sm:$0xff]
  %v60 = vld [vmem:[#allocation2 + $0x50] sm:$0xff]
  %v61 = vld [vmem:[#allocation2 + $0x58] sm:$0xff]
  %v62 = vld [vmem:[#allocation2 + $0x60] sm:$0xff]
  %v63 = vld [vmem:[#allocation2 + $0x68] sm:$0xff]
  %v64 = vld [vmem:[#allocation2 + $0x70] sm:$0xff]
  %v65 = vld [vmem:[#allocation2 + $0x78] sm:$0xff]
  %v66 = vld [vmem:[#allocation2 + $0x80] sm:$0xff]
  %v67 = vld [vmem:[#allocation2 + $0x88] sm:$0xff]
  %v68 = vld [vmem:[#allocation2 + $0x90] sm:$0xff]
  %v69 = vld [vmem:[#allocation2 + $0x98] sm:$0xff]
  %v70 = vld [vmem:[#allocation2 + $0xa0] sm:$0xff]
  %v71 = vld [vmem:[#allocation2 + $0xa8] sm:$0xff]
  %v72 = vld [vmem:[#allocation2 + $0xb0] sm:$0xff]
  %v73 = vld [vmem:[#allocation2 + $0xb8] sm:$0xff]
  %v74 = vld [vmem:[#allocation2 + $0xc0] sm:$0xff]
  %v75 = vld [vmem:[#allocation2 + $0xc8] sm:$0xff]
  %v76 = vld [vmem:[#allocation2 + $0xd0] sm:$0xff]
  %v77 = vld [vmem:[#allocation2 + $0xd8] sm:$0xff]
  %v78 = vld [vmem:[#allocation2 + $0xe0] sm:$0xff]
  %v79 = vld [vmem:[#allocation2 + $0xe8] sm:$0xff]
  %v80 = vld [vmem:[#allocation2 + $0xf0] sm:$0xff]
  %v81 = vld [vmem:[#allocation2 + $0xf8] sm:$0xff]
  %v82 = vld [vmem:[%s0] sm:$0xff]
  %v83 = vld [vmem:[%s0 + $0x8] sm:$0xff]
  %v84 = vld [vmem:[%s0 + $0x10] sm:$0xff]
  %v85 = vld [vmem:[%s0 + $0x18] sm:$0xff]
  %v86 = vld [vmem:[%s0 + $0x20] sm:$0xff]
  %v87 = vld [vmem:[%s0 + $0x28] sm:$0xff]
  %v88 = vld [vmem:[%s0 + $0x30] sm:$0xff]
  %v89 = vld [vmem:[%s0 + $0x38] sm:$0xff]
  %v90 = vld [vmem:[%s0 + $0x40] sm:$0xff]
  %v91 = vld [vmem:[%s0 + $0x48] sm:$0xff]
  %v92 = vld [vmem:[%s0 + $0x50] sm:$0xff]
  %v93 = vld [vmem:[%s0 + $0x58] sm:$0xff]
  %v94 = vld [vmem:[%s0 + $0x60] sm:$0xff]
  %v95 = vld [vmem:[%s0 + $0x68] sm:$0xff]
  %v96 = vld [vmem:[%s0 + $0x70] sm:$0xff]
  %v97 = vld [vmem:[%s0 + $0x78] sm:$0xff]
  %v98 = vld [vmem:[%s1] sm:$0xff]
  %v99 = vld [vmem:[%s1 + $0x8] sm:$0xff]
  %v100 = vld [vmem:[%s1 + $0x10] sm:$0xff]
  %v101 = vld [vmem:[%s1 + $0x18] sm:$0xff]
  %v102 = vld [vmem:[%s1 + $0x20] sm:$0xff]
  %v103 = vld [vmem:[%s1 + $0x28] sm:$0xff]
  %v104 = vld [vmem:[%s1 + $0x30] sm:$0xff]
  %v105 = vld [vmem:[%s1 + $0x38] sm:$0xff]
  %v106 = vld [vmem:[%s1 + $0x40] sm:$0xff]
  %v107 = vld [vmem:[%s1 + $0x48] sm:$0xff]
  %v108 = vld [vmem:[%s1 + $0x50] sm:$0xff]
  %v109 = vld [vmem:[%s1 + $0x58] sm:$0xff]
  %v110 = vld [vmem:[%s1 + $0x60] sm:$0xff]
  %v111 = vld [vmem:[%s1 + $0x68] sm:$0xff]
  %v112 = vld [vmem:[%s1 + $0x70] sm:$0xff]
  %v113 = vld [vmem:[%s1 + $0x78] sm:$0xff]
  %v114 = vld [vmem:[%s1 + $0x80] sm:$0xff]
  %v115 = vld [vmem:[%s1 + $0x88] sm:$0xff]
  %v116 = vld [vmem:[%s1 + $0x90] sm:$0xff]
  %v117 = vld [vmem:[%s1 + $0x98] sm:$0xff]
  %v118 = vld [vmem:[%s1 + $0xa0] sm:$0xff]
  %v119 = vld [vmem:[%s1 + $0xa8] sm:$0xff]
  %v120 = vld [vmem:[%s1 + $0xb0] sm:$0xff]
  %v121 = vld [vmem:[%s1 + $0xb8] sm:$0xff]
  %v122 = vld [vmem:[%s1 + $0xc0] sm:$0xff]
  %v123 = vld [vmem:[%s1 + $0xc8] sm:$0xff]
  %v124 = vld [vmem:[%s1 + $0xd0] sm:$0xff]
  %v125 = vld [vmem:[%s1 + $0xd8] sm:$0xff]
  %v126 = vld [vmem:[%s1 + $0xe0] sm:$0xff]
  %v127 = vld [vmem:[%s1 + $0xe8] sm:$0xff]
  %v128 = vld [vmem:[%s1 + $0xf0] sm:$0xff]
  %v129 = vld [vmem:[%s1 + $0xf8] sm:$0xff]
  %130 = vmatprep.subr.mxu0 %v99
  %131 = vmatpush1.msra.mxu0 %v98
  %132 = vmatprep.subr.mxu0 %v101
  %133 = vmatpush1.msra.mxu0 %v100
  %134 = vmatprep.subr.mxu0 %v103
  %135 = vmatpush1.msra.mxu0 %v102
  %136 = vmatprep.subr.mxu0 %v105
  %137 = vmatpush1.msra.mxu0 %v104
  %138 = vmatprep.subr.mxu0 %v107
  %139 = vmatpush1.msra.mxu0 %v106
  %140 = vmatprep.subr.mxu0 %v109
  %141 = vmatpush1.msra.mxu0 %v108
  %142 = vmatprep.subr.mxu0 %v111
  %143 = vmatpush1.msra.mxu0 %v110
  %144 = vmatprep.subr.mxu0 %v113
  %145 = vmatpush1.msra.mxu0 %v112
  %146 = vmatprep.subr.mxu0 %v115
  %147 = vmatpush1.msra.mxu0 %v114
  %148 = vmatprep.subr.mxu0 %v117
  %149 = vmatpush1.msra.mxu0 %v116
  %150 = vmatprep.subr.mxu0 %v119
  %151 = vmatpush1.msra.mxu0 %v118
  %152 = vmatprep.subr.mxu0 %v121
  %153 = vmatpush1.msra.mxu0 %v120
  %154 = vmatprep.subr.mxu0 %v123
  %155 = vmatpush1.msra.mxu0 %v122
  %156 = vmatprep.subr.mxu0 %v125
  %157 = vmatpush1.msra.mxu0 %v124
  %158 = vmatprep.subr.mxu0 %v127
  %159 = vmatpush1.msra.mxu0 %v126
  %160 = vmatprep.subr.mxu0 %v129
  %161 = vmatpush1.msra.mxu0 %v128
  %162 = vmatprep.subr.mxu0 0.0
  %163 = vmatpush1.msra.mxu0 0.0
  %164 = vmatprep.subr.mxu0 0.0
  %165 = vmatpush1.msra.mxu0 0.0
  %166 = vmatprep.subr.mxu0 0.0
  %167 = vmatpush1.msra.mxu0 0.0
  %168 = vmatprep.subr.mxu0 0.0
  %169 = vmatpush1.msra.mxu0 0.0
  %170 = vmatprep.subr.mxu0 0.0
  %171 = vmatpush1.msra.mxu0 0.0
  %172 = vmatprep.subr.mxu0 0.0
  %173 = vmatpush1.msra.mxu0 0.0
  %174 = vmatprep.subr.mxu0 0.0
  %175 = vmatpush1.msra.mxu0 0.0
  %176 = vmatprep.subr.mxu0 0.0
  %177 = vmatpush1.msra.mxu0 0.0
  %178 = vmatprep.subr.mxu0 0.0
  %179 = vmatpush1.msra.mxu0 0.0
  %180 = vmatprep.subr.mxu0 0.0
  %181 = vmatpush1.msra.mxu0 0.0
  %182 = vmatprep.subr.mxu0 0.0
  %183 = vmatpush1.msra.mxu0 0.0
  %184 = vmatprep.subr.mxu0 0.0
  %185 = vmatpush1.msra.mxu0 0.0
  %186 = vmatprep.subr.mxu0 0.0
  %187 = vmatpush1.msra.mxu0 0.0
  %188 = vmatprep.subr.mxu0 0.0
  %189 = vmatpush1.msra.mxu0 0.0
  %190 = vmatprep.subr.mxu0 0.0
  %191 = vmatpush1.msra.mxu0 0.0
  %192 = vmatprep.subr.mxu0 0.0
  %193 = vmatpush1.msra.mxu0 0.0
  %194 = vmatprep.mubr.f32.mxu0 0.0
  %195 = vmatmul.mubr.f32.gmra.mrb[0].mxu0 %v82
  %v196 = vpop.f32.mrb[0].mxu0
  %v197 = vadd.f32 0.0, %v196
  %v198 = vpop.f32.mrb[0].mxu0
  %v199 = vadd.f32 0.0, %v198
  %200 = vmatprep.mubr.f32.mxu0 0.0
  %201 = vmatmul.mubr.f32.gmra.mrb[0].mxu0 %v83
  %v202 = vpop.f32.mrb[0].mxu0
  %v203 = vadd.f32 0.0, %v202
  %v204 = vpop.f32.mrb[0].mxu0
  %v205 = vadd.f32 0.0, %v204
  %206 = vmatprep.mubr.f32.mxu0 0.0
  %207 = vmatmul.mubr.f32.gmra.mrb[0].mxu0 %v84
  %v208 = vpop.f32.mrb[0].mxu0
  %v209 = vadd.f32 0.0, %v208
  %v210 = vpop.f32.mrb[0].mxu0
  %v211 = vadd.f32 0.0, %v210
  %212 = vmatprep.mubr.f32.mxu0 0.0
  %213 = vmatmul.mubr.f32.gmra.mrb[0].mxu0 %v85
  %v214 = vpop.f32.mrb[0].mxu0
  %v215 = vadd.f32 0.0, %v214
  %v216 = vpop.f32.mrb[0].mxu0
  %v217 = vadd.f32 0.0, %v216
  %218 = vmatprep.mubr.f32.mxu0 0.0
  %219 = vmatmul.mubr.f32.gmra.mrb[0].mxu0 %v86
  %v220 = vpop.f32.mrb[0].mxu0
  %v221 = vadd.f32 0.0, %v220
  %v222 = vpop.f32.mrb[0].mxu0
  %v223 = vadd.f32 0.0, %v222
  %224 = vmatprep.mubr.f32.mxu0 0.0
  %225 = vmatmul.mubr.f32.gmra.mrb[0].mxu0 %v87
  %v226 = vpop.f32.mrb[0].mxu0
  %v227 = vadd.f32 0.0, %v226
  %v228 = vpop.f32.mrb[0].mxu0
  %v229 = vadd.f32 0.0, %v228
  %230 = vmatprep.mubr.f32.mxu0 0.0
  %231 = vmatmul.mubr.f32.gmra.mrb[0].mxu0 %v88
  %v232 = vpop.f32.mrb[0].mxu0
  %v233 = vadd.f32 0.0, %v232
  %v234 = vpop.f32.mrb[0].mxu0
  %v235 = vadd.f32 0.0, %v234
  %236 = vmatprep.mubr.f32.mxu0 0.0
  %237 = vmatmul.mubr.f32.gmra.mrb[0].mxu0 %v89
  %v238 = vpop.f32.mrb[0].mxu0
  %v239 = vadd.f32 0.0, %v238
  %v240 = vpop.f32.mrb[0].mxu0
  %v241 = vadd.f32 0.0, %v240
  %242 = vmatprep.mubr.f32.mxu0 0.0
  %243 = vmatmul.mubr.f32.gmra.mrb[0].mxu0 %v90
  %v244 = vpop.f32.mrb[0].mxu0
  %v245 = vadd.f32 0.0, %v244
  %v246 = vpop.f32.mrb[0].mxu0
  %v247 = vadd.f32 0.0, %v246
  %248 = vmatprep.mubr.f32.mxu0 0.0
  %249 = vmatmul.mubr.f32.gmra.mrb[0].mxu0 %v91
  %v250 = vpop.f32.mrb[0].mxu0
  %v251 = vadd.f32 0.0, %v250
  %v252 = vpop.f32.mrb[0].mxu0
  %v253 = vadd.f32 0.0, %v252
  %254 = vmatprep.mubr.f32.mxu0 0.0
  %255 = vmatmul.mubr.f32.gmra.mrb[0].mxu0 %v92
  %v256 = vpop.f32.mrb[0].mxu0
  %v257 = vadd.f32 0.0, %v256
  %v258 = vpop.f32.mrb[0].mxu0
  %v259 = vadd.f32 0.0, %v258
  %260 = vmatprep.mubr.f32.mxu0 0.0
  %261 = vmatmul.mubr.f32.gmra.mrb[0].mxu0 %v93
  %v262 = vpop.f32.mrb[0].mxu0
  %v263 = vadd.f32 0.0, %v262
  %v264 = vpop.f32.mrb[0].mxu0
  %v265 = vadd.f32 0.0, %v264
  %266 = vmatprep.mubr.f32.mxu0 0.0
  %267 = vmatmul.mubr.f32.gmra.mrb[0].mxu0 %v94
  %v268 = vpop.f32.mrb[0].mxu0
  %v269 = vadd.f32 0.0, %v268
  %v270 = vpop.f32.mrb[0].mxu0
  %v271 = vadd.f32 0.0, %v270
  %272 = vmatprep.mubr.f32.mxu0 0.0
  %273 = vmatmul.mubr.f32.gmra.mrb[0].mxu0 %v95
  %v274 = vpop.f32.mrb[0].mxu0
  %v275 = vadd.f32 0.0, %v274
  %v276 = vpop.f32.mrb[0].mxu0
  %v277 = vadd.f32 0.0, %v276
  %278 = vmatprep.mubr.f32.mxu0 0.0
  %279 = vmatmul.mubr.f32.gmra.mrb[0].mxu0 %v96
  %v280 = vpop.f32.mrb[0].mxu0
  %v281 = vadd.f32 0.0, %v280
  %v282 = vpop.f32.mrb[0].mxu0
  %v283 = vadd.f32 0.0, %v282
  %284 = vmatprep.mubr.f32.mxu0 0.0
  %285 = vmatmul.mubr.f32.gmra.mrb[0].mxu0 %v97
  %v286 = vpop.f32.mrb[0].mxu0
  %v287 = vadd.f32 0.0, %v286
  %v288 = vpop.f32.mrb[0].mxu0
  %v289 = vadd.f32 0.0, %v288
  %290 = vdwg.mxu0
  %v291 = vadd.f32 %v50, %v197
  %v292 = vadd.f32 %v51, %v199
  %v293 = vadd.f32 %v52, %v203
  %v294 = vadd.f32 %v53, %v205
  %v295 = vadd.f32 %v54, %v209
  %v296 = vadd.f32 %v55, %v211
  %v297 = vadd.f32 %v56, %v215
  %v298 = vadd.f32 %v57, %v217
  %v299 = vadd.f32 %v58, %v221
  %v300 = vadd.f32 %v59, %v223
  %v301 = vadd.f32 %v60, %v227
  %v302 = vadd.f32 %v61, %v229
  %v303 = vadd.f32 %v62, %v233
  %v304 = vadd.f32 %v63, %v235
  %v305 = vadd.f32 %v64, %v239
  %v306 = vadd.f32 %v65, %v241
  %v307 = vadd.f32 %v66, %v245
  %v308 = vadd.f32 %v67, %v247
  %v309 = vadd.f32 %v68, %v251
  %v310 = vadd.f32 %v69, %v253
  %v311 = vadd.f32 %v70, %v257
  %v312 = vadd.f32 %v71, %v259
  %v313 = vadd.f32 %v72, %v263
  %v314 = vadd.f32 %v73, %v265
  %v315 = vadd.f32 %v74, %v269
  %v316 = vadd.f32 %v75, %v271
  %v317 = vadd.f32 %v76, %v275
  %v318 = vadd.f32 %v77, %v277
  %v319 = vadd.f32 %v78, %v281
  %v320 = vadd.f32 %v79, %v283
  %v321 = vadd.f32 %v80, %v287
  %v322 = vadd.f32 %v81, %v289
  %323 = vst [vmem:[#allocation2] sm:$0xff] %v291
  %324 = vst [vmem:[#allocation2 + $0x8] sm:$0xff] %v292
  %325 = vst [vmem:[#allocation2 + $0x10] sm:$0xff] %v293
  %326 = vst [vmem:[#allocation2 + $0x18] sm:$0xff] %v294
  %327 = vst [vmem:[#allocation2 + $0x20] sm:$0xff] %v295
  %328 = vst [vmem:[#allocation2 + $0x28] sm:$0xff] %v296
  %329 = vst [vmem:[#allocation2 + $0x30] sm:$0xff] %v297
  %330 = vst [vmem:[#allocation2 + $0x38] sm:$0xff] %v298
  %331 = vst [vmem:[#allocation2 + $0x40] sm:$0xff] %v299
  %332 = vst [vmem:[#allocation2 + $0x48] sm:$0xff] %v300
  %333 = vst [vmem:[#allocation2 + $0x50] sm:$0xff] %v301
  %334 = vst [vmem:[#allocation2 + $0x58] sm:$0xff] %v302
  %335 = vst [vmem:[#allocation2 + $0x60] sm:$0xff] %v303
  %336 = vst [vmem:[#allocation2 + $0x68] sm:$0xff] %v304
  %337 = vst [vmem:[#allocation2 + $0x70] sm:$0xff] %v305
  %338 = vst [vmem:[#allocation2 + $0x78] sm:$0xff] %v306
  %339 = vst [vmem:[#allocation2 + $0x80] sm:$0xff] %v307
  %340 = vst [vmem:[#allocation2 + $0x88] sm:$0xff] %v308
  %341 = vst [vmem:[#allocation2 + $0x90] sm:$0xff] %v309
  %342 = vst [vmem:[#allocation2 + $0x98] sm:$0xff] %v310
  %343 = vst [vmem:[#allocation2 + $0xa0] sm:$0xff] %v311
  %344 = vst [vmem:[#allocation2 + $0xa8] sm:$0xff] %v312
  %345 = vst [vmem:[#allocation2 + $0xb0] sm:$0xff] %v313
  %346 = vst [vmem:[#allocation2 + $0xb8] sm:$0xff] %v314
  %347 = vst [vmem:[#allocation2 + $0xc0] sm:$0xff] %v315
  %348 = vst [vmem:[#allocation2 + $0xc8] sm:$0xff] %v316
  %349 = vst [vmem:[#allocation2 + $0xd0] sm:$0xff] %v317
  %350 = vst [vmem:[#allocation2 + $0xd8] sm:$0xff] %v318
  %351 = vst [vmem:[#allocation2 + $0xe0] sm:$0xff] %v319
  %352 = vst [vmem:[#allocation2 + $0xe8] sm:$0xff] %v320
  %353 = vst [vmem:[#allocation2 + $0xf0] sm:$0xff] %v321
  %354 = vst [vmem:[#allocation2 + $0xf8] sm:$0xff] %v322
  // Predicated region
  $region18: #{_lambda_.66} parent=0 // pred_check
    %p355 = pneg %p14
  $region19: #{_lambda_.66} parent=0 // pred_check_branch
    %357 = sbr.rel (%p355) target = $region21
  $region20: #{_lambda_.66} parent=0 // pred_region
    %v358 = vld [vmem:[#allocation2] sm:$0xff]
    %v359 = vld [vmem:[#allocation2 + $0x8] sm:$0xff]
    %v360 = vld [vmem:[#allocation2 + $0x10] sm:$0xff]
    %v361 = vld [vmem:[#allocation2 + $0x18] sm:$0xff]
    %v362 = vld [vmem:[#allocation2 + $0x20] sm:$0xff]
    %v363 = vld [vmem:[#allocation2 + $0x28] sm:$0xff]
    %v364 = vld [vmem:[#allocation2 + $0x30] sm:$0xff]
    %v365 = vld [vmem:[#allocation2 + $0x38] sm:$0xff]
    %v366 = vld [vmem:[#allocation2 + $0x40] sm:$0xff]
    %v367 = vld [vmem:[#allocation2 + $0x48] sm:$0xff]
    %v368 = vld [vmem:[#allocation2 + $0x50] sm:$0xff]
    %v369 = vld [vmem:[#allocation2 + $0x58] sm:$0xff]
    %v370 = vld [vmem:[#allocation2 + $0x60] sm:$0xff]
    %v371 = vld [vmem:[#allocation2 + $0x68] sm:$0xff]
    %v372 = vld [vmem:[#allocation2 + $0x70] sm:$0xff]
    %v373 = vld [vmem:[#allocation2 + $0x78] sm:$0xff]
    %v374 = vld [vmem:[#allocation2 + $0x80] sm:$0xff]
    %v375 = vld [vmem:[#allocation2 + $0x88] sm:$0xff]
    %v376 = vld [vmem:[#allocation2 + $0x90] sm:$0xff]
    %v377 = vld [vmem:[#allocation2 + $0x98] sm:$0xff]
    %v378 = vld [vmem:[#allocation2 + $0xa0] sm:$0xff]
    %v379 = vld [vmem:[#allocation2 + $0xa8] sm:$0xff]
    %v380 = vld [vmem:[#allocation2 + $0xb0] sm:$0xff]
    %v381 = vld [vmem:[#allocation2 + $0xb8] sm:$0xff]
    %v382 = vld [vmem:[#allocation2 + $0xc0] sm:$0xff]
    %v383 = vld [vmem:[#allocation2 + $0xc8] sm:$0xff]
    %v384 = vld [vmem:[#allocation2 + $0xd0] sm:$0xff]
    %v385 = vld [vmem:[#allocation2 + $0xd8] sm:$0xff]
    %v386 = vld [vmem:[#allocation2 + $0xe0] sm:$0xff]
    %v387 = vld [vmem:[#allocation2 + $0xe8] sm:$0xff]
    %v388 = vld [vmem:[#allocation2 + $0xf0] sm:$0xff]
    %v389 = vld [vmem:[#allocation2 + $0xf8] sm:$0xff]
    %v390 = vld [vmem:[%s2] sm:$0x3]
    %v392 = vlaneseq
    %v393 = vshrl.u32 %v392, 7
    %v394 = vsub.s32 0, %v393
    %v395 = vrot.slane %v390, %v394
    %v396 = vlaneseq
    %v397 = vshrl.u32 %v396, 7
    %v398 = vsub.s32 1, %v397
    %v399 = vrot.slane %v390, %v398
    %v402 = vadd.f32 %v358, %v395
    %v403 = vadd.f32 %v359, %v399
    %v404 = vadd.f32 %v360, %v395
    %v405 = vadd.f32 %v361, %v399
    %v406 = vadd.f32 %v362, %v395
    %v407 = vadd.f32 %v363, %v399
    %v408 = vadd.f32 %v364, %v395
    %v409 = vadd.f32 %v365, %v399
    %v410 = vadd.f32 %v366, %v395
    %v411 = vadd.f32 %v367, %v399
    %v412 = vadd.f32 %v368, %v395
    %v413 = vadd.f32 %v369, %v399
    %v414 = vadd.f32 %v370, %v395
    %v415 = vadd.f32 %v371, %v399
    %v416 = vadd.f32 %v372, %v395
    %v417 = vadd.f32 %v373, %v399
    %v418 = vadd.f32 %v374, %v395
    %v419 = vadd.f32 %v375, %v399
    %v420 = vadd.f32 %v376, %v395
    %v421 = vadd.f32 %v377, %v399
    %v422 = vadd.f32 %v378, %v395
    %v423 = vadd.f32 %v379, %v399
    %v424 = vadd.f32 %v380, %v395
    %v425 = vadd.f32 %v381, %v399
    %v426 = vadd.f32 %v382, %v395
    %v427 = vadd.f32 %v383, %v399
    %v428 = vadd.f32 %v384, %v395
    %v429 = vadd.f32 %v385, %v399
    %v430 = vadd.f32 %v386, %v395
    %v431 = vadd.f32 %v387, %v399
    %v432 = vadd.f32 %v388, %v395
    %v433 = vadd.f32 %v389, %v399
    %434 = vst [vmem:[%s3] sm:$0xff] %v402
    %435 = vst [vmem:[%s3 + $0x8] sm:$0xff] %v403
    %436 = vst [vmem:[%s3 + $0x10] sm:$0xff] %v404
    %437 = vst [vmem:[%s3 + $0x18] sm:$0xff] %v405
    %438 = vst [vmem:[%s3 + $0x20] sm:$0xff] %v406
    %439 = vst [vmem:[%s3 + $0x28] sm:$0xff] %v407
    %440 = vst [vmem:[%s3 + $0x30] sm:$0xff] %v408
    %441 = vst [vmem:[%s3 + $0x38] sm:$0xff] %v409
    %442 = vst [vmem:[%s3 + $0x40] sm:$0xff] %v410
    %443 = vst [vmem:[%s3 + $0x48] sm:$0xff] %v411
    %444 = vst [vmem:[%s3 + $0x50] sm:$0xff] %v412
    %445 = vst [vmem:[%s3 + $0x58] sm:$0xff] %v413
    %446 = vst [vmem:[%s3 + $0x60] sm:$0xff] %v414
    %447 = vst [vmem:[%s3 + $0x68] sm:$0xff] %v415
    %448 = vst [vmem:[%s3 + $0x70] sm:$0xff] %v416
    %449 = vst [vmem:[%s3 + $0x78] sm:$0xff] %v417
    %450 = vst [vmem:[%s3 + $0x80] sm:$0xff] %v418
    %451 = vst [vmem:[%s3 + $0x88] sm:$0xff] %v419
    %452 = vst [vmem:[%s3 + $0x90] sm:$0xff] %v420
    %453 = vst [vmem:[%s3 + $0x98] sm:$0xff] %v421
    %454 = vst [vmem:[%s3 + $0xa0] sm:$0xff] %v422
    %455 = vst [vmem:[%s3 + $0xa8] sm:$0xff] %v423
    %456 = vst [vmem:[%s3 + $0xb0] sm:$0xff] %v424
    %457 = vst [vmem:[%s3 + $0xb8] sm:$0xff] %v425
    %458 = vst [vmem:[%s3 + $0xc0] sm:$0xff] %v426
    %459 = vst [vmem:[%s3 + $0xc8] sm:$0xff] %v427
    %460 = vst [vmem:[%s3 + $0xd0] sm:$0xff] %v428
    %461 = vst [vmem:[%s3 + $0xd8] sm:$0xff] %v429
    %462 = vst [vmem:[%s3 + $0xe0] sm:$0xff] %v430
    %463 = vst [vmem:[%s3 + $0xe8] sm:$0xff] %v431
    %464 = vst [vmem:[%s3 + $0xf0] sm:$0xff] %v432
    %465 = vst [vmem:[%s3 + $0xf8] sm:$0xff] %v433
  $region21: #{_lambda_.66} parent=0 // pred_fallthru
    _
  // Predicated region
  $region22: #{_lambda_.66} parent=0 // pred_check
    _
  $region23: #{_lambda_.66} parent=0 // pred_check_branch
    %467 = sbr.rel (0) target = $region25
  $region24: #{_lambda_.66} parent=0 // pred_region
    _
  $region25: #{_lambda_.66} parent=0 // pred_fallthru
    _
  // Predicated region
  $region26: #{_lambda_.66} parent=0 // pred_check
    _
  $region27: #{_lambda_.66} parent=0 // pred_check_branch
    %469 = sbr.rel (0) target = $region29
  $region28: #{_lambda_.66} parent=0 // pred_region
    _
  $region29: #{_lambda_.66} parent=0 // pred_fallthru
    _

// kernel: _lambda_.44
$region0: #{_lambda_.44}
  #allocation0 [shape = 'u32[]', space=smem, size = 0x4, offset = 0x4, fixed_abs, tag = 'smem constant byte address 0x4 - core index']
  #allocation1 [shape = 'u32[144,128]{1,0:T(1,128)}', space=vmem, size = 0x12000, scoped, tag = 'internal scratch']
  %s0 = inlined_call_operand.vmem [shape: f32[16,128], index: 0, kind: input, shape index: {}]
  %s1 = inlined_call_operand.vmem [shape: f32[1,128], index: 1, kind: input, shape index: {}]
  %s2 = inlined_call_operand.vmem [shape: f32[1,128], index: 2, kind: input, shape index: {}]
  %s3 = inlined_call_operand.vmem [shape: f32[16,128], index: 3, kind: output, shape index: {}]
  %s4 = sld [smem:[#allocation0]]
  $region22: #{_lambda_.44} parent=0
    _
  %s6 = ssub.s32 1, %s4
  %s7 = scalar_select 0, %s6, %s4
  // Predicated region
  $region2: #{_lambda_.44} parent=0 // pred_check
    _
  $region3: #{_lambda_.44} parent=0 // pred_check_branch
    %9 = sbr.rel (0) target = $region5
  $region4: #{_lambda_.44} parent=0 // pred_region
    _
  $region5: #{_lambda_.44} parent=0 // pred_fallthru
    _
  // Predicated region
  $region6: #{_lambda_.44} parent=0 // pred_check
    _
  $region7: #{_lambda_.44} parent=0 // pred_check_branch
    %11 = sbr.rel (0) target = $region9
  $region8: #{_lambda_.44} parent=0 // pred_region
    _
  $region9: #{_lambda_.44} parent=0 // pred_fallthru
    _
  // Predicated region
  $region10: #{_lambda_.44} parent=0 // pred_check
    _
  $region11: #{_lambda_.44} parent=0 // pred_check_branch
    %13 = sbr.rel (0) target = $region13
  $region12: #{_lambda_.44} parent=0 // pred_region
    _
  $region13: #{_lambda_.44} parent=0 // pred_fallthru
    _
  %v14 = vld [vmem:[%s0] sm:$0xff]
  %v15 = vld [vmem:[%s0 + $0x8] sm:$0xff]
  %16 = vadd.xlane.f32.xlu0 %v14
  %v17 = vpop.xlane.xlu0 %16
  %18 = vadd.xlane.f32.xlu0 %v15
  %v19 = vpop.xlane.xlu0 %18
  %v20 = vrcp.pop 128.0
  %v21 = vmul.f32 %v17, %v20
  %v22 = vmul.f32 %v19, %v20
  %v23 = vsub.f32 %v14, %v21
  %v24 = vsub.f32 %v15, %v22
  %v25 = vmul.f32 %v23, %v23
  %v26 = vmul.f32 %v24, %v24
  %27 = vadd.xlane.f32.xlu0 %v25
  %v28 = vpop.xlane.xlu0 %27
  %29 = vadd.xlane.f32.xlu0 %v26
  %v30 = vpop.xlane.xlu0 %29
  %v31 = vmul.f32 %v28, %v20
  %v32 = vmul.f32 %v30, %v20
  %v33 = vadd.f32 %v31, 1e-05
  %v34 = vadd.f32 %v32, 1e-05
  %v35 = vrsqrt.pop %v33
  %v36 = vrsqrt.pop %v34
  %v37 = vmul.f32 %v23, %v35
  %v38 = vmul.f32 %v24, %v36
  %v39 = vld [vmem:[%s1] sm:$0x1]
  %v41 = vlaneseq
  %v42 = vshrl.u32 %v41, 7
  %v43 = vsub.s32 0, %v42
  %v44 = vrot.slane %v39, %v43
  %v46 = vmul.f32 %v37, %v44
  %v47 = vmul.f32 %v38, %v44
  %v48 = vld [vmem:[%s2] sm:$0x1]
  %v50 = vlaneseq
  %v51 = vshrl.u32 %v50, 7
  %v52 = vsub.s32 0, %v51
  %v53 = vrot.slane %v48, %v52
  %v55 = vadd.f32 %v46, %v53
  %v56 = vadd.f32 %v47, %v53
  %57 = vst [vmem:[%s3] sm:$0xff] %v55
  %58 = vst [vmem:[%s3 + $0x8] sm:$0xff] %v56
  // Predicated region
  $region14: #{_lambda_.44} parent=0 // pred_check
    _
  $region15: #{_lambda_.44} parent=0 // pred_check_branch
    %60 = sbr.rel (0) target = $region17
  $region16: #{_lambda_.44} parent=0 // pred_region
    _
  $region17: #{_lambda_.44} parent=0 // pred_fallthru
    _
  // Predicated region
  $region18: #{_lambda_.44} parent=0 // pred_check
    _
  $region19: #{_lambda_.44} parent=0 // pred_check_branch
    %62 = sbr.rel (0) target = $region21
  $region20: #{_lambda_.44} parent=0 // pred_region
    _
  $region21: #{_lambda_.44} parent=0 // pred_fallthru
    _

// kernel: _lambda_.61
$region0: #{_lambda_.61}
  #allocation0 [shape = 'u32[]', space=smem, size = 0x4, offset = 0x4, fixed_abs, tag = 'smem constant byte address 0x4 - core index']
  #allocation1 [shape = 'u32[144,128]{1,0:T(1,128)}', space=vmem, size = 0x12000, scoped, tag = 'internal scratch']
  #allocation2 [shape = 'f32[16,384]{1,0:T(8,128)}', space=vmem, size = 0x6000, scoped, tag = 'scratch operand']
  %s0 = inlined_call_operand.vmem [shape: f32[16,128], index: 0, kind: input, shape index: {}]
  %s1 = inlined_call_operand.vmem [shape: f32[128,384], index: 1, kind: input, shape index: {}]
  %s2 = inlined_call_operand.vmem [shape: f32[1,384], index: 2, kind: input, shape index: {}]
  %s3 = inlined_call_operand.vmem [shape: f32[16,384], index: 3, kind: output, shape index: {}]
  %s4 = sld [smem:[#allocation0]]
  $region30: #{_lambda_.61} parent=0
    _
  %s6 = ssub.s32 1, %s4
  %s7 = scalar_select 0, %s6, %s4
  // Predicated region
  $region2: #{_lambda_.61} parent=0 // pred_check
    _
  $region3: #{_lambda_.61} parent=0 // pred_check_branch
    %9 = sbr.rel (0) target = $region5
  $region4: #{_lambda_.61} parent=0 // pred_region
    _
  $region5: #{_lambda_.61} parent=0 // pred_fallthru
    _
  // Predicated region
  $region6: #{_lambda_.61} parent=0 // pred_check
    _
  $region7: #{_lambda_.61} parent=0 // pred_check_branch
    %11 = sbr.rel (0) target = $region9
  $region8: #{_lambda_.61} parent=0 // pred_region
    _
  $region9: #{_lambda_.61} parent=0 // pred_fallthru
    _
  // Predicated region
  $region10: #{_lambda_.61} parent=0 // pred_check
    _
  $region11: #{_lambda_.61} parent=0 // pred_check_branch
    %13 = sbr.rel (0) target = $region13
  $region12: #{_lambda_.61} parent=0 // pred_region
    _
  $region13: #{_lambda_.61} parent=0 // pred_fallthru
    _
  %p14 = scmp.eq.s32.totalorder 0, 0
  // Predicated region
  $region14: #{_lambda_.61} parent=0 // pred_check
    %p15 = pneg %p14
  $region15: #{_lambda_.61} parent=0 // pred_check_branch
    %17 = sbr.rel (%p15) target = $region17
  $region16: #{_lambda_.61} parent=0 // pred_region
    %18 = vst [vmem:[#allocation2] sm:$0xff] 0.0
    %19 = vst [vmem:[#allocation2 + $0x8] sm:$0xff] 0.0
    %20 = vst [vmem:[#allocation2 + $0x10] sm:$0xff] 0.0
    %21 = vst [vmem:[#allocation2 + $0x18] sm:$0xff] 0.0
    %22 = vst [vmem:[#allocation2 + $0x20] sm:$0xff] 0.0
    %23 = vst [vmem:[#allocation2 + $0x28] sm:$0xff] 0.0
  $region17: #{_lambda_.61} parent=0 // pred_fallthru
    _
  %v24 = vld [vmem:[#allocation2] sm:$0xff]
  %v25 = vld [vmem:[#allocation2 + $0x8] sm:$0xff]
  %v26 = vld [vmem:[#allocation2 + $0x10] sm:$0xff]
  %v27 = vld [vmem:[#allocation2 + $0x18] sm:$0xff]
  %v28 = vld [vmem:[#allocation2 + $0x20] sm:$0xff]
  %v29 = vld [vmem:[#allocation2 + $0x28] sm:$0xff]
  %v30 = vld [vmem:[%s0] sm:$0xff]
  %v31 = vld [vmem:[%s0 + $0x8] sm:$0xff]
  %v32 = vld [vmem:[%s1] sm:$0xff]
  %v33 = vld [vmem:[%s1 + $0x8] sm:$0xff]
  %v34 = vld [vmem:[%s1 + $0x10] sm:$0xff]
  %v35 = vld [vmem:[%s1 + $0x18] sm:$0xff]
  %v36 = vld [vmem:[%s1 + $0x20] sm:$0xff]
  %v37 = vld [vmem:[%s1 + $0x28] sm:$0xff]
  %v38 = vld [vmem:[%s1 + $0x30] sm:$0xff]
  %v39 = vld [vmem:[%s1 + $0x38] sm:$0xff]
  %v40 = vld [vmem:[%s1 + $0x40] sm:$0xff]
  %v41 = vld [vmem:[%s1 + $0x48] sm:$0xff]
  %v42 = vld [vmem:[%s1 + $0x50] sm:$0xff]
  %v43 = vld [vmem:[%s1 + $0x58] sm:$0xff]
  %v44 = vld [vmem:[%s1 + $0x60] sm:$0xff]
  %v45 = vld [vmem:[%s1 + $0x68] sm:$0xff]
  %v46 = vld [vmem:[%s1 + $0x70] sm:$0xff]
  %v47 = vld [vmem:[%s1 + $0x78] sm:$0xff]
  %v48 = vld [vmem:[%s1 + $0x80] sm:$0xff]
  %v49 = vld [vmem:[%s1 + $0x88] sm:$0xff]
  %v50 = vld [vmem:[%s1 + $0x90] sm:$0xff]
  %v51 = vld [vmem:[%s1 + $0x98] sm:$0xff]
  %v52 = vld [vmem:[%s1 + $0xa0] sm:$0xff]
  %v53 = vld [vmem:[%s1 + $0xa8] sm:$0xff]
  %v54 = vld [vmem:[%s1 + $0xb0] sm:$0xff]
  %v55 = vld [vmem:[%s1 + $0xb8] sm:$0xff]
  %v56 = vld [vmem:[%s1 + $0xc0] sm:$0xff]
  %v57 = vld [vmem:[%s1 + $0xc8] sm:$0xff]
  %v58 = vld [vmem:[%s1 + $0xd0] sm:$0xff]
  %v59 = vld [vmem:[%s1 + $0xd8] sm:$0xff]
  %v60 = vld [vmem:[%s1 + $0xe0] sm:$0xff]
  %v61 = vld [vmem:[%s1 + $0xe8] sm:$0xff]
  %v62 = vld [vmem:[%s1 + $0xf0] sm:$0xff]
  %v63 = vld [vmem:[%s1 + $0xf8] sm:$0xff]
  %v64 = vld [vmem:[%s1 + $0x100] sm:$0xff]
  %v65 = vld [vmem:[%s1 + $0x108] sm:$0xff]
  %v66 = vld [vmem:[%s1 + $0x110] sm:$0xff]
  %v67 = vld [vmem:[%s1 + $0x118] sm:$0xff]
  %v68 = vld [vmem:[%s1 + $0x120] sm:$0xff]
  %v69 = vld [vmem:[%s1 + $0x128] sm:$0xff]
  %v70 = vld [vmem:[%s1 + $0x130] sm:$0xff]
  %v71 = vld [vmem:[%s1 + $0x138] sm:$0xff]
  %v72 = vld [vmem:[%s1 + $0x140] sm:$0xff]
  %v73 = vld [vmem:[%s1 + $0x148] sm:$0xff]
  %v74 = vld [vmem:[%s1 + $0x150] sm:$0xff]
  %v75 = vld [vmem:[%s1 + $0x158] sm:$0xff]
  %v76 = vld [vmem:[%s1 + $0x160] sm:$0xff]
  %v77 = vld [vmem:[%s1 + $0x168] sm:$0xff]
  %v78 = vld [vmem:[%s1 + $0x170] sm:$0xff]
  %v79 = vld [vmem:[%s1 + $0x178] sm:$0xff]
  %80 = vmatprep.subr.mxu0 %v33
  %81 = vmatpush1.msra.mxu0 %v32
  %82 = vmatprep.subr.mxu0 %v36
  %83 = vmatpush1.msra.mxu0 %v35
  %84 = vmatprep.subr.mxu0 %v39
  %85 = vmatpush1.msra.mxu0 %v38
  %86 = vmatprep.subr.mxu0 %v42
  %87 = vmatpush1.msra.mxu0 %v41
  %88 = vmatprep.subr.mxu0 %v45
  %89 = vmatpush1.msra.mxu0 %v44
  %90 = vmatprep.subr.mxu0 %v48
  %91 = vmatpush1.msra.mxu0 %v47
  %92 = vmatprep.subr.mxu0 %v51
  %93 = vmatpush1.msra.mxu0 %v50
  %94 = vmatprep.subr.mxu0 %v54
  %95 = vmatpush1.msra.mxu0 %v53
  %96 = vmatprep.subr.mxu0 %v57
  %97 = vmatpush1.msra.mxu0 %v56
  %98 = vmatprep.subr.mxu0 %v60
  %99 = vmatpush1.msra.mxu0 %v59
  %100 = vmatprep.subr.mxu0 %v63
  %101 = vmatpush1.msra.mxu0 %v62
  %102 = vmatprep.subr.mxu0 %v66
  %103 = vmatpush1.msra.mxu0 %v65
  %104 = vmatprep.subr.mxu0 %v69
  %105 = vmatpush1.msra.mxu0 %v68
  %106 = vmatprep.subr.mxu0 %v72
  %107 = vmatpush1.msra.mxu0 %v71
  %108 = vmatprep.subr.mxu0 %v75
  %109 = vmatpush1.msra.mxu0 %v74
  %110 = vmatprep.subr.mxu0 %v78
  %111 = vmatpush1.msra.mxu0 %v77
  %112 = vmatprep.subr.mxu0 0.0
  %113 = vmatpush1.msra.mxu0 0.0
  %114 = vmatprep.subr.mxu0 0.0
  %115 = vmatpush1.msra.mxu0 0.0
  %116 = vmatprep.subr.mxu0 0.0
  %117 = vmatpush1.msra.mxu0 0.0
  %118 = vmatprep.subr.mxu0 0.0
  %119 = vmatpush1.msra.mxu0 0.0
  %120 = vmatprep.subr.mxu0 0.0
  %121 = vmatpush1.msra.mxu0 0.0
  %122 = vmatprep.subr.mxu0 0.0
  %123 = vmatpush1.msra.mxu0 0.0
  %124 = vmatprep.subr.mxu0 0.0
  %125 = vmatpush1.msra.mxu0 0.0
  %126 = vmatprep.subr.mxu0 0.0
  %127 = vmatpush1.msra.mxu0 0.0
  %128 = vmatprep.subr.mxu0 0.0
  %129 = vmatpush1.msra.mxu0 0.0
  %130 = vmatprep.subr.mxu0 0.0
  %131 = vmatpush1.msra.mxu0 0.0
  %132 = vmatprep.subr.mxu0 0.0
  %133 = vmatpush1.msra.mxu0 0.0
  %134 = vmatprep.subr.mxu0 0.0
  %135 = vmatpush1.msra.mxu0 0.0
  %136 = vmatprep.subr.mxu0 0.0
  %137 = vmatpush1.msra.mxu0 0.0
  %138 = vmatprep.subr.mxu0 0.0
  %139 = vmatpush1.msra.mxu0 0.0
  %140 = vmatprep.subr.mxu0 0.0
  %141 = vmatpush1.msra.mxu0 0.0
  %142 = vmatprep.subr.mxu0 0.0
  %143 = vmatpush1.msra.mxu0 0.0
  %144 = vmatprep.mubr.f32.mxu0 0.0
  %145 = vmatmul.mubr.f32.gmra.mrb[0].mxu0 %v30
  %v146 = vpop.f32.mrb[0].mxu0
  %v147 = vadd.f32 0.0, %v146
  %v148 = vpop.f32.mrb[0].mxu0
  %v149 = vadd.f32 0.0, %v148
  %150 = vmatprep.mubr.f32.mxu0 0.0
  %151 = vmatmul.mubr.f32.gmra.mrb[0].mxu0 %v31
  %v152 = vpop.f32.mrb[0].mxu0
  %v153 = vadd.f32 0.0, %v152
  %v154 = vpop.f32.mrb[0].mxu0
  %v155 = vadd.f32 0.0, %v154
  %156 = vdwg.mxu0
  %157 = vmatprep.subr.mxu0 0.0
  %158 = vmatpush1.msra.mxu0 %v34
  %159 = vmatprep.subr.mxu0 0.0
  %160 = vmatpush1.msra.mxu0 %v37
  %161 = vmatprep.subr.mxu0 0.0
  %162 = vmatpush1.msra.mxu0 %v40
  %163 = vmatprep.subr.mxu0 0.0
  %164 = vmatpush1.msra.mxu0 %v43
  %165 = vmatprep.subr.mxu0 0.0
  %166 = vmatpush1.msra.mxu0 %v46
  %167 = vmatprep.subr.mxu0 0.0
  %168 = vmatpush1.msra.mxu0 %v49
  %169 = vmatprep.subr.mxu0 0.0
  %170 = vmatpush1.msra.mxu0 %v52
  %171 = vmatprep.subr.mxu0 0.0
  %172 = vmatpush1.msra.mxu0 %v55
  %173 = vmatprep.subr.mxu0 0.0
  %174 = vmatpush1.msra.mxu0 %v58
  %175 = vmatprep.subr.mxu0 0.0
  %176 = vmatpush1.msra.mxu0 %v61
  %177 = vmatprep.subr.mxu0 0.0
  %178 = vmatpush1.msra.mxu0 %v64
  %179 = vmatprep.subr.mxu0 0.0
  %180 = vmatpush1.msra.mxu0 %v67
  %181 = vmatprep.subr.mxu0 0.0
  %182 = vmatpush1.msra.mxu0 %v70
  %183 = vmatprep.subr.mxu0 0.0
  %184 = vmatpush1.msra.mxu0 %v73
  %185 = vmatprep.subr.mxu0 0.0
  %186 = vmatpush1.msra.mxu0 %v76
  %187 = vmatprep.subr.mxu0 0.0
  %188 = vmatpush1.msra.mxu0 %v79
  %189 = vmatprep.subr.mxu0 0.0
  %190 = vmatpush1.msra.mxu0 0.0
  %191 = vmatprep.subr.mxu0 0.0
  %192 = vmatpush1.msra.mxu0 0.0
  %193 = vmatprep.subr.mxu0 0.0
  %194 = vmatpush1.msra.mxu0 0.0
  %195 = vmatprep.subr.mxu0 0.0
  %196 = vmatpush1.msra.mxu0 0.0
  %197 = vmatprep.subr.mxu0 0.0
  %198 = vmatpush1.msra.mxu0 0.0
  %199 = vmatprep.subr.mxu0 0.0
  %200 = vmatpush1.msra.mxu0 0.0
  %201 = vmatprep.subr.mxu0 0.0
  %202 = vmatpush1.msra.mxu0 0.0
  %203 = vmatprep.subr.mxu0 0.0
  %204 = vmatpush1.msra.mxu0 0.0
  %205 = vmatprep.subr.mxu0 0.0
  %206 = vmatpush1.msra.mxu0 0.0
  %207 = vmatprep.subr.mxu0 0.0
  %208 = vmatpush1.msra.mxu0 0.0
  %209 = vmatprep.subr.mxu0 0.0
  %210 = vmatpush1.msra.mxu0 0.0
  %211 = vmatprep.subr.mxu0 0.0
  %212 = vmatpush1.msra.mxu0 0.0
  %213 = vmatprep.subr.mxu0 0.0
  %214 = vmatpush1.msra.mxu0 0.0
  %215 = vmatprep.subr.mxu0 0.0
  %216 = vmatpush1.msra.mxu0 0.0
  %217 = vmatprep.subr.mxu0 0.0
  %218 = vmatpush1.msra.mxu0 0.0
  %219 = vmatprep.subr.mxu0 0.0
  %220 = vmatpush1.msra.mxu0 0.0
  %221 = vmatprep.mubr.f32.mxu0 0.0
  %222 = vmatmul.mubr.f32.gmra.mrb[0].mxu0 %v30
  %v223 = vpop.f32.mrb[0].mxu0
  %v224 = vadd.f32 0.0, %v223
  %v225 = vpop.f32.mrb[0].mxu0
  %226 = vmatprep.mubr.f32.mxu0 0.0
  %227 = vmatmul.mubr.f32.gmra.mrb[0].mxu0 %v31
  %v228 = vpop.f32.mrb[0].mxu0
  %v229 = vadd.f32 0.0, %v228
  %v230 = vpop.f32.mrb[0].mxu0
  %231 = vdwg.mxu0
  %v232 = vadd.f32 %v24, %v147
  %v233 = vadd.f32 %v25, %v149
  %v234 = vadd.f32 %v26, %v224
  %v235 = vadd.f32 %v27, %v153
  %v236 = vadd.f32 %v28, %v155
  %v237 = vadd.f32 %v29, %v229
  %238 = vst [vmem:[#allocation2] sm:$0xff] %v232
  %239 = vst [vmem:[#allocation2 + $0x8] sm:$0xff] %v233
  %240 = vst [vmem:[#allocation2 + $0x10] sm:$0xff] %v234
  %241 = vst [vmem:[#allocation2 + $0x18] sm:$0xff] %v235
  %242 = vst [vmem:[#allocation2 + $0x20] sm:$0xff] %v236
  %243 = vst [vmem:[#allocation2 + $0x28] sm:$0xff] %v237
  // Predicated region
  $region18: #{_lambda_.61} parent=0 // pred_check
    %p244 = pneg %p14
  $region19: #{_lambda_.61} parent=0 // pred_check_branch
    %246 = sbr.rel (%p244) target = $region21
  $region20: #{_lambda_.61} parent=0 // pred_region
    %v247 = vld [vmem:[#allocation2] sm:$0xff]
    %v248 = vld [vmem:[#allocation2 + $0x8] sm:$0xff]
    %v249 = vld [vmem:[#allocation2 + $0x10] sm:$0xff]
    %v250 = vld [vmem:[#allocation2 + $0x18] sm:$0xff]
    %v251 = vld [vmem:[#allocation2 + $0x20] sm:$0xff]
    %v252 = vld [vmem:[#allocation2 + $0x28] sm:$0xff]
    %v253 = vld [vmem:[%s2] sm:$0x7]
    %v255 = vlaneseq
    %v256 = vshrl.u32 %v255, 7
    %v257 = vsub.s32 0, %v256
    %v258 = vrot.slane %v253, %v257
    %v259 = vlaneseq
    %v260 = vshrl.u32 %v259, 7
    %v261 = vsub.s32 1, %v260
    %v262 = vrot.slane %v253, %v261
    %v263 = vlaneseq
    %v264 = vshrl.u32 %v263, 7
    %v265 = vsub.s32 2, %v264
    %v266 = vrot.slane %v253, %v265
    %v270 = vadd.f32 %v247, %v258
    %v271 = vadd.f32 %v248, %v262
    %v272 = vadd.f32 %v249, %v266
    %v273 = vadd.f32 %v250, %v258
    %v274 = vadd.f32 %v251, %v262
    %v275 = vadd.f32 %v252, %v266
    %276 = vst [vmem:[%s3] sm:$0xff] %v270
    %277 = vst [vmem:[%s3 + $0x8] sm:$0xff] %v271
    %278 = vst [vmem:[%s3 + $0x10] sm:$0xff] %v272
    %279 = vst [vmem:[%s3 + $0x18] sm:$0xff] %v273
    %280 = vst [vmem:[%s3 + $0x20] sm:$0xff] %v274
    %281 = vst [vmem:[%s3 + $0x28] sm:$0xff] %v275
  $region21: #{_lambda_.61} parent=0 // pred_fallthru
    _
  // Predicated region
  $region22: #{_lambda_.61} parent=0 // pred_check
    _
  $region23: #{_lambda_.61} parent=0 // pred_check_branch
    %283 = sbr.rel (0) target = $region25
  $region24: #{_lambda_.61} parent=0 // pred_region
    _
  $region25: #{_lambda_.61} parent=0 // pred_fallthru
    _
  // Predicated region
  $region26: #{_lambda_.61} parent=0 // pred_check
    _
  $region27: #{_lambda_.61} parent=0 // pred_check_branch
    %285 = sbr.rel (0) target = $region29
  $region28: #{_lambda_.61} parent=0 // pred_region
    _
  $region29: #{_lambda_.61} parent=0 // pred_fallthru
    _

// kernel: _lambda_.62
$region0: #{_lambda_.62}
  #allocation0 [shape = 'u32[]', space=smem, size = 0x4, offset = 0x4, fixed_abs, tag = 'smem constant byte address 0x4 - core index']
  #allocation1 [shape = 'u32[144,128]{1,0:T(1,128)}', space=vmem, size = 0x12000, scoped, tag = 'internal scratch']
  #allocation2 [shape = 'f32[1,8,1]{2,1,0:T(8,128)}', space=vmem, size = 0x1000, scoped, tag = 'scratch operand']
  #allocation3 [shape = 'f32[1,8,1]{2,1,0:T(8,128)}', space=vmem, size = 0x1000, scoped, tag = 'scratch operand']
  #allocation4 [shape = 'f32[1,8,16]{2,1,0:T(8,128)}', space=vmem, size = 0x1000, scoped, tag = 'scratch operand']
  %s0 = inlined_call_operand.vmem [shape: f32[16,8,16], index: 0, kind: input, shape index: {}]
  %s1 = inlined_call_operand.vmem [shape: f32[16,8,16], index: 1, kind: input, shape index: {}]
  %s2 = inlined_call_operand.vmem [shape: f32[16,8,16], index: 2, kind: input, shape index: {}]
  %s3 = inlined_call_operand.vmem [shape: f32[16,8,16], index: 3, kind: output, shape index: {}]
  %s4 = sld [smem:[#allocation0]]
  $region53: #{_lambda_.62} parent=0
    _
  %s6 = ssub.s32 1, %s4
  %s7 = scalar_select 0, %s6, %s4
  loop: start=0, step=1, limit=18
  $region2: #{_lambda_.62} parent=0 // loop_pre_header
    _
  $region3: #{_lambda_.62} parent=0 // loop_header
    %s9 = sphi 0, %s13
    %p10 = scmp.ge.s32.totalorder %s9, 18
    %s16 = sphi 0, %s35
    %s17 = sphi 0, %s31
    %s18 = sphi 0, %s27
    %s19 = sphi 0, %s16
    %s20 = sphi 0, %s17
    %s21 = sphi 0, %s18
    %s22 = sphi 0, %s19
    %s23 = sphi 0, %s20
    %s24 = sphi 0, %s21
    %s40 = sphi 0, %s42
    %s43 = sphi 0, %s40
    %s44 = sphi 0, %s43
    %s60 = sphi 0, %s44
    %s68 = sphi 0, %s70
    %s71 = sphi 0, %s68
    %s72 = sphi 0, %s71
    %s88 = sphi 0, %s72
    %s96 = sphi 0, %s98
    %s99 = sphi 0, %s96
    %s100 = sphi 0, %s99
    %s116 = sphi 0, %s100
    %s124 = sphi 0, %s126
    %s127 = sphi 0, %s124
    %s128 = sphi 0, %s127
    %s144 = sphi 0, %s128
  $region4: #{_lambda_.62} parent=0 // loop_header_branch
    %12 = sbr.rel (%p10) target = $region8
  $region5: #{_lambda_.62} parent=0 // loop_body
    %s14 = ssub.s32 %s9, 1
    %s15 = ssub.s32 %s9, 2
    %s25 = sadd.s32 1, %s18
    %p26 = scmp.ge.s32.totalorder %s25, 1
    %s27 = scalar_select %p26, 0, %s25
    %s28 = sadd.s32 1, %s17
    %s29 = scalar_select %p26, %s28, %s17
    %p30 = scmp.ge.s32.totalorder %s29, 1
    %s31 = scalar_select %p30, 0, %s29
    %s32 = sadd.s32 1, %s16
    %s33 = scalar_select %p30, %s32, %s16
    %p34 = scmp.ge.s32.totalorder %s33, 16
    %s35 = scalar_select %p34, 0, %s33
    %s36 = ssub.s32 %s16, %s35
    %s37 = ssub.s32 %s17, %s31
    %s38 = sor.u32 %s36, %s37
    %p39 = scmp.eq.s32.totalorder %s38, 0
    %s41 = sadd.s32 %s40, 1
    %s42 = scalar_select %p39, %s40, %s41
    %p45 = pneg %p39
    %p46 = scmp.eq.s32.totalorder %s9, 15
    %p47 = por %p45, %p46
    %p48 = scmp.ne.s32.totalorder %s40, %s43
    %p49 = scmp.eq.s32.totalorder %s9, 0
    %p50 = por %p48, %p49
    %p51 = scmp.ne.s32.totalorder %s40, %s43
    %p52 = scmp.eq.s32.totalorder %s14, 15
    %p53 = por %p51, %p52
    %p54 = scmp.ne.s32.totalorder %s43, %s44
    %p55 = scmp.eq.s32.totalorder %s14, 0
    %p56 = por %p54, %p55
    %p57 = scmp.ne.s32.totalorder %s43, %s44
    %p58 = scmp.eq.s32.totalorder %s15, 15
    %p59 = por %p57, %p58
    %p61 = scmp.ne.s32.totalorder %s44, %s60
    %p62 = scmp.eq.s32.totalorder %s15, 0
    %p63 = por %p61, %p62
    %s64 = ssub.s32 %s16, %s35
    %s65 = ssub.s32 %s18, %s27
    %s66 = sor.u32 %s64, %s65
    %p67 = scmp.eq.s32.totalorder %s66, 0
    %s69 = sadd.s32 %s68, 1
    %s70 = scalar_select %p67, %s68, %s69
    %p73 = pneg %p67
    %p74 = scmp.eq.s32.totalorder %s9, 15
    %p75 = por %p73, %p74
    %p76 = scmp.ne.s32.totalorder %s68, %s71
    %p77 = scmp.eq.s32.totalorder %s9, 0
    %p78 = por %p76, %p77
    %p79 = scmp.ne.s32.totalorder %s68, %s71
    %p80 = scmp.eq.s32.totalorder %s14, 15
    %p81 = por %p79, %p80
    %p82 = scmp.ne.s32.totalorder %s71, %s72
    %p83 = scmp.eq.s32.totalorder %s14, 0
    %p84 = por %p82, %p83
    %p85 = scmp.ne.s32.totalorder %s71, %s72
    %p86 = scmp.eq.s32.totalorder %s15, 15
    %p87 = por %p85, %p86
    %p89 = scmp.ne.s32.totalorder %s72, %s88
    %p90 = scmp.eq.s32.totalorder %s15, 0
    %p91 = por %p89, %p90
    %s92 = ssub.s32 %s16, %s35
    %s93 = ssub.s32 %s18, %s27
    %s94 = sor.u32 %s92, %s93
    %p95 = scmp.eq.s32.totalorder %s94, 0
    %s97 = sadd.s32 %s96, 1
    %s98 = scalar_select %p95, %s96, %s97
    %p101 = pneg %p95
    %p102 = scmp.eq.s32.totalorder %s9, 15
    %p103 = por %p101, %p102
    %p104 = scmp.ne.s32.totalorder %s96, %s99
    %p105 = scmp.eq.s32.totalorder %s9, 0
    %p106 = por %p104, %p105
    %p107 = scmp.ne.s32.totalorder %s96, %s99
    %p108 = scmp.eq.s32.totalorder %s14, 15
    %p109 = por %p107, %p108
    %p110 = scmp.ne.s32.totalorder %s99, %s100
    %p111 = scmp.eq.s32.totalorder %s14, 0
    %p112 = por %p110, %p111
    %p113 = scmp.ne.s32.totalorder %s99, %s100
    %p114 = scmp.eq.s32.totalorder %s15, 15
    %p115 = por %p113, %p114
    %p117 = scmp.ne.s32.totalorder %s100, %s116
    %p118 = scmp.eq.s32.totalorder %s15, 0
    %p119 = por %p117, %p118
    %s120 = ssub.s32 %s16, %s35
    %s121 = ssub.s32 %s17, %s31
    %s122 = sor.u32 %s120, %s121
    %p123 = scmp.eq.s32.totalorder %s122, 0
    %s125 = sadd.s32 %s124, 1
    %s126 = scalar_select %p123, %s124, %s125
    %p129 = pneg %p123
    %p130 = scmp.eq.s32.totalorder %s9, 15
    %p131 = por %p129, %p130
    %p132 = scmp.ne.s32.totalorder %s124, %s127
    %p133 = scmp.eq.s32.totalorder %s9, 0
    %p134 = por %p132, %p133
    %p135 = scmp.ne.s32.totalorder %s124, %s127
    %p136 = scmp.eq.s32.totalorder %s14, 15
    %p137 = por %p135, %p136
    %p138 = scmp.ne.s32.totalorder %s127, %s128
    %p139 = scmp.eq.s32.totalorder %s14, 0
    %p140 = por %p138, %p139
    %p141 = scmp.ne.s32.totalorder %s127, %s128
    %p142 = scmp.eq.s32.totalorder %s15, 15
    %p143 = por %p141, %p142
    %p145 = scmp.ne.s32.totalorder %s128, %s144
    %p146 = scmp.eq.s32.totalorder %s15, 0
    %p147 = por %p145, %p146
    %p148 = scmp.le.s32.totalorder 1, %s9
    %p149 = scmp.lt.s32.totalorder %s9, 17
    %p150 = pnand %p148, %p149
    %p151 = pneg %p150
    // Predicated region
    $region9: #{_lambda_.62} parent=5 // pred_check
      _
    $region10: #{_lambda_.62} parent=5 // pred_check_branch
      %153 = sbr.rel (%p150) target = $region12
    $region11: #{_lambda_.62} parent=5 // pred_region
      %s154 = ssub.s32 %s9, 1
    $region12: #{_lambda_.62} parent=5 // pred_fallthru
      _
    %p155 = scmp.lt.s32.totalorder %s9, 16
    // Predicated region
    $region13: #{_lambda_.62} parent=5 // pred_check
      %p156 = pneg %p155
    $region14: #{_lambda_.62} parent=5 // pred_check_branch
      %158 = sbr.rel (%p156) target = $region16
    $region15: #{_lambda_.62} parent=5 // pred_region
      // Predicated region
      $region17: #{_lambda_.62} parent=15 // pred_check
        %p159 = pneg %p50
      $region18: #{_lambda_.62} parent=15 // pred_check_branch
        %161 = sbr.rel (%p159) target = $region20
      $region19: #{_lambda_.62} parent=15 // pred_region
        %p162 = scmp.lt.s32.totalorder %s16, 15
        %s163 = scalar_select %p162, %s16, 15
        %p164 = scmp.lt.s32.totalorder %s17, 0
        %s165 = scalar_select %p164, %s17, 0
        %s166 = sadd.s32 %s165, %s163
        %s167 = smul.addr %s166, 8
        %s168 = scalar_lea.vmem %s0, %s167
      $region20: #{_lambda_.62} parent=15 // pred_fallthru
        _
      // Predicated region
      $region21: #{_lambda_.62} parent=15 // pred_check
        %p169 = pneg %p78
      $region22: #{_lambda_.62} parent=15 // pred_check_branch
        %171 = sbr.rel (%p169) target = $region24
      $region23: #{_lambda_.62} parent=15 // pred_region
        %p172 = scmp.lt.s32.totalorder %s16, 15
        %s173 = scalar_select %p172, %s16, 15
        %p174 = scmp.lt.s32.totalorder %s18, 0
        %s175 = scalar_select %p174, %s18, 0
        %s176 = sadd.s32 %s175, %s173
        %s177 = smul.addr %s176, 8
        %s178 = scalar_lea.vmem %s1, %s177
      $region24: #{_lambda_.62} parent=15 // pred_fallthru
        _
      // Predicated region
      $region25: #{_lambda_.62} parent=15 // pred_check
        %p179 = pneg %p106
      $region26: #{_lambda_.62} parent=15 // pred_check_branch
        %181 = sbr.rel (%p179) target = $region28
      $region27: #{_lambda_.62} parent=15 // pred_region
        %p182 = scmp.lt.s32.totalorder %s16, 15
        %s183 = scalar_select %p182, %s16, 15
        %p184 = scmp.lt.s32.totalorder %s18, 0
        %s185 = scalar_select %p184, %s18, 0
        %s186 = sadd.s32 %s185, %s183
        %s187 = smul.addr %s186, 8
        %s188 = scalar_lea.vmem %s2, %s187
      $region28: #{_lambda_.62} parent=15 // pred_fallthru
        _
    $region16: #{_lambda_.62} parent=5 // pred_fallthru
      _
    %p189 = scmp.le.s32.totalorder 1, %s9
    %p190 = scmp.lt.s32.totalorder %s9, 17
    %p191 = pnand %p189, %p190
    %p192 = pneg %p191
    // Predicated region
    $region29: #{_lambda_.62} parent=5 // pred_check
      _
    $region30: #{_lambda_.62} parent=5 // pred_check_branch
      %194 = sbr.rel (%p191) target = $region32
    $region31: #{_lambda_.62} parent=5 // pred_region
      %s195 = ssub.s32 %s9, 1
      %p196 = scmp.lt.s32.totalorder %s19, 15
      %s197 = scalar_select %p196, %s19, 15
      %p198 = scmp.lt.s32.totalorder %s20, 0
      %s199 = scalar_select %p198, %s20, 0
      %s200 = sadd.s32 %s199, %s197
      %s201 = smul.addr %s200, 8
      %s202 = scalar_lea.vmem %s0, %s201
      %p203 = pneg %p56
      %p204 = pneg %p53
      %p205 = scmp.lt.s32.totalorder %s19, 15
      %s206 = scalar_select %p205, %s19, 15
      %p207 = scmp.lt.s32.totalorder %s21, 0
      %s208 = scalar_select %p207, %s21, 0
      %s209 = sadd.s32 %s208, %s206
      %s210 = smul.addr %s209, 8
      %s211 = scalar_lea.vmem %s1, %s210
      %p212 = pneg %p84
      %p213 = pneg %p81
      %p214 = scmp.lt.s32.totalorder %s19, 15
      %s215 = scalar_select %p214, %s19, 15
      %p216 = scmp.lt.s32.totalorder %s21, 0
      %s217 = scalar_select %p216, %s21, 0
      %s218 = sadd.s32 %s217, %s215
      %s219 = smul.addr %s218, 8
      %s220 = scalar_lea.vmem %s2, %s219
      %p221 = pneg %p112
      %p222 = pneg %p109
      %p223 = pneg %p140
      %p224 = pneg %p137
      %p225 = scmp.lt.s32.totalorder %s19, 15
      %s226 = scalar_select %p225, %s19, 15
      %p227 = scmp.lt.s32.totalorder %s20, 0
      %s228 = scalar_select %p227, %s20, 0
      %s229 = sadd.s32 %s228, %s226
      %s230 = smul.addr %s229, 8
      %s231 = scalar_lea.vmem %s3, %s230
      %p232 = scmp.lt.s32.totalorder %s19, 15
      %s233 = scalar_select %p232, %s19, 15
      %p234 = scmp.lt.s32.totalorder %s20, 0
      %s235 = scalar_select %p234, %s20, 0
      %s236 = sadd.s32 %s235, %s233
      %s237 = smul.addr %s236, 8
      %s238 = scalar_lea.vmem %s0, %s237
      %p239 = scmp.lt.s32.totalorder %s19, 15
      %s240 = scalar_select %p239, %s19, 15
      %p241 = scmp.lt.s32.totalorder %s21, 0
      %s242 = scalar_select %p241, %s21, 0
      %s243 = sadd.s32 %s242, %s240
      %s244 = smul.addr %s243, 8
      %s245 = scalar_lea.vmem %s1, %s244
      %p246 = scmp.lt.s32.totalorder %s19, 15
      %s247 = scalar_select %p246, %s19, 15
      %p248 = scmp.lt.s32.totalorder %s21, 0
      %s249 = scalar_select %p248, %s21, 0
      %s250 = sadd.s32 %s249, %s247
      %s251 = smul.addr %s250, 8
      %s252 = scalar_lea.vmem %s2, %s251
      %p253 = scmp.lt.s32.totalorder %s19, 15
      %s254 = scalar_select %p253, %s19, 15
      %p255 = scmp.lt.s32.totalorder %s20, 0
      %s256 = scalar_select %p255, %s20, 0
      %s257 = sadd.s32 %s256, %s254
      %s258 = smul.addr %s257, 8
      %s259 = scalar_lea.vmem %s3, %s258
      %p260 = scmp.eq.s32.totalorder %s21, 0
      // Predicated region
      $region33: #{_lambda_.62} parent=31 // pred_check
        %p261 = pneg %p260
      $region34: #{_lambda_.62} parent=31 // pred_check_branch
        %263 = sbr.rel (%p261) target = $region36
      $region35: #{_lambda_.62} parent=31 // pred_region
        %vm264 = vcmask 7168
        %265 = vst.msk [vmem:[#allocation2] sm:$0xff] %vm264, -inf
        %266 = vst.msk [vmem:[#allocation3] sm:$0xff] %vm264, 0.0
        %vm267 = vcmask 130048
        %268 = vst.msk [vmem:[#allocation4] sm:$0xff] %vm267, 0.0
      $region36: #{_lambda_.62} parent=31 // pred_fallthru
        _
      %v269 = vld [vmem:[%s238] sm:$0xff]
      %v270 = vld [vmem:[%s245] sm:$0xff]
      %v271 = vld [vmem:[%s252] sm:$0xff]
      %vm272 = vcmask 130048
      %v274 = vsel %vm272, %v269, 0
      %v277 = vsel %vm272, %v270, 0
      %279 = vmatprep.subr.mxu0 0.0
      %280 = vmatpush1.xpose.msra.mxu0 %v277
      %281 = vmatprep.subr.mxu0 0.0
      %282 = vmatpush1.xpose.msra.mxu0 0.0
      %283 = vmatprep.subr.mxu0 0.0
      %284 = vmatpush1.xpose.msra.mxu0 0.0
      %285 = vmatprep.subr.mxu0 0.0
      %286 = vmatpush1.xpose.msra.mxu0 0.0
      %287 = vmatprep.subr.mxu0 0.0
      %288 = vmatpush1.xpose.msra.mxu0 0.0
      %289 = vmatprep.subr.mxu0 0.0
      %290 = vmatpush1.xpose.msra.mxu0 0.0
      %291 = vmatprep.subr.mxu0 0.0
      %292 = vmatpush1.xpose.msra.mxu0 0.0
      %293 = vmatprep.subr.mxu0 0.0
      %294 = vmatpush1.xpose.msra.mxu0 0.0
      %295 = vmatprep.subr.mxu0 0.0
      %296 = vmatpush1.xpose.msra.mxu0 0.0
      %297 = vmatprep.subr.mxu0 0.0
      %298 = vmatpush1.xpose.msra.mxu0 0.0
      %299 = vmatprep.subr.mxu0 0.0
      %300 = vmatpush1.xpose.msra.mxu0 0.0
      %301 = vmatprep.subr.mxu0 0.0
      %302 = vmatpush1.xpose.msra.mxu0 0.0
      %303 = vmatprep.subr.mxu0 0.0
      %304 = vmatpush1.xpose.msra.mxu0 0.0
      %305 = vmatprep.subr.mxu0 0.0
      %306 = vmatpush1.xpose.msra.mxu0 0.0
      %307 = vmatprep.subr.mxu0 0.0
      %308 = vmatpush1.xpose.msra.mxu0 0.0
      %309 = vmatprep.subr.mxu0 0.0
      %310 = vmatpush1.xpose.msra.mxu0 0.0
      %311 = vmatprep.subr.mxu0 0.0
      %312 = vmatpush1.xpose.msra.mxu0 0.0
      %313 = vmatprep.subr.mxu0 0.0
      %314 = vmatpush1.xpose.msra.mxu0 0.0
      %315 = vmatprep.subr.mxu0 0.0
      %316 = vmatpush1.xpose.msra.mxu0 0.0
      %317 = vmatprep.subr.mxu0 0.0
      %318 = vmatpush1.xpose.msra.mxu0 0.0
      %319 = vmatprep.subr.mxu0 0.0
      %320 = vmatpush1.xpose.msra.mxu0 0.0
      %321 = vmatprep.subr.mxu0 0.0
      %322 = vmatpush1.xpose.msra.mxu0 0.0
      %323 = vmatprep.subr.mxu0 0.0
      %324 = vmatpush1.xpose.msra.mxu0 0.0
      %325 = vmatprep.subr.mxu0 0.0
      %326 = vmatpush1.xpose.msra.mxu0 0.0
      %327 = vmatprep.subr.mxu0 0.0
      %328 = vmatpush1.xpose.msra.mxu0 0.0
      %329 = vmatprep.subr.mxu0 0.0
      %330 = vmatpush1.xpose.msra.mxu0 0.0
      %331 = vmatprep.subr.mxu0 0.0
      %332 = vmatpush1.xpose.msra.mxu0 0.0
      %333 = vmatprep.subr.mxu0 0.0
      %334 = vmatpush1.xpose.msra.mxu0 0.0
      %335 = vmatprep.subr.mxu0 0.0
      %336 = vmatpush1.xpose.msra.mxu0 0.0
      %337 = vmatprep.subr.mxu0 0.0
      %338 = vmatpush1.xpose.msra.mxu0 0.0
      %339 = vmatprep.subr.mxu0 0.0
      %340 = vmatpush1.xpose.msra.mxu0 0.0
      %341 = vmatprep.subr.mxu0 0.0
      %342 = vmatpush1.xpose.msra.mxu0 0.0
      %343 = vmatprep.mubr.f32.mxu0 0.0
      %344 = vmatmul.mubr.f32.gmra.mrb[0].mxu0 %v274
      %v345 = vpop.f32.mrb[0].mxu0
      %v346 = vadd.f32 0.0, %v345
      %v347 = vpop.f32.mrb[0].mxu0
      %348 = vdwg.mxu0
      %v349 = vmul.f32 %v346, 0.25
      %v350 = vld [vmem:[#allocation2] sm:$0xff]
      %vm351 = vcmask 64512
      %v352 = vsel %vm351, %v349, -inf
      %353 = vmax.xlane.f32.xlu0 %v352
      %v354 = vpop.xlane.xlu0 %353
      %v355 = vmax.f32 %v350, %v354
      %v356 = vsub.f32 %v350, %v355
      %v357 = vmul.f32 %v356, 1.442695
      %v358 = vpow.pop %v357
      %360 = vset.pattern.permute.xlu0 0
      %361 = vperm.xlu0 %360, %v355
      %v362 = vpop.permute.xlu0 %361
      %v364 = vsub.f32 %v349, %v362
      %v365 = vmul.f32 %v364, 1.442695
      %v366 = vpow.pop %v365
      %v367 = vld [vmem:[#allocation3] sm:$0xff]
      %v368 = vmul.f32 %v358, %v367
      %v369 = vsel %vm351, %v366, 0.0
      %370 = vadd.xlane.f32.xlu0 %v369
      %v371 = vpop.xlane.xlu0 %370
      %v372 = vadd.f32 %v368, %v371
      %vm373 = vcmask 7168
      %374 = vst.msk [vmem:[#allocation3] sm:$0xff] %vm373, %v372
      %v375 = vld [vmem:[#allocation4] sm:$0xff]
      %377 = vset.pattern.permute.xlu0 0
      %378 = vperm.xlu0 %377, %v358
      %v379 = vpop.permute.xlu0 %378
      %v381 = vmul.f32 %v379, %v375
      %v383 = vsel %vm351, %v366, 0
      %385 = vmatprep.subr.mxu0 0.0
      %386 = vmatpush1.msra.mxu0 %v271
      %387 = vmatprep.subr.mxu0 0.0
      %388 = vmatpush1.msra.mxu0 0.0
      %389 = vmatprep.subr.mxu0 0.0
      %390 = vmatpush1.msra.mxu0 0.0
      %391 = vmatprep.subr.mxu0 0.0
      %392 = vmatpush1.msra.mxu0 0.0
      %393 = vmatprep.subr.mxu0 0.0
      %394 = vmatpush1.msra.mxu0 0.0
      %395 = vmatprep.subr.mxu0 0.0
      %396 = vmatpush1.msra.mxu0 0.0
      %397 = vmatprep.subr.mxu0 0.0
      %398 = vmatpush1.msra.mxu0 0.0
      %399 = vmatprep.subr.mxu0 0.0
      %400 = vmatpush1.msra.mxu0 0.0
      %401 = vmatprep.subr.mxu0 0.0
      %402 = vmatpush1.msra.mxu0 0.0
      %403 = vmatprep.subr.mxu0 0.0
      %404 = vmatpush1.msra.mxu0 0.0
      %405 = vmatprep.subr.mxu0 0.0
      %406 = vmatpush1.msra.mxu0 0.0
      %407 = vmatprep.subr.mxu0 0.0
      %408 = vmatpush1.msra.mxu0 0.0
      %409 = vmatprep.subr.mxu0 0.0
      %410 = vmatpush1.msra.mxu0 0.0
      %411 = vmatprep.subr.mxu0 0.0
      %412 = vmatpush1.msra.mxu0 0.0
      %413 = vmatprep.subr.mxu0 0.0
      %414 = vmatpush1.msra.mxu0 0.0
      %415 = vmatprep.subr.mxu0 0.0
      %416 = vmatpush1.msra.mxu0 0.0
      %417 = vmatprep.subr.mxu0 0.0
      %418 = vmatpush1.msra.mxu0 0.0
      %419 = vmatprep.subr.mxu0 0.0
      %420 = vmatpush1.msra.mxu0 0.0
      %421 = vmatprep.subr.mxu0 0.0
      %422 = vmatpush1.msra.mxu0 0.0
      %423 = vmatprep.subr.mxu0 0.0
      %424 = vmatpush1.msra.mxu0 0.0
      %425 = vmatprep.subr.mxu0 0.0
      %426 = vmatpush1.msra.mxu0 0.0
      %427 = vmatprep.subr.mxu0 0.0
      %428 = vmatpush1.msra.mxu0 0.0
      %429 = vmatprep.subr.mxu0 0.0
      %430 = vmatpush1.msra.mxu0 0.0
      %431 = vmatprep.subr.mxu0 0.0
      %432 = vmatpush1.msra.mxu0 0.0
      %433 = vmatprep.subr.mxu0 0.0
      %434 = vmatpush1.msra.mxu0 0.0
      %435 = vmatprep.subr.mxu0 0.0
      %436 = vmatpush1.msra.mxu0 0.0
      %437 = vmatprep.subr.mxu0 0.0
      %438 = vmatpush1.msra.mxu0 0.0
      %439 = vmatprep.subr.mxu0 0.0
      %440 = vmatpush1.msra.mxu0 0.0
      %441 = vmatprep.subr.mxu0 0.0
      %442 = vmatpush1.msra.mxu0 0.0
      %443 = vmatprep.subr.mxu0 0.0
      %444 = vmatpush1.msra.mxu0 0.0
      %445 = vmatprep.subr.mxu0 0.0
      %446 = vmatpush1.msra.mxu0 0.0
      %447 = vmatprep.subr.mxu0 0.0
      %448 = vmatpush1.msra.mxu0 0.0
      %449 = vmatprep.mubr.f32.mxu0 0.0
      %450 = vmatmul.mubr.f32.gmra.mrb[0].mxu0 %v383
      %v451 = vpop.f32.mrb[0].mxu0
      %v452 = vadd.f32 0.0, %v451
      %v453 = vpop.f32.mrb[0].mxu0
      %454 = vdwg.mxu0
      %v455 = vadd.f32 %v381, %v452
      %456 = vst.msk [vmem:[#allocation4] sm:$0xff] %vm272, %v455
      %457 = vst.msk [vmem:[#allocation2] sm:$0xff] %vm373, %v355
      // Predicated region
      $region37: #{_lambda_.62} parent=31 // pred_check
        %p458 = pneg %p260
      $region38: #{_lambda_.62} parent=31 // pred_check_branch
        %460 = sbr.rel (%p458) target = $region40
      $region39: #{_lambda_.62} parent=31 // pred_region
        %v461 = vld [vmem:[#allocation4] sm:$0xff]
        %v462 = vld [vmem:[#allocation3] sm:$0xff]
        %v463 = vrcp.pop %v462
        %465 = vset.pattern.permute.xlu0 0
        %466 = vperm.xlu0 %465, %v463
        %v467 = vpop.permute.xlu0 %466
        %v469 = vmul.f32 %v461, %v467
        %470 = vst.msk [vmem:[%s259] sm:$0xff] %vm272, %v469
      $region40: #{_lambda_.62} parent=31 // pred_fallthru
        _
      %p471 = scmp.lt.s32.totalorder %s19, 15
      %s472 = scalar_select %p471, %s19, 15
      %p473 = scmp.lt.s32.totalorder %s20, 0
      %s474 = scalar_select %p473, %s20, 0
      %s475 = sadd.s32 %s474, %s472
      %s476 = smul.addr %s475, 8
      %s477 = scalar_lea.vmem %s3, %s476
      // Predicated region
      $region41: #{_lambda_.62} parent=31 // pred_check
        %p478 = pneg %p137
      $region42: #{_lambda_.62} parent=31 // pred_check_branch
        %480 = sbr.rel (%p478) target = $region44
      $region43: #{_lambda_.62} parent=31 // pred_region
        _
      $region44: #{_lambda_.62} parent=31 // pred_fallthru
        _
    $region32: #{_lambda_.62} parent=5 // pred_fallthru
      _
    %p481 = scmp.le.s32.totalorder 2, %s9
    // Predicated region
    $region45: #{_lambda_.62} parent=5 // pred_check
      %p482 = pneg %p481
    $region46: #{_lambda_.62} parent=5 // pred_check_branch
      %484 = sbr.rel (%p482) target = $region48
    $region47: #{_lambda_.62} parent=5 // pred_region
      %s485 = ssub.s32 %s9, 2
      // Predicated region
      $region49: #{_lambda_.62} parent=47 // pred_check
        %p486 = pneg %p143
      $region50: #{_lambda_.62} parent=47 // pred_check_branch
        %488 = sbr.rel (%p486) target = $region52
      $region51: #{_lambda_.62} parent=47 // pred_region
        %p489 = scmp.lt.s32.totalorder %s22, 15
        %s490 = scalar_select %p489, %s22, 15
        %p491 = scmp.lt.s32.totalorder %s23, 0
        %s492 = scalar_select %p491, %s23, 0
        %s493 = sadd.s32 %s492, %s490
        %s494 = smul.addr %s493, 8
        %s495 = scalar_lea.vmem %s3, %s494
      $region52: #{_lambda_.62} parent=47 // pred_fallthru
        _
    $region48: #{_lambda_.62} parent=5 // pred_fallthru
      _
  $region6: #{_lambda_.62} parent=0 // loop_footer
    %s13 = sadd.s32 1, %s9
  $region7: #{_lambda_.62} parent=0 // loop_footer_branch
    %8 = sbr.rel target = $region3
  $region8: #{_lambda_.62} parent=0 // loop_exit
    _

// kernel: _lambda_.64
$region0: #{_lambda_.64}
  #allocation0 [shape = 'u32[]', space=smem, size = 0x4, offset = 0x4, fixed_abs, tag = 'smem constant byte address 0x4 - core index']
  #allocation1 [shape = 'u32[144,128]{1,0:T(1,128)}', space=vmem, size = 0x12000, scoped, tag = 'internal scratch']
  %s0 = inlined_call_operand.vmem [shape: f32[16,128], index: 0, kind: input, shape index: {}]
  %s1 = inlined_call_operand.vmem [shape: f32[16,128], index: 1, kind: input, shape index: {}]
  %s2 = inlined_call_operand.vmem [shape: f32[1,128], index: 2, kind: input, shape index: {}]
  %s3 = inlined_call_operand.vmem [shape: f32[1,128], index: 3, kind: input, shape index: {}]
  %s4 = inlined_call_operand.vmem [shape: f32[16,128], index: 4, kind: output, shape index: {}]
  %s5 = sld [smem:[#allocation0]]
  $region26: #{_lambda_.64} parent=0
    _
  %s7 = ssub.s32 1, %s5
  %s8 = scalar_select 0, %s7, %s5
  // Predicated region
  $region2: #{_lambda_.64} parent=0 // pred_check
    _
  $region3: #{_lambda_.64} parent=0 // pred_check_branch
    %10 = sbr.rel (0) target = $region5
  $region4: #{_lambda_.64} parent=0 // pred_region
    _
  $region5: #{_lambda_.64} parent=0 // pred_fallthru
    _
  // Predicated region
  $region6: #{_lambda_.64} parent=0 // pred_check
    _
  $region7: #{_lambda_.64} parent=0 // pred_check_branch
    %12 = sbr.rel (0) target = $region9
  $region8: #{_lambda_.64} parent=0 // pred_region
    _
  $region9: #{_lambda_.64} parent=0 // pred_fallthru
    _
  // Predicated region
  $region10: #{_lambda_.64} parent=0 // pred_check
    _
  $region11: #{_lambda_.64} parent=0 // pred_check_branch
    %14 = sbr.rel (0) target = $region13
  $region12: #{_lambda_.64} parent=0 // pred_region
    _
  $region13: #{_lambda_.64} parent=0 // pred_fallthru
    _
  // Predicated region
  $region14: #{_lambda_.64} parent=0 // pred_check
    _
  $region15: #{_lambda_.64} parent=0 // pred_check_branch
    %16 = sbr.rel (0) target = $region17
  $region16: #{_lambda_.64} parent=0 // pred_region
    _
  $region17: #{_lambda_.64} parent=0 // pred_fallthru
    _
  %v17 = vld [vmem:[%s0] sm:$0xff]
  %v18 = vld [vmem:[%s0 + $0x8] sm:$0xff]
  %v19 = vld [vmem:[%s1] sm:$0xff]
  %v20 = vld [vmem:[%s1 + $0x8] sm:$0xff]
  %v21 = vadd.f32 %v17, %v19
  %v22 = vadd.f32 %v18, %v20
  %23 = vadd.xlane.f32.xlu0 %v21
  %v24 = vpop.xlane.xlu0 %23
  %25 = vadd.xlane.f32.xlu0 %v22
  %v26 = vpop.xlane.xlu0 %25
  %v27 = vrcp.pop 128.0
  %v28 = vmul.f32 %v24, %v27
  %v29 = vmul.f32 %v26, %v27
  %v30 = vsub.f32 %v21, %v28
  %v31 = vsub.f32 %v22, %v29
  %v32 = vmul.f32 %v30, %v30
  %v33 = vmul.f32 %v31, %v31
  %34 = vadd.xlane.f32.xlu0 %v32
  %v35 = vpop.xlane.xlu0 %34
  %36 = vadd.xlane.f32.xlu0 %v33
  %v37 = vpop.xlane.xlu0 %36
  %v38 = vmul.f32 %v35, %v27
  %v39 = vmul.f32 %v37, %v27
  %v40 = vadd.f32 %v38, 1e-05
  %v41 = vadd.f32 %v39, 1e-05
  %v42 = vrsqrt.pop %v40
  %v43 = vrsqrt.pop %v41
  %v44 = vmul.f32 %v30, %v42
  %v45 = vmul.f32 %v31, %v43
  %v46 = vld [vmem:[%s2] sm:$0x1]
  %v48 = vlaneseq
  %v49 = vshrl.u32 %v48, 7
  %v50 = vsub.s32 0, %v49
  %v51 = vrot.slane %v46, %v50
  %v53 = vmul.f32 %v44, %v51
  %v54 = vmul.f32 %v45, %v51
  %v55 = vld [vmem:[%s3] sm:$0x1]
  %v57 = vlaneseq
  %v58 = vshrl.u32 %v57, 7
  %v59 = vsub.s32 0, %v58
  %v60 = vrot.slane %v55, %v59
  %v62 = vadd.f32 %v53, %v60
  %v63 = vadd.f32 %v54, %v60
  %64 = vst [vmem:[%s4] sm:$0xff] %v62
  %65 = vst [vmem:[%s4 + $0x8] sm:$0xff] %v63
  // Predicated region
  $region18: #{_lambda_.64} parent=0 // pred_check
    _
  $region19: #{_lambda_.64} parent=0 // pred_check_branch
    %67 = sbr.rel (0) target = $region21
  $region20: #{_lambda_.64} parent=0 // pred_region
    _
  $region21: #{_lambda_.64} parent=0 // pred_fallthru
    _
  // Predicated region
  $region22: #{_lambda_.64} parent=0 // pred_check
    _
  $region23: #{_lambda_.64} parent=0 // pred_check_branch
    %69 = sbr.rel (0) target = $region25
  $region24: #{_lambda_.64} parent=0 // pred_region
    _
  $region25: #{_lambda_.64} parent=0 // pred_fallthru
    _

// kernel: _lambda_.67
$region0: #{_lambda_.67}
  #allocation0 [shape = 'u32[]', space=smem, size = 0x4, offset = 0x4, fixed_abs, tag = 'smem constant byte address 0x4 - core index']
  #allocation1 [shape = 'u32[144,128]{1,0:T(1,128)}', space=vmem, size = 0x12000, scoped, tag = 'internal scratch']
  #allocation2 [shape = 'f32[1,8,1]{2,1,0:T(8,128)}', space=vmem, size = 0x1000, scoped, tag = 'scratch operand']
  #allocation3 [shape = 'f32[1,8,1]{2,1,0:T(8,128)}', space=vmem, size = 0x1000, scoped, tag = 'scratch operand']
  #allocation4 [shape = 'f32[1,8,16]{2,1,0:T(8,128)}', space=vmem, size = 0x1000, scoped, tag = 'scratch operand']
  %s0 = inlined_call_operand.vmem [shape: f32[16,8,16], index: 0, kind: input, shape index: {}]
  %s1 = inlined_call_operand.vmem [shape: f32[16,64,16], index: 1, kind: input, shape index: {}]
  %s2 = inlined_call_operand.vmem [shape: f32[16,64,16], index: 2, kind: input, shape index: {}]
  %s3 = inlined_call_operand.vmem [shape: f32[16,8,16], index: 3, kind: output, shape index: {}]
  %s4 = sld [smem:[#allocation0]]
  $region53: #{_lambda_.67} parent=0
    _
  %s6 = ssub.s32 1, %s4
  %s7 = scalar_select 0, %s6, %s4
  loop: start=0, step=1, limit=18
  $region2: #{_lambda_.67} parent=0 // loop_pre_header
    _
  $region3: #{_lambda_.67} parent=0 // loop_header
    %s9 = sphi 0, %s13
    %p10 = scmp.ge.s32.totalorder %s9, 18
    %s16 = sphi 0, %s35
    %s17 = sphi 0, %s31
    %s18 = sphi 0, %s27
    %s19 = sphi 0, %s16
    %s20 = sphi 0, %s17
    %s21 = sphi 0, %s18
    %s22 = sphi 0, %s19
    %s23 = sphi 0, %s20
    %s24 = sphi 0, %s21
    %s40 = sphi 0, %s42
    %s43 = sphi 0, %s40
    %s44 = sphi 0, %s43
    %s60 = sphi 0, %s44
    %s68 = sphi 0, %s70
    %s71 = sphi 0, %s68
    %s72 = sphi 0, %s71
    %s88 = sphi 0, %s72
    %s96 = sphi 0, %s98
    %s99 = sphi 0, %s96
    %s100 = sphi 0, %s99
    %s116 = sphi 0, %s100
    %s124 = sphi 0, %s126
    %s127 = sphi 0, %s124
    %s128 = sphi 0, %s127
    %s144 = sphi 0, %s128
  $region4: #{_lambda_.67} parent=0 // loop_header_branch
    %12 = sbr.rel (%p10) target = $region8
  $region5: #{_lambda_.67} parent=0 // loop_body
    %s14 = ssub.s32 %s9, 1
    %s15 = ssub.s32 %s9, 2
    %s25 = sadd.s32 1, %s18
    %p26 = scmp.ge.s32.totalorder %s25, 1
    %s27 = scalar_select %p26, 0, %s25
    %s28 = sadd.s32 1, %s17
    %s29 = scalar_select %p26, %s28, %s17
    %p30 = scmp.ge.s32.totalorder %s29, 1
    %s31 = scalar_select %p30, 0, %s29
    %s32 = sadd.s32 1, %s16
    %s33 = scalar_select %p30, %s32, %s16
    %p34 = scmp.ge.s32.totalorder %s33, 16
    %s35 = scalar_select %p34, 0, %s33
    %s36 = ssub.s32 %s16, %s35
    %s37 = ssub.s32 %s17, %s31
    %s38 = sor.u32 %s36, %s37
    %p39 = scmp.eq.s32.totalorder %s38, 0
    %s41 = sadd.s32 %s40, 1
    %s42 = scalar_select %p39, %s40, %s41
    %p45 = pneg %p39
    %p46 = scmp.eq.s32.totalorder %s9, 15
    %p47 = por %p45, %p46
    %p48 = scmp.ne.s32.totalorder %s40, %s43
    %p49 = scmp.eq.s32.totalorder %s9, 0
    %p50 = por %p48, %p49
    %p51 = scmp.ne.s32.totalorder %s40, %s43
    %p52 = scmp.eq.s32.totalorder %s14, 15
    %p53 = por %p51, %p52
    %p54 = scmp.ne.s32.totalorder %s43, %s44
    %p55 = scmp.eq.s32.totalorder %s14, 0
    %p56 = por %p54, %p55
    %p57 = scmp.ne.s32.totalorder %s43, %s44
    %p58 = scmp.eq.s32.totalorder %s15, 15
    %p59 = por %p57, %p58
    %p61 = scmp.ne.s32.totalorder %s44, %s60
    %p62 = scmp.eq.s32.totalorder %s15, 0
    %p63 = por %p61, %p62
    %s64 = ssub.s32 %s16, %s35
    %s65 = ssub.s32 %s18, %s27
    %s66 = sor.u32 %s64, %s65
    %p67 = scmp.eq.s32.totalorder %s66, 0
    %s69 = sadd.s32 %s68, 1
    %s70 = scalar_select %p67, %s68, %s69
    %p73 = pneg %p67
    %p74 = scmp.eq.s32.totalorder %s9, 15
    %p75 = por %p73, %p74
    %p76 = scmp.ne.s32.totalorder %s68, %s71
    %p77 = scmp.eq.s32.totalorder %s9, 0
    %p78 = por %p76, %p77
    %p79 = scmp.ne.s32.totalorder %s68, %s71
    %p80 = scmp.eq.s32.totalorder %s14, 15
    %p81 = por %p79, %p80
    %p82 = scmp.ne.s32.totalorder %s71, %s72
    %p83 = scmp.eq.s32.totalorder %s14, 0
    %p84 = por %p82, %p83
    %p85 = scmp.ne.s32.totalorder %s71, %s72
    %p86 = scmp.eq.s32.totalorder %s15, 15
    %p87 = por %p85, %p86
    %p89 = scmp.ne.s32.totalorder %s72, %s88
    %p90 = scmp.eq.s32.totalorder %s15, 0
    %p91 = por %p89, %p90
    %s92 = ssub.s32 %s16, %s35
    %s93 = ssub.s32 %s18, %s27
    %s94 = sor.u32 %s92, %s93
    %p95 = scmp.eq.s32.totalorder %s94, 0
    %s97 = sadd.s32 %s96, 1
    %s98 = scalar_select %p95, %s96, %s97
    %p101 = pneg %p95
    %p102 = scmp.eq.s32.totalorder %s9, 15
    %p103 = por %p101, %p102
    %p104 = scmp.ne.s32.totalorder %s96, %s99
    %p105 = scmp.eq.s32.totalorder %s9, 0
    %p106 = por %p104, %p105
    %p107 = scmp.ne.s32.totalorder %s96, %s99
    %p108 = scmp.eq.s32.totalorder %s14, 15
    %p109 = por %p107, %p108
    %p110 = scmp.ne.s32.totalorder %s99, %s100
    %p111 = scmp.eq.s32.totalorder %s14, 0
    %p112 = por %p110, %p111
    %p113 = scmp.ne.s32.totalorder %s99, %s100
    %p114 = scmp.eq.s32.totalorder %s15, 15
    %p115 = por %p113, %p114
    %p117 = scmp.ne.s32.totalorder %s100, %s116
    %p118 = scmp.eq.s32.totalorder %s15, 0
    %p119 = por %p117, %p118
    %s120 = ssub.s32 %s16, %s35
    %s121 = ssub.s32 %s17, %s31
    %s122 = sor.u32 %s120, %s121
    %p123 = scmp.eq.s32.totalorder %s122, 0
    %s125 = sadd.s32 %s124, 1
    %s126 = scalar_select %p123, %s124, %s125
    %p129 = pneg %p123
    %p130 = scmp.eq.s32.totalorder %s9, 15
    %p131 = por %p129, %p130
    %p132 = scmp.ne.s32.totalorder %s124, %s127
    %p133 = scmp.eq.s32.totalorder %s9, 0
    %p134 = por %p132, %p133
    %p135 = scmp.ne.s32.totalorder %s124, %s127
    %p136 = scmp.eq.s32.totalorder %s14, 15
    %p137 = por %p135, %p136
    %p138 = scmp.ne.s32.totalorder %s127, %s128
    %p139 = scmp.eq.s32.totalorder %s14, 0
    %p140 = por %p138, %p139
    %p141 = scmp.ne.s32.totalorder %s127, %s128
    %p142 = scmp.eq.s32.totalorder %s15, 15
    %p143 = por %p141, %p142
    %p145 = scmp.ne.s32.totalorder %s128, %s144
    %p146 = scmp.eq.s32.totalorder %s15, 0
    %p147 = por %p145, %p146
    %p148 = scmp.le.s32.totalorder 1, %s9
    %p149 = scmp.lt.s32.totalorder %s9, 17
    %p150 = pnand %p148, %p149
    %p151 = pneg %p150
    // Predicated region
    $region9: #{_lambda_.67} parent=5 // pred_check
      _
    $region10: #{_lambda_.67} parent=5 // pred_check_branch
      %153 = sbr.rel (%p150) target = $region12
    $region11: #{_lambda_.67} parent=5 // pred_region
      %s154 = ssub.s32 %s9, 1
    $region12: #{_lambda_.67} parent=5 // pred_fallthru
      _
    %p155 = scmp.lt.s32.totalorder %s9, 16
    // Predicated region
    $region13: #{_lambda_.67} parent=5 // pred_check
      %p156 = pneg %p155
    $region14: #{_lambda_.67} parent=5 // pred_check_branch
      %158 = sbr.rel (%p156) target = $region16
    $region15: #{_lambda_.67} parent=5 // pred_region
      // Predicated region
      $region17: #{_lambda_.67} parent=15 // pred_check
        %p159 = pneg %p50
      $region18: #{_lambda_.67} parent=15 // pred_check_branch
        %161 = sbr.rel (%p159) target = $region20
      $region19: #{_lambda_.67} parent=15 // pred_region
        %p162 = scmp.lt.s32.totalorder %s16, 15
        %s163 = scalar_select %p162, %s16, 15
        %p164 = scmp.lt.s32.totalorder %s17, 0
        %s165 = scalar_select %p164, %s17, 0
        %s166 = sadd.s32 %s165, %s163
        %s167 = smul.addr %s166, 8
        %s168 = scalar_lea.vmem %s0, %s167
      $region20: #{_lambda_.67} parent=15 // pred_fallthru
        _
      // Predicated region
      $region21: #{_lambda_.67} parent=15 // pred_check
        %p169 = pneg %p78
      $region22: #{_lambda_.67} parent=15 // pred_check_branch
        %171 = sbr.rel (%p169) target = $region24
      $region23: #{_lambda_.67} parent=15 // pred_region
        %s172 = smul.u32 8, %s18
        %p173 = scmp.lt.s32.totalorder %s16, 15
        %s174 = scalar_select %p173, %s16, 15
        %p175 = scmp.lt.s32.totalorder %s172, 7
        %s176 = scalar_select %p175, %s172, 7
        %s177 = smul.addr %s174, 8
        %s178 = sadd.s32 %s176, %s177
        %s179 = smul.addr %s178, 8
        %s180 = scalar_lea.vmem %s1, %s179
        %s181 = smul.u32 8, %s18
      $region24: #{_lambda_.67} parent=15 // pred_fallthru
        _
      // Predicated region
      $region25: #{_lambda_.67} parent=15 // pred_check
        %p182 = pneg %p106
      $region26: #{_lambda_.67} parent=15 // pred_check_branch
        %184 = sbr.rel (%p182) target = $region28
      $region27: #{_lambda_.67} parent=15 // pred_region
        %s185 = smul.u32 8, %s18
        %p186 = scmp.lt.s32.totalorder %s16, 15
        %s187 = scalar_select %p186, %s16, 15
        %p188 = scmp.lt.s32.totalorder %s185, 7
        %s189 = scalar_select %p188, %s185, 7
        %s190 = smul.addr %s187, 8
        %s191 = sadd.s32 %s189, %s190
        %s192 = smul.addr %s191, 8
        %s193 = scalar_lea.vmem %s2, %s192
        %s194 = smul.u32 8, %s18
      $region28: #{_lambda_.67} parent=15 // pred_fallthru
        _
    $region16: #{_lambda_.67} parent=5 // pred_fallthru
      _
    %p195 = scmp.le.s32.totalorder 1, %s9
    %p196 = scmp.lt.s32.totalorder %s9, 17
    %p197 = pnand %p195, %p196
    %p198 = pneg %p197
    // Predicated region
    $region29: #{_lambda_.67} parent=5 // pred_check
      _
    $region30: #{_lambda_.67} parent=5 // pred_check_branch
      %200 = sbr.rel (%p197) target = $region32
    $region31: #{_lambda_.67} parent=5 // pred_region
      %s201 = ssub.s32 %s9, 1
      %p202 = scmp.lt.s32.totalorder %s19, 15
      %s203 = scalar_select %p202, %s19, 15
      %p204 = scmp.lt.s32.totalorder %s20, 0
      %s205 = scalar_select %p204, %s20, 0
      %s206 = sadd.s32 %s205, %s203
      %s207 = smul.addr %s206, 8
      %s208 = scalar_lea.vmem %s0, %s207
      %p209 = pneg %p56
      %p210 = pneg %p53
      %s211 = smul.u32 8, %s21
      %p212 = scmp.lt.s32.totalorder %s19, 15
      %s213 = scalar_select %p212, %s19, 15
      %p214 = scmp.lt.s32.totalorder %s211, 7
      %s215 = scalar_select %p214, %s211, 7
      %s216 = smul.addr %s213, 8
      %s217 = sadd.s32 %s215, %s216
      %s218 = smul.addr %s217, 8
      %s219 = scalar_lea.vmem %s1, %s218
      %p220 = pneg %p84
      %p221 = pneg %p81
      %s222 = smul.u32 8, %s21
      %p223 = scmp.lt.s32.totalorder %s19, 15
      %s224 = scalar_select %p223, %s19, 15
      %p225 = scmp.lt.s32.totalorder %s222, 7
      %s226 = scalar_select %p225, %s222, 7
      %s227 = smul.addr %s224, 8
      %s228 = sadd.s32 %s226, %s227
      %s229 = smul.addr %s228, 8
      %s230 = scalar_lea.vmem %s2, %s229
      %p231 = pneg %p112
      %p232 = pneg %p109
      %p233 = pneg %p140
      %p234 = pneg %p137
      %p235 = scmp.lt.s32.totalorder %s19, 15
      %s236 = scalar_select %p235, %s19, 15
      %p237 = scmp.lt.s32.totalorder %s20, 0
      %s238 = scalar_select %p237, %s20, 0
      %s239 = sadd.s32 %s238, %s236
      %s240 = smul.addr %s239, 8
      %s241 = scalar_lea.vmem %s3, %s240
      %p242 = scmp.lt.s32.totalorder %s19, 15
      %s243 = scalar_select %p242, %s19, 15
      %p244 = scmp.lt.s32.totalorder %s20, 0
      %s245 = scalar_select %p244, %s20, 0
      %s246 = sadd.s32 %s245, %s243
      %s247 = smul.addr %s246, 8
      %s248 = scalar_lea.vmem %s0, %s247
      %s249 = smul.u32 8, %s21
      %p250 = scmp.lt.s32.totalorder %s19, 15
      %s251 = scalar_select %p250, %s19, 15
      %p252 = scmp.lt.s32.totalorder %s249, 7
      %s253 = scalar_select %p252, %s249, 7
      %s254 = smul.addr %s251, 8
      %s255 = sadd.s32 %s253, %s254
      %s256 = smul.addr %s255, 8
      %s257 = scalar_lea.vmem %s1, %s256
      %s258 = smul.u32 8, %s21
      %s259 = smul.u32 8, %s21
      %p260 = scmp.lt.s32.totalorder %s19, 15
      %s261 = scalar_select %p260, %s19, 15
      %p262 = scmp.lt.s32.totalorder %s259, 7
      %s263 = scalar_select %p262, %s259, 7
      %s264 = smul.addr %s261, 8
      %s265 = sadd.s32 %s263, %s264
      %s266 = smul.addr %s265, 8
      %s267 = scalar_lea.vmem %s2, %s266
      %s268 = smul.u32 8, %s21
      %p269 = scmp.lt.s32.totalorder %s19, 15
      %s270 = scalar_select %p269, %s19, 15
      %p271 = scmp.lt.s32.totalorder %s20, 0
      %s272 = scalar_select %p271, %s20, 0
      %s273 = sadd.s32 %s272, %s270
      %s274 = smul.addr %s273, 8
      %s275 = scalar_lea.vmem %s3, %s274
      %p276 = scmp.eq.s32.totalorder %s21, 0
      // Predicated region
      $region33: #{_lambda_.67} parent=31 // pred_check
        %p277 = pneg %p276
      $region34: #{_lambda_.67} parent=31 // pred_check_branch
        %279 = sbr.rel (%p277) target = $region36
      $region35: #{_lambda_.67} parent=31 // pred_region
        %vm280 = vcmask 7168
        %281 = vst.msk [vmem:[#allocation2] sm:$0xff] %vm280, -inf
        %282 = vst.msk [vmem:[#allocation3] sm:$0xff] %vm280, 0.0
        %vm283 = vcmask 130048
        %284 = vst.msk [vmem:[#allocation4] sm:$0xff] %vm283, 0.0
      $region36: #{_lambda_.67} parent=31 // pred_fallthru
        _
      %v285 = vld [vmem:[%s248] sm:$0xff]
      %v286 = vld [vmem:[%s257] sm:$0xff]
      %v287 = vld [vmem:[%s257 + $0x8] sm:$0xff]
      %v288 = vld [vmem:[%s257 + $0x10] sm:$0xff]
      %v289 = vld [vmem:[%s257 + $0x18] sm:$0xff]
      %v290 = vld [vmem:[%s257 + $0x20] sm:$0xff]
      %v291 = vld [vmem:[%s257 + $0x28] sm:$0xff]
      %v292 = vld [vmem:[%s257 + $0x30] sm:$0xff]
      %v293 = vld [vmem:[%s257 + $0x38] sm:$0xff]
      %v294 = vld [vmem:[%s267] sm:$0xff]
      %v295 = vld [vmem:[%s267 + $0x8] sm:$0xff]
      %v296 = vld [vmem:[%s267 + $0x10] sm:$0xff]
      %v297 = vld [vmem:[%s267 + $0x18] sm:$0xff]
      %v298 = vld [vmem:[%s267 + $0x20] sm:$0xff]
      %v299 = vld [vmem:[%s267 + $0x28] sm:$0xff]
      %v300 = vld [vmem:[%s267 + $0x30] sm:$0xff]
      %v301 = vld [vmem:[%s267 + $0x38] sm:$0xff]
      %vm302 = vcmask 130048
      %v304 = vsel %vm302, %v285, 0
      %v307 = vsel %vm302, %v286, 0
      %v310 = vsel %vm302, %v287, 0
      %v313 = vsel %vm302, %v288, 0
      %v316 = vsel %vm302, %v289, 0
      %v319 = vsel %vm302, %v290, 0
      %v322 = vsel %vm302, %v291, 0
      %v325 = vsel %vm302, %v292, 0
      %v328 = vsel %vm302, %v293, 0
      %330 = vmatprep.subr.mxu0 0.0
      %331 = vmatpush1.xpose.msra.mxu0 %v307
      %332 = vmatprep.subr.mxu0 0.0
      %333 = vmatpush1.xpose.msra.mxu0 %v310
      %334 = vmatprep.subr.mxu0 0.0
      %335 = vmatpush1.xpose.msra.mxu0 %v313
      %336 = vmatprep.subr.mxu0 0.0
      %337 = vmatpush1.xpose.msra.mxu0 %v316
      %338 = vmatprep.subr.mxu0 0.0
      %339 = vmatpush1.xpose.msra.mxu0 %v319
      %340 = vmatprep.subr.mxu0 0.0
      %341 = vmatpush1.xpose.msra.mxu0 %v322
      %342 = vmatprep.subr.mxu0 0.0
      %343 = vmatpush1.xpose.msra.mxu0 %v325
      %344 = vmatprep.subr.mxu0 0.0
      %345 = vmatpush1.xpose.msra.mxu0 %v328
      %346 = vmatprep.subr.mxu0 0.0
      %347 = vmatpush1.xpose.msra.mxu0 0.0
      %348 = vmatprep.subr.mxu0 0.0
      %349 = vmatpush1.xpose.msra.mxu0 0.0
      %350 = vmatprep.subr.mxu0 0.0
      %351 = vmatpush1.xpose.msra.mxu0 0.0
      %352 = vmatprep.subr.mxu0 0.0
      %353 = vmatpush1.xpose.msra.mxu0 0.0
      %354 = vmatprep.subr.mxu0 0.0
      %355 = vmatpush1.xpose.msra.mxu0 0.0
      %356 = vmatprep.subr.mxu0 0.0
      %357 = vmatpush1.xpose.msra.mxu0 0.0
      %358 = vmatprep.subr.mxu0 0.0
      %359 = vmatpush1.xpose.msra.mxu0 0.0
      %360 = vmatprep.subr.mxu0 0.0
      %361 = vmatpush1.xpose.msra.mxu0 0.0
      %362 = vmatprep.subr.mxu0 0.0
      %363 = vmatpush1.xpose.msra.mxu0 0.0
      %364 = vmatprep.subr.mxu0 0.0
      %365 = vmatpush1.xpose.msra.mxu0 0.0
      %366 = vmatprep.subr.mxu0 0.0
      %367 = vmatpush1.xpose.msra.mxu0 0.0
      %368 = vmatprep.subr.mxu0 0.0
      %369 = vmatpush1.xpose.msra.mxu0 0.0
      %370 = vmatprep.subr.mxu0 0.0
      %371 = vmatpush1.xpose.msra.mxu0 0.0
      %372 = vmatprep.subr.mxu0 0.0
      %373 = vmatpush1.xpose.msra.mxu0 0.0
      %374 = vmatprep.subr.mxu0 0.0
      %375 = vmatpush1.xpose.msra.mxu0 0.0
      %376 = vmatprep.subr.mxu0 0.0
      %377 = vmatpush1.xpose.msra.mxu0 0.0
      %378 = vmatprep.subr.mxu0 0.0
      %379 = vmatpush1.xpose.msra.mxu0 0.0
      %380 = vmatprep.subr.mxu0 0.0
      %381 = vmatpush1.xpose.msra.mxu0 0.0
      %382 = vmatprep.subr.mxu0 0.0
      %383 = vmatpush1.xpose.msra.mxu0 0.0
      %384 = vmatprep.subr.mxu0 0.0
      %385 = vmatpush1.xpose.msra.mxu0 0.0
      %386 = vmatprep.subr.mxu0 0.0
      %387 = vmatpush1.xpose.msra.mxu0 0.0
      %388 = vmatprep.subr.mxu0 0.0
      %389 = vmatpush1.xpose.msra.mxu0 0.0
      %390 = vmatprep.subr.mxu0 0.0
      %391 = vmatpush1.xpose.msra.mxu0 0.0
      %392 = vmatprep.subr.mxu0 0.0
      %393 = vmatpush1.xpose.msra.mxu0 0.0
      %394 = vmatprep.mubr.f32.mxu0 0.0
      %395 = vmatmul.mubr.f32.gmra.mrb[0].mxu0 %v304
      %v396 = vpop.f32.mrb[0].mxu0
      %v397 = vadd.f32 0.0, %v396
      %v398 = vpop.f32.mrb[0].mxu0
      %399 = vdwg.mxu0
      %v400 = vmul.f32 %v397, 0.25
      %v401 = vld [vmem:[#allocation2] sm:$0xff]
      %vm402 = vcmask 523264
      %v403 = vsel %vm402, %v400, -inf
      %404 = vmax.xlane.f32.xlu0 %v403
      %v405 = vpop.xlane.xlu0 %404
      %v406 = vmax.f32 %v401, %v405
      %v407 = vsub.f32 %v401, %v406
      %v408 = vmul.f32 %v407, 1.442695
      %v409 = vpow.pop %v408
      %411 = vset.pattern.permute.xlu0 0
      %412 = vperm.xlu0 %411, %v406
      %v413 = vpop.permute.xlu0 %412
      %v415 = vsub.f32 %v400, %v413
      %v416 = vmul.f32 %v415, 1.442695
      %v417 = vpow.pop %v416
      %v418 = vld [vmem:[#allocation3] sm:$0xff]
      %v419 = vmul.f32 %v409, %v418
      %v420 = vsel %vm402, %v417, 0.0
      %421 = vadd.xlane.f32.xlu0 %v420
      %v422 = vpop.xlane.xlu0 %421
      %v423 = vadd.f32 %v419, %v422
      %vm424 = vcmask 7168
      %425 = vst.msk [vmem:[#allocation3] sm:$0xff] %vm424, %v423
      %v426 = vld [vmem:[#allocation4] sm:$0xff]
      %428 = vset.pattern.permute.xlu0 0
      %429 = vperm.xlu0 %428, %v409
      %v430 = vpop.permute.xlu0 %429
      %v432 = vmul.f32 %v430, %v426
      %v434 = vsel %vm402, %v417, 0
      %436 = vmatprep.subr.mxu0 0.0
      %437 = vmatpush1.msra.mxu0 %v294
      %438 = vmatprep.subr.mxu0 0.0
      %439 = vmatpush1.msra.mxu0 %v295
      %440 = vmatprep.subr.mxu0 0.0
      %441 = vmatpush1.msra.mxu0 %v296
      %442 = vmatprep.subr.mxu0 0.0
      %443 = vmatpush1.msra.mxu0 %v297
      %444 = vmatprep.subr.mxu0 0.0
      %445 = vmatpush1.msra.mxu0 %v298
      %446 = vmatprep.subr.mxu0 0.0
      %447 = vmatpush1.msra.mxu0 %v299
      %448 = vmatprep.subr.mxu0 0.0
      %449 = vmatpush1.msra.mxu0 %v300
      %450 = vmatprep.subr.mxu0 0.0
      %451 = vmatpush1.msra.mxu0 %v301
      %452 = vmatprep.subr.mxu0 0.0
      %453 = vmatpush1.msra.mxu0 0.0
      %454 = vmatprep.subr.mxu0 0.0
      %455 = vmatpush1.msra.mxu0 0.0
      %456 = vmatprep.subr.mxu0 0.0
      %457 = vmatpush1.msra.mxu0 0.0
      %458 = vmatprep.subr.mxu0 0.0
      %459 = vmatpush1.msra.mxu0 0.0
      %460 = vmatprep.subr.mxu0 0.0
      %461 = vmatpush1.msra.mxu0 0.0
      %462 = vmatprep.subr.mxu0 0.0
      %463 = vmatpush1.msra.mxu0 0.0
      %464 = vmatprep.subr.mxu0 0.0
      %465 = vmatpush1.msra.mxu0 0.0
      %466 = vmatprep.subr.mxu0 0.0
      %467 = vmatpush1.msra.mxu0 0.0
      %468 = vmatprep.subr.mxu0 0.0
      %469 = vmatpush1.msra.mxu0 0.0
      %470 = vmatprep.subr.mxu0 0.0
      %471 = vmatpush1.msra.mxu0 0.0
      %472 = vmatprep.subr.mxu0 0.0
      %473 = vmatpush1.msra.mxu0 0.0
      %474 = vmatprep.subr.mxu0 0.0
      %475 = vmatpush1.msra.mxu0 0.0
      %476 = vmatprep.subr.mxu0 0.0
      %477 = vmatpush1.msra.mxu0 0.0
      %478 = vmatprep.subr.mxu0 0.0
      %479 = vmatpush1.msra.mxu0 0.0
      %480 = vmatprep.subr.mxu0 0.0
      %481 = vmatpush1.msra.mxu0 0.0
      %482 = vmatprep.subr.mxu0 0.0
      %483 = vmatpush1.msra.mxu0 0.0
      %484 = vmatprep.subr.mxu0 0.0
      %485 = vmatpush1.msra.mxu0 0.0
      %486 = vmatprep.subr.mxu0 0.0
      %487 = vmatpush1.msra.mxu0 0.0
      %488 = vmatprep.subr.mxu0 0.0
      %489 = vmatpush1.msra.mxu0 0.0
      %490 = vmatprep.subr.mxu0 0.0
      %491 = vmatpush1.msra.mxu0 0.0
      %492 = vmatprep.subr.mxu0 0.0
      %493 = vmatpush1.msra.mxu0 0.0
      %494 = vmatprep.subr.mxu0 0.0
      %495 = vmatpush1.msra.mxu0 0.0
      %496 = vmatprep.subr.mxu0 0.0
      %497 = vmatpush1.msra.mxu0 0.0
      %498 = vmatprep.subr.mxu0 0.0
      %499 = vmatpush1.msra.mxu0 0.0
      %500 = vmatprep.mubr.f32.mxu0 0.0
      %501 = vmatmul.mubr.f32.gmra.mrb[0].mxu0 %v434
      %v502 = vpop.f32.mrb[0].mxu0
      %v503 = vadd.f32 0.0, %v502
      %v504 = vpop.f32.mrb[0].mxu0
      %505 = vdwg.mxu0
      %v506 = vadd.f32 %v432, %v503
      %507 = vst.msk [vmem:[#allocation4] sm:$0xff] %vm302, %v506
      %508 = vst.msk [vmem:[#allocation2] sm:$0xff] %vm424, %v406
      // Predicated region
      $region37: #{_lambda_.67} parent=31 // pred_check
        %p509 = pneg %p276
      $region38: #{_lambda_.67} parent=31 // pred_check_branch
        %511 = sbr.rel (%p509) target = $region40
      $region39: #{_lambda_.67} parent=31 // pred_region
        %v512 = vld [vmem:[#allocation4] sm:$0xff]
        %v513 = vld [vmem:[#allocation3] sm:$0xff]
        %v514 = vrcp.pop %v513
        %516 = vset.pattern.permute.xlu0 0
        %517 = vperm.xlu0 %516, %v514
        %v518 = vpop.permute.xlu0 %517
        %v520 = vmul.f32 %v512, %v518
        %521 = vst.msk [vmem:[%s275] sm:$0xff] %vm302, %v520
      $region40: #{_lambda_.67} parent=31 // pred_fallthru
        _
      %p522 = scmp.lt.s32.totalorder %s19, 15
      %s523 = scalar_select %p522, %s19, 15
      %p524 = scmp.lt.s32.totalorder %s20, 0
      %s525 = scalar_select %p524, %s20, 0
      %s526 = sadd.s32 %s525, %s523
      %s527 = smul.addr %s526, 8
      %s528 = scalar_lea.vmem %s3, %s527
      // Predicated region
      $region41: #{_lambda_.67} parent=31 // pred_check
        %p529 = pneg %p137
      $region42: #{_lambda_.67} parent=31 // pred_check_branch
        %531 = sbr.rel (%p529) target = $region44
      $region43: #{_lambda_.67} parent=31 // pred_region
        _
      $region44: #{_lambda_.67} parent=31 // pred_fallthru
        _
    $region32: #{_lambda_.67} parent=5 // pred_fallthru
      _
    %p532 = scmp.le.s32.totalorder 2, %s9
    // Predicated region
    $region45: #{_lambda_.67} parent=5 // pred_check
      %p533 = pneg %p532
    $region46: #{_lambda_.67} parent=5 // pred_check_branch
      %535 = sbr.rel (%p533) target = $region48
    $region47: #{_lambda_.67} parent=5 // pred_region
      %s536 = ssub.s32 %s9, 2
      // Predicated region
      $region49: #{_lambda_.67} parent=47 // pred_check
        %p537 = pneg %p143
      $region50: #{_lambda_.67} parent=47 // pred_check_branch
        %539 = sbr.rel (%p537) target = $region52
      $region51: #{_lambda_.67} parent=47 // pred_region
        %p540 = scmp.lt.s32.totalorder %s22, 15
        %s541 = scalar_select %p540, %s22, 15
        %p542 = scmp.lt.s32.totalorder %s23, 0
        %s543 = scalar_select %p542, %s23, 0
        %s544 = sadd.s32 %s543, %s541
        %s545 = smul.addr %s544, 8
        %s546 = scalar_lea.vmem %s3, %s545
      $region52: #{_lambda_.67} parent=47 // pred_fallthru
        _
    $region48: #{_lambda_.67} parent=5 // pred_fallthru
      _
  $region6: #{_lambda_.67} parent=0 // loop_footer
    %s13 = sadd.s32 1, %s9
  $region7: #{_lambda_.67} parent=0 // loop_footer_branch
    %8 = sbr.rel target = $region3
  $region8: #{_lambda_.67} parent=0 // loop_exit
    _

// kernel: _lambda_.70
$region0: #{_lambda_.70}
  #allocation0 [shape = 'u32[]', space=smem, size = 0x4, offset = 0x4, fixed_abs, tag = 'smem constant byte address 0x4 - core index']
  #allocation1 [shape = 'u32[144,128]{1,0:T(1,128)}', space=vmem, size = 0x12000, scoped, tag = 'internal scratch']
  #allocation2 [shape = 'f32[16,256]{1,0:T(8,128)}', space=vmem, size = 0x4000, scoped, tag = 'scratch operand']
  %s0 = inlined_call_operand.vmem [shape: f32[16,128], index: 0, kind: input, shape index: {}]
  %s1 = inlined_call_operand.vmem [shape: f32[128,256], index: 1, kind: input, shape index: {}]
  %s2 = inlined_call_operand.vmem [shape: f32[1,256], index: 2, kind: input, shape index: {}]
  %s3 = inlined_call_operand.vmem [shape: f32[16,256], index: 3, kind: output, shape index: {}]
  %s4 = sld [smem:[#allocation0]]
  $region30: #{_lambda_.70} parent=0
    _
  %s6 = ssub.s32 1, %s4
  %s7 = scalar_select 0, %s6, %s4
  // Predicated region
  $region2: #{_lambda_.70} parent=0 // pred_check
    _
  $region3: #{_lambda_.70} parent=0 // pred_check_branch
    %9 = sbr.rel (0) target = $region5
  $region4: #{_lambda_.70} parent=0 // pred_region
    _
  $region5: #{_lambda_.70} parent=0 // pred_fallthru
    _
  // Predicated region
  $region6: #{_lambda_.70} parent=0 // pred_check
    _
  $region7: #{_lambda_.70} parent=0 // pred_check_branch
    %11 = sbr.rel (0) target = $region9
  $region8: #{_lambda_.70} parent=0 // pred_region
    _
  $region9: #{_lambda_.70} parent=0 // pred_fallthru
    _
  // Predicated region
  $region10: #{_lambda_.70} parent=0 // pred_check
    _
  $region11: #{_lambda_.70} parent=0 // pred_check_branch
    %13 = sbr.rel (0) target = $region13
  $region12: #{_lambda_.70} parent=0 // pred_region
    _
  $region13: #{_lambda_.70} parent=0 // pred_fallthru
    _
  %p14 = scmp.eq.s32.totalorder 0, 0
  // Predicated region
  $region14: #{_lambda_.70} parent=0 // pred_check
    %p15 = pneg %p14
  $region15: #{_lambda_.70} parent=0 // pred_check_branch
    %17 = sbr.rel (%p15) target = $region17
  $region16: #{_lambda_.70} parent=0 // pred_region
    %18 = vst [vmem:[#allocation2] sm:$0xff] 0.0
    %19 = vst [vmem:[#allocation2 + $0x8] sm:$0xff] 0.0
    %20 = vst [vmem:[#allocation2 + $0x10] sm:$0xff] 0.0
    %21 = vst [vmem:[#allocation2 + $0x18] sm:$0xff] 0.0
  $region17: #{_lambda_.70} parent=0 // pred_fallthru
    _
  %v22 = vld [vmem:[#allocation2] sm:$0xff]
  %v23 = vld [vmem:[#allocation2 + $0x8] sm:$0xff]
  %v24 = vld [vmem:[#allocation2 + $0x10] sm:$0xff]
  %v25 = vld [vmem:[#allocation2 + $0x18] sm:$0xff]
  %v26 = vld [vmem:[%s0] sm:$0xff]
  %v27 = vld [vmem:[%s0 + $0x8] sm:$0xff]
  %v28 = vld [vmem:[%s1] sm:$0xff]
  %v29 = vld [vmem:[%s1 + $0x8] sm:$0xff]
  %v30 = vld [vmem:[%s1 + $0x10] sm:$0xff]
  %v31 = vld [vmem:[%s1 + $0x18] sm:$0xff]
  %v32 = vld [vmem:[%s1 + $0x20] sm:$0xff]
  %v33 = vld [vmem:[%s1 + $0x28] sm:$0xff]
  %v34 = vld [vmem:[%s1 + $0x30] sm:$0xff]
  %v35 = vld [vmem:[%s1 + $0x38] sm:$0xff]
  %v36 = vld [vmem:[%s1 + $0x40] sm:$0xff]
  %v37 = vld [vmem:[%s1 + $0x48] sm:$0xff]
  %v38 = vld [vmem:[%s1 + $0x50] sm:$0xff]
  %v39 = vld [vmem:[%s1 + $0x58] sm:$0xff]
  %v40 = vld [vmem:[%s1 + $0x60] sm:$0xff]
  %v41 = vld [vmem:[%s1 + $0x68] sm:$0xff]
  %v42 = vld [vmem:[%s1 + $0x70] sm:$0xff]
  %v43 = vld [vmem:[%s1 + $0x78] sm:$0xff]
  %v44 = vld [vmem:[%s1 + $0x80] sm:$0xff]
  %v45 = vld [vmem:[%s1 + $0x88] sm:$0xff]
  %v46 = vld [vmem:[%s1 + $0x90] sm:$0xff]
  %v47 = vld [vmem:[%s1 + $0x98] sm:$0xff]
  %v48 = vld [vmem:[%s1 + $0xa0] sm:$0xff]
  %v49 = vld [vmem:[%s1 + $0xa8] sm:$0xff]
  %v50 = vld [vmem:[%s1 + $0xb0] sm:$0xff]
  %v51 = vld [vmem:[%s1 + $0xb8] sm:$0xff]
  %v52 = vld [vmem:[%s1 + $0xc0] sm:$0xff]
  %v53 = vld [vmem:[%s1 + $0xc8] sm:$0xff]
  %v54 = vld [vmem:[%s1 + $0xd0] sm:$0xff]
  %v55 = vld [vmem:[%s1 + $0xd8] sm:$0xff]
  %v56 = vld [vmem:[%s1 + $0xe0] sm:$0xff]
  %v57 = vld [vmem:[%s1 + $0xe8] sm:$0xff]
  %v58 = vld [vmem:[%s1 + $0xf0] sm:$0xff]
  %v59 = vld [vmem:[%s1 + $0xf8] sm:$0xff]
  %60 = vmatprep.subr.mxu0 %v29
  %61 = vmatpush1.msra.mxu0 %v28
  %62 = vmatprep.subr.mxu0 %v31
  %63 = vmatpush1.msra.mxu0 %v30
  %64 = vmatprep.subr.mxu0 %v33
  %65 = vmatpush1.msra.mxu0 %v32
  %66 = vmatprep.subr.mxu0 %v35
  %67 = vmatpush1.msra.mxu0 %v34
  %68 = vmatprep.subr.mxu0 %v37
  %69 = vmatpush1.msra.mxu0 %v36
  %70 = vmatprep.subr.mxu0 %v39
  %71 = vmatpush1.msra.mxu0 %v38
  %72 = vmatprep.subr.mxu0 %v41
  %73 = vmatpush1.msra.mxu0 %v40
  %74 = vmatprep.subr.mxu0 %v43
  %75 = vmatpush1.msra.mxu0 %v42
  %76 = vmatprep.subr.mxu0 %v45
  %77 = vmatpush1.msra.mxu0 %v44
  %78 = vmatprep.subr.mxu0 %v47
  %79 = vmatpush1.msra.mxu0 %v46
  %80 = vmatprep.subr.mxu0 %v49
  %81 = vmatpush1.msra.mxu0 %v48
  %82 = vmatprep.subr.mxu0 %v51
  %83 = vmatpush1.msra.mxu0 %v50
  %84 = vmatprep.subr.mxu0 %v53
  %85 = vmatpush1.msra.mxu0 %v52
  %86 = vmatprep.subr.mxu0 %v55
  %87 = vmatpush1.msra.mxu0 %v54
  %88 = vmatprep.subr.mxu0 %v57
  %89 = vmatpush1.msra.mxu0 %v56
  %90 = vmatprep.subr.mxu0 %v59
  %91 = vmatpush1.msra.mxu0 %v58
  %92 = vmatprep.subr.mxu0 0.0
  %93 = vmatpush1.msra.mxu0 0.0
  %94 = vmatprep.subr.mxu0 0.0
  %95 = vmatpush1.msra.mxu0 0.0
  %96 = vmatprep.subr.mxu0 0.0
  %97 = vmatpush1.msra.mxu0 0.0
  %98 = vmatprep.subr.mxu0 0.0
  %99 = vmatpush1.msra.mxu0 0.0
  %100 = vmatprep.subr.mxu0 0.0
  %101 = vmatpush1.msra.mxu0 0.0
  %102 = vmatprep.subr.mxu0 0.0
  %103 = vmatpush1.msra.mxu0 0.0
  %104 = vmatprep.subr.mxu0 0.0
  %105 = vmatpush1.msra.mxu0 0.0
  %106 = vmatprep.subr.mxu0 0.0
  %107 = vmatpush1.msra.mxu0 0.0
  %108 = vmatprep.subr.mxu0 0.0
  %109 = vmatpush1.msra.mxu0 0.0
  %110 = vmatprep.subr.mxu0 0.0
  %111 = vmatpush1.msra.mxu0 0.0
  %112 = vmatprep.subr.mxu0 0.0
  %113 = vmatpush1.msra.mxu0 0.0
  %114 = vmatprep.subr.mxu0 0.0
  %115 = vmatpush1.msra.mxu0 0.0
  %116 = vmatprep.subr.mxu0 0.0
  %117 = vmatpush1.msra.mxu0 0.0
  %118 = vmatprep.subr.mxu0 0.0
  %119 = vmatpush1.msra.mxu0 0.0
  %120 = vmatprep.subr.mxu0 0.0
  %121 = vmatpush1.msra.mxu0 0.0
  %122 = vmatprep.subr.mxu0 0.0
  %123 = vmatpush1.msra.mxu0 0.0
  %124 = vmatprep.mubr.f32.mxu0 0.0
  %125 = vmatmul.mubr.f32.gmra.mrb[0].mxu0 %v26
  %v126 = vpop.f32.mrb[0].mxu0
  %v127 = vadd.f32 0.0, %v126
  %v128 = vpop.f32.mrb[0].mxu0
  %v129 = vadd.f32 0.0, %v128
  %130 = vmatprep.mubr.f32.mxu0 0.0
  %131 = vmatmul.mubr.f32.gmra.mrb[0].mxu0 %v27
  %v132 = vpop.f32.mrb[0].mxu0
  %v133 = vadd.f32 0.0, %v132
  %v134 = vpop.f32.mrb[0].mxu0
  %v135 = vadd.f32 0.0, %v134
  %136 = vdwg.mxu0
  %v137 = vadd.f32 %v22, %v127
  %v138 = vadd.f32 %v23, %v129
  %v139 = vadd.f32 %v24, %v133
  %v140 = vadd.f32 %v25, %v135
  %141 = vst [vmem:[#allocation2] sm:$0xff] %v137
  %142 = vst [vmem:[#allocation2 + $0x8] sm:$0xff] %v138
  %143 = vst [vmem:[#allocation2 + $0x10] sm:$0xff] %v139
  %144 = vst [vmem:[#allocation2 + $0x18] sm:$0xff] %v140
  // Predicated region
  $region18: #{_lambda_.70} parent=0 // pred_check
    %p145 = pneg %p14
  $region19: #{_lambda_.70} parent=0 // pred_check_branch
    %147 = sbr.rel (%p145) target = $region21
  $region20: #{_lambda_.70} parent=0 // pred_region
    %v148 = vld [vmem:[#allocation2] sm:$0xff]
    %v149 = vld [vmem:[#allocation2 + $0x8] sm:$0xff]
    %v150 = vld [vmem:[#allocation2 + $0x10] sm:$0xff]
    %v151 = vld [vmem:[#allocation2 + $0x18] sm:$0xff]
    %v152 = vld [vmem:[%s2] sm:$0x3]
    %v154 = vlaneseq
    %v155 = vshrl.u32 %v154, 7
    %v156 = vsub.s32 0, %v155
    %v157 = vrot.slane %v152, %v156
    %v158 = vlaneseq
    %v159 = vshrl.u32 %v158, 7
    %v160 = vsub.s32 1, %v159
    %v161 = vrot.slane %v152, %v160
    %v164 = vadd.f32 %v148, %v157
    %v165 = vadd.f32 %v149, %v161
    %v166 = vadd.f32 %v150, %v157
    %v167 = vadd.f32 %v151, %v161
    %v168 = vmax.f32 %v164, 0.0
    %v169 = vmax.f32 %v165, 0.0
    %v170 = vmax.f32 %v166, 0.0
    %v171 = vmax.f32 %v167, 0.0
    %172 = vst [vmem:[%s3] sm:$0xff] %v168
    %173 = vst [vmem:[%s3 + $0x8] sm:$0xff] %v169
    %174 = vst [vmem:[%s3 + $0x10] sm:$0xff] %v170
    %175 = vst [vmem:[%s3 + $0x18] sm:$0xff] %v171
  $region21: #{_lambda_.70} parent=0 // pred_fallthru
    _
  // Predicated region
  $region22: #{_lambda_.70} parent=0 // pred_check
    _
  $region23: #{_lambda_.70} parent=0 // pred_check_branch
    %177 = sbr.rel (0) target = $region25
  $region24: #{_lambda_.70} parent=0 // pred_region
    _
  $region25: #{_lambda_.70} parent=0 // pred_fallthru
    _
  // Predicated region
  $region26: #{_lambda_.70} parent=0 // pred_check
    _
  $region27: #{_lambda_.70} parent=0 // pred_check_branch
    %179 = sbr.rel (0) target = $region29
  $region28: #{_lambda_.70} parent=0 // pred_region
    _
  $region29: #{_lambda_.70} parent=0 // pred_fallthru
    _

// kernel: _lambda_.71
$region0: #{_lambda_.71}
  #allocation0 [shape = 'u32[]', space=smem, size = 0x4, offset = 0x4, fixed_abs, tag = 'smem constant byte address 0x4 - core index']
  #allocation1 [shape = 'u32[144,128]{1,0:T(1,128)}', space=vmem, size = 0x12000, scoped, tag = 'internal scratch']
  #allocation2 [shape = 'f32[16,128]{1,0:T(8,128)}', space=vmem, size = 0x2000, scoped, tag = 'scratch operand']
  %s0 = inlined_call_operand.vmem [shape: f32[16,256], index: 0, kind: input, shape index: {}]
  %s1 = inlined_call_operand.vmem [shape: f32[256,128], index: 1, kind: input, shape index: {}]
  %s2 = inlined_call_operand.vmem [shape: f32[1,128], index: 2, kind: input, shape index: {}]
  %s3 = inlined_call_operand.vmem [shape: f32[16,128], index: 3, kind: output, shape index: {}]
  %s4 = sld [smem:[#allocation0]]
  $region30: #{_lambda_.71} parent=0
    _
  %s6 = ssub.s32 1, %s4
  %s7 = scalar_select 0, %s6, %s4
  // Predicated region
  $region2: #{_lambda_.71} parent=0 // pred_check
    _
  $region3: #{_lambda_.71} parent=0 // pred_check_branch
    %9 = sbr.rel (0) target = $region5
  $region4: #{_lambda_.71} parent=0 // pred_region
    _
  $region5: #{_lambda_.71} parent=0 // pred_fallthru
    _
  // Predicated region
  $region6: #{_lambda_.71} parent=0 // pred_check
    _
  $region7: #{_lambda_.71} parent=0 // pred_check_branch
    %11 = sbr.rel (0) target = $region9
  $region8: #{_lambda_.71} parent=0 // pred_region
    _
  $region9: #{_lambda_.71} parent=0 // pred_fallthru
    _
  // Predicated region
  $region10: #{_lambda_.71} parent=0 // pred_check
    _
  $region11: #{_lambda_.71} parent=0 // pred_check_branch
    %13 = sbr.rel (0) target = $region13
  $region12: #{_lambda_.71} parent=0 // pred_region
    _
  $region13: #{_lambda_.71} parent=0 // pred_fallthru
    _
  %p14 = scmp.eq.s32.totalorder 0, 0
  // Predicated region
  $region14: #{_lambda_.71} parent=0 // pred_check
    %p15 = pneg %p14
  $region15: #{_lambda_.71} parent=0 // pred_check_branch
    %17 = sbr.rel (%p15) target = $region17
  $region16: #{_lambda_.71} parent=0 // pred_region
    %18 = vst [vmem:[#allocation2] sm:$0xff] 0.0
    %19 = vst [vmem:[#allocation2 + $0x8] sm:$0xff] 0.0
  $region17: #{_lambda_.71} parent=0 // pred_fallthru
    _
  %v20 = vld [vmem:[#allocation2] sm:$0xff]
  %v21 = vld [vmem:[#allocation2 + $0x8] sm:$0xff]
  %v22 = vld [vmem:[%s0] sm:$0xff]
  %v23 = vld [vmem:[%s0 + $0x8] sm:$0xff]
  %v24 = vld [vmem:[%s0 + $0x10] sm:$0xff]
  %v25 = vld [vmem:[%s0 + $0x18] sm:$0xff]
  %v26 = vld [vmem:[%s1] sm:$0xff]
  %v27 = vld [vmem:[%s1 + $0x8] sm:$0xff]
  %v28 = vld [vmem:[%s1 + $0x10] sm:$0xff]
  %v29 = vld [vmem:[%s1 + $0x18] sm:$0xff]
  %v30 = vld [vmem:[%s1 + $0x20] sm:$0xff]
  %v31 = vld [vmem:[%s1 + $0x28] sm:$0xff]
  %v32 = vld [vmem:[%s1 + $0x30] sm:$0xff]
  %v33 = vld [vmem:[%s1 + $0x38] sm:$0xff]
  %v34 = vld [vmem:[%s1 + $0x40] sm:$0xff]
  %v35 = vld [vmem:[%s1 + $0x48] sm:$0xff]
  %v36 = vld [vmem:[%s1 + $0x50] sm:$0xff]
  %v37 = vld [vmem:[%s1 + $0x58] sm:$0xff]
  %v38 = vld [vmem:[%s1 + $0x60] sm:$0xff]
  %v39 = vld [vmem:[%s1 + $0x68] sm:$0xff]
  %v40 = vld [vmem:[%s1 + $0x70] sm:$0xff]
  %v41 = vld [vmem:[%s1 + $0x78] sm:$0xff]
  %v42 = vld [vmem:[%s1 + $0x80] sm:$0xff]
  %v43 = vld [vmem:[%s1 + $0x88] sm:$0xff]
  %v44 = vld [vmem:[%s1 + $0x90] sm:$0xff]
  %v45 = vld [vmem:[%s1 + $0x98] sm:$0xff]
  %v46 = vld [vmem:[%s1 + $0xa0] sm:$0xff]
  %v47 = vld [vmem:[%s1 + $0xa8] sm:$0xff]
  %v48 = vld [vmem:[%s1 + $0xb0] sm:$0xff]
  %v49 = vld [vmem:[%s1 + $0xb8] sm:$0xff]
  %v50 = vld [vmem:[%s1 + $0xc0] sm:$0xff]
  %v51 = vld [vmem:[%s1 + $0xc8] sm:$0xff]
  %v52 = vld [vmem:[%s1 + $0xd0] sm:$0xff]
  %v53 = vld [vmem:[%s1 + $0xd8] sm:$0xff]
  %v54 = vld [vmem:[%s1 + $0xe0] sm:$0xff]
  %v55 = vld [vmem:[%s1 + $0xe8] sm:$0xff]
  %v56 = vld [vmem:[%s1 + $0xf0] sm:$0xff]
  %v57 = vld [vmem:[%s1 + $0xf8] sm:$0xff]
  %58 = vmatprep.subr.mxu0 0.0
  %59 = vmatpush1.msra.mxu0 %v26
  %60 = vmatprep.subr.mxu0 0.0
  %61 = vmatpush1.msra.mxu0 %v27
  %62 = vmatprep.subr.mxu0 0.0
  %63 = vmatpush1.msra.mxu0 %v28
  %64 = vmatprep.subr.mxu0 0.0
  %65 = vmatpush1.msra.mxu0 %v29
  %66 = vmatprep.subr.mxu0 0.0
  %67 = vmatpush1.msra.mxu0 %v30
  %68 = vmatprep.subr.mxu0 0.0
  %69 = vmatpush1.msra.mxu0 %v31
  %70 = vmatprep.subr.mxu0 0.0
  %71 = vmatpush1.msra.mxu0 %v32
  %72 = vmatprep.subr.mxu0 0.0
  %73 = vmatpush1.msra.mxu0 %v33
  %74 = vmatprep.subr.mxu0 0.0
  %75 = vmatpush1.msra.mxu0 %v34
  %76 = vmatprep.subr.mxu0 0.0
  %77 = vmatpush1.msra.mxu0 %v35
  %78 = vmatprep.subr.mxu0 0.0
  %79 = vmatpush1.msra.mxu0 %v36
  %80 = vmatprep.subr.mxu0 0.0
  %81 = vmatpush1.msra.mxu0 %v37
  %82 = vmatprep.subr.mxu0 0.0
  %83 = vmatpush1.msra.mxu0 %v38
  %84 = vmatprep.subr.mxu0 0.0
  %85 = vmatpush1.msra.mxu0 %v39
  %86 = vmatprep.subr.mxu0 0.0
  %87 = vmatpush1.msra.mxu0 %v40
  %88 = vmatprep.subr.mxu0 0.0
  %89 = vmatpush1.msra.mxu0 %v41
  %90 = vmatprep.subr.mxu0 0.0
  %91 = vmatpush1.msra.mxu0 %v42
  %92 = vmatprep.subr.mxu0 0.0
  %93 = vmatpush1.msra.mxu0 %v43
  %94 = vmatprep.subr.mxu0 0.0
  %95 = vmatpush1.msra.mxu0 %v44
  %96 = vmatprep.subr.mxu0 0.0
  %97 = vmatpush1.msra.mxu0 %v45
  %98 = vmatprep.subr.mxu0 0.0
  %99 = vmatpush1.msra.mxu0 %v46
  %100 = vmatprep.subr.mxu0 0.0
  %101 = vmatpush1.msra.mxu0 %v47
  %102 = vmatprep.subr.mxu0 0.0
  %103 = vmatpush1.msra.mxu0 %v48
  %104 = vmatprep.subr.mxu0 0.0
  %105 = vmatpush1.msra.mxu0 %v49
  %106 = vmatprep.subr.mxu0 0.0
  %107 = vmatpush1.msra.mxu0 %v50
  %108 = vmatprep.subr.mxu0 0.0
  %109 = vmatpush1.msra.mxu0 %v51
  %110 = vmatprep.subr.mxu0 0.0
  %111 = vmatpush1.msra.mxu0 %v52
  %112 = vmatprep.subr.mxu0 0.0
  %113 = vmatpush1.msra.mxu0 %v53
  %114 = vmatprep.subr.mxu0 0.0
  %115 = vmatpush1.msra.mxu0 %v54
  %116 = vmatprep.subr.mxu0 0.0
  %117 = vmatpush1.msra.mxu0 %v55
  %118 = vmatprep.subr.mxu0 0.0
  %119 = vmatpush1.msra.mxu0 %v56
  %120 = vmatprep.subr.mxu0 0.0
  %121 = vmatpush1.msra.mxu0 %v57
  %122 = vmatprep.mubr.f32.mxu0 %v23
  %123 = vmatmul.mubr.f32.gmra.mrb[0].mxu0 %v22
  %v124 = vpop.f32.mrb[0].mxu0
  %v125 = vadd.f32 0.0, %v124
  %v126 = vpop.f32.mrb[0].mxu0
  %127 = vmatprep.mubr.f32.mxu0 %v25
  %128 = vmatmul.mubr.f32.gmra.mrb[0].mxu0 %v24
  %v129 = vpop.f32.mrb[0].mxu0
  %v130 = vadd.f32 0.0, %v129
  %v131 = vpop.f32.mrb[0].mxu0
  %132 = vdwg.mxu0
  %v133 = vadd.f32 %v20, %v125
  %v134 = vadd.f32 %v21, %v130
  %135 = vst [vmem:[#allocation2] sm:$0xff] %v133
  %136 = vst [vmem:[#allocation2 + $0x8] sm:$0xff] %v134
  // Predicated region
  $region18: #{_lambda_.71} parent=0 // pred_check
    %p137 = pneg %p14
  $region19: #{_lambda_.71} parent=0 // pred_check_branch
    %139 = sbr.rel (%p137) target = $region21
  $region20: #{_lambda_.71} parent=0 // pred_region
    %v140 = vld [vmem:[#allocation2] sm:$0xff]
    %v141 = vld [vmem:[#allocation2 + $0x8] sm:$0xff]
    %v142 = vld [vmem:[%s2] sm:$0x1]
    %v144 = vlaneseq
    %v145 = vshrl.u32 %v144, 7
    %v146 = vsub.s32 0, %v145
    %v147 = vrot.slane %v142, %v146
    %v149 = vadd.f32 %v140, %v147
    %v150 = vadd.f32 %v141, %v147
    %151 = vst [vmem:[%s3] sm:$0xff] %v149
    %152 = vst [vmem:[%s3 + $0x8] sm:$0xff] %v150
  $region21: #{_lambda_.71} parent=0 // pred_fallthru
    _
  // Predicated region
  $region22: #{_lambda_.71} parent=0 // pred_check
    _
  $region23: #{_lambda_.71} parent=0 // pred_check_branch
    %154 = sbr.rel (0) target = $region25
  $region24: #{_lambda_.71} parent=0 // pred_region
    _
  $region25: #{_lambda_.71} parent=0 // pred_fallthru
    _
  // Predicated region
  $region26: #{_lambda_.71} parent=0 // pred_check
    _
  $region27: #{_lambda_.71} parent=0 // pred_check_branch
    %156 = sbr.rel (0) target = $region29
  $region28: #{_lambda_.71} parent=0 // pred_region
    _
  $region29: #{_lambda_.71} parent=0 // pred_fallthru
    _

// kernel: _lambda_.86
$region0: #{_lambda_.86}
  #allocation0 [shape = 'u32[]', space=smem, size = 0x4, offset = 0x4, fixed_abs, tag = 'smem constant byte address 0x4 - core index']
  #allocation1 [shape = 'u32[144,128]{1,0:T(1,128)}', space=vmem, size = 0x12000, scoped, tag = 'internal scratch']
  #allocation2 [shape = 'f32[16,128]{1,0:T(8,128)}', space=vmem, size = 0x2000, scoped, tag = 'scratch operand']
  %s0 = inlined_call_operand.vmem [shape: f32[16,128], index: 0, kind: input, shape index: {}]
  %s1 = inlined_call_operand.vmem [shape: f32[128,128], index: 1, kind: input, shape index: {}]
  %s2 = inlined_call_operand.vmem [shape: f32[1,128], index: 2, kind: input, shape index: {}]
  %s3 = inlined_call_operand.vmem [shape: f32[16,128], index: 3, kind: output, shape index: {}]
  %s4 = sld [smem:[#allocation0]]
  $region30: #{_lambda_.86} parent=0
    _
  %s6 = ssub.s32 1, %s4
  %s7 = scalar_select 0, %s6, %s4
  // Predicated region
  $region2: #{_lambda_.86} parent=0 // pred_check
    _
  $region3: #{_lambda_.86} parent=0 // pred_check_branch
    %9 = sbr.rel (0) target = $region5
  $region4: #{_lambda_.86} parent=0 // pred_region
    _
  $region5: #{_lambda_.86} parent=0 // pred_fallthru
    _
  // Predicated region
  $region6: #{_lambda_.86} parent=0 // pred_check
    _
  $region7: #{_lambda_.86} parent=0 // pred_check_branch
    %11 = sbr.rel (0) target = $region9
  $region8: #{_lambda_.86} parent=0 // pred_region
    _
  $region9: #{_lambda_.86} parent=0 // pred_fallthru
    _
  // Predicated region
  $region10: #{_lambda_.86} parent=0 // pred_check
    _
  $region11: #{_lambda_.86} parent=0 // pred_check_branch
    %13 = sbr.rel (0) target = $region13
  $region12: #{_lambda_.86} parent=0 // pred_region
    _
  $region13: #{_lambda_.86} parent=0 // pred_fallthru
    _
  %p14 = scmp.eq.s32.totalorder 0, 0
  // Predicated region
  $region14: #{_lambda_.86} parent=0 // pred_check
    %p15 = pneg %p14
  $region15: #{_lambda_.86} parent=0 // pred_check_branch
    %17 = sbr.rel (%p15) target = $region17
  $region16: #{_lambda_.86} parent=0 // pred_region
    %18 = vst [vmem:[#allocation2] sm:$0xff] 0.0
    %19 = vst [vmem:[#allocation2 + $0x8] sm:$0xff] 0.0
  $region17: #{_lambda_.86} parent=0 // pred_fallthru
    _
  %v20 = vld [vmem:[#allocation2] sm:$0xff]
  %v21 = vld [vmem:[#allocation2 + $0x8] sm:$0xff]
  %v22 = vld [vmem:[%s0] sm:$0xff]
  %v23 = vld [vmem:[%s0 + $0x8] sm:$0xff]
  %v24 = vld [vmem:[%s1] sm:$0xff]
  %v25 = vld [vmem:[%s1 + $0x8] sm:$0xff]
  %v26 = vld [vmem:[%s1 + $0x10] sm:$0xff]
  %v27 = vld [vmem:[%s1 + $0x18] sm:$0xff]
  %v28 = vld [vmem:[%s1 + $0x20] sm:$0xff]
  %v29 = vld [vmem:[%s1 + $0x28] sm:$0xff]
  %v30 = vld [vmem:[%s1 + $0x30] sm:$0xff]
  %v31 = vld [vmem:[%s1 + $0x38] sm:$0xff]
  %v32 = vld [vmem:[%s1 + $0x40] sm:$0xff]
  %v33 = vld [vmem:[%s1 + $0x48] sm:$0xff]
  %v34 = vld [vmem:[%s1 + $0x50] sm:$0xff]
  %v35 = vld [vmem:[%s1 + $0x58] sm:$0xff]
  %v36 = vld [vmem:[%s1 + $0x60] sm:$0xff]
  %v37 = vld [vmem:[%s1 + $0x68] sm:$0xff]
  %v38 = vld [vmem:[%s1 + $0x70] sm:$0xff]
  %v39 = vld [vmem:[%s1 + $0x78] sm:$0xff]
  %40 = vmatprep.subr.mxu0 0.0
  %41 = vmatpush1.msra.mxu0 %v24
  %42 = vmatprep.subr.mxu0 0.0
  %43 = vmatpush1.msra.mxu0 %v25
  %44 = vmatprep.subr.mxu0 0.0
  %45 = vmatpush1.msra.mxu0 %v26
  %46 = vmatprep.subr.mxu0 0.0
  %47 = vmatpush1.msra.mxu0 %v27
  %48 = vmatprep.subr.mxu0 0.0
  %49 = vmatpush1.msra.mxu0 %v28
  %50 = vmatprep.subr.mxu0 0.0
  %51 = vmatpush1.msra.mxu0 %v29
  %52 = vmatprep.subr.mxu0 0.0
  %53 = vmatpush1.msra.mxu0 %v30
  %54 = vmatprep.subr.mxu0 0.0
  %55 = vmatpush1.msra.mxu0 %v31
  %56 = vmatprep.subr.mxu0 0.0
  %57 = vmatpush1.msra.mxu0 %v32
  %58 = vmatprep.subr.mxu0 0.0
  %59 = vmatpush1.msra.mxu0 %v33
  %60 = vmatprep.subr.mxu0 0.0
  %61 = vmatpush1.msra.mxu0 %v34
  %62 = vmatprep.subr.mxu0 0.0
  %63 = vmatpush1.msra.mxu0 %v35
  %64 = vmatprep.subr.mxu0 0.0
  %65 = vmatpush1.msra.mxu0 %v36
  %66 = vmatprep.subr.mxu0 0.0
  %67 = vmatpush1.msra.mxu0 %v37
  %68 = vmatprep.subr.mxu0 0.0
  %69 = vmatpush1.msra.mxu0 %v38
  %70 = vmatprep.subr.mxu0 0.0
  %71 = vmatpush1.msra.mxu0 %v39
  %72 = vmatprep.subr.mxu0 0.0
  %73 = vmatpush1.msra.mxu0 0.0
  %74 = vmatprep.subr.mxu0 0.0
  %75 = vmatpush1.msra.mxu0 0.0
  %76 = vmatprep.subr.mxu0 0.0
  %77 = vmatpush1.msra.mxu0 0.0
  %78 = vmatprep.subr.mxu0 0.0
  %79 = vmatpush1.msra.mxu0 0.0
  %80 = vmatprep.subr.mxu0 0.0
  %81 = vmatpush1.msra.mxu0 0.0
  %82 = vmatprep.subr.mxu0 0.0
  %83 = vmatpush1.msra.mxu0 0.0
  %84 = vmatprep.subr.mxu0 0.0
  %85 = vmatpush1.msra.mxu0 0.0
  %86 = vmatprep.subr.mxu0 0.0
  %87 = vmatpush1.msra.mxu0 0.0
  %88 = vmatprep.subr.mxu0 0.0
  %89 = vmatpush1.msra.mxu0 0.0
  %90 = vmatprep.subr.mxu0 0.0
  %91 = vmatpush1.msra.mxu0 0.0
  %92 = vmatprep.subr.mxu0 0.0
  %93 = vmatpush1.msra.mxu0 0.0
  %94 = vmatprep.subr.mxu0 0.0
  %95 = vmatpush1.msra.mxu0 0.0
  %96 = vmatprep.subr.mxu0 0.0
  %97 = vmatpush1.msra.mxu0 0.0
  %98 = vmatprep.subr.mxu0 0.0
  %99 = vmatpush1.msra.mxu0 0.0
  %100 = vmatprep.subr.mxu0 0.0
  %101 = vmatpush1.msra.mxu0 0.0
  %102 = vmatprep.subr.mxu0 0.0
  %103 = vmatpush1.msra.mxu0 0.0
  %104 = vmatprep.mubr.f32.mxu0 0.0
  %105 = vmatmul.mubr.f32.gmra.mrb[0].mxu0 %v22
  %v106 = vpop.f32.mrb[0].mxu0
  %v107 = vadd.f32 0.0, %v106
  %v108 = vpop.f32.mrb[0].mxu0
  %109 = vmatprep.mubr.f32.mxu0 0.0
  %110 = vmatmul.mubr.f32.gmra.mrb[0].mxu0 %v23
  %v111 = vpop.f32.mrb[0].mxu0
  %v112 = vadd.f32 0.0, %v111
  %v113 = vpop.f32.mrb[0].mxu0
  %114 = vdwg.mxu0
  %v115 = vadd.f32 %v20, %v107
  %v116 = vadd.f32 %v21, %v112
  %117 = vst [vmem:[#allocation2] sm:$0xff] %v115
  %118 = vst [vmem:[#allocation2 + $0x8] sm:$0xff] %v116
  // Predicated region
  $region18: #{_lambda_.86} parent=0 // pred_check
    %p119 = pneg %p14
  $region19: #{_lambda_.86} parent=0 // pred_check_branch
    %121 = sbr.rel (%p119) target = $region21
  $region20: #{_lambda_.86} parent=0 // pred_region
    %v122 = vld [vmem:[#allocation2] sm:$0xff]
    %v123 = vld [vmem:[#allocation2 + $0x8] sm:$0xff]
    %v124 = vld [vmem:[%s2] sm:$0x1]
    %v126 = vlaneseq
    %v127 = vshrl.u32 %v126, 7
    %v128 = vsub.s32 0, %v127
    %v129 = vrot.slane %v124, %v128
    %v131 = vadd.f32 %v122, %v129
    %v132 = vadd.f32 %v123, %v129
    %v133 = vmax.f32 %v131, 0.0
    %v134 = vmax.f32 %v132, 0.0
    %135 = vst [vmem:[%s3] sm:$0xff] %v133
    %136 = vst [vmem:[%s3 + $0x8] sm:$0xff] %v134
  $region21: #{_lambda_.86} parent=0 // pred_fallthru
    _
  // Predicated region
  $region22: #{_lambda_.86} parent=0 // pred_check
    _
  $region23: #{_lambda_.86} parent=0 // pred_check_branch
    %138 = sbr.rel (0) target = $region25
  $region24: #{_lambda_.86} parent=0 // pred_region
    _
  $region25: #{_lambda_.86} parent=0 // pred_fallthru
    _
  // Predicated region
  $region26: #{_lambda_.86} parent=0 // pred_check
    _
  $region27: #{_lambda_.86} parent=0 // pred_check_branch
    %140 = sbr.rel (0) target = $region29
  $region28: #{_lambda_.86} parent=0 // pred_region
    _
  $region29: #{_lambda_.86} parent=0 // pred_fallthru
    _

// kernel: _lambda_.87
$region0: #{_lambda_.87}
  #allocation0 [shape = 'u32[]', space=smem, size = 0x4, offset = 0x4, fixed_abs, tag = 'smem constant byte address 0x4 - core index']
  #allocation1 [shape = 'u32[144,128]{1,0:T(1,128)}', space=vmem, size = 0x12000, scoped, tag = 'internal scratch']
  #allocation2 [shape = 'f32[16,256]{1,0:T(8,128)}', space=vmem, size = 0x4000, scoped, tag = 'scratch operand']
  %s0 = inlined_call_operand.vmem [shape: f32[16,128], index: 0, kind: input, shape index: {}]
  %s1 = inlined_call_operand.vmem [shape: f32[128,256], index: 1, kind: input, shape index: {}]
  %s2 = inlined_call_operand.vmem [shape: f32[1,256], index: 2, kind: input, shape index: {}]
  %s3 = inlined_call_operand.vmem [shape: f32[16,256], index: 3, kind: output, shape index: {}]
  %s4 = sld [smem:[#allocation0]]
  $region30: #{_lambda_.87} parent=0
    _
  %s6 = ssub.s32 1, %s4
  %s7 = scalar_select 0, %s6, %s4
  // Predicated region
  $region2: #{_lambda_.87} parent=0 // pred_check
    _
  $region3: #{_lambda_.87} parent=0 // pred_check_branch
    %9 = sbr.rel (0) target = $region5
  $region4: #{_lambda_.87} parent=0 // pred_region
    _
  $region5: #{_lambda_.87} parent=0 // pred_fallthru
    _
  // Predicated region
  $region6: #{_lambda_.87} parent=0 // pred_check
    _
  $region7: #{_lambda_.87} parent=0 // pred_check_branch
    %11 = sbr.rel (0) target = $region9
  $region8: #{_lambda_.87} parent=0 // pred_region
    _
  $region9: #{_lambda_.87} parent=0 // pred_fallthru
    _
  // Predicated region
  $region10: #{_lambda_.87} parent=0 // pred_check
    _
  $region11: #{_lambda_.87} parent=0 // pred_check_branch
    %13 = sbr.rel (0) target = $region13
  $region12: #{_lambda_.87} parent=0 // pred_region
    _
  $region13: #{_lambda_.87} parent=0 // pred_fallthru
    _
  %p14 = scmp.eq.s32.totalorder 0, 0
  // Predicated region
  $region14: #{_lambda_.87} parent=0 // pred_check
    %p15 = pneg %p14
  $region15: #{_lambda_.87} parent=0 // pred_check_branch
    %17 = sbr.rel (%p15) target = $region17
  $region16: #{_lambda_.87} parent=0 // pred_region
    %18 = vst [vmem:[#allocation2] sm:$0xff] 0.0
    %19 = vst [vmem:[#allocation2 + $0x8] sm:$0xff] 0.0
    %20 = vst [vmem:[#allocation2 + $0x10] sm:$0xff] 0.0
    %21 = vst [vmem:[#allocation2 + $0x18] sm:$0xff] 0.0
  $region17: #{_lambda_.87} parent=0 // pred_fallthru
    _
  %v22 = vld [vmem:[#allocation2] sm:$0xff]
  %v23 = vld [vmem:[#allocation2 + $0x8] sm:$0xff]
  %v24 = vld [vmem:[#allocation2 + $0x10] sm:$0xff]
  %v25 = vld [vmem:[#allocation2 + $0x18] sm:$0xff]
  %v26 = vld [vmem:[%s0] sm:$0xff]
  %v27 = vld [vmem:[%s0 + $0x8] sm:$0xff]
  %v28 = vld [vmem:[%s1] sm:$0xff]
  %v29 = vld [vmem:[%s1 + $0x8] sm:$0xff]
  %v30 = vld [vmem:[%s1 + $0x10] sm:$0xff]
  %v31 = vld [vmem:[%s1 + $0x18] sm:$0xff]
  %v32 = vld [vmem:[%s1 + $0x20] sm:$0xff]
  %v33 = vld [vmem:[%s1 + $0x28] sm:$0xff]
  %v34 = vld [vmem:[%s1 + $0x30] sm:$0xff]
  %v35 = vld [vmem:[%s1 + $0x38] sm:$0xff]
  %v36 = vld [vmem:[%s1 + $0x40] sm:$0xff]
  %v37 = vld [vmem:[%s1 + $0x48] sm:$0xff]
  %v38 = vld [vmem:[%s1 + $0x50] sm:$0xff]
  %v39 = vld [vmem:[%s1 + $0x58] sm:$0xff]
  %v40 = vld [vmem:[%s1 + $0x60] sm:$0xff]
  %v41 = vld [vmem:[%s1 + $0x68] sm:$0xff]
  %v42 = vld [vmem:[%s1 + $0x70] sm:$0xff]
  %v43 = vld [vmem:[%s1 + $0x78] sm:$0xff]
  %v44 = vld [vmem:[%s1 + $0x80] sm:$0xff]
  %v45 = vld [vmem:[%s1 + $0x88] sm:$0xff]
  %v46 = vld [vmem:[%s1 + $0x90] sm:$0xff]
  %v47 = vld [vmem:[%s1 + $0x98] sm:$0xff]
  %v48 = vld [vmem:[%s1 + $0xa0] sm:$0xff]
  %v49 = vld [vmem:[%s1 + $0xa8] sm:$0xff]
  %v50 = vld [vmem:[%s1 + $0xb0] sm:$0xff]
  %v51 = vld [vmem:[%s1 + $0xb8] sm:$0xff]
  %v52 = vld [vmem:[%s1 + $0xc0] sm:$0xff]
  %v53 = vld [vmem:[%s1 + $0xc8] sm:$0xff]
  %v54 = vld [vmem:[%s1 + $0xd0] sm:$0xff]
  %v55 = vld [vmem:[%s1 + $0xd8] sm:$0xff]
  %v56 = vld [vmem:[%s1 + $0xe0] sm:$0xff]
  %v57 = vld [vmem:[%s1 + $0xe8] sm:$0xff]
  %v58 = vld [vmem:[%s1 + $0xf0] sm:$0xff]
  %v59 = vld [vmem:[%s1 + $0xf8] sm:$0xff]
  %60 = vmatprep.subr.mxu0 %v29
  %61 = vmatpush1.msra.mxu0 %v28
  %62 = vmatprep.subr.mxu0 %v31
  %63 = vmatpush1.msra.mxu0 %v30
  %64 = vmatprep.subr.mxu0 %v33
  %65 = vmatpush1.msra.mxu0 %v32
  %66 = vmatprep.subr.mxu0 %v35
  %67 = vmatpush1.msra.mxu0 %v34
  %68 = vmatprep.subr.mxu0 %v37
  %69 = vmatpush1.msra.mxu0 %v36
  %70 = vmatprep.subr.mxu0 %v39
  %71 = vmatpush1.msra.mxu0 %v38
  %72 = vmatprep.subr.mxu0 %v41
  %73 = vmatpush1.msra.mxu0 %v40
  %74 = vmatprep.subr.mxu0 %v43
  %75 = vmatpush1.msra.mxu0 %v42
  %76 = vmatprep.subr.mxu0 %v45
  %77 = vmatpush1.msra.mxu0 %v44
  %78 = vmatprep.subr.mxu0 %v47
  %79 = vmatpush1.msra.mxu0 %v46
  %80 = vmatprep.subr.mxu0 %v49
  %81 = vmatpush1.msra.mxu0 %v48
  %82 = vmatprep.subr.mxu0 %v51
  %83 = vmatpush1.msra.mxu0 %v50
  %84 = vmatprep.subr.mxu0 %v53
  %85 = vmatpush1.msra.mxu0 %v52
  %86 = vmatprep.subr.mxu0 %v55
  %87 = vmatpush1.msra.mxu0 %v54
  %88 = vmatprep.subr.mxu0 %v57
  %89 = vmatpush1.msra.mxu0 %v56
  %90 = vmatprep.subr.mxu0 %v59
  %91 = vmatpush1.msra.mxu0 %v58
  %92 = vmatprep.subr.mxu0 0.0
  %93 = vmatpush1.msra.mxu0 0.0
  %94 = vmatprep.subr.mxu0 0.0
  %95 = vmatpush1.msra.mxu0 0.0
  %96 = vmatprep.subr.mxu0 0.0
  %97 = vmatpush1.msra.mxu0 0.0
  %98 = vmatprep.subr.mxu0 0.0
  %99 = vmatpush1.msra.mxu0 0.0
  %100 = vmatprep.subr.mxu0 0.0
  %101 = vmatpush1.msra.mxu0 0.0
  %102 = vmatprep.subr.mxu0 0.0
  %103 = vmatpush1.msra.mxu0 0.0
  %104 = vmatprep.subr.mxu0 0.0
  %105 = vmatpush1.msra.mxu0 0.0
  %106 = vmatprep.subr.mxu0 0.0
  %107 = vmatpush1.msra.mxu0 0.0
  %108 = vmatprep.subr.mxu0 0.0
  %109 = vmatpush1.msra.mxu0 0.0
  %110 = vmatprep.subr.mxu0 0.0
  %111 = vmatpush1.msra.mxu0 0.0
  %112 = vmatprep.subr.mxu0 0.0
  %113 = vmatpush1.msra.mxu0 0.0
  %114 = vmatprep.subr.mxu0 0.0
  %115 = vmatpush1.msra.mxu0 0.0
  %116 = vmatprep.subr.mxu0 0.0
  %117 = vmatpush1.msra.mxu0 0.0
  %118 = vmatprep.subr.mxu0 0.0
  %119 = vmatpush1.msra.mxu0 0.0
  %120 = vmatprep.subr.mxu0 0.0
  %121 = vmatpush1.msra.mxu0 0.0
  %122 = vmatprep.subr.mxu0 0.0
  %123 = vmatpush1.msra.mxu0 0.0
  %124 = vmatprep.mubr.f32.mxu0 0.0
  %125 = vmatmul.mubr.f32.gmra.mrb[0].mxu0 %v26
  %v126 = vpop.f32.mrb[0].mxu0
  %v127 = vadd.f32 0.0, %v126
  %v128 = vpop.f32.mrb[0].mxu0
  %v129 = vadd.f32 0.0, %v128
  %130 = vmatprep.mubr.f32.mxu0 0.0
  %131 = vmatmul.mubr.f32.gmra.mrb[0].mxu0 %v27
  %v132 = vpop.f32.mrb[0].mxu0
  %v133 = vadd.f32 0.0, %v132
  %v134 = vpop.f32.mrb[0].mxu0
  %v135 = vadd.f32 0.0, %v134
  %136 = vdwg.mxu0
  %v137 = vadd.f32 %v22, %v127
  %v138 = vadd.f32 %v23, %v129
  %v139 = vadd.f32 %v24, %v133
  %v140 = vadd.f32 %v25, %v135
  %141 = vst [vmem:[#allocation2] sm:$0xff] %v137
  %142 = vst [vmem:[#allocation2 + $0x8] sm:$0xff] %v138
  %143 = vst [vmem:[#allocation2 + $0x10] sm:$0xff] %v139
  %144 = vst [vmem:[#allocation2 + $0x18] sm:$0xff] %v140
  // Predicated region
  $region18: #{_lambda_.87} parent=0 // pred_check
    %p145 = pneg %p14
  $region19: #{_lambda_.87} parent=0 // pred_check_branch
    %147 = sbr.rel (%p145) target = $region21
  $region20: #{_lambda_.87} parent=0 // pred_region
    %v148 = vld [vmem:[#allocation2] sm:$0xff]
    %v149 = vld [vmem:[#allocation2 + $0x8] sm:$0xff]
    %v150 = vld [vmem:[#allocation2 + $0x10] sm:$0xff]
    %v151 = vld [vmem:[#allocation2 + $0x18] sm:$0xff]
    %v152 = vld [vmem:[%s2] sm:$0x3]
    %v154 = vlaneseq
    %v155 = vshrl.u32 %v154, 7
    %v156 = vsub.s32 0, %v155
    %v157 = vrot.slane %v152, %v156
    %v158 = vlaneseq
    %v159 = vshrl.u32 %v158, 7
    %v160 = vsub.s32 1, %v159
    %v161 = vrot.slane %v152, %v160
    %v164 = vadd.f32 %v148, %v157
    %v165 = vadd.f32 %v149, %v161
    %v166 = vadd.f32 %v150, %v157
    %v167 = vadd.f32 %v151, %v161
    %v168 = vtanh.pop %v164
    %v169 = vtanh.pop %v165
    %v170 = vtanh.pop %v166
    %v171 = vtanh.pop %v167
    %172 = vst [vmem:[%s3] sm:$0xff] %v168
    %173 = vst [vmem:[%s3 + $0x8] sm:$0xff] %v169
    %174 = vst [vmem:[%s3 + $0x10] sm:$0xff] %v170
    %175 = vst [vmem:[%s3 + $0x18] sm:$0xff] %v171
  $region21: #{_lambda_.87} parent=0 // pred_fallthru
    _
  // Predicated region
  $region22: #{_lambda_.87} parent=0 // pred_check
    _
  $region23: #{_lambda_.87} parent=0 // pred_check_branch
    %177 = sbr.rel (0) target = $region25
  $region24: #{_lambda_.87} parent=0 // pred_region
    _
  $region25: #{_lambda_.87} parent=0 // pred_fallthru
    _
  // Predicated region
  $region26: #{_lambda_.87} parent=0 // pred_check
    _
  $region27: #{_lambda_.87} parent=0 // pred_check_branch
    %179 = sbr.rel (0) target = $region29
  $region28: #{_lambda_.87} parent=0 // pred_region
    _
  $region29: #{_lambda_.87} parent=0 // pred_fallthru
    _

</llo_original>
